<compile_context>
chip_gen: v6e
topology: v6e:2x2x1
jax: 0.10.0
libtpu: 0.0.40
codegen_flags: <defaults>
</compile_context>

<pallas_src>
import jax
import jax.numpy as jnp
from jax.experimental import pallas as pl
from jax.experimental.pallas import tpu as pltpu

# Geometry fixed by the module: Linear(10368) = 128 * 9 * 9  =>  15x15 spatial input.
_H = 15
_OH1 = 11            # conv1 output side: 15 - 5 + 1
_OH2 = 9             # conv2 output side: 11 - 3 + 1
_P1 = 128            # conv1 patch rows (121 valid, zero-padded) == _GR + max tap shift
_GR = 104            # conv2 flat-grid rows computed (valid rows are o = 11*a + b, b < 9)
_C1 = 256            # conv1 out channels
_C2 = 128            # conv2 out channels
_HW = _OH2 * _OH2    # 81 valid conv2 positions
_HWP = 84            # padded so the flat GEMV K splits into lane-aligned groups
_FLATW = _HWP * _C2  # 10752 flat GEMV K (torch K=10368 plus 3 zeroed dummy rows)

# conv2 tap (i, j) reads y1 rows [11*i + j, 11*i + j + _GR); the largest start is 24, so
# the conv1 scratch must hold at least _GR + 24 rows (conv1 writes all _P1 rows).
assert _P1 >= _GR + 2 * _OH1 + 2
assert _GR >= _OH1 * (_OH2 - 1) + _OH2       # need h2 rows up to 11*8 + 8 = 96
assert _GR % 8 == 0 and _FLATW % 128 == 0


# ------------------------------- fused encoder kernel ---------------------------------

def _encoder_kernel(p1_ref, w1_ref, b1_ref, b2_ref, blin_ref, w2_hbm, wl_hbm,
                    out_ref, y1_s, w2_s, wl_s, flat_s, sem):
    kq, gep = wl_s.shape
    ep = blin_ref.shape[1]
    groups = gep // ep

    # Kick off the big weight DMAs first so their HBM traffic overlaps the conv compute.
    cp_w2 = pltpu.make_async_copy(w2_hbm, w2_s, sem.at[0])
    cp_wl = pltpu.make_async_copy(wl_hbm, wl_s, sem.at[1])
    cp_w2.start()
    cp_wl.start()

    # conv1: one (128, K1) @ (K1, 256) MXU matmul + bias + ReLU; kept in f32 VMEM.
    h1 = jnp.dot(p1_ref[...], w1_ref[...], preferred_element_type=jnp.float32)
    y1_s[...] = jnp.maximum(h1 + b1_ref[...], 0.0)   # row r = a*11 + b of the 11x11 map

    # conv2: 9 shift-and-accumulate matmuls on the flat (row = a*11 + b) layout,
    # accumulated in registers:
    #   acc[o, co] = sum_{i,j,ci} y1[o + 11*i + j, ci] * w2[3*i+j, ci, co]
    # Rows o with (o % 11) >= 9 or o >= 99 are harmless garbage and never read below.
    cp_w2.wait()
    acc = None
    for i in range(3):
        for j in range(3):
            lhs = y1_s[pl.ds(_OH1 * i + j, _GR), :].astype(jnp.bfloat16)
            d = jnp.dot(lhs, w2_s[3 * i + j], preferred_element_type=jnp.float32)
            acc = d if acc is None else acc + d
    h2 = jnp.maximum(acc + b2_ref[...], 0.0)          # (104, 128) f32, register-resident

    # Scatter the 81 valid rows into the flat GEMV vector (lane-aligned 128-wide stores):
    #   flat[(9a + b)*128 + c] = h2[11a + b, c]
    flat_s[:, pl.ds(_HW * _C2, (_HWP - _HW) * _C2)] = jnp.zeros(
        (1, (_HWP - _HW) * _C2), jnp.float32)         # zero the 3 dummy tail rows
    for a in range(_OH2):
        for b in range(_OH2):
            src = a * _OH1 + b
            flat_s[:, pl.ds((a * _OH2 + b) * _C2, _C2)] = h2[src:src + 1, :]

    # Linear as grouped GEMVs.  wl_s packs `groups` K-slices side by side along lanes
    # (so the weight stays lane-dense):  wl_s[k, g*ep + e] = Wlin[g*kq + k, e].
    cp_wl.wait()
    flat_bf = flat_s[...].astype(jnp.bfloat16)
    wl = wl_s[...]
    res = blin_ref[...]
    for g in range(groups):
        part = jnp.dot(flat_bf[:, g * kq:(g + 1) * kq], wl,
                       preferred_element_type=jnp.float32)
        res = res + part[:, g * ep:(g + 1) * ep]
    out_ref[...] = res


def _encoder_call(patches, prep):
    k1p = patches.shape[1]
    kq, gep = prep["wl"].shape
    ep = prep["blin"].shape[1]
    return pl.pallas_call(
        _encoder_kernel,
        out_shape=jax.ShapeDtypeStruct((1, ep), jnp.float32),
        grid=(1,),
        in_specs=[
            pl.BlockSpec((_P1, k1p), lambda i: (0, 0)),      # im2col patches (bf16)
            pl.BlockSpec((k1p, _C1), lambda i: (0, 0)),      # conv1 weight (bf16)
            pl.BlockSpec((1, _C1), lambda i: (0, 0)),        # conv1 bias (f32)
            pl.BlockSpec((1, _C2), lambda i: (0, 0)),        # conv2 bias (f32)
            pl.BlockSpec((1, ep), lambda i: (0, 0)),         # linear bias (f32)
            pl.BlockSpec(memory_space=pl.ANY),               # conv2 weight, stays in HBM
            pl.BlockSpec(memory_space=pl.ANY),               # packed linear weight, HBM
        ],
        out_specs=pl.BlockSpec((1, ep), lambda i: (0, 0)),
        scratch_shapes=[
            pltpu.VMEM((_P1, _C1), jnp.float32),             # conv1 activations
            pltpu.VMEM((9, _C1, _C2), jnp.bfloat16),         # conv2 weight landing buffer
            pltpu.VMEM((kq, gep), jnp.bfloat16),             # linear weight landing buffer
            pltpu.VMEM((1, _FLATW), jnp.float32),            # flat GEMV LHS
            pltpu.SemaphoreType.DMA((2,)),
        ],
        compiler_params=pltpu.CompilerParams(dimension_semantics=("arbitrary",)),
        cost_estimate=pl.CostEstimate(flops=70_000_000, transcendentals=0,
                                      bytes_accessed=1_500_000),
    )(patches, prep["w1"], prep["b1"], prep["b2"], prep["blin"], prep["w2"], prep["wl"])


# ------------------------------------ glue / params -----------------------------------

def _im2col_5x5(x_hwc, k1p):
    """(15,15,C) bf16 -> (128, k1p) patch matrix; column order (ci, i, j); zero padded."""
    H, W, C = x_hwc.shape
    oh, ow = H - 4, W - 4
    taps = []
    for i in range(5):
        for j in range(5):
            taps.append(x_hwc[i:i + oh, j:j + ow, :])            # (11, 11, C)
    p = jnp.stack(taps, axis=0)                                  # (25, 11, 11, C)
    p = jnp.transpose(p, (1, 2, 3, 0)).reshape(oh * ow, C * 25)  # col = ci*25 + i*5 + j
    return jnp.pad(p, ((0, _P1 - oh * ow), (0, k1p - C * 25)))


def _linear_group_geometry(encode_size):
    """(Ep, groups) with groups*Ep a multiple of 128 and groups dividing _HWP=84."""
    if encode_size <= 32:
        return 32, 4
    if encode_size <= 64:
        return 64, 2
    return ((encode_size + 127) // 128) * 128, 1


def prepare_params(params):
    """One-time weight relayout / bf16 cast (kept outside the jitted hot path)."""
    cout1, cin = params["w1"].shape[:2]
    k1 = cin * 25
    k1p = pl.cdiv(k1, 128) * 128
    # Conv1: (256, Cin, 5, 5) -> (Cin*25, 256), row = ci*25 + i*5 + j, zero-padded rows.
    w1 = params["w1"].reshape(cout1, k1).T
    w1 = jnp.pad(w1, ((0, k1p - k1), (0, 0))).astype(jnp.bfloat16)
    # Conv2: (128, 256, 3, 3) -> (9, 256, 128) with w2[3i+j, ci, co] = torch_w2[co, ci, i, j].
    w2 = jnp.transpose(params["w2"], (2, 3, 1, 0)).reshape(9, _C1, _C2).astype(jnp.bfloat16)
    # Linear: torch flat index c*81 + hw  ->  kernel flat index hw*128 + c, then pack
    # `groups` K-slices side by side along lanes so the HBM array stays lane-dense.
    e = params["wlin"].shape[0]
    ep, groups = _linear_group_geometry(e)
    kq = _FLATW // groups
    wl = jnp.transpose(params["wlin"].reshape(e, _C2, _HW), (2, 1, 0))   # (81, 128, E)
    wl = wl.reshape(_HW * _C2, e)
    wl = jnp.pad(wl, ((0, _FLATW - _HW * _C2), (0, ep - e)))             # (10752, Ep)
    wl = jnp.transpose(wl.reshape(groups, kq, ep), (1, 0, 2)).reshape(kq, groups * ep)
    wl = wl.astype(jnp.bfloat16)
    blin = jnp.pad(params["blin"], (0, ep - e)).reshape(1, ep).astype(jnp.float32)
    return dict(
        w1=w1, b1=params["b1"].reshape(1, _C1).astype(jnp.float32),
        w2=w2, b2=params["b2"].reshape(1, _C2).astype(jnp.float32),
        wl=wl, blin=blin,
    )


def init_params(key, in_channel, encode_size):
    k1, k2, k3, k4, k5, k6 = jax.random.split(key, 6)
    w1 = jax.random.normal(k1, (256, in_channel, 5, 5), jnp.float32) * 0.05
    b1 = jax.random.normal(k2, (256,), jnp.float32) * 0.05
    w2 = jax.random.normal(k3, (128, 256, 3, 3), jnp.float32) * 0.02
    b2 = jax.random.normal(k4, (128,), jnp.float32) * 0.02
    fan_in, fan_out = 10368, encode_size
    std = (2.0 / (fan_in + fan_out)) ** 0.5
    wlin = jax.random.normal(k5, (encode_size, 10368), jnp.float32) * std
    blin = jax.random.normal(k6, (encode_size,), jnp.float32) * 0.01
    return dict(w1=w1, b1=b1, w2=w2, b2=b2, wlin=wlin, blin=blin)


def map_encoder_forward(prep, x):
    """x: (1, Cin, 15, 15) NCHW (batch=1 and 15x15 spatial are forced by Linear(10368))."""
    x_hwc = jnp.transpose(x[0], (1, 2, 0)).astype(jnp.bfloat16)  # (15, 15, Cin) bf16
    patches = _im2col_5x5(x_hwc, prep["w1"].shape[0])            # (128, K1p) bf16
    out = _encoder_call(patches, prep)                           # (1, Ep) f32
    return out[0]                                                # (Ep,); caller takes [:E]


def _reference_forward(params, x):
    dn = ("NCHW", "OIHW", "NCHW")
    y = jax.lax.conv_general_dilated(x, params["w1"], (1, 1), "VALID", dimension_numbers=dn)
    y = jax.nn.relu(y + params["b1"][None, :, None, None])
    y = jax.lax.conv_general_dilated(y, params["w2"], (1, 1), "VALID", dimension_numbers=dn)
    y = jax.nn.relu(y + params["b2"][None, :, None, None])
    return params["wlin"] @ y.reshape(-1) + params["blin"]       # torch.flatten order


if __name__ == "__main__":
    in_channel = 4
    encode_size = 32

    key = jax.random.PRNGKey(0)
    k_params, k_x = jax.random.split(key)
    params = init_params(k_params, in_channel, encode_size)
    prep = prepare_params(params)                                # one-time, outside jit

    # Input spatial size 15x15 is fixed by Linear(10368) = 128 * 9 * 9 in the module.
    x = jax.random.normal(k_x, (1, in_channel, 15, 15), jnp.float32)

    fwd = jax.jit(map_encoder_forward)
    out = fwd(prep, x)
    jax.block_until_ready(out)
    enc = out[:encode_size]
    assert enc.shape == (encode_size,)

    # Sanity check vs. pure-JAX f32 reference (bf16 MXU operands -> relative-ish tolerance).
    ref = _reference_forward(params, x)
    err = float(jnp.max(jnp.abs(enc - ref)))
    scale = float(jnp.max(jnp.abs(ref)))
    assert err <= 0.05 * (1.0 + scale), (err, scale)

    print("KERNEL_OK")
</pallas_src>

<mosaic_0001>
module attributes {stable_mosaic.version = 11 : i64} {
  func.func @_encoder_kernel(%arg0: i32, %arg1: memref<128x128xbf16, #tpu.memory_space<vmem>>, %arg2: memref<128x256xbf16, #tpu.memory_space<vmem>>, %arg3: memref<1x256xf32, #tpu.memory_space<vmem>>, %arg4: memref<1x128xf32, #tpu.memory_space<vmem>>, %arg5: memref<1x32xf32, #tpu.memory_space<vmem>>, %arg6: memref<9x256x128xbf16, #tpu.memory_space<any>>, %arg7: memref<2688x128xbf16, #tpu.memory_space<any>>, %arg8: memref<1x32xf32, #tpu.memory_space<vmem>>, %arg9: memref<128x256xf32, #tpu.memory_space<vmem>>, %arg10: memref<9x256x128xbf16, #tpu.memory_space<vmem>>, %arg11: memref<2688x128xbf16, #tpu.memory_space<vmem>>, %arg12: memref<1x10752xf32, #tpu.memory_space<vmem>>, %arg13: memref<2x!tpu.dma_semaphore, #tpu.memory_space<semaphore_mem>>) attributes {dimension_semantics = [#tpu.dimension_semantics<arbitrary>], iteration_bounds = array<i64: 1>, scalar_prefetch = 0 : i64, scratch_operands = 5 : i64, tpu.core_type = #tpu.core_type<tc>, window_params = [{pipeline_mode = #tpu.pipeline_mode<synchronous>, transform_indices = @transform_0, window_bounds = array<i64: 128, 128>}, {pipeline_mode = #tpu.pipeline_mode<synchronous>, transform_indices = @transform_1, window_bounds = array<i64: 128, 256>}, {pipeline_mode = #tpu.pipeline_mode<synchronous>, transform_indices = @transform_2, window_bounds = array<i64: 1, 256>}, {pipeline_mode = #tpu.pipeline_mode<synchronous>, transform_indices = @transform_3, window_bounds = array<i64: 1, 128>}, {pipeline_mode = #tpu.pipeline_mode<synchronous>, transform_indices = @transform_4, window_bounds = array<i64: 1, 32>}, {}, {}, {pipeline_mode = #tpu.pipeline_mode<synchronous>, transform_indices = @transform_7, window_bounds = array<i64: 1, 32>}]} {
    %c0_i32 = arith.constant 0 : i32
    %0 = tpu.memref_slice %arg13[%c0_i32] : memref<2x!tpu.dma_semaphore, #tpu.memory_space<semaphore_mem>> -> memref<1x!tpu.dma_semaphore, #tpu.memory_space<semaphore_mem>>
    %1 = tpu.memref_squeeze %0 : memref<1x!tpu.dma_semaphore, #tpu.memory_space<semaphore_mem>> -> memref<!tpu.dma_semaphore, #tpu.memory_space<semaphore_mem>>
    tpu.enqueue_dma source(%arg6 : memref<9x256x128xbf16, #tpu.memory_space<any>>) target(%arg10 : memref<9x256x128xbf16, #tpu.memory_space<vmem>>) target_semaphore(%1 : memref<!tpu.dma_semaphore, #tpu.memory_space<semaphore_mem>>)
    %c1_i32 = arith.constant 1 : i32
    %2 = tpu.memref_slice %arg13[%c1_i32] : memref<2x!tpu.dma_semaphore, #tpu.memory_space<semaphore_mem>> -> memref<1x!tpu.dma_semaphore, #tpu.memory_space<semaphore_mem>>
    %3 = tpu.memref_squeeze %2 : memref<1x!tpu.dma_semaphore, #tpu.memory_space<semaphore_mem>> -> memref<!tpu.dma_semaphore, #tpu.memory_space<semaphore_mem>>
    tpu.enqueue_dma source(%arg7 : memref<2688x128xbf16, #tpu.memory_space<any>>) target(%arg11 : memref<2688x128xbf16, #tpu.memory_space<vmem>>) target_semaphore(%3 : memref<!tpu.dma_semaphore, #tpu.memory_space<semaphore_mem>>)
    %c0 = arith.constant 0 : index
    %c0_0 = arith.constant 0 : index
    %4 = vector.load %arg1[%c0, %c0_0] : memref<128x128xbf16, #tpu.memory_space<vmem>>, vector<128x128xbf16>
    %c0_1 = arith.constant 0 : index
    %c0_2 = arith.constant 0 : index
    %5 = vector.load %arg2[%c0_1, %c0_2] : memref<128x256xbf16, #tpu.memory_space<vmem>>, vector<128x256xbf16>
    %cst = arith.constant dense<0.000000e+00> : vector<128x256xf32>
    %6 = tpu.matmul %4, %5, %cst {dimension_numbers = #tpu.dot_dimension_numbers<[1], [0], [0], [1], [0, 0, 1, 1], [], []>} : vector<128x128xbf16>, vector<128x256xbf16>, vector<128x256xf32> -> vector<128x256xf32>
    %c0_3 = arith.constant 0 : index
    %c0_4 = arith.constant 0 : index
    %7 = vector.load %arg3[%c0_3, %c0_4] : memref<1x256xf32, #tpu.memory_space<vmem>>, vector<1x256xf32>
    %8 = vector.broadcast %7 : vector<1x256xf32> to vector<128x256xf32>
    %9 = arith.addf %6, %8 : vector<128x256xf32>
    %cst_5 = arith.constant 0.000000e+00 : f32
    %10 = vector.broadcast %cst_5 : f32 to vector<128x256xf32>
    %11 = arith.maximumf %9, %10 : vector<128x256xf32>
    %c0_6 = arith.constant 0 : index
    %c0_7 = arith.constant 0 : index
    %12 = vector.load %arg9[%c0_6, %c0_7] : memref<128x256xf32, #tpu.memory_space<vmem>>, vector<128x256xf32>
    tpu.vector_store %arg9[%c0_6, %c0_7], %11 {strides = array<i32>} : memref<128x256xf32, #tpu.memory_space<vmem>>, vector<128x256xf32>,
    %c0_i32_8 = arith.constant 0 : i32
    %13 = tpu.memref_slice %arg13[%c0_i32_8] : memref<2x!tpu.dma_semaphore, #tpu.memory_space<semaphore_mem>> -> memref<1x!tpu.dma_semaphore, #tpu.memory_space<semaphore_mem>>
    %14 = tpu.memref_squeeze %13 : memref<1x!tpu.dma_semaphore, #tpu.memory_space<semaphore_mem>> -> memref<!tpu.dma_semaphore, #tpu.memory_space<semaphore_mem>>
    tpu.wait_dma2 semaphore(%14 : memref<!tpu.dma_semaphore, #tpu.memory_space<semaphore_mem>>) src(%arg6 : memref<9x256x128xbf16, #tpu.memory_space<any>>) dst(%arg10 : memref<9x256x128xbf16, #tpu.memory_space<vmem>>)
    %c0_9 = arith.constant 0 : index
    %c0_10 = arith.constant 0 : index
    %15 = vector.load %arg9[%c0_9, %c0_10] : memref<128x256xf32, #tpu.memory_space<vmem>>, vector<104x256xf32>
    %16 = arith.truncf %15 : vector<104x256xf32> to vector<104x256xbf16>
    %c0_11 = arith.constant 0 : index
    %c0_12 = arith.constant 0 : index
    %c0_13 = arith.constant 0 : index
    %17 = vector.load %arg10[%c0_11, %c0_12, %c0_13] : memref<9x256x128xbf16, #tpu.memory_space<vmem>>, vector<1x256x128xbf16>
    %18 = vector.shape_cast %17 : vector<1x256x128xbf16> to vector<256x128xbf16>
    %cst_14 = arith.constant dense<0.000000e+00> : vector<104x128xf32>
    %19 = tpu.matmul %16, %18, %cst_14 {dimension_numbers = #tpu.dot_dimension_numbers<[1], [0], [0], [1], [0, 0, 1, 1], [], []>} : vector<104x256xbf16>, vector<256x128xbf16>, vector<104x128xf32> -> vector<104x128xf32>
    %c1 = arith.constant 1 : index
    %c0_15 = arith.constant 0 : index
    %20 = vector.load %arg9[%c1, %c0_15] : memref<128x256xf32, #tpu.memory_space<vmem>>, vector<104x256xf32>
    %21 = arith.truncf %20 : vector<104x256xf32> to vector<104x256xbf16>
    %c1_16 = arith.constant 1 : index
    %c0_17 = arith.constant 0 : index
    %c0_18 = arith.constant 0 : index
    %22 = vector.load %arg10[%c1_16, %c0_17, %c0_18] : memref<9x256x128xbf16, #tpu.memory_space<vmem>>, vector<1x256x128xbf16>
    %23 = vector.shape_cast %22 : vector<1x256x128xbf16> to vector<256x128xbf16>
    %cst_19 = arith.constant dense<0.000000e+00> : vector<104x128xf32>
    %24 = tpu.matmul %21, %23, %cst_19 {dimension_numbers = #tpu.dot_dimension_numbers<[1], [0], [0], [1], [0, 0, 1, 1], [], []>} : vector<104x256xbf16>, vector<256x128xbf16>, vector<104x128xf32> -> vector<104x128xf32>
    %25 = arith.addf %19, %24 : vector<104x128xf32>
    %c2 = arith.constant 2 : index
    %c0_20 = arith.constant 0 : index
    %26 = vector.load %arg9[%c2, %c0_20] : memref<128x256xf32, #tpu.memory_space<vmem>>, vector<104x256xf32>
    %27 = arith.truncf %26 : vector<104x256xf32> to vector<104x256xbf16>
    %c2_21 = arith.constant 2 : index
    %c0_22 = arith.constant 0 : index
    %c0_23 = arith.constant 0 : index
    %28 = vector.load %arg10[%c2_21, %c0_22, %c0_23] : memref<9x256x128xbf16, #tpu.memory_space<vmem>>, vector<1x256x128xbf16>
    %29 = vector.shape_cast %28 : vector<1x256x128xbf16> to vector<256x128xbf16>
    %cst_24 = arith.constant dense<0.000000e+00> : vector<104x128xf32>
    %30 = tpu.matmul %27, %29, %cst_24 {dimension_numbers = #tpu.dot_dimension_numbers<[1], [0], [0], [1], [0, 0, 1, 1], [], []>} : vector<104x256xbf16>, vector<256x128xbf16>, vector<104x128xf32> -> vector<104x128xf32>
    %31 = arith.addf %25, %30 : vector<104x128xf32>
    %c11 = arith.constant 11 : index
    %c0_25 = arith.constant 0 : index
    %32 = vector.load %arg9[%c11, %c0_25] : memref<128x256xf32, #tpu.memory_space<vmem>>, vector<104x256xf32>
    %33 = arith.truncf %32 : vector<104x256xf32> to vector<104x256xbf16>
    %c3 = arith.constant 3 : index
    %c0_26 = arith.constant 0 : index
    %c0_27 = arith.constant 0 : index
    %34 = vector.load %arg10[%c3, %c0_26, %c0_27] : memref<9x256x128xbf16, #tpu.memory_space<vmem>>, vector<1x256x128xbf16>
    %35 = vector.shape_cast %34 : vector<1x256x128xbf16> to vector<256x128xbf16>
    %cst_28 = arith.constant dense<0.000000e+00> : vector<104x128xf32>
    %36 = tpu.matmul %33, %35, %cst_28 {dimension_numbers = #tpu.dot_dimension_numbers<[1], [0], [0], [1], [0, 0, 1, 1], [], []>} : vector<104x256xbf16>, vector<256x128xbf16>, vector<104x128xf32> -> vector<104x128xf32>
    %37 = arith.addf %31, %36 : vector<104x128xf32>
    %c12 = arith.constant 12 : index
    %c0_29 = arith.constant 0 : index
    %38 = vector.load %arg9[%c12, %c0_29] : memref<128x256xf32, #tpu.memory_space<vmem>>, vector<104x256xf32>
    %39 = arith.truncf %38 : vector<104x256xf32> to vector<104x256xbf16>
    %c4 = arith.constant 4 : index
    %c0_30 = arith.constant 0 : index
    %c0_31 = arith.constant 0 : index
    %40 = vector.load %arg10[%c4, %c0_30, %c0_31] : memref<9x256x128xbf16, #tpu.memory_space<vmem>>, vector<1x256x128xbf16>
    %41 = vector.shape_cast %40 : vector<1x256x128xbf16> to vector<256x128xbf16>
    %cst_32 = arith.constant dense<0.000000e+00> : vector<104x128xf32>
    %42 = tpu.matmul %39, %41, %cst_32 {dimension_numbers = #tpu.dot_dimension_numbers<[1], [0], [0], [1], [0, 0, 1, 1], [], []>} : vector<104x256xbf16>, vector<256x128xbf16>, vector<104x128xf32> -> vector<104x128xf32>
    %43 = arith.addf %37, %42 : vector<104x128xf32>
    %c13 = arith.constant 13 : index
    %c0_33 = arith.constant 0 : index
    %44 = vector.load %arg9[%c13, %c0_33] : memref<128x256xf32, #tpu.memory_space<vmem>>, vector<104x256xf32>
    %45 = arith.truncf %44 : vector<104x256xf32> to vector<104x256xbf16>
    %c5 = arith.constant 5 : index
    %c0_34 = arith.constant 0 : index
    %c0_35 = arith.constant 0 : index
    %46 = vector.load %arg10[%c5, %c0_34, %c0_35] : memref<9x256x128xbf16, #tpu.memory_space<vmem>>, vector<1x256x128xbf16>
    %47 = vector.shape_cast %46 : vector<1x256x128xbf16> to vector<256x128xbf16>
    %cst_36 = arith.constant dense<0.000000e+00> : vector<104x128xf32>
    %48 = tpu.matmul %45, %47, %cst_36 {dimension_numbers = #tpu.dot_dimension_numbers<[1], [0], [0], [1], [0, 0, 1, 1], [], []>} : vector<104x256xbf16>, vector<256x128xbf16>, vector<104x128xf32> -> vector<104x128xf32>
    %49 = arith.addf %43, %48 : vector<104x128xf32>
    %c22 = arith.constant 22 : index
    %c0_37 = arith.constant 0 : index
    %50 = vector.load %arg9[%c22, %c0_37] : memref<128x256xf32, #tpu.memory_space<vmem>>, vector<104x256xf32>
    %51 = arith.truncf %50 : vector<104x256xf32> to vector<104x256xbf16>
    %c6 = arith.constant 6 : index
    %c0_38 = arith.constant 0 : index
    %c0_39 = arith.constant 0 : index
    %52 = vector.load %arg10[%c6, %c0_38, %c0_39] : memref<9x256x128xbf16, #tpu.memory_space<vmem>>, vector<1x256x128xbf16>
    %53 = vector.shape_cast %52 : vector<1x256x128xbf16> to vector<256x128xbf16>
    %cst_40 = arith.constant dense<0.000000e+00> : vector<104x128xf32>
    %54 = tpu.matmul %51, %53, %cst_40 {dimension_numbers = #tpu.dot_dimension_numbers<[1], [0], [0], [1], [0, 0, 1, 1], [], []>} : vector<104x256xbf16>, vector<256x128xbf16>, vector<104x128xf32> -> vector<104x128xf32>
    %55 = arith.addf %49, %54 : vector<104x128xf32>
    %c23 = arith.constant 23 : index
    %c0_41 = arith.constant 0 : index
    %56 = vector.load %arg9[%c23, %c0_41] : memref<128x256xf32, #tpu.memory_space<vmem>>, vector<104x256xf32>
    %57 = arith.truncf %56 : vector<104x256xf32> to vector<104x256xbf16>
    %c7 = arith.constant 7 : index
    %c0_42 = arith.constant 0 : index
    %c0_43 = arith.constant 0 : index
    %58 = vector.load %arg10[%c7, %c0_42, %c0_43] : memref<9x256x128xbf16, #tpu.memory_space<vmem>>, vector<1x256x128xbf16>
    %59 = vector.shape_cast %58 : vector<1x256x128xbf16> to vector<256x128xbf16>
    %cst_44 = arith.constant dense<0.000000e+00> : vector<104x128xf32>
    %60 = tpu.matmul %57, %59, %cst_44 {dimension_numbers = #tpu.dot_dimension_numbers<[1], [0], [0], [1], [0, 0, 1, 1], [], []>} : vector<104x256xbf16>, vector<256x128xbf16>, vector<104x128xf32> -> vector<104x128xf32>
    %61 = arith.addf %55, %60 : vector<104x128xf32>
    %c24 = arith.constant 24 : index
    %c0_45 = arith.constant 0 : index
    %62 = vector.load %arg9[%c24, %c0_45] : memref<128x256xf32, #tpu.memory_space<vmem>>, vector<104x256xf32>
    %63 = arith.truncf %62 : vector<104x256xf32> to vector<104x256xbf16>
    %c8 = arith.constant 8 : index
    %c0_46 = arith.constant 0 : index
    %c0_47 = arith.constant 0 : index
    %64 = vector.load %arg10[%c8, %c0_46, %c0_47] : memref<9x256x128xbf16, #tpu.memory_space<vmem>>, vector<1x256x128xbf16>
    %65 = vector.shape_cast %64 : vector<1x256x128xbf16> to vector<256x128xbf16>
    %cst_48 = arith.constant dense<0.000000e+00> : vector<104x128xf32>
    %66 = tpu.matmul %63, %65, %cst_48 {dimension_numbers = #tpu.dot_dimension_numbers<[1], [0], [0], [1], [0, 0, 1, 1], [], []>} : vector<104x256xbf16>, vector<256x128xbf16>, vector<104x128xf32> -> vector<104x128xf32>
    %67 = arith.addf %61, %66 : vector<104x128xf32>
    %c0_49 = arith.constant 0 : index
    %c0_50 = arith.constant 0 : index
    %68 = vector.load %arg4[%c0_49, %c0_50] : memref<1x128xf32, #tpu.memory_space<vmem>>, vector<1x128xf32>
    %69 = vector.broadcast %68 : vector<1x128xf32> to vector<104x128xf32>
    %70 = arith.addf %67, %69 : vector<104x128xf32>
    %cst_51 = arith.constant 0.000000e+00 : f32
    %71 = vector.broadcast %cst_51 : f32 to vector<104x128xf32>
    %72 = arith.maximumf %70, %71 : vector<104x128xf32>
    %cst_52 = arith.constant 0.000000e+00 : f32
    %73 = vector.broadcast %cst_52 : f32 to vector<1x384xf32>
    %c0_53 = arith.constant 0 : index
    %c10368 = arith.constant 10368 : index
    %74 = vector.load %arg12[%c0_53, %c10368] : memref<1x10752xf32, #tpu.memory_space<vmem>>, vector<1x384xf32>
    tpu.vector_store %arg12[%c0_53, %c10368], %73 {strides = array<i32>} : memref<1x10752xf32, #tpu.memory_space<vmem>>, vector<1x384xf32>,
    %75 = vector.extract_strided_slice %72 {offsets = [0, 0], sizes = [1, 128], strides = [1, 1]} : vector<104x128xf32> to vector<1x128xf32>
    %c0_54 = arith.constant 0 : index
    %c0_55 = arith.constant 0 : index
    %76 = vector.load %arg12[%c0_54, %c0_55] : memref<1x10752xf32, #tpu.memory_space<vmem>>, vector<1x128xf32>
    tpu.vector_store %arg12[%c0_54, %c0_55], %75 {strides = array<i32>} : memref<1x10752xf32, #tpu.memory_space<vmem>>, vector<1x128xf32>,
    %77 = vector.extract_strided_slice %72 {offsets = [1, 0], sizes = [1, 128], strides = [1, 1]} : vector<104x128xf32> to vector<1x128xf32>
    %c0_56 = arith.constant 0 : index
    %c128 = arith.constant 128 : index
    %78 = vector.load %arg12[%c0_56, %c128] : memref<1x10752xf32, #tpu.memory_space<vmem>>, vector<1x128xf32>
    tpu.vector_store %arg12[%c0_56, %c128], %77 {strides = array<i32>} : memref<1x10752xf32, #tpu.memory_space<vmem>>, vector<1x128xf32>,
    %79 = vector.extract_strided_slice %72 {offsets = [2, 0], sizes = [1, 128], strides = [1, 1]} : vector<104x128xf32> to vector<1x128xf32>
    %c0_57 = arith.constant 0 : index
    %c256 = arith.constant 256 : index
    %80 = vector.load %arg12[%c0_57, %c256] : memref<1x10752xf32, #tpu.memory_space<vmem>>, vector<1x128xf32>
    tpu.vector_store %arg12[%c0_57, %c256], %79 {strides = array<i32>} : memref<1x10752xf32, #tpu.memory_space<vmem>>, vector<1x128xf32>,
    %81 = vector.extract_strided_slice %72 {offsets = [3, 0], sizes = [1, 128], strides = [1, 1]} : vector<104x128xf32> to vector<1x128xf32>
    %c0_58 = arith.constant 0 : index
    %c384 = arith.constant 384 : index
    %82 = vector.load %arg12[%c0_58, %c384] : memref<1x10752xf32, #tpu.memory_space<vmem>>, vector<1x128xf32>
    tpu.vector_store %arg12[%c0_58, %c384], %81 {strides = array<i32>} : memref<1x10752xf32, #tpu.memory_space<vmem>>, vector<1x128xf32>,
    %83 = vector.extract_strided_slice %72 {offsets = [4, 0], sizes = [1, 128], strides = [1, 1]} : vector<104x128xf32> to vector<1x128xf32>
    %c0_59 = arith.constant 0 : index
    %c512 = arith.constant 512 : index
    %84 = vector.load %arg12[%c0_59, %c512] : memref<1x10752xf32, #tpu.memory_space<vmem>>, vector<1x128xf32>
    tpu.vector_store %arg12[%c0_59, %c512], %83 {strides = array<i32>} : memref<1x10752xf32, #tpu.memory_space<vmem>>, vector<1x128xf32>,
    %85 = vector.extract_strided_slice %72 {offsets = [5, 0], sizes = [1, 128], strides = [1, 1]} : vector<104x128xf32> to vector<1x128xf32>
    %c0_60 = arith.constant 0 : index
    %c640 = arith.constant 640 : index
    %86 = vector.load %arg12[%c0_60, %c640] : memref<1x10752xf32, #tpu.memory_space<vmem>>, vector<1x128xf32>
    tpu.vector_store %arg12[%c0_60, %c640], %85 {strides = array<i32>} : memref<1x10752xf32, #tpu.memory_space<vmem>>, vector<1x128xf32>,
    %87 = vector.extract_strided_slice %72 {offsets = [6, 0], sizes = [1, 128], strides = [1, 1]} : vector<104x128xf32> to vector<1x128xf32>
    %c0_61 = arith.constant 0 : index
    %c768 = arith.constant 768 : index
    %88 = vector.load %arg12[%c0_61, %c768] : memref<1x10752xf32, #tpu.memory_space<vmem>>, vector<1x128xf32>
    tpu.vector_store %arg12[%c0_61, %c768], %87 {strides = array<i32>} : memref<1x10752xf32, #tpu.memory_space<vmem>>, vector<1x128xf32>,
    %89 = vector.extract_strided_slice %72 {offsets = [7, 0], sizes = [1, 128], strides = [1, 1]} : vector<104x128xf32> to vector<1x128xf32>
    %c0_62 = arith.constant 0 : index
    %c896 = arith.constant 896 : index
    %90 = vector.load %arg12[%c0_62, %c896] : memref<1x10752xf32, #tpu.memory_space<vmem>>, vector<1x128xf32>
    tpu.vector_store %arg12[%c0_62, %c896], %89 {strides = array<i32>} : memref<1x10752xf32, #tpu.memory_space<vmem>>, vector<1x128xf32>,
    %91 = vector.extract_strided_slice %72 {offsets = [8, 0], sizes = [1, 128], strides = [1, 1]} : vector<104x128xf32> to vector<1x128xf32>
    %c0_63 = arith.constant 0 : index
    %c1024 = arith.constant 1024 : index
    %92 = vector.load %arg12[%c0_63, %c1024] : memref<1x10752xf32, #tpu.memory_space<vmem>>, vector<1x128xf32>
    tpu.vector_store %arg12[%c0_63, %c1024], %91 {strides = array<i32>} : memref<1x10752xf32, #tpu.memory_space<vmem>>, vector<1x128xf32>,
    %93 = vector.extract_strided_slice %72 {offsets = [11, 0], sizes = [1, 128], strides = [1, 1]} : vector<104x128xf32> to vector<1x128xf32>
    %c0_64 = arith.constant 0 : index
    %c1152 = arith.constant 1152 : index
    %94 = vector.load %arg12[%c0_64, %c1152] : memref<1x10752xf32, #tpu.memory_space<vmem>>, vector<1x128xf32>
    tpu.vector_store %arg12[%c0_64, %c1152], %93 {strides = array<i32>} : memref<1x10752xf32, #tpu.memory_space<vmem>>, vector<1x128xf32>,
    %95 = vector.extract_strided_slice %72 {offsets = [12, 0], sizes = [1, 128], strides = [1, 1]} : vector<104x128xf32> to vector<1x128xf32>
    %c0_65 = arith.constant 0 : index
    %c1280 = arith.constant 1280 : index
    %96 = vector.load %arg12[%c0_65, %c1280] : memref<1x10752xf32, #tpu.memory_space<vmem>>, vector<1x128xf32>
    tpu.vector_store %arg12[%c0_65, %c1280], %95 {strides = array<i32>} : memref<1x10752xf32, #tpu.memory_space<vmem>>, vector<1x128xf32>,
    %97 = vector.extract_strided_slice %72 {offsets = [13, 0], sizes = [1, 128], strides = [1, 1]} : vector<104x128xf32> to vector<1x128xf32>
    %c0_66 = arith.constant 0 : index
    %c1408 = arith.constant 1408 : index
    %98 = vector.load %arg12[%c0_66, %c1408] : memref<1x10752xf32, #tpu.memory_space<vmem>>, vector<1x128xf32>
    tpu.vector_store %arg12[%c0_66, %c1408], %97 {strides = array<i32>} : memref<1x10752xf32, #tpu.memory_space<vmem>>, vector<1x128xf32>,
    %99 = vector.extract_strided_slice %72 {offsets = [14, 0], sizes = [1, 128], strides = [1, 1]} : vector<104x128xf32> to vector<1x128xf32>
    %c0_67 = arith.constant 0 : index
    %c1536 = arith.constant 1536 : index
    %100 = vector.load %arg12[%c0_67, %c1536] : memref<1x10752xf32, #tpu.memory_space<vmem>>, vector<1x128xf32>
    tpu.vector_store %arg12[%c0_67, %c1536], %99 {strides = array<i32>} : memref<1x10752xf32, #tpu.memory_space<vmem>>, vector<1x128xf32>,
    %101 = vector.extract_strided_slice %72 {offsets = [15, 0], sizes = [1, 128], strides = [1, 1]} : vector<104x128xf32> to vector<1x128xf32>
    %c0_68 = arith.constant 0 : index
    %c1664 = arith.constant 1664 : index
    %102 = vector.load %arg12[%c0_68, %c1664] : memref<1x10752xf32, #tpu.memory_space<vmem>>, vector<1x128xf32>
    tpu.vector_store %arg12[%c0_68, %c1664], %101 {strides = array<i32>} : memref<1x10752xf32, #tpu.memory_space<vmem>>, vector<1x128xf32>,
    %103 = vector.extract_strided_slice %72 {offsets = [16, 0], sizes = [1, 128], strides = [1, 1]} : vector<104x128xf32> to vector<1x128xf32>
    %c0_69 = arith.constant 0 : index
    %c1792 = arith.constant 1792 : index
    %104 = vector.load %arg12[%c0_69, %c1792] : memref<1x10752xf32, #tpu.memory_space<vmem>>, vector<1x128xf32>
    tpu.vector_store %arg12[%c0_69, %c1792], %103 {strides = array<i32>} : memref<1x10752xf32, #tpu.memory_space<vmem>>, vector<1x128xf32>,
    %105 = vector.extract_strided_slice %72 {offsets = [17, 0], sizes = [1, 128], strides = [1, 1]} : vector<104x128xf32> to vector<1x128xf32>
    %c0_70 = arith.constant 0 : index
    %c1920 = arith.constant 1920 : index
    %106 = vector.load %arg12[%c0_70, %c1920] : memref<1x10752xf32, #tpu.memory_space<vmem>>, vector<1x128xf32>
    tpu.vector_store %arg12[%c0_70, %c1920], %105 {strides = array<i32>} : memref<1x10752xf32, #tpu.memory_space<vmem>>, vector<1x128xf32>,
    %107 = vector.extract_strided_slice %72 {offsets = [18, 0], sizes = [1, 128], strides = [1, 1]} : vector<104x128xf32> to vector<1x128xf32>
    %c0_71 = arith.constant 0 : index
    %c2048 = arith.constant 2048 : index
    %108 = vector.load %arg12[%c0_71, %c2048] : memref<1x10752xf32, #tpu.memory_space<vmem>>, vector<1x128xf32>
    tpu.vector_store %arg12[%c0_71, %c2048], %107 {strides = array<i32>} : memref<1x10752xf32, #tpu.memory_space<vmem>>, vector<1x128xf32>,
    %109 = vector.extract_strided_slice %72 {offsets = [19, 0], sizes = [1, 128], strides = [1, 1]} : vector<104x128xf32> to vector<1x128xf32>
    %c0_72 = arith.constant 0 : index
    %c2176 = arith.constant 2176 : index
    %110 = vector.load %arg12[%c0_72, %c2176] : memref<1x10752xf32, #tpu.memory_space<vmem>>, vector<1x128xf32>
    tpu.vector_store %arg12[%c0_72, %c2176], %109 {strides = array<i32>} : memref<1x10752xf32, #tpu.memory_space<vmem>>, vector<1x128xf32>,
    %111 = vector.extract_strided_slice %72 {offsets = [22, 0], sizes = [1, 128], strides = [1, 1]} : vector<104x128xf32> to vector<1x128xf32>
    %c0_73 = arith.constant 0 : index
    %c2304 = arith.constant 2304 : index
    %112 = vector.load %arg12[%c0_73, %c2304] : memref<1x10752xf32, #tpu.memory_space<vmem>>, vector<1x128xf32>
    tpu.vector_store %arg12[%c0_73, %c2304], %111 {strides = array<i32>} : memref<1x10752xf32, #tpu.memory_space<vmem>>, vector<1x128xf32>,
    %113 = vector.extract_strided_slice %72 {offsets = [23, 0], sizes = [1, 128], strides = [1, 1]} : vector<104x128xf32> to vector<1x128xf32>
    %c0_74 = arith.constant 0 : index
    %c2432 = arith.constant 2432 : index
    %114 = vector.load %arg12[%c0_74, %c2432] : memref<1x10752xf32, #tpu.memory_space<vmem>>, vector<1x128xf32>
    tpu.vector_store %arg12[%c0_74, %c2432], %113 {strides = array<i32>} : memref<1x10752xf32, #tpu.memory_space<vmem>>, vector<1x128xf32>,
    %115 = vector.extract_strided_slice %72 {offsets = [24, 0], sizes = [1, 128], strides = [1, 1]} : vector<104x128xf32> to vector<1x128xf32>
    %c0_75 = arith.constant 0 : index
    %c2560 = arith.constant 2560 : index
    %116 = vector.load %arg12[%c0_75, %c2560] : memref<1x10752xf32, #tpu.memory_space<vmem>>, vector<1x128xf32>
    tpu.vector_store %arg12[%c0_75, %c2560], %115 {strides = array<i32>} : memref<1x10752xf32, #tpu.memory_space<vmem>>, vector<1x128xf32>,
    %117 = vector.extract_strided_slice %72 {offsets = [25, 0], sizes = [1, 128], strides = [1, 1]} : vector<104x128xf32> to vector<1x128xf32>
    %c0_76 = arith.constant 0 : index
    %c2688 = arith.constant 2688 : index
    %118 = vector.load %arg12[%c0_76, %c2688] : memref<1x10752xf32, #tpu.memory_space<vmem>>, vector<1x128xf32>
    tpu.vector_store %arg12[%c0_76, %c2688], %117 {strides = array<i32>} : memref<1x10752xf32, #tpu.memory_space<vmem>>, vector<1x128xf32>,
    %119 = vector.extract_strided_slice %72 {offsets = [26, 0], sizes = [1, 128], strides = [1, 1]} : vector<104x128xf32> to vector<1x128xf32>
    %c0_77 = arith.constant 0 : index
    %c2816 = arith.constant 2816 : index
    %120 = vector.load %arg12[%c0_77, %c2816] : memref<1x10752xf32, #tpu.memory_space<vmem>>, vector<1x128xf32>
    tpu.vector_store %arg12[%c0_77, %c2816], %119 {strides = array<i32>} : memref<1x10752xf32, #tpu.memory_space<vmem>>, vector<1x128xf32>,
    %121 = vector.extract_strided_slice %72 {offsets = [27, 0], sizes = [1, 128], strides = [1, 1]} : vector<104x128xf32> to vector<1x128xf32>
    %c0_78 = arith.constant 0 : index
    %c2944 = arith.constant 2944 : index
    %122 = vector.load %arg12[%c0_78, %c2944] : memref<1x10752xf32, #tpu.memory_space<vmem>>, vector<1x128xf32>
    tpu.vector_store %arg12[%c0_78, %c2944], %121 {strides = array<i32>} : memref<1x10752xf32, #tpu.memory_space<vmem>>, vector<1x128xf32>,
    %123 = vector.extract_strided_slice %72 {offsets = [28, 0], sizes = [1, 128], strides = [1, 1]} : vector<104x128xf32> to vector<1x128xf32>
    %c0_79 = arith.constant 0 : index
    %c3072 = arith.constant 3072 : index
    %124 = vector.load %arg12[%c0_79, %c3072] : memref<1x10752xf32, #tpu.memory_space<vmem>>, vector<1x128xf32>
    tpu.vector_store %arg12[%c0_79, %c3072], %123 {strides = array<i32>} : memref<1x10752xf32, #tpu.memory_space<vmem>>, vector<1x128xf32>,
    %125 = vector.extract_strided_slice %72 {offsets = [29, 0], sizes = [1, 128], strides = [1, 1]} : vector<104x128xf32> to vector<1x128xf32>
    %c0_80 = arith.constant 0 : index
    %c3200 = arith.constant 3200 : index
    %126 = vector.load %arg12[%c0_80, %c3200] : memref<1x10752xf32, #tpu.memory_space<vmem>>, vector<1x128xf32>
    tpu.vector_store %arg12[%c0_80, %c3200], %125 {strides = array<i32>} : memref<1x10752xf32, #tpu.memory_space<vmem>>, vector<1x128xf32>,
    %127 = vector.extract_strided_slice %72 {offsets = [30, 0], sizes = [1, 128], strides = [1, 1]} : vector<104x128xf32> to vector<1x128xf32>
    %c0_81 = arith.constant 0 : index
    %c3328 = arith.constant 3328 : index
    %128 = vector.load %arg12[%c0_81, %c3328] : memref<1x10752xf32, #tpu.memory_space<vmem>>, vector<1x128xf32>
    tpu.vector_store %arg12[%c0_81, %c3328], %127 {strides = array<i32>} : memref<1x10752xf32, #tpu.memory_space<vmem>>, vector<1x128xf32>,
    %129 = vector.extract_strided_slice %72 {offsets = [33, 0], sizes = [1, 128], strides = [1, 1]} : vector<104x128xf32> to vector<1x128xf32>
    %c0_82 = arith.constant 0 : index
    %c3456 = arith.constant 3456 : index
    %130 = vector.load %arg12[%c0_82, %c3456] : memref<1x10752xf32, #tpu.memory_space<vmem>>, vector<1x128xf32>
    tpu.vector_store %arg12[%c0_82, %c3456], %129 {strides = array<i32>} : memref<1x10752xf32, #tpu.memory_space<vmem>>, vector<1x128xf32>,
    %131 = vector.extract_strided_slice %72 {offsets = [34, 0], sizes = [1, 128], strides = [1, 1]} : vector<104x128xf32> to vector<1x128xf32>
    %c0_83 = arith.constant 0 : index
    %c3584 = arith.constant 3584 : index
    %132 = vector.load %arg12[%c0_83, %c3584] : memref<1x10752xf32, #tpu.memory_space<vmem>>, vector<1x128xf32>
    tpu.vector_store %arg12[%c0_83, %c3584], %131 {strides = array<i32>} : memref<1x10752xf32, #tpu.memory_space<vmem>>, vector<1x128xf32>,
    %133 = vector.extract_strided_slice %72 {offsets = [35, 0], sizes = [1, 128], strides = [1, 1]} : vector<104x128xf32> to vector<1x128xf32>
    %c0_84 = arith.constant 0 : index
    %c3712 = arith.constant 3712 : index
    %134 = vector.load %arg12[%c0_84, %c3712] : memref<1x10752xf32, #tpu.memory_space<vmem>>, vector<1x128xf32>
    tpu.vector_store %arg12[%c0_84, %c3712], %133 {strides = array<i32>} : memref<1x10752xf32, #tpu.memory_space<vmem>>, vector<1x128xf32>,
    %135 = vector.extract_strided_slice %72 {offsets = [36, 0], sizes = [1, 128], strides = [1, 1]} : vector<104x128xf32> to vector<1x128xf32>
    %c0_85 = arith.constant 0 : index
    %c3840 = arith.constant 3840 : index
    %136 = vector.load %arg12[%c0_85, %c3840] : memref<1x10752xf32, #tpu.memory_space<vmem>>, vector<1x128xf32>
    tpu.vector_store %arg12[%c0_85, %c3840], %135 {strides = array<i32>} : memref<1x10752xf32, #tpu.memory_space<vmem>>, vector<1x128xf32>,
    %137 = vector.extract_strided_slice %72 {offsets = [37, 0], sizes = [1, 128], strides = [1, 1]} : vector<104x128xf32> to vector<1x128xf32>
    %c0_86 = arith.constant 0 : index
    %c3968 = arith.constant 3968 : index
    %138 = vector.load %arg12[%c0_86, %c3968] : memref<1x10752xf32, #tpu.memory_space<vmem>>, vector<1x128xf32>
    tpu.vector_store %arg12[%c0_86, %c3968], %137 {strides = array<i32>} : memref<1x10752xf32, #tpu.memory_space<vmem>>, vector<1x128xf32>,
    %139 = vector.extract_strided_slice %72 {offsets = [38, 0], sizes = [1, 128], strides = [1, 1]} : vector<104x128xf32> to vector<1x128xf32>
    %c0_87 = arith.constant 0 : index
    %c4096 = arith.constant 4096 : index
    %140 = vector.load %arg12[%c0_87, %c4096] : memref<1x10752xf32, #tpu.memory_space<vmem>>, vector<1x128xf32>
    tpu.vector_store %arg12[%c0_87, %c4096], %139 {strides = array<i32>} : memref<1x10752xf32, #tpu.memory_space<vmem>>, vector<1x128xf32>,
    %141 = vector.extract_strided_slice %72 {offsets = [39, 0], sizes = [1, 128], strides = [1, 1]} : vector<104x128xf32> to vector<1x128xf32>
    %c0_88 = arith.constant 0 : index
    %c4224 = arith.constant 4224 : index
    %142 = vector.load %arg12[%c0_88, %c4224] : memref<1x10752xf32, #tpu.memory_space<vmem>>, vector<1x128xf32>
    tpu.vector_store %arg12[%c0_88, %c4224], %141 {strides = array<i32>} : memref<1x10752xf32, #tpu.memory_space<vmem>>, vector<1x128xf32>,
    %143 = vector.extract_strided_slice %72 {offsets = [40, 0], sizes = [1, 128], strides = [1, 1]} : vector<104x128xf32> to vector<1x128xf32>
    %c0_89 = arith.constant 0 : index
    %c4352 = arith.constant 4352 : index
    %144 = vector.load %arg12[%c0_89, %c4352] : memref<1x10752xf32, #tpu.memory_space<vmem>>, vector<1x128xf32>
    tpu.vector_store %arg12[%c0_89, %c4352], %143 {strides = array<i32>} : memref<1x10752xf32, #tpu.memory_space<vmem>>, vector<1x128xf32>,
    %145 = vector.extract_strided_slice %72 {offsets = [41, 0], sizes = [1, 128], strides = [1, 1]} : vector<104x128xf32> to vector<1x128xf32>
    %c0_90 = arith.constant 0 : index
    %c4480 = arith.constant 4480 : index
    %146 = vector.load %arg12[%c0_90, %c4480] : memref<1x10752xf32, #tpu.memory_space<vmem>>, vector<1x128xf32>
    tpu.vector_store %arg12[%c0_90, %c4480], %145 {strides = array<i32>} : memref<1x10752xf32, #tpu.memory_space<vmem>>, vector<1x128xf32>,
    %147 = vector.extract_strided_slice %72 {offsets = [44, 0], sizes = [1, 128], strides = [1, 1]} : vector<104x128xf32> to vector<1x128xf32>
    %c0_91 = arith.constant 0 : index
    %c4608 = arith.constant 4608 : index
    %148 = vector.load %arg12[%c0_91, %c4608] : memref<1x10752xf32, #tpu.memory_space<vmem>>, vector<1x128xf32>
    tpu.vector_store %arg12[%c0_91, %c4608], %147 {strides = array<i32>} : memref<1x10752xf32, #tpu.memory_space<vmem>>, vector<1x128xf32>,
    %149 = vector.extract_strided_slice %72 {offsets = [45, 0], sizes = [1, 128], strides = [1, 1]} : vector<104x128xf32> to vector<1x128xf32>
    %c0_92 = arith.constant 0 : index
    %c4736 = arith.constant 4736 : index
    %150 = vector.load %arg12[%c0_92, %c4736] : memref<1x10752xf32, #tpu.memory_space<vmem>>, vector<1x128xf32>
    tpu.vector_store %arg12[%c0_92, %c4736], %149 {strides = array<i32>} : memref<1x10752xf32, #tpu.memory_space<vmem>>, vector<1x128xf32>,
    %151 = vector.extract_strided_slice %72 {offsets = [46, 0], sizes = [1, 128], strides = [1, 1]} : vector<104x128xf32> to vector<1x128xf32>
    %c0_93 = arith.constant 0 : index
    %c4864 = arith.constant 4864 : index
    %152 = vector.load %arg12[%c0_93, %c4864] : memref<1x10752xf32, #tpu.memory_space<vmem>>, vector<1x128xf32>
    tpu.vector_store %arg12[%c0_93, %c4864], %151 {strides = array<i32>} : memref<1x10752xf32, #tpu.memory_space<vmem>>, vector<1x128xf32>,
    %153 = vector.extract_strided_slice %72 {offsets = [47, 0], sizes = [1, 128], strides = [1, 1]} : vector<104x128xf32> to vector<1x128xf32>
    %c0_94 = arith.constant 0 : index
    %c4992 = arith.constant 4992 : index
    %154 = vector.load %arg12[%c0_94, %c4992] : memref<1x10752xf32, #tpu.memory_space<vmem>>, vector<1x128xf32>
    tpu.vector_store %arg12[%c0_94, %c4992], %153 {strides = array<i32>} : memref<1x10752xf32, #tpu.memory_space<vmem>>, vector<1x128xf32>,
    %155 = vector.extract_strided_slice %72 {offsets = [48, 0], sizes = [1, 128], strides = [1, 1]} : vector<104x128xf32> to vector<1x128xf32>
    %c0_95 = arith.constant 0 : index
    %c5120 = arith.constant 5120 : index
    %156 = vector.load %arg12[%c0_95, %c5120] : memref<1x10752xf32, #tpu.memory_space<vmem>>, vector<1x128xf32>
    tpu.vector_store %arg12[%c0_95, %c5120], %155 {strides = array<i32>} : memref<1x10752xf32, #tpu.memory_space<vmem>>, vector<1x128xf32>,
    %157 = vector.extract_strided_slice %72 {offsets = [49, 0], sizes = [1, 128], strides = [1, 1]} : vector<104x128xf32> to vector<1x128xf32>
    %c0_96 = arith.constant 0 : index
    %c5248 = arith.constant 5248 : index
    %158 = vector.load %arg12[%c0_96, %c5248] : memref<1x10752xf32, #tpu.memory_space<vmem>>, vector<1x128xf32>
    tpu.vector_store %arg12[%c0_96, %c5248], %157 {strides = array<i32>} : memref<1x10752xf32, #tpu.memory_space<vmem>>, vector<1x128xf32>,
    %159 = vector.extract_strided_slice %72 {offsets = [50, 0], sizes = [1, 128], strides = [1, 1]} : vector<104x128xf32> to vector<1x128xf32>
    %c0_97 = arith.constant 0 : index
    %c5376 = arith.constant 5376 : index
    %160 = vector.load %arg12[%c0_97, %c5376] : memref<1x10752xf32, #tpu.memory_space<vmem>>, vector<1x128xf32>
    tpu.vector_store %arg12[%c0_97, %c5376], %159 {strides = array<i32>} : memref<1x10752xf32, #tpu.memory_space<vmem>>, vector<1x128xf32>,
    %161 = vector.extract_strided_slice %72 {offsets = [51, 0], sizes = [1, 128], strides = [1, 1]} : vector<104x128xf32> to vector<1x128xf32>
    %c0_98 = arith.constant 0 : index
    %c5504 = arith.constant 5504 : index
    %162 = vector.load %arg12[%c0_98, %c5504] : memref<1x10752xf32, #tpu.memory_space<vmem>>, vector<1x128xf32>
    tpu.vector_store %arg12[%c0_98, %c5504], %161 {strides = array<i32>} : memref<1x10752xf32, #tpu.memory_space<vmem>>, vector<1x128xf32>,
    %163 = vector.extract_strided_slice %72 {offsets = [52, 0], sizes = [1, 128], strides = [1, 1]} : vector<104x128xf32> to vector<1x128xf32>
    %c0_99 = arith.constant 0 : index
    %c5632 = arith.constant 5632 : index
    %164 = vector.load %arg12[%c0_99, %c5632] : memref<1x10752xf32, #tpu.memory_space<vmem>>, vector<1x128xf32>
    tpu.vector_store %arg12[%c0_99, %c5632], %163 {strides = array<i32>} : memref<1x10752xf32, #tpu.memory_space<vmem>>, vector<1x128xf32>,
    %165 = vector.extract_strided_slice %72 {offsets = [55, 0], sizes = [1, 128], strides = [1, 1]} : vector<104x128xf32> to vector<1x128xf32>
    %c0_100 = arith.constant 0 : index
    %c5760 = arith.constant 5760 : index
    %166 = vector.load %arg12[%c0_100, %c5760] : memref<1x10752xf32, #tpu.memory_space<vmem>>, vector<1x128xf32>
    tpu.vector_store %arg12[%c0_100, %c5760], %165 {strides = array<i32>} : memref<1x10752xf32, #tpu.memory_space<vmem>>, vector<1x128xf32>,
    %167 = vector.extract_strided_slice %72 {offsets = [56, 0], sizes = [1, 128], strides = [1, 1]} : vector<104x128xf32> to vector<1x128xf32>
    %c0_101 = arith.constant 0 : index
    %c5888 = arith.constant 5888 : index
    %168 = vector.load %arg12[%c0_101, %c5888] : memref<1x10752xf32, #tpu.memory_space<vmem>>, vector<1x128xf32>
    tpu.vector_store %arg12[%c0_101, %c5888], %167 {strides = array<i32>} : memref<1x10752xf32, #tpu.memory_space<vmem>>, vector<1x128xf32>,
    %169 = vector.extract_strided_slice %72 {offsets = [57, 0], sizes = [1, 128], strides = [1, 1]} : vector<104x128xf32> to vector<1x128xf32>
    %c0_102 = arith.constant 0 : index
    %c6016 = arith.constant 6016 : index
    %170 = vector.load %arg12[%c0_102, %c6016] : memref<1x10752xf32, #tpu.memory_space<vmem>>, vector<1x128xf32>
    tpu.vector_store %arg12[%c0_102, %c6016], %169 {strides = array<i32>} : memref<1x10752xf32, #tpu.memory_space<vmem>>, vector<1x128xf32>,
    %171 = vector.extract_strided_slice %72 {offsets = [58, 0], sizes = [1, 128], strides = [1, 1]} : vector<104x128xf32> to vector<1x128xf32>
    %c0_103 = arith.constant 0 : index
    %c6144 = arith.constant 6144 : index
    %172 = vector.load %arg12[%c0_103, %c6144] : memref<1x10752xf32, #tpu.memory_space<vmem>>, vector<1x128xf32>
    tpu.vector_store %arg12[%c0_103, %c6144], %171 {strides = array<i32>} : memref<1x10752xf32, #tpu.memory_space<vmem>>, vector<1x128xf32>,
    %173 = vector.extract_strided_slice %72 {offsets = [59, 0], sizes = [1, 128], strides = [1, 1]} : vector<104x128xf32> to vector<1x128xf32>
    %c0_104 = arith.constant 0 : index
    %c6272 = arith.constant 6272 : index
    %174 = vector.load %arg12[%c0_104, %c6272] : memref<1x10752xf32, #tpu.memory_space<vmem>>, vector<1x128xf32>
    tpu.vector_store %arg12[%c0_104, %c6272], %173 {strides = array<i32>} : memref<1x10752xf32, #tpu.memory_space<vmem>>, vector<1x128xf32>,
    %175 = vector.extract_strided_slice %72 {offsets = [60, 0], sizes = [1, 128], strides = [1, 1]} : vector<104x128xf32> to vector<1x128xf32>
    %c0_105 = arith.constant 0 : index
    %c6400 = arith.constant 6400 : index
    %176 = vector.load %arg12[%c0_105, %c6400] : memref<1x10752xf32, #tpu.memory_space<vmem>>, vector<1x128xf32>
    tpu.vector_store %arg12[%c0_105, %c6400], %175 {strides = array<i32>} : memref<1x10752xf32, #tpu.memory_space<vmem>>, vector<1x128xf32>,
    %177 = vector.extract_strided_slice %72 {offsets = [61, 0], sizes = [1, 128], strides = [1, 1]} : vector<104x128xf32> to vector<1x128xf32>
    %c0_106 = arith.constant 0 : index
    %c6528 = arith.constant 6528 : index
    %178 = vector.load %arg12[%c0_106, %c6528] : memref<1x10752xf32, #tpu.memory_space<vmem>>, vector<1x128xf32>
    tpu.vector_store %arg12[%c0_106, %c6528], %177 {strides = array<i32>} : memref<1x10752xf32, #tpu.memory_space<vmem>>, vector<1x128xf32>,
    %179 = vector.extract_strided_slice %72 {offsets = [62, 0], sizes = [1, 128], strides = [1, 1]} : vector<104x128xf32> to vector<1x128xf32>
    %c0_107 = arith.constant 0 : index
    %c6656 = arith.constant 6656 : index
    %180 = vector.load %arg12[%c0_107, %c6656] : memref<1x10752xf32, #tpu.memory_space<vmem>>, vector<1x128xf32>
    tpu.vector_store %arg12[%c0_107, %c6656], %179 {strides = array<i32>} : memref<1x10752xf32, #tpu.memory_space<vmem>>, vector<1x128xf32>,
    %181 = vector.extract_strided_slice %72 {offsets = [63, 0], sizes = [1, 128], strides = [1, 1]} : vector<104x128xf32> to vector<1x128xf32>
    %c0_108 = arith.constant 0 : index
    %c6784 = arith.constant 6784 : index
    %182 = vector.load %arg12[%c0_108, %c6784] : memref<1x10752xf32, #tpu.memory_space<vmem>>, vector<1x128xf32>
    tpu.vector_store %arg12[%c0_108, %c6784], %181 {strides = array<i32>} : memref<1x10752xf32, #tpu.memory_space<vmem>>, vector<1x128xf32>,
    %183 = vector.extract_strided_slice %72 {offsets = [66, 0], sizes = [1, 128], strides = [1, 1]} : vector<104x128xf32> to vector<1x128xf32>
    %c0_109 = arith.constant 0 : index
    %c6912 = arith.constant 6912 : index
    %184 = vector.load %arg12[%c0_109, %c6912] : memref<1x10752xf32, #tpu.memory_space<vmem>>, vector<1x128xf32>
    tpu.vector_store %arg12[%c0_109, %c6912], %183 {strides = array<i32>} : memref<1x10752xf32, #tpu.memory_space<vmem>>, vector<1x128xf32>,
    %185 = vector.extract_strided_slice %72 {offsets = [67, 0], sizes = [1, 128], strides = [1, 1]} : vector<104x128xf32> to vector<1x128xf32>
    %c0_110 = arith.constant 0 : index
    %c7040 = arith.constant 7040 : index
    %186 = vector.load %arg12[%c0_110, %c7040] : memref<1x10752xf32, #tpu.memory_space<vmem>>, vector<1x128xf32>
    tpu.vector_store %arg12[%c0_110, %c7040], %185 {strides = array<i32>} : memref<1x10752xf32, #tpu.memory_space<vmem>>, vector<1x128xf32>,
    %187 = vector.extract_strided_slice %72 {offsets = [68, 0], sizes = [1, 128], strides = [1, 1]} : vector<104x128xf32> to vector<1x128xf32>
    %c0_111 = arith.constant 0 : index
    %c7168 = arith.constant 7168 : index
    %188 = vector.load %arg12[%c0_111, %c7168] : memref<1x10752xf32, #tpu.memory_space<vmem>>, vector<1x128xf32>
    tpu.vector_store %arg12[%c0_111, %c7168], %187 {strides = array<i32>} : memref<1x10752xf32, #tpu.memory_space<vmem>>, vector<1x128xf32>,
    %189 = vector.extract_strided_slice %72 {offsets = [69, 0], sizes = [1, 128], strides = [1, 1]} : vector<104x128xf32> to vector<1x128xf32>
    %c0_112 = arith.constant 0 : index
    %c7296 = arith.constant 7296 : index
    %190 = vector.load %arg12[%c0_112, %c7296] : memref<1x10752xf32, #tpu.memory_space<vmem>>, vector<1x128xf32>
    tpu.vector_store %arg12[%c0_112, %c7296], %189 {strides = array<i32>} : memref<1x10752xf32, #tpu.memory_space<vmem>>, vector<1x128xf32>,
    %191 = vector.extract_strided_slice %72 {offsets = [70, 0], sizes = [1, 128], strides = [1, 1]} : vector<104x128xf32> to vector<1x128xf32>
    %c0_113 = arith.constant 0 : index
    %c7424 = arith.constant 7424 : index
    %192 = vector.load %arg12[%c0_113, %c7424] : memref<1x10752xf32, #tpu.memory_space<vmem>>, vector<1x128xf32>
    tpu.vector_store %arg12[%c0_113, %c7424], %191 {strides = array<i32>} : memref<1x10752xf32, #tpu.memory_space<vmem>>, vector<1x128xf32>,
    %193 = vector.extract_strided_slice %72 {offsets = [71, 0], sizes = [1, 128], strides = [1, 1]} : vector<104x128xf32> to vector<1x128xf32>
    %c0_114 = arith.constant 0 : index
    %c7552 = arith.constant 7552 : index
    %194 = vector.load %arg12[%c0_114, %c7552] : memref<1x10752xf32, #tpu.memory_space<vmem>>, vector<1x128xf32>
    tpu.vector_store %arg12[%c0_114, %c7552], %193 {strides = array<i32>} : memref<1x10752xf32, #tpu.memory_space<vmem>>, vector<1x128xf32>,
    %195 = vector.extract_strided_slice %72 {offsets = [72, 0], sizes = [1, 128], strides = [1, 1]} : vector<104x128xf32> to vector<1x128xf32>
    %c0_115 = arith.constant 0 : index
    %c7680 = arith.constant 7680 : index
    %196 = vector.load %arg12[%c0_115, %c7680] : memref<1x10752xf32, #tpu.memory_space<vmem>>, vector<1x128xf32>
    tpu.vector_store %arg12[%c0_115, %c7680], %195 {strides = array<i32>} : memref<1x10752xf32, #tpu.memory_space<vmem>>, vector<1x128xf32>,
    %197 = vector.extract_strided_slice %72 {offsets = [73, 0], sizes = [1, 128], strides = [1, 1]} : vector<104x128xf32> to vector<1x128xf32>
    %c0_116 = arith.constant 0 : index
    %c7808 = arith.constant 7808 : index
    %198 = vector.load %arg12[%c0_116, %c7808] : memref<1x10752xf32, #tpu.memory_space<vmem>>, vector<1x128xf32>
    tpu.vector_store %arg12[%c0_116, %c7808], %197 {strides = array<i32>} : memref<1x10752xf32, #tpu.memory_space<vmem>>, vector<1x128xf32>,
    %199 = vector.extract_strided_slice %72 {offsets = [74, 0], sizes = [1, 128], strides = [1, 1]} : vector<104x128xf32> to vector<1x128xf32>
    %c0_117 = arith.constant 0 : index
    %c7936 = arith.constant 7936 : index
    %200 = vector.load %arg12[%c0_117, %c7936] : memref<1x10752xf32, #tpu.memory_space<vmem>>, vector<1x128xf32>
    tpu.vector_store %arg12[%c0_117, %c7936], %199 {strides = array<i32>} : memref<1x10752xf32, #tpu.memory_space<vmem>>, vector<1x128xf32>,
    %201 = vector.extract_strided_slice %72 {offsets = [77, 0], sizes = [1, 128], strides = [1, 1]} : vector<104x128xf32> to vector<1x128xf32>
    %c0_118 = arith.constant 0 : index
    %c8064 = arith.constant 8064 : index
    %202 = vector.load %arg12[%c0_118, %c8064] : memref<1x10752xf32, #tpu.memory_space<vmem>>, vector<1x128xf32>
    tpu.vector_store %arg12[%c0_118, %c8064], %201 {strides = array<i32>} : memref<1x10752xf32, #tpu.memory_space<vmem>>, vector<1x128xf32>,
    %203 = vector.extract_strided_slice %72 {offsets = [78, 0], sizes = [1, 128], strides = [1, 1]} : vector<104x128xf32> to vector<1x128xf32>
    %c0_119 = arith.constant 0 : index
    %c8192 = arith.constant 8192 : index
    %204 = vector.load %arg12[%c0_119, %c8192] : memref<1x10752xf32, #tpu.memory_space<vmem>>, vector<1x128xf32>
    tpu.vector_store %arg12[%c0_119, %c8192], %203 {strides = array<i32>} : memref<1x10752xf32, #tpu.memory_space<vmem>>, vector<1x128xf32>,
    %205 = vector.extract_strided_slice %72 {offsets = [79, 0], sizes = [1, 128], strides = [1, 1]} : vector<104x128xf32> to vector<1x128xf32>
    %c0_120 = arith.constant 0 : index
    %c8320 = arith.constant 8320 : index
    %206 = vector.load %arg12[%c0_120, %c8320] : memref<1x10752xf32, #tpu.memory_space<vmem>>, vector<1x128xf32>
    tpu.vector_store %arg12[%c0_120, %c8320], %205 {strides = array<i32>} : memref<1x10752xf32, #tpu.memory_space<vmem>>, vector<1x128xf32>,
    %207 = vector.extract_strided_slice %72 {offsets = [80, 0], sizes = [1, 128], strides = [1, 1]} : vector<104x128xf32> to vector<1x128xf32>
    %c0_121 = arith.constant 0 : index
    %c8448 = arith.constant 8448 : index
    %208 = vector.load %arg12[%c0_121, %c8448] : memref<1x10752xf32, #tpu.memory_space<vmem>>, vector<1x128xf32>
    tpu.vector_store %arg12[%c0_121, %c8448], %207 {strides = array<i32>} : memref<1x10752xf32, #tpu.memory_space<vmem>>, vector<1x128xf32>,
    %209 = vector.extract_strided_slice %72 {offsets = [81, 0], sizes = [1, 128], strides = [1, 1]} : vector<104x128xf32> to vector<1x128xf32>
    %c0_122 = arith.constant 0 : index
    %c8576 = arith.constant 8576 : index
    %210 = vector.load %arg12[%c0_122, %c8576] : memref<1x10752xf32, #tpu.memory_space<vmem>>, vector<1x128xf32>
    tpu.vector_store %arg12[%c0_122, %c8576], %209 {strides = array<i32>} : memref<1x10752xf32, #tpu.memory_space<vmem>>, vector<1x128xf32>,
    %211 = vector.extract_strided_slice %72 {offsets = [82, 0], sizes = [1, 128], strides = [1, 1]} : vector<104x128xf32> to vector<1x128xf32>
    %c0_123 = arith.constant 0 : index
    %c8704 = arith.constant 8704 : index
    %212 = vector.load %arg12[%c0_123, %c8704] : memref<1x10752xf32, #tpu.memory_space<vmem>>, vector<1x128xf32>
    tpu.vector_store %arg12[%c0_123, %c8704], %211 {strides = array<i32>} : memref<1x10752xf32, #tpu.memory_space<vmem>>, vector<1x128xf32>,
    %213 = vector.extract_strided_slice %72 {offsets = [83, 0], sizes = [1, 128], strides = [1, 1]} : vector<104x128xf32> to vector<1x128xf32>
    %c0_124 = arith.constant 0 : index
    %c8832 = arith.constant 8832 : index
    %214 = vector.load %arg12[%c0_124, %c8832] : memref<1x10752xf32, #tpu.memory_space<vmem>>, vector<1x128xf32>
    tpu.vector_store %arg12[%c0_124, %c8832], %213 {strides = array<i32>} : memref<1x10752xf32, #tpu.memory_space<vmem>>, vector<1x128xf32>,
    %215 = vector.extract_strided_slice %72 {offsets = [84, 0], sizes = [1, 128], strides = [1, 1]} : vector<104x128xf32> to vector<1x128xf32>
    %c0_125 = arith.constant 0 : index
    %c8960 = arith.constant 8960 : index
    %216 = vector.load %arg12[%c0_125, %c8960] : memref<1x10752xf32, #tpu.memory_space<vmem>>, vector<1x128xf32>
    tpu.vector_store %arg12[%c0_125, %c8960], %215 {strides = array<i32>} : memref<1x10752xf32, #tpu.memory_space<vmem>>, vector<1x128xf32>,
    %217 = vector.extract_strided_slice %72 {offsets = [85, 0], sizes = [1, 128], strides = [1, 1]} : vector<104x128xf32> to vector<1x128xf32>
    %c0_126 = arith.constant 0 : index
    %c9088 = arith.constant 9088 : index
    %218 = vector.load %arg12[%c0_126, %c9088] : memref<1x10752xf32, #tpu.memory_space<vmem>>, vector<1x128xf32>
    tpu.vector_store %arg12[%c0_126, %c9088], %217 {strides = array<i32>} : memref<1x10752xf32, #tpu.memory_space<vmem>>, vector<1x128xf32>,
    %219 = vector.extract_strided_slice %72 {offsets = [88, 0], sizes = [1, 128], strides = [1, 1]} : vector<104x128xf32> to vector<1x128xf32>
    %c0_127 = arith.constant 0 : index
    %c9216 = arith.constant 9216 : index
    %220 = vector.load %arg12[%c0_127, %c9216] : memref<1x10752xf32, #tpu.memory_space<vmem>>, vector<1x128xf32>
    tpu.vector_store %arg12[%c0_127, %c9216], %219 {strides = array<i32>} : memref<1x10752xf32, #tpu.memory_space<vmem>>, vector<1x128xf32>,
    %221 = vector.extract_strided_slice %72 {offsets = [89, 0], sizes = [1, 128], strides = [1, 1]} : vector<104x128xf32> to vector<1x128xf32>
    %c0_128 = arith.constant 0 : index
    %c9344 = arith.constant 9344 : index
    %222 = vector.load %arg12[%c0_128, %c9344] : memref<1x10752xf32, #tpu.memory_space<vmem>>, vector<1x128xf32>
    tpu.vector_store %arg12[%c0_128, %c9344], %221 {strides = array<i32>} : memref<1x10752xf32, #tpu.memory_space<vmem>>, vector<1x128xf32>,
    %223 = vector.extract_strided_slice %72 {offsets = [90, 0], sizes = [1, 128], strides = [1, 1]} : vector<104x128xf32> to vector<1x128xf32>
    %c0_129 = arith.constant 0 : index
    %c9472 = arith.constant 9472 : index
    %224 = vector.load %arg12[%c0_129, %c9472] : memref<1x10752xf32, #tpu.memory_space<vmem>>, vector<1x128xf32>
    tpu.vector_store %arg12[%c0_129, %c9472], %223 {strides = array<i32>} : memref<1x10752xf32, #tpu.memory_space<vmem>>, vector<1x128xf32>,
    %225 = vector.extract_strided_slice %72 {offsets = [91, 0], sizes = [1, 128], strides = [1, 1]} : vector<104x128xf32> to vector<1x128xf32>
    %c0_130 = arith.constant 0 : index
    %c9600 = arith.constant 9600 : index
    %226 = vector.load %arg12[%c0_130, %c9600] : memref<1x10752xf32, #tpu.memory_space<vmem>>, vector<1x128xf32>
    tpu.vector_store %arg12[%c0_130, %c9600], %225 {strides = array<i32>} : memref<1x10752xf32, #tpu.memory_space<vmem>>, vector<1x128xf32>,
    %227 = vector.extract_strided_slice %72 {offsets = [92, 0], sizes = [1, 128], strides = [1, 1]} : vector<104x128xf32> to vector<1x128xf32>
    %c0_131 = arith.constant 0 : index
    %c9728 = arith.constant 9728 : index
    %228 = vector.load %arg12[%c0_131, %c9728] : memref<1x10752xf32, #tpu.memory_space<vmem>>, vector<1x128xf32>
    tpu.vector_store %arg12[%c0_131, %c9728], %227 {strides = array<i32>} : memref<1x10752xf32, #tpu.memory_space<vmem>>, vector<1x128xf32>,
    %229 = vector.extract_strided_slice %72 {offsets = [93, 0], sizes = [1, 128], strides = [1, 1]} : vector<104x128xf32> to vector<1x128xf32>
    %c0_132 = arith.constant 0 : index
    %c9856 = arith.constant 9856 : index
    %230 = vector.load %arg12[%c0_132, %c9856] : memref<1x10752xf32, #tpu.memory_space<vmem>>, vector<1x128xf32>
    tpu.vector_store %arg12[%c0_132, %c9856], %229 {strides = array<i32>} : memref<1x10752xf32, #tpu.memory_space<vmem>>, vector<1x128xf32>,
    %231 = vector.extract_strided_slice %72 {offsets = [94, 0], sizes = [1, 128], strides = [1, 1]} : vector<104x128xf32> to vector<1x128xf32>
    %c0_133 = arith.constant 0 : index
    %c9984 = arith.constant 9984 : index
    %232 = vector.load %arg12[%c0_133, %c9984] : memref<1x10752xf32, #tpu.memory_space<vmem>>, vector<1x128xf32>
    tpu.vector_store %arg12[%c0_133, %c9984], %231 {strides = array<i32>} : memref<1x10752xf32, #tpu.memory_space<vmem>>, vector<1x128xf32>,
    %233 = vector.extract_strided_slice %72 {offsets = [95, 0], sizes = [1, 128], strides = [1, 1]} : vector<104x128xf32> to vector<1x128xf32>
    %c0_134 = arith.constant 0 : index
    %c10112 = arith.constant 10112 : index
    %234 = vector.load %arg12[%c0_134, %c10112] : memref<1x10752xf32, #tpu.memory_space<vmem>>, vector<1x128xf32>
    tpu.vector_store %arg12[%c0_134, %c10112], %233 {strides = array<i32>} : memref<1x10752xf32, #tpu.memory_space<vmem>>, vector<1x128xf32>,
    %235 = vector.extract_strided_slice %72 {offsets = [96, 0], sizes = [1, 128], strides = [1, 1]} : vector<104x128xf32> to vector<1x128xf32>
    %c0_135 = arith.constant 0 : index
    %c10240 = arith.constant 10240 : index
    %236 = vector.load %arg12[%c0_135, %c10240] : memref<1x10752xf32, #tpu.memory_space<vmem>>, vector<1x128xf32>
    tpu.vector_store %arg12[%c0_135, %c10240], %235 {strides = array<i32>} : memref<1x10752xf32, #tpu.memory_space<vmem>>, vector<1x128xf32>,
    %c1_i32_136 = arith.constant 1 : i32
    %237 = tpu.memref_slice %arg13[%c1_i32_136] : memref<2x!tpu.dma_semaphore, #tpu.memory_space<semaphore_mem>> -> memref<1x!tpu.dma_semaphore, #tpu.memory_space<semaphore_mem>>
    %238 = tpu.memref_squeeze %237 : memref<1x!tpu.dma_semaphore, #tpu.memory_space<semaphore_mem>> -> memref<!tpu.dma_semaphore, #tpu.memory_space<semaphore_mem>>
    tpu.wait_dma2 semaphore(%238 : memref<!tpu.dma_semaphore, #tpu.memory_space<semaphore_mem>>) src(%arg7 : memref<2688x128xbf16, #tpu.memory_space<any>>) dst(%arg11 : memref<2688x128xbf16, #tpu.memory_space<vmem>>)
    %c0_137 = arith.constant 0 : index
    %c0_138 = arith.constant 0 : index
    %239 = vector.load %arg12[%c0_137, %c0_138] : memref<1x10752xf32, #tpu.memory_space<vmem>>, vector<1x10752xf32>
    %240 = arith.truncf %239 : vector<1x10752xf32> to vector<1x10752xbf16>
    %c0_139 = arith.constant 0 : index
    %c0_140 = arith.constant 0 : index
    %241 = vector.load %arg11[%c0_139, %c0_140] : memref<2688x128xbf16, #tpu.memory_space<vmem>>, vector<2688x128xbf16>
    %c0_141 = arith.constant 0 : index
    %c0_142 = arith.constant 0 : index
    %242 = vector.load %arg5[%c0_141, %c0_142] : memref<1x32xf32, #tpu.memory_space<vmem>>, vector<1x32xf32>
    %243 = vector.extract_strided_slice %240 {offsets = [0, 0], sizes = [1, 2688], strides = [1, 1]} : vector<1x10752xbf16> to vector<1x2688xbf16>
    %cst_143 = arith.constant dense<0.000000e+00> : vector<1x128xf32>
    %244 = tpu.matmul %243, %241, %cst_143 {dimension_numbers = #tpu.dot_dimension_numbers<[1], [0], [0], [1], [0, 0, 1, 1], [], []>} : vector<1x2688xbf16>, vector<2688x128xbf16>, vector<1x128xf32> -> vector<1x128xf32>
    %245 = vector.extract_strided_slice %244 {offsets = [0, 0], sizes = [1, 32], strides = [1, 1]} : vector<1x128xf32> to vector<1x32xf32>
    %246 = arith.addf %242, %245 : vector<1x32xf32>
    %247 = vector.extract_strided_slice %240 {offsets = [0, 2688], sizes = [1, 2688], strides = [1, 1]} : vector<1x10752xbf16> to vector<1x2688xbf16>
    %cst_144 = arith.constant dense<0.000000e+00> : vector<1x128xf32>
    %248 = tpu.matmul %247, %241, %cst_144 {dimension_numbers = #tpu.dot_dimension_numbers<[1], [0], [0], [1], [0, 0, 1, 1], [], []>} : vector<1x2688xbf16>, vector<2688x128xbf16>, vector<1x128xf32> -> vector<1x128xf32>
    %249 = vector.extract_strided_slice %248 {offsets = [0, 32], sizes = [1, 32], strides = [1, 1]} : vector<1x128xf32> to vector<1x32xf32>
    %250 = arith.addf %246, %249 : vector<1x32xf32>
    %251 = vector.extract_strided_slice %240 {offsets = [0, 5376], sizes = [1, 2688], strides = [1, 1]} : vector<1x10752xbf16> to vector<1x2688xbf16>
    %cst_145 = arith.constant dense<0.000000e+00> : vector<1x128xf32>
    %252 = tpu.matmul %251, %241, %cst_145 {dimension_numbers = #tpu.dot_dimension_numbers<[1], [0], [0], [1], [0, 0, 1, 1], [], []>} : vector<1x2688xbf16>, vector<2688x128xbf16>, vector<1x128xf32> -> vector<1x128xf32>
    %253 = vector.extract_strided_slice %252 {offsets = [0, 64], sizes = [1, 32], strides = [1, 1]} : vector<1x128xf32> to vector<1x32xf32>
    %254 = arith.addf %250, %253 : vector<1x32xf32>
    %255 = vector.extract_strided_slice %240 {offsets = [0, 8064], sizes = [1, 2688], strides = [1, 1]} : vector<1x10752xbf16> to vector<1x2688xbf16>
    %cst_146 = arith.constant dense<0.000000e+00> : vector<1x128xf32>
    %256 = tpu.matmul %255, %241, %cst_146 {dimension_numbers = #tpu.dot_dimension_numbers<[1], [0], [0], [1], [0, 0, 1, 1], [], []>} : vector<1x2688xbf16>, vector<2688x128xbf16>, vector<1x128xf32> -> vector<1x128xf32>
    %257 = vector.extract_strided_slice %256 {offsets = [0, 96], sizes = [1, 32], strides = [1, 1]} : vector<1x128xf32> to vector<1x32xf32>
    %258 = arith.addf %254, %257 : vector<1x32xf32>
    %c0_147 = arith.constant 0 : index
    %c0_148 = arith.constant 0 : index
    %259 = vector.load %arg8[%c0_147, %c0_148] : memref<1x32xf32, #tpu.memory_space<vmem>>, vector<1x32xf32>
    tpu.vector_store %arg8[%c0_147, %c0_148], %258 {strides = array<i32>} : memref<1x32xf32, #tpu.memory_space<vmem>>, vector<1x32xf32>,
    return
  }
  func.func @transform_0(%arg0: i32) -> (i32, i32) {
    %c0_i32 = arith.constant 0 : i32
    %c0_i32_0 = arith.constant 0 : i32
    %c0_i32_1 = arith.constant 0 : i32
    return %c0_i32, %c0_i32_0 : i32, i32
  }
  func.func @transform_1(%arg0: i32) -> (i32, i32) {
    %c0_i32 = arith.constant 0 : i32
    %c0_i32_0 = arith.constant 0 : i32
    %c0_i32_1 = arith.constant 0 : i32
    return %c0_i32, %c0_i32_0 : i32, i32
  }
  func.func @transform_2(%arg0: i32) -> (i32, i32) {
    %c0_i32 = arith.constant 0 : i32
    %c0_i32_0 = arith.constant 0 : i32
    %c0_i32_1 = arith.constant 0 : i32
    return %c0_i32, %c0_i32_0 : i32, i32
  }
  func.func @transform_3(%arg0: i32) -> (i32, i32) {
    %c0_i32 = arith.constant 0 : i32
    %c0_i32_0 = arith.constant 0 : i32
    %c0_i32_1 = arith.constant 0 : i32
    return %c0_i32, %c0_i32_0 : i32, i32
  }
  func.func @transform_4(%arg0: i32) -> (i32, i32) {
    %c0_i32 = arith.constant 0 : i32
    %c0_i32_0 = arith.constant 0 : i32
    %c0_i32_1 = arith.constant 0 : i32
    return %c0_i32, %c0_i32_0 : i32, i32
  }
  func.func @transform_7(%arg0: i32) -> (i32, i32) {
    %c0_i32 = arith.constant 0 : i32
    %c0_i32_0 = arith.constant 0 : i32
    %c0_i32_1 = arith.constant 0 : i32
    return %c0_i32, %c0_i32_0 : i32, i32
  }
}

</mosaic_0001>

<llo_original>
// kernel: map_encoder_forward.1
$region0: #{map_encoder_forward.1}
  #allocation0 [shape = 'u32[]', space=smem, size = 0x4, offset = 0x4, fixed_abs, tag = 'smem constant byte address 0x4 - core index']
  #allocation1 [shape = 'u32[144,128]{1,0:T(1,128)}', space=vmem, size = 0x12000, scoped, tag = 'internal scratch']
  #allocation2 [shape = 'f32[128,256]{1,0:T(8,128)}', space=vmem, size = 0x20000, scoped, tag = 'scratch operand']
  #allocation3 [shape = 'bf16[9,256,128]{2,1,0:T(8,128)(2,1)}', space=vmem, size = 0x90000, scoped, tag = 'scratch operand']
  #allocation4 [shape = 'bf16[2688,128]{1,0:T(8,128)(2,1)}', space=vmem, size = 0xa8000, scoped, tag = 'scratch operand']
  #allocation5 [shape = 'f32[1,10752]{1,0:T(1,128)}', space=vmem, size = 0xa800, scoped, tag = 'scratch operand']
  #allocation6 [shape = 's32[2]{0}', space=sflag, size = 0x8, scoped, tag = 'scratch operand']
  #allocation9 [shape = 's32[]', space=sflag, size = 0x4, offset = 0, fixed_abs, tag = 'sflag constant byte address 0x0 - dummy sync flag']
  #allocation10 [shape = 's32[]', space=sflag, size = 0x4, offset = 0, fixed_abs, tag = 'sflag constant byte address 0x0 - dummy sync flag']
  %s0 = inlined_call_operand.vmem [shape: bf16[128,128], index: 0, kind: input, shape index: {}]
  %s1 = inlined_call_operand.vmem [shape: bf16[128,256], index: 1, kind: input, shape index: {}]
  %s2 = inlined_call_operand.vmem [shape: f32[1,256], index: 2, kind: input, shape index: {}]
  %s3 = inlined_call_operand.vmem [shape: f32[1,128], index: 3, kind: input, shape index: {}]
  %s4 = inlined_call_operand.vmem [shape: f32[1,32], index: 4, kind: input, shape index: {}]
  %s5 = inlined_call_operand.vmem [shape: bf16[9,256,128], index: 5, kind: input, shape index: {}]
  %s6 = inlined_call_operand.vmem [shape: bf16[2688,128], index: 6, kind: input, shape index: {}]
  %s7 = inlined_call_operand.hbm [shape: f32[1,32], index: 7, kind: output, shape index: {}]
  %s8 = sld [smem:[#allocation0]]
  $region98: #{map_encoder_forward.1} parent=0
    _
  %s10 = ssub.s32 1, %s8
  %s11 = scalar_select 0, %s10, %s8
  $region1: #{map_encoder_forward.1} parent=0
    #allocation7 [shape = 'u8[512]{0}', space=vmem, size = 0x400, scoped, tag = 'output window, operand 0, single buffered']
    #allocation8 [shape = 's32[1]{0}', space=sflag, size = 0x4, scoped, tag = 'scoped memory for map_encoder_forward.1']
    %12 = vsyncpa [#allocation8], 0
    // Predicated region
    $region2: #{map_encoder_forward.1} parent=1 // pred_check
      _
    $region3: #{map_encoder_forward.1} parent=1 // pred_check_branch
      %14 = sbr.rel (0) target = $region5
    $region4: #{map_encoder_forward.1} parent=1 // pred_region
      _
    $region5: #{map_encoder_forward.1} parent=1 // pred_fallthru
      _
    // Predicated region
    $region6: #{map_encoder_forward.1} parent=1 // pred_check
      _
    $region7: #{map_encoder_forward.1} parent=1 // pred_check_branch
      %16 = sbr.rel (0) target = $region9
    $region8: #{map_encoder_forward.1} parent=1 // pred_region
      _
    $region9: #{map_encoder_forward.1} parent=1 // pred_fallthru
      _
    // Predicated region
    $region10: #{map_encoder_forward.1} parent=1 // pred_check
      _
    $region11: #{map_encoder_forward.1} parent=1 // pred_check_branch
      %18 = sbr.rel (0) target = $region13
    $region12: #{map_encoder_forward.1} parent=1 // pred_region
      _
    $region13: #{map_encoder_forward.1} parent=1 // pred_fallthru
      _
    // Predicated region
    $region14: #{map_encoder_forward.1} parent=1 // pred_check
      _
    $region15: #{map_encoder_forward.1} parent=1 // pred_check_branch
      %20 = sbr.rel (0) target = $region17
    $region16: #{map_encoder_forward.1} parent=1 // pred_region
      _
    $region17: #{map_encoder_forward.1} parent=1 // pred_fallthru
      _
    // Predicated region
    $region18: #{map_encoder_forward.1} parent=1 // pred_check
      _
    $region19: #{map_encoder_forward.1} parent=1 // pred_check_branch
      %22 = sbr.rel (0) target = $region21
    $region20: #{map_encoder_forward.1} parent=1 // pred_region
      _
    $region21: #{map_encoder_forward.1} parent=1 // pred_fallthru
      _
    %p25 = scmp.lt.u32.totalorder 1152, 8
    %p26 = pneg %p25
    // Predicated region
    $region22: #{map_encoder_forward.1} parent=1 // pred_check
      _
    $region23: #{map_encoder_forward.1} parent=1 // pred_check_branch
      %28 = sbr.rel (%p25) target = $region25
    $region24: #{map_encoder_forward.1} parent=1 // pred_region
      %s44 = sand.u32 1152, 7
      %p45 = scmp.eq.s32.totalorder %s44, 0
      // Predicated region
      $region37: #{map_encoder_forward.1} parent=24 // pred_check
        %p46 = pneg %p45
      $region38: #{map_encoder_forward.1} parent=24 // pred_check_branch
        %48 = sbr.rel (%p46) target = $region40
      $region39: #{map_encoder_forward.1} parent=24 // pred_region
        loop: start=0, step=1, limit=1
        $region41: #{map_encoder_forward.1} parent=39 // loop_pre_header
          _
        $region42: #{map_encoder_forward.1} parent=39 // loop_header
          %s50 = sphi 0, %s54
          %p51 = scmp.ge.s32.totalorder %s50, 1
          %s55 = sphi %s5, %s5
          %s56 = sphi [#allocation3], [#allocation3]
        $region43: #{map_encoder_forward.1} parent=39 // loop_header_branch
          %53 = sbr.rel (%p51) target = $region47
        $region44: #{map_encoder_forward.1} parent=39 // loop_body
          %v57 = vld [vmem:[%s55] sm:$0xff]
          %58 = vst [vmem:[%s56] sm:$0xff] %v57
          %v59 = vld [vmem:[%s55 + $0x8] sm:$0xff]
          %60 = vst [vmem:[%s56 + $0x8] sm:$0xff] %v59
          %v61 = vld [vmem:[%s55 + $0x10] sm:$0xff]
          %62 = vst [vmem:[%s56 + $0x10] sm:$0xff] %v61
          %v63 = vld [vmem:[%s55 + $0x18] sm:$0xff]
          %64 = vst [vmem:[%s56 + $0x18] sm:$0xff] %v63
          %v65 = vld [vmem:[%s55 + $0x20] sm:$0xff]
          %66 = vst [vmem:[%s56 + $0x20] sm:$0xff] %v65
          %v67 = vld [vmem:[%s55 + $0x28] sm:$0xff]
          %68 = vst [vmem:[%s56 + $0x28] sm:$0xff] %v67
          %v69 = vld [vmem:[%s55 + $0x30] sm:$0xff]
          %70 = vst [vmem:[%s56 + $0x30] sm:$0xff] %v69
          %v71 = vld [vmem:[%s55 + $0x38] sm:$0xff]
          %72 = vst [vmem:[%s56 + $0x38] sm:$0xff] %v71
          %v73 = vld [vmem:[%s55 + $0x40] sm:$0xff]
          %74 = vst [vmem:[%s56 + $0x40] sm:$0xff] %v73
          %v75 = vld [vmem:[%s55 + $0x48] sm:$0xff]
          %76 = vst [vmem:[%s56 + $0x48] sm:$0xff] %v75
          %v77 = vld [vmem:[%s55 + $0x50] sm:$0xff]
          %78 = vst [vmem:[%s56 + $0x50] sm:$0xff] %v77
          %v79 = vld [vmem:[%s55 + $0x58] sm:$0xff]
          %80 = vst [vmem:[%s56 + $0x58] sm:$0xff] %v79
          %v81 = vld [vmem:[%s55 + $0x60] sm:$0xff]
          %82 = vst [vmem:[%s56 + $0x60] sm:$0xff] %v81
          %v83 = vld [vmem:[%s55 + $0x68] sm:$0xff]
          %84 = vst [vmem:[%s56 + $0x68] sm:$0xff] %v83
          %v85 = vld [vmem:[%s55 + $0x70] sm:$0xff]
          %86 = vst [vmem:[%s56 + $0x70] sm:$0xff] %v85
          %v87 = vld [vmem:[%s55 + $0x78] sm:$0xff]
          %88 = vst [vmem:[%s56 + $0x78] sm:$0xff] %v87
          %v89 = vld [vmem:[%s55 + $0x80] sm:$0xff]
          %90 = vst [vmem:[%s56 + $0x80] sm:$0xff] %v89
          %v91 = vld [vmem:[%s55 + $0x88] sm:$0xff]
          %92 = vst [vmem:[%s56 + $0x88] sm:$0xff] %v91
          %v93 = vld [vmem:[%s55 + $0x90] sm:$0xff]
          %94 = vst [vmem:[%s56 + $0x90] sm:$0xff] %v93
          %v95 = vld [vmem:[%s55 + $0x98] sm:$0xff]
          %96 = vst [vmem:[%s56 + $0x98] sm:$0xff] %v95
          %v97 = vld [vmem:[%s55 + $0xa0] sm:$0xff]
          %98 = vst [vmem:[%s56 + $0xa0] sm:$0xff] %v97
          %v99 = vld [vmem:[%s55 + $0xa8] sm:$0xff]
          %100 = vst [vmem:[%s56 + $0xa8] sm:$0xff] %v99
          %v101 = vld [vmem:[%s55 + $0xb0] sm:$0xff]
          %102 = vst [vmem:[%s56 + $0xb0] sm:$0xff] %v101
          %v103 = vld [vmem:[%s55 + $0xb8] sm:$0xff]
          %104 = vst [vmem:[%s56 + $0xb8] sm:$0xff] %v103
          %v105 = vld [vmem:[%s55 + $0xc0] sm:$0xff]
          %106 = vst [vmem:[%s56 + $0xc0] sm:$0xff] %v105
          %v107 = vld [vmem:[%s55 + $0xc8] sm:$0xff]
          %108 = vst [vmem:[%s56 + $0xc8] sm:$0xff] %v107
          %v109 = vld [vmem:[%s55 + $0xd0] sm:$0xff]
          %110 = vst [vmem:[%s56 + $0xd0] sm:$0xff] %v109
          %v111 = vld [vmem:[%s55 + $0xd8] sm:$0xff]
          %112 = vst [vmem:[%s56 + $0xd8] sm:$0xff] %v111
          %v113 = vld [vmem:[%s55 + $0xe0] sm:$0xff]
          %114 = vst [vmem:[%s56 + $0xe0] sm:$0xff] %v113
          %v115 = vld [vmem:[%s55 + $0xe8] sm:$0xff]
          %116 = vst [vmem:[%s56 + $0xe8] sm:$0xff] %v115
          %v117 = vld [vmem:[%s55 + $0xf0] sm:$0xff]
          %118 = vst [vmem:[%s56 + $0xf0] sm:$0xff] %v117
          %v119 = vld [vmem:[%s55 + $0xf8] sm:$0xff]
          %120 = vst [vmem:[%s56 + $0xf8] sm:$0xff] %v119
          %v121 = vld [vmem:[%s55 + $0x100] sm:$0xff]
          %122 = vst [vmem:[%s56 + $0x100] sm:$0xff] %v121
          %v123 = vld [vmem:[%s55 + $0x108] sm:$0xff]
          %124 = vst [vmem:[%s56 + $0x108] sm:$0xff] %v123
          %v125 = vld [vmem:[%s55 + $0x110] sm:$0xff]
          %126 = vst [vmem:[%s56 + $0x110] sm:$0xff] %v125
          %v127 = vld [vmem:[%s55 + $0x118] sm:$0xff]
          %128 = vst [vmem:[%s56 + $0x118] sm:$0xff] %v127
          %v129 = vld [vmem:[%s55 + $0x120] sm:$0xff]
          %130 = vst [vmem:[%s56 + $0x120] sm:$0xff] %v129
          %v131 = vld [vmem:[%s55 + $0x128] sm:$0xff]
          %132 = vst [vmem:[%s56 + $0x128] sm:$0xff] %v131
          %v133 = vld [vmem:[%s55 + $0x130] sm:$0xff]
          %134 = vst [vmem:[%s56 + $0x130] sm:$0xff] %v133
          %v135 = vld [vmem:[%s55 + $0x138] sm:$0xff]
          %136 = vst [vmem:[%s56 + $0x138] sm:$0xff] %v135
          %v137 = vld [vmem:[%s55 + $0x140] sm:$0xff]
          %138 = vst [vmem:[%s56 + $0x140] sm:$0xff] %v137
          %v139 = vld [vmem:[%s55 + $0x148] sm:$0xff]
          %140 = vst [vmem:[%s56 + $0x148] sm:$0xff] %v139
          %v141 = vld [vmem:[%s55 + $0x150] sm:$0xff]
          %142 = vst [vmem:[%s56 + $0x150] sm:$0xff] %v141
          %v143 = vld [vmem:[%s55 + $0x158] sm:$0xff]
          %144 = vst [vmem:[%s56 + $0x158] sm:$0xff] %v143
          %v145 = vld [vmem:[%s55 + $0x160] sm:$0xff]
          %146 = vst [vmem:[%s56 + $0x160] sm:$0xff] %v145
          %v147 = vld [vmem:[%s55 + $0x168] sm:$0xff]
          %148 = vst [vmem:[%s56 + $0x168] sm:$0xff] %v147
          %v149 = vld [vmem:[%s55 + $0x170] sm:$0xff]
          %150 = vst [vmem:[%s56 + $0x170] sm:$0xff] %v149
          %v151 = vld [vmem:[%s55 + $0x178] sm:$0xff]
          %152 = vst [vmem:[%s56 + $0x178] sm:$0xff] %v151
          %v153 = vld [vmem:[%s55 + $0x180] sm:$0xff]
          %154 = vst [vmem:[%s56 + $0x180] sm:$0xff] %v153
          %v155 = vld [vmem:[%s55 + $0x188] sm:$0xff]
          %156 = vst [vmem:[%s56 + $0x188] sm:$0xff] %v155
          %v157 = vld [vmem:[%s55 + $0x190] sm:$0xff]
          %158 = vst [vmem:[%s56 + $0x190] sm:$0xff] %v157
          %v159 = vld [vmem:[%s55 + $0x198] sm:$0xff]
          %160 = vst [vmem:[%s56 + $0x198] sm:$0xff] %v159
          %v161 = vld [vmem:[%s55 + $0x1a0] sm:$0xff]
          %162 = vst [vmem:[%s56 + $0x1a0] sm:$0xff] %v161
          %v163 = vld [vmem:[%s55 + $0x1a8] sm:$0xff]
          %164 = vst [vmem:[%s56 + $0x1a8] sm:$0xff] %v163
          %v165 = vld [vmem:[%s55 + $0x1b0] sm:$0xff]
          %166 = vst [vmem:[%s56 + $0x1b0] sm:$0xff] %v165
          %v167 = vld [vmem:[%s55 + $0x1b8] sm:$0xff]
          %168 = vst [vmem:[%s56 + $0x1b8] sm:$0xff] %v167
          %v169 = vld [vmem:[%s55 + $0x1c0] sm:$0xff]
          %170 = vst [vmem:[%s56 + $0x1c0] sm:$0xff] %v169
          %v171 = vld [vmem:[%s55 + $0x1c8] sm:$0xff]
          %172 = vst [vmem:[%s56 + $0x1c8] sm:$0xff] %v171
          %v173 = vld [vmem:[%s55 + $0x1d0] sm:$0xff]
          %174 = vst [vmem:[%s56 + $0x1d0] sm:$0xff] %v173
          %v175 = vld [vmem:[%s55 + $0x1d8] sm:$0xff]
          %176 = vst [vmem:[%s56 + $0x1d8] sm:$0xff] %v175
          %v177 = vld [vmem:[%s55 + $0x1e0] sm:$0xff]
          %178 = vst [vmem:[%s56 + $0x1e0] sm:$0xff] %v177
          %v179 = vld [vmem:[%s55 + $0x1e8] sm:$0xff]
          %180 = vst [vmem:[%s56 + $0x1e8] sm:$0xff] %v179
          %v181 = vld [vmem:[%s55 + $0x1f0] sm:$0xff]
          %182 = vst [vmem:[%s56 + $0x1f0] sm:$0xff] %v181
          %v183 = vld [vmem:[%s55 + $0x1f8] sm:$0xff]
          %184 = vst [vmem:[%s56 + $0x1f8] sm:$0xff] %v183
          %v185 = vld [vmem:[%s55 + $0x200] sm:$0xff]
          %186 = vst [vmem:[%s56 + $0x200] sm:$0xff] %v185
          %v187 = vld [vmem:[%s55 + $0x208] sm:$0xff]
          %188 = vst [vmem:[%s56 + $0x208] sm:$0xff] %v187
          %v189 = vld [vmem:[%s55 + $0x210] sm:$0xff]
          %190 = vst [vmem:[%s56 + $0x210] sm:$0xff] %v189
          %v191 = vld [vmem:[%s55 + $0x218] sm:$0xff]
          %192 = vst [vmem:[%s56 + $0x218] sm:$0xff] %v191
          %v193 = vld [vmem:[%s55 + $0x220] sm:$0xff]
          %194 = vst [vmem:[%s56 + $0x220] sm:$0xff] %v193
          %v195 = vld [vmem:[%s55 + $0x228] sm:$0xff]
          %196 = vst [vmem:[%s56 + $0x228] sm:$0xff] %v195
          %v197 = vld [vmem:[%s55 + $0x230] sm:$0xff]
          %198 = vst [vmem:[%s56 + $0x230] sm:$0xff] %v197
          %v199 = vld [vmem:[%s55 + $0x238] sm:$0xff]
          %200 = vst [vmem:[%s56 + $0x238] sm:$0xff] %v199
          %v201 = vld [vmem:[%s55 + $0x240] sm:$0xff]
          %202 = vst [vmem:[%s56 + $0x240] sm:$0xff] %v201
          %v203 = vld [vmem:[%s55 + $0x248] sm:$0xff]
          %204 = vst [vmem:[%s56 + $0x248] sm:$0xff] %v203
          %v205 = vld [vmem:[%s55 + $0x250] sm:$0xff]
          %206 = vst [vmem:[%s56 + $0x250] sm:$0xff] %v205
          %v207 = vld [vmem:[%s55 + $0x258] sm:$0xff]
          %208 = vst [vmem:[%s56 + $0x258] sm:$0xff] %v207
          %v209 = vld [vmem:[%s55 + $0x260] sm:$0xff]
          %210 = vst [vmem:[%s56 + $0x260] sm:$0xff] %v209
          %v211 = vld [vmem:[%s55 + $0x268] sm:$0xff]
          %212 = vst [vmem:[%s56 + $0x268] sm:$0xff] %v211
          %v213 = vld [vmem:[%s55 + $0x270] sm:$0xff]
          %214 = vst [vmem:[%s56 + $0x270] sm:$0xff] %v213
          %v215 = vld [vmem:[%s55 + $0x278] sm:$0xff]
          %216 = vst [vmem:[%s56 + $0x278] sm:$0xff] %v215
          %v217 = vld [vmem:[%s55 + $0x280] sm:$0xff]
          %218 = vst [vmem:[%s56 + $0x280] sm:$0xff] %v217
          %v219 = vld [vmem:[%s55 + $0x288] sm:$0xff]
          %220 = vst [vmem:[%s56 + $0x288] sm:$0xff] %v219
          %v221 = vld [vmem:[%s55 + $0x290] sm:$0xff]
          %222 = vst [vmem:[%s56 + $0x290] sm:$0xff] %v221
          %v223 = vld [vmem:[%s55 + $0x298] sm:$0xff]
          %224 = vst [vmem:[%s56 + $0x298] sm:$0xff] %v223
          %v225 = vld [vmem:[%s55 + $0x2a0] sm:$0xff]
          %226 = vst [vmem:[%s56 + $0x2a0] sm:$0xff] %v225
          %v227 = vld [vmem:[%s55 + $0x2a8] sm:$0xff]
          %228 = vst [vmem:[%s56 + $0x2a8] sm:$0xff] %v227
          %v229 = vld [vmem:[%s55 + $0x2b0] sm:$0xff]
          %230 = vst [vmem:[%s56 + $0x2b0] sm:$0xff] %v229
          %v231 = vld [vmem:[%s55 + $0x2b8] sm:$0xff]
          %232 = vst [vmem:[%s56 + $0x2b8] sm:$0xff] %v231
          %v233 = vld [vmem:[%s55 + $0x2c0] sm:$0xff]
          %234 = vst [vmem:[%s56 + $0x2c0] sm:$0xff] %v233
          %v235 = vld [vmem:[%s55 + $0x2c8] sm:$0xff]
          %236 = vst [vmem:[%s56 + $0x2c8] sm:$0xff] %v235
          %v237 = vld [vmem:[%s55 + $0x2d0] sm:$0xff]
          %238 = vst [vmem:[%s56 + $0x2d0] sm:$0xff] %v237
          %v239 = vld [vmem:[%s55 + $0x2d8] sm:$0xff]
          %240 = vst [vmem:[%s56 + $0x2d8] sm:$0xff] %v239
          %v241 = vld [vmem:[%s55 + $0x2e0] sm:$0xff]
          %242 = vst [vmem:[%s56 + $0x2e0] sm:$0xff] %v241
          %v243 = vld [vmem:[%s55 + $0x2e8] sm:$0xff]
          %244 = vst [vmem:[%s56 + $0x2e8] sm:$0xff] %v243
          %v245 = vld [vmem:[%s55 + $0x2f0] sm:$0xff]
          %246 = vst [vmem:[%s56 + $0x2f0] sm:$0xff] %v245
          %v247 = vld [vmem:[%s55 + $0x2f8] sm:$0xff]
          %248 = vst [vmem:[%s56 + $0x2f8] sm:$0xff] %v247
          %v249 = vld [vmem:[%s55 + $0x300] sm:$0xff]
          %250 = vst [vmem:[%s56 + $0x300] sm:$0xff] %v249
          %v251 = vld [vmem:[%s55 + $0x308] sm:$0xff]
          %252 = vst [vmem:[%s56 + $0x308] sm:$0xff] %v251
          %v253 = vld [vmem:[%s55 + $0x310] sm:$0xff]
          %254 = vst [vmem:[%s56 + $0x310] sm:$0xff] %v253
          %v255 = vld [vmem:[%s55 + $0x318] sm:$0xff]
          %256 = vst [vmem:[%s56 + $0x318] sm:$0xff] %v255
          %v257 = vld [vmem:[%s55 + $0x320] sm:$0xff]
          %258 = vst [vmem:[%s56 + $0x320] sm:$0xff] %v257
          %v259 = vld [vmem:[%s55 + $0x328] sm:$0xff]
          %260 = vst [vmem:[%s56 + $0x328] sm:$0xff] %v259
          %v261 = vld [vmem:[%s55 + $0x330] sm:$0xff]
          %262 = vst [vmem:[%s56 + $0x330] sm:$0xff] %v261
          %v263 = vld [vmem:[%s55 + $0x338] sm:$0xff]
          %264 = vst [vmem:[%s56 + $0x338] sm:$0xff] %v263
          %v265 = vld [vmem:[%s55 + $0x340] sm:$0xff]
          %266 = vst [vmem:[%s56 + $0x340] sm:$0xff] %v265
          %v267 = vld [vmem:[%s55 + $0x348] sm:$0xff]
          %268 = vst [vmem:[%s56 + $0x348] sm:$0xff] %v267
          %v269 = vld [vmem:[%s55 + $0x350] sm:$0xff]
          %270 = vst [vmem:[%s56 + $0x350] sm:$0xff] %v269
          %v271 = vld [vmem:[%s55 + $0x358] sm:$0xff]
          %272 = vst [vmem:[%s56 + $0x358] sm:$0xff] %v271
          %v273 = vld [vmem:[%s55 + $0x360] sm:$0xff]
          %274 = vst [vmem:[%s56 + $0x360] sm:$0xff] %v273
          %v275 = vld [vmem:[%s55 + $0x368] sm:$0xff]
          %276 = vst [vmem:[%s56 + $0x368] sm:$0xff] %v275
          %v277 = vld [vmem:[%s55 + $0x370] sm:$0xff]
          %278 = vst [vmem:[%s56 + $0x370] sm:$0xff] %v277
          %v279 = vld [vmem:[%s55 + $0x378] sm:$0xff]
          %280 = vst [vmem:[%s56 + $0x378] sm:$0xff] %v279
          %v281 = vld [vmem:[%s55 + $0x380] sm:$0xff]
          %282 = vst [vmem:[%s56 + $0x380] sm:$0xff] %v281
          %v283 = vld [vmem:[%s55 + $0x388] sm:$0xff]
          %284 = vst [vmem:[%s56 + $0x388] sm:$0xff] %v283
          %v285 = vld [vmem:[%s55 + $0x390] sm:$0xff]
          %286 = vst [vmem:[%s56 + $0x390] sm:$0xff] %v285
          %v287 = vld [vmem:[%s55 + $0x398] sm:$0xff]
          %288 = vst [vmem:[%s56 + $0x398] sm:$0xff] %v287
          %v289 = vld [vmem:[%s55 + $0x3a0] sm:$0xff]
          %290 = vst [vmem:[%s56 + $0x3a0] sm:$0xff] %v289
          %v291 = vld [vmem:[%s55 + $0x3a8] sm:$0xff]
          %292 = vst [vmem:[%s56 + $0x3a8] sm:$0xff] %v291
          %v293 = vld [vmem:[%s55 + $0x3b0] sm:$0xff]
          %294 = vst [vmem:[%s56 + $0x3b0] sm:$0xff] %v293
          %v295 = vld [vmem:[%s55 + $0x3b8] sm:$0xff]
          %296 = vst [vmem:[%s56 + $0x3b8] sm:$0xff] %v295
          %v297 = vld [vmem:[%s55 + $0x3c0] sm:$0xff]
          %298 = vst [vmem:[%s56 + $0x3c0] sm:$0xff] %v297
          %v299 = vld [vmem:[%s55 + $0x3c8] sm:$0xff]
          %300 = vst [vmem:[%s56 + $0x3c8] sm:$0xff] %v299
          %v301 = vld [vmem:[%s55 + $0x3d0] sm:$0xff]
          %302 = vst [vmem:[%s56 + $0x3d0] sm:$0xff] %v301
          %v303 = vld [vmem:[%s55 + $0x3d8] sm:$0xff]
          %304 = vst [vmem:[%s56 + $0x3d8] sm:$0xff] %v303
          %v305 = vld [vmem:[%s55 + $0x3e0] sm:$0xff]
          %306 = vst [vmem:[%s56 + $0x3e0] sm:$0xff] %v305
          %v307 = vld [vmem:[%s55 + $0x3e8] sm:$0xff]
          %308 = vst [vmem:[%s56 + $0x3e8] sm:$0xff] %v307
          %v309 = vld [vmem:[%s55 + $0x3f0] sm:$0xff]
          %310 = vst [vmem:[%s56 + $0x3f0] sm:$0xff] %v309
          %v311 = vld [vmem:[%s55 + $0x3f8] sm:$0xff]
          %312 = vst [vmem:[%s56 + $0x3f8] sm:$0xff] %v311
          %v313 = vld [vmem:[%s55 + $0x400] sm:$0xff]
          %314 = vst [vmem:[%s56 + $0x400] sm:$0xff] %v313
          %v315 = vld [vmem:[%s55 + $0x408] sm:$0xff]
          %316 = vst [vmem:[%s56 + $0x408] sm:$0xff] %v315
          %v317 = vld [vmem:[%s55 + $0x410] sm:$0xff]
          %318 = vst [vmem:[%s56 + $0x410] sm:$0xff] %v317
          %v319 = vld [vmem:[%s55 + $0x418] sm:$0xff]
          %320 = vst [vmem:[%s56 + $0x418] sm:$0xff] %v319
          %v321 = vld [vmem:[%s55 + $0x420] sm:$0xff]
          %322 = vst [vmem:[%s56 + $0x420] sm:$0xff] %v321
          %v323 = vld [vmem:[%s55 + $0x428] sm:$0xff]
          %324 = vst [vmem:[%s56 + $0x428] sm:$0xff] %v323
          %v325 = vld [vmem:[%s55 + $0x430] sm:$0xff]
          %326 = vst [vmem:[%s56 + $0x430] sm:$0xff] %v325
          %v327 = vld [vmem:[%s55 + $0x438] sm:$0xff]
          %328 = vst [vmem:[%s56 + $0x438] sm:$0xff] %v327
          %v329 = vld [vmem:[%s55 + $0x440] sm:$0xff]
          %330 = vst [vmem:[%s56 + $0x440] sm:$0xff] %v329
          %v331 = vld [vmem:[%s55 + $0x448] sm:$0xff]
          %332 = vst [vmem:[%s56 + $0x448] sm:$0xff] %v331
          %v333 = vld [vmem:[%s55 + $0x450] sm:$0xff]
          %334 = vst [vmem:[%s56 + $0x450] sm:$0xff] %v333
          %v335 = vld [vmem:[%s55 + $0x458] sm:$0xff]
          %336 = vst [vmem:[%s56 + $0x458] sm:$0xff] %v335
          %v337 = vld [vmem:[%s55 + $0x460] sm:$0xff]
          %338 = vst [vmem:[%s56 + $0x460] sm:$0xff] %v337
          %v339 = vld [vmem:[%s55 + $0x468] sm:$0xff]
          %340 = vst [vmem:[%s56 + $0x468] sm:$0xff] %v339
          %v341 = vld [vmem:[%s55 + $0x470] sm:$0xff]
          %342 = vst [vmem:[%s56 + $0x470] sm:$0xff] %v341
          %v343 = vld [vmem:[%s55 + $0x478] sm:$0xff]
          %344 = vst [vmem:[%s56 + $0x478] sm:$0xff] %v343
        $region45: #{map_encoder_forward.1} parent=39 // loop_footer
          %s54 = sadd.s32 1, %s50
        $region46: #{map_encoder_forward.1} parent=39 // loop_footer_branch
          %49 = sbr.rel target = $region42
        $region47: #{map_encoder_forward.1} parent=39 // loop_exit
          _
      $region40: #{map_encoder_forward.1} parent=24 // pred_fallthru
        _
      %p345 = pneg %p45
      // Predicated region
      $region48: #{map_encoder_forward.1} parent=24 // pred_check
        _
      $region49: #{map_encoder_forward.1} parent=24 // pred_check_branch
        %347 = sbr.rel (%p45) target = $region51
      $region50: #{map_encoder_forward.1} parent=24 // pred_region
        %s348 = sand.u32 1152, 7
      $region51: #{map_encoder_forward.1} parent=24 // pred_fallthru
        _
    $region25: #{map_encoder_forward.1} parent=1 // pred_fallthru
      _
    // Predicated region
    $region26: #{map_encoder_forward.1} parent=1 // pred_check
      %p29 = pneg %p25
    $region27: #{map_encoder_forward.1} parent=1 // pred_check_branch
      %31 = sbr.rel (%p29) target = $region29
    $region28: #{map_encoder_forward.1} parent=1 // pred_region
      %s32 = sshll.u32 1, 1152
      %s33 = ssub.s32 %s32, 1
      loop: start=0, step=1, limit=1
      $region30: #{map_encoder_forward.1} parent=28 // loop_pre_header
        _
      $region31: #{map_encoder_forward.1} parent=28 // loop_header
        %s35 = sphi 0, %s39
        %p36 = scmp.ge.s32.totalorder %s35, 1
        %s40 = sphi %s5, %s5
        %s41 = sphi [#allocation3], [#allocation3]
      $region32: #{map_encoder_forward.1} parent=28 // loop_header_branch
        %38 = sbr.rel (%p36) target = $region36
      $region33: #{map_encoder_forward.1} parent=28 // loop_body
        %v42 = vld [vmem:[%s40] sm:%s33]
        %43 = vst [vmem:[%s41] sm:%s33] %v42
      $region34: #{map_encoder_forward.1} parent=28 // loop_footer
        %s39 = sadd.s32 1, %s35
      $region35: #{map_encoder_forward.1} parent=28 // loop_footer_branch
        %34 = sbr.rel target = $region31
      $region36: #{map_encoder_forward.1} parent=28 // loop_exit
        _
    $region29: #{map_encoder_forward.1} parent=1 // pred_fallthru
      _
    // Predicated region
    $region52: #{map_encoder_forward.1} parent=1 // pred_check
      _
    $region53: #{map_encoder_forward.1} parent=1 // pred_check_branch
      %351 = sbr.rel (0) target = $region55
    $region54: #{map_encoder_forward.1} parent=1 // pred_region
      %352 = vsyncadd [#allocation6], 18432
    $region55: #{map_encoder_forward.1} parent=1 // pred_fallthru
      _
    %s353 = scalar_lea.sflag [#allocation6], 1
    %p355 = scmp.lt.u32.totalorder 1344, 8
    %p356 = pneg %p355
    // Predicated region
    $region56: #{map_encoder_forward.1} parent=1 // pred_check
      _
    $region57: #{map_encoder_forward.1} parent=1 // pred_check_branch
      %358 = sbr.rel (%p355) target = $region59
    $region58: #{map_encoder_forward.1} parent=1 // pred_region
      %s374 = sand.u32 1344, 7
      %p375 = scmp.eq.s32.totalorder %s374, 0
      // Predicated region
      $region71: #{map_encoder_forward.1} parent=58 // pred_check
        %p376 = pneg %p375
      $region72: #{map_encoder_forward.1} parent=58 // pred_check_branch
        %378 = sbr.rel (%p376) target = $region74
      $region73: #{map_encoder_forward.1} parent=58 // pred_region
        loop: start=0, step=1, limit=1
        $region75: #{map_encoder_forward.1} parent=73 // loop_pre_header
          _
        $region76: #{map_encoder_forward.1} parent=73 // loop_header
          %s380 = sphi 0, %s384
          %p381 = scmp.ge.s32.totalorder %s380, 1
          %s385 = sphi %s6, %s6
          %s386 = sphi [#allocation4], [#allocation4]
        $region77: #{map_encoder_forward.1} parent=73 // loop_header_branch
          %383 = sbr.rel (%p381) target = $region81
        $region78: #{map_encoder_forward.1} parent=73 // loop_body
          %v387 = vld [vmem:[%s385] sm:$0xff]
          %388 = vst [vmem:[%s386] sm:$0xff] %v387
          %v389 = vld [vmem:[%s385 + $0x8] sm:$0xff]
          %390 = vst [vmem:[%s386 + $0x8] sm:$0xff] %v389
          %v391 = vld [vmem:[%s385 + $0x10] sm:$0xff]
          %392 = vst [vmem:[%s386 + $0x10] sm:$0xff] %v391
          %v393 = vld [vmem:[%s385 + $0x18] sm:$0xff]
          %394 = vst [vmem:[%s386 + $0x18] sm:$0xff] %v393
          %v395 = vld [vmem:[%s385 + $0x20] sm:$0xff]
          %396 = vst [vmem:[%s386 + $0x20] sm:$0xff] %v395
          %v397 = vld [vmem:[%s385 + $0x28] sm:$0xff]
          %398 = vst [vmem:[%s386 + $0x28] sm:$0xff] %v397
          %v399 = vld [vmem:[%s385 + $0x30] sm:$0xff]
          %400 = vst [vmem:[%s386 + $0x30] sm:$0xff] %v399
          %v401 = vld [vmem:[%s385 + $0x38] sm:$0xff]
          %402 = vst [vmem:[%s386 + $0x38] sm:$0xff] %v401
          %v403 = vld [vmem:[%s385 + $0x40] sm:$0xff]
          %404 = vst [vmem:[%s386 + $0x40] sm:$0xff] %v403
          %v405 = vld [vmem:[%s385 + $0x48] sm:$0xff]
          %406 = vst [vmem:[%s386 + $0x48] sm:$0xff] %v405
          %v407 = vld [vmem:[%s385 + $0x50] sm:$0xff]
          %408 = vst [vmem:[%s386 + $0x50] sm:$0xff] %v407
          %v409 = vld [vmem:[%s385 + $0x58] sm:$0xff]
          %410 = vst [vmem:[%s386 + $0x58] sm:$0xff] %v409
          %v411 = vld [vmem:[%s385 + $0x60] sm:$0xff]
          %412 = vst [vmem:[%s386 + $0x60] sm:$0xff] %v411
          %v413 = vld [vmem:[%s385 + $0x68] sm:$0xff]
          %414 = vst [vmem:[%s386 + $0x68] sm:$0xff] %v413
          %v415 = vld [vmem:[%s385 + $0x70] sm:$0xff]
          %416 = vst [vmem:[%s386 + $0x70] sm:$0xff] %v415
          %v417 = vld [vmem:[%s385 + $0x78] sm:$0xff]
          %418 = vst [vmem:[%s386 + $0x78] sm:$0xff] %v417
          %v419 = vld [vmem:[%s385 + $0x80] sm:$0xff]
          %420 = vst [vmem:[%s386 + $0x80] sm:$0xff] %v419
          %v421 = vld [vmem:[%s385 + $0x88] sm:$0xff]
          %422 = vst [vmem:[%s386 + $0x88] sm:$0xff] %v421
          %v423 = vld [vmem:[%s385 + $0x90] sm:$0xff]
          %424 = vst [vmem:[%s386 + $0x90] sm:$0xff] %v423
          %v425 = vld [vmem:[%s385 + $0x98] sm:$0xff]
          %426 = vst [vmem:[%s386 + $0x98] sm:$0xff] %v425
          %v427 = vld [vmem:[%s385 + $0xa0] sm:$0xff]
          %428 = vst [vmem:[%s386 + $0xa0] sm:$0xff] %v427
          %v429 = vld [vmem:[%s385 + $0xa8] sm:$0xff]
          %430 = vst [vmem:[%s386 + $0xa8] sm:$0xff] %v429
          %v431 = vld [vmem:[%s385 + $0xb0] sm:$0xff]
          %432 = vst [vmem:[%s386 + $0xb0] sm:$0xff] %v431
          %v433 = vld [vmem:[%s385 + $0xb8] sm:$0xff]
          %434 = vst [vmem:[%s386 + $0xb8] sm:$0xff] %v433
          %v435 = vld [vmem:[%s385 + $0xc0] sm:$0xff]
          %436 = vst [vmem:[%s386 + $0xc0] sm:$0xff] %v435
          %v437 = vld [vmem:[%s385 + $0xc8] sm:$0xff]
          %438 = vst [vmem:[%s386 + $0xc8] sm:$0xff] %v437
          %v439 = vld [vmem:[%s385 + $0xd0] sm:$0xff]
          %440 = vst [vmem:[%s386 + $0xd0] sm:$0xff] %v439
          %v441 = vld [vmem:[%s385 + $0xd8] sm:$0xff]
          %442 = vst [vmem:[%s386 + $0xd8] sm:$0xff] %v441
          %v443 = vld [vmem:[%s385 + $0xe0] sm:$0xff]
          %444 = vst [vmem:[%s386 + $0xe0] sm:$0xff] %v443
          %v445 = vld [vmem:[%s385 + $0xe8] sm:$0xff]
          %446 = vst [vmem:[%s386 + $0xe8] sm:$0xff] %v445
          %v447 = vld [vmem:[%s385 + $0xf0] sm:$0xff]
          %448 = vst [vmem:[%s386 + $0xf0] sm:$0xff] %v447
          %v449 = vld [vmem:[%s385 + $0xf8] sm:$0xff]
          %450 = vst [vmem:[%s386 + $0xf8] sm:$0xff] %v449
          %v451 = vld [vmem:[%s385 + $0x100] sm:$0xff]
          %452 = vst [vmem:[%s386 + $0x100] sm:$0xff] %v451
          %v453 = vld [vmem:[%s385 + $0x108] sm:$0xff]
          %454 = vst [vmem:[%s386 + $0x108] sm:$0xff] %v453
          %v455 = vld [vmem:[%s385 + $0x110] sm:$0xff]
          %456 = vst [vmem:[%s386 + $0x110] sm:$0xff] %v455
          %v457 = vld [vmem:[%s385 + $0x118] sm:$0xff]
          %458 = vst [vmem:[%s386 + $0x118] sm:$0xff] %v457
          %v459 = vld [vmem:[%s385 + $0x120] sm:$0xff]
          %460 = vst [vmem:[%s386 + $0x120] sm:$0xff] %v459
          %v461 = vld [vmem:[%s385 + $0x128] sm:$0xff]
          %462 = vst [vmem:[%s386 + $0x128] sm:$0xff] %v461
          %v463 = vld [vmem:[%s385 + $0x130] sm:$0xff]
          %464 = vst [vmem:[%s386 + $0x130] sm:$0xff] %v463
          %v465 = vld [vmem:[%s385 + $0x138] sm:$0xff]
          %466 = vst [vmem:[%s386 + $0x138] sm:$0xff] %v465
          %v467 = vld [vmem:[%s385 + $0x140] sm:$0xff]
          %468 = vst [vmem:[%s386 + $0x140] sm:$0xff] %v467
          %v469 = vld [vmem:[%s385 + $0x148] sm:$0xff]
          %470 = vst [vmem:[%s386 + $0x148] sm:$0xff] %v469
          %v471 = vld [vmem:[%s385 + $0x150] sm:$0xff]
          %472 = vst [vmem:[%s386 + $0x150] sm:$0xff] %v471
          %v473 = vld [vmem:[%s385 + $0x158] sm:$0xff]
          %474 = vst [vmem:[%s386 + $0x158] sm:$0xff] %v473
          %v475 = vld [vmem:[%s385 + $0x160] sm:$0xff]
          %476 = vst [vmem:[%s386 + $0x160] sm:$0xff] %v475
          %v477 = vld [vmem:[%s385 + $0x168] sm:$0xff]
          %478 = vst [vmem:[%s386 + $0x168] sm:$0xff] %v477
          %v479 = vld [vmem:[%s385 + $0x170] sm:$0xff]
          %480 = vst [vmem:[%s386 + $0x170] sm:$0xff] %v479
          %v481 = vld [vmem:[%s385 + $0x178] sm:$0xff]
          %482 = vst [vmem:[%s386 + $0x178] sm:$0xff] %v481
          %v483 = vld [vmem:[%s385 + $0x180] sm:$0xff]
          %484 = vst [vmem:[%s386 + $0x180] sm:$0xff] %v483
          %v485 = vld [vmem:[%s385 + $0x188] sm:$0xff]
          %486 = vst [vmem:[%s386 + $0x188] sm:$0xff] %v485
          %v487 = vld [vmem:[%s385 + $0x190] sm:$0xff]
          %488 = vst [vmem:[%s386 + $0x190] sm:$0xff] %v487
          %v489 = vld [vmem:[%s385 + $0x198] sm:$0xff]
          %490 = vst [vmem:[%s386 + $0x198] sm:$0xff] %v489
          %v491 = vld [vmem:[%s385 + $0x1a0] sm:$0xff]
          %492 = vst [vmem:[%s386 + $0x1a0] sm:$0xff] %v491
          %v493 = vld [vmem:[%s385 + $0x1a8] sm:$0xff]
          %494 = vst [vmem:[%s386 + $0x1a8] sm:$0xff] %v493
          %v495 = vld [vmem:[%s385 + $0x1b0] sm:$0xff]
          %496 = vst [vmem:[%s386 + $0x1b0] sm:$0xff] %v495
          %v497 = vld [vmem:[%s385 + $0x1b8] sm:$0xff]
          %498 = vst [vmem:[%s386 + $0x1b8] sm:$0xff] %v497
          %v499 = vld [vmem:[%s385 + $0x1c0] sm:$0xff]
          %500 = vst [vmem:[%s386 + $0x1c0] sm:$0xff] %v499
          %v501 = vld [vmem:[%s385 + $0x1c8] sm:$0xff]
          %502 = vst [vmem:[%s386 + $0x1c8] sm:$0xff] %v501
          %v503 = vld [vmem:[%s385 + $0x1d0] sm:$0xff]
          %504 = vst [vmem:[%s386 + $0x1d0] sm:$0xff] %v503
          %v505 = vld [vmem:[%s385 + $0x1d8] sm:$0xff]
          %506 = vst [vmem:[%s386 + $0x1d8] sm:$0xff] %v505
          %v507 = vld [vmem:[%s385 + $0x1e0] sm:$0xff]
          %508 = vst [vmem:[%s386 + $0x1e0] sm:$0xff] %v507
          %v509 = vld [vmem:[%s385 + $0x1e8] sm:$0xff]
          %510 = vst [vmem:[%s386 + $0x1e8] sm:$0xff] %v509
          %v511 = vld [vmem:[%s385 + $0x1f0] sm:$0xff]
          %512 = vst [vmem:[%s386 + $0x1f0] sm:$0xff] %v511
          %v513 = vld [vmem:[%s385 + $0x1f8] sm:$0xff]
          %514 = vst [vmem:[%s386 + $0x1f8] sm:$0xff] %v513
          %v515 = vld [vmem:[%s385 + $0x200] sm:$0xff]
          %516 = vst [vmem:[%s386 + $0x200] sm:$0xff] %v515
          %v517 = vld [vmem:[%s385 + $0x208] sm:$0xff]
          %518 = vst [vmem:[%s386 + $0x208] sm:$0xff] %v517
          %v519 = vld [vmem:[%s385 + $0x210] sm:$0xff]
          %520 = vst [vmem:[%s386 + $0x210] sm:$0xff] %v519
          %v521 = vld [vmem:[%s385 + $0x218] sm:$0xff]
          %522 = vst [vmem:[%s386 + $0x218] sm:$0xff] %v521
          %v523 = vld [vmem:[%s385 + $0x220] sm:$0xff]
          %524 = vst [vmem:[%s386 + $0x220] sm:$0xff] %v523
          %v525 = vld [vmem:[%s385 + $0x228] sm:$0xff]
          %526 = vst [vmem:[%s386 + $0x228] sm:$0xff] %v525
          %v527 = vld [vmem:[%s385 + $0x230] sm:$0xff]
          %528 = vst [vmem:[%s386 + $0x230] sm:$0xff] %v527
          %v529 = vld [vmem:[%s385 + $0x238] sm:$0xff]
          %530 = vst [vmem:[%s386 + $0x238] sm:$0xff] %v529
          %v531 = vld [vmem:[%s385 + $0x240] sm:$0xff]
          %532 = vst [vmem:[%s386 + $0x240] sm:$0xff] %v531
          %v533 = vld [vmem:[%s385 + $0x248] sm:$0xff]
          %534 = vst [vmem:[%s386 + $0x248] sm:$0xff] %v533
          %v535 = vld [vmem:[%s385 + $0x250] sm:$0xff]
          %536 = vst [vmem:[%s386 + $0x250] sm:$0xff] %v535
          %v537 = vld [vmem:[%s385 + $0x258] sm:$0xff]
          %538 = vst [vmem:[%s386 + $0x258] sm:$0xff] %v537
          %v539 = vld [vmem:[%s385 + $0x260] sm:$0xff]
          %540 = vst [vmem:[%s386 + $0x260] sm:$0xff] %v539
          %v541 = vld [vmem:[%s385 + $0x268] sm:$0xff]
          %542 = vst [vmem:[%s386 + $0x268] sm:$0xff] %v541
          %v543 = vld [vmem:[%s385 + $0x270] sm:$0xff]
          %544 = vst [vmem:[%s386 + $0x270] sm:$0xff] %v543
          %v545 = vld [vmem:[%s385 + $0x278] sm:$0xff]
          %546 = vst [vmem:[%s386 + $0x278] sm:$0xff] %v545
          %v547 = vld [vmem:[%s385 + $0x280] sm:$0xff]
          %548 = vst [vmem:[%s386 + $0x280] sm:$0xff] %v547
          %v549 = vld [vmem:[%s385 + $0x288] sm:$0xff]
          %550 = vst [vmem:[%s386 + $0x288] sm:$0xff] %v549
          %v551 = vld [vmem:[%s385 + $0x290] sm:$0xff]
          %552 = vst [vmem:[%s386 + $0x290] sm:$0xff] %v551
          %v553 = vld [vmem:[%s385 + $0x298] sm:$0xff]
          %554 = vst [vmem:[%s386 + $0x298] sm:$0xff] %v553
          %v555 = vld [vmem:[%s385 + $0x2a0] sm:$0xff]
          %556 = vst [vmem:[%s386 + $0x2a0] sm:$0xff] %v555
          %v557 = vld [vmem:[%s385 + $0x2a8] sm:$0xff]
          %558 = vst [vmem:[%s386 + $0x2a8] sm:$0xff] %v557
          %v559 = vld [vmem:[%s385 + $0x2b0] sm:$0xff]
          %560 = vst [vmem:[%s386 + $0x2b0] sm:$0xff] %v559
          %v561 = vld [vmem:[%s385 + $0x2b8] sm:$0xff]
          %562 = vst [vmem:[%s386 + $0x2b8] sm:$0xff] %v561
          %v563 = vld [vmem:[%s385 + $0x2c0] sm:$0xff]
          %564 = vst [vmem:[%s386 + $0x2c0] sm:$0xff] %v563
          %v565 = vld [vmem:[%s385 + $0x2c8] sm:$0xff]
          %566 = vst [vmem:[%s386 + $0x2c8] sm:$0xff] %v565
          %v567 = vld [vmem:[%s385 + $0x2d0] sm:$0xff]
          %568 = vst [vmem:[%s386 + $0x2d0] sm:$0xff] %v567
          %v569 = vld [vmem:[%s385 + $0x2d8] sm:$0xff]
          %570 = vst [vmem:[%s386 + $0x2d8] sm:$0xff] %v569
          %v571 = vld [vmem:[%s385 + $0x2e0] sm:$0xff]
          %572 = vst [vmem:[%s386 + $0x2e0] sm:$0xff] %v571
          %v573 = vld [vmem:[%s385 + $0x2e8] sm:$0xff]
          %574 = vst [vmem:[%s386 + $0x2e8] sm:$0xff] %v573
          %v575 = vld [vmem:[%s385 + $0x2f0] sm:$0xff]
          %576 = vst [vmem:[%s386 + $0x2f0] sm:$0xff] %v575
          %v577 = vld [vmem:[%s385 + $0x2f8] sm:$0xff]
          %578 = vst [vmem:[%s386 + $0x2f8] sm:$0xff] %v577
          %v579 = vld [vmem:[%s385 + $0x300] sm:$0xff]
          %580 = vst [vmem:[%s386 + $0x300] sm:$0xff] %v579
          %v581 = vld [vmem:[%s385 + $0x308] sm:$0xff]
          %582 = vst [vmem:[%s386 + $0x308] sm:$0xff] %v581
          %v583 = vld [vmem:[%s385 + $0x310] sm:$0xff]
          %584 = vst [vmem:[%s386 + $0x310] sm:$0xff] %v583
          %v585 = vld [vmem:[%s385 + $0x318] sm:$0xff]
          %586 = vst [vmem:[%s386 + $0x318] sm:$0xff] %v585
          %v587 = vld [vmem:[%s385 + $0x320] sm:$0xff]
          %588 = vst [vmem:[%s386 + $0x320] sm:$0xff] %v587
          %v589 = vld [vmem:[%s385 + $0x328] sm:$0xff]
          %590 = vst [vmem:[%s386 + $0x328] sm:$0xff] %v589
          %v591 = vld [vmem:[%s385 + $0x330] sm:$0xff]
          %592 = vst [vmem:[%s386 + $0x330] sm:$0xff] %v591
          %v593 = vld [vmem:[%s385 + $0x338] sm:$0xff]
          %594 = vst [vmem:[%s386 + $0x338] sm:$0xff] %v593
          %v595 = vld [vmem:[%s385 + $0x340] sm:$0xff]
          %596 = vst [vmem:[%s386 + $0x340] sm:$0xff] %v595
          %v597 = vld [vmem:[%s385 + $0x348] sm:$0xff]
          %598 = vst [vmem:[%s386 + $0x348] sm:$0xff] %v597
          %v599 = vld [vmem:[%s385 + $0x350] sm:$0xff]
          %600 = vst [vmem:[%s386 + $0x350] sm:$0xff] %v599
          %v601 = vld [vmem:[%s385 + $0x358] sm:$0xff]
          %602 = vst [vmem:[%s386 + $0x358] sm:$0xff] %v601
          %v603 = vld [vmem:[%s385 + $0x360] sm:$0xff]
          %604 = vst [vmem:[%s386 + $0x360] sm:$0xff] %v603
          %v605 = vld [vmem:[%s385 + $0x368] sm:$0xff]
          %606 = vst [vmem:[%s386 + $0x368] sm:$0xff] %v605
          %v607 = vld [vmem:[%s385 + $0x370] sm:$0xff]
          %608 = vst [vmem:[%s386 + $0x370] sm:$0xff] %v607
          %v609 = vld [vmem:[%s385 + $0x378] sm:$0xff]
          %610 = vst [vmem:[%s386 + $0x378] sm:$0xff] %v609
          %v611 = vld [vmem:[%s385 + $0x380] sm:$0xff]
          %612 = vst [vmem:[%s386 + $0x380] sm:$0xff] %v611
          %v613 = vld [vmem:[%s385 + $0x388] sm:$0xff]
          %614 = vst [vmem:[%s386 + $0x388] sm:$0xff] %v613
          %v615 = vld [vmem:[%s385 + $0x390] sm:$0xff]
          %616 = vst [vmem:[%s386 + $0x390] sm:$0xff] %v615
          %v617 = vld [vmem:[%s385 + $0x398] sm:$0xff]
          %618 = vst [vmem:[%s386 + $0x398] sm:$0xff] %v617
          %v619 = vld [vmem:[%s385 + $0x3a0] sm:$0xff]
          %620 = vst [vmem:[%s386 + $0x3a0] sm:$0xff] %v619
          %v621 = vld [vmem:[%s385 + $0x3a8] sm:$0xff]
          %622 = vst [vmem:[%s386 + $0x3a8] sm:$0xff] %v621
          %v623 = vld [vmem:[%s385 + $0x3b0] sm:$0xff]
          %624 = vst [vmem:[%s386 + $0x3b0] sm:$0xff] %v623
          %v625 = vld [vmem:[%s385 + $0x3b8] sm:$0xff]
          %626 = vst [vmem:[%s386 + $0x3b8] sm:$0xff] %v625
          %v627 = vld [vmem:[%s385 + $0x3c0] sm:$0xff]
          %628 = vst [vmem:[%s386 + $0x3c0] sm:$0xff] %v627
          %v629 = vld [vmem:[%s385 + $0x3c8] sm:$0xff]
          %630 = vst [vmem:[%s386 + $0x3c8] sm:$0xff] %v629
          %v631 = vld [vmem:[%s385 + $0x3d0] sm:$0xff]
          %632 = vst [vmem:[%s386 + $0x3d0] sm:$0xff] %v631
          %v633 = vld [vmem:[%s385 + $0x3d8] sm:$0xff]
          %634 = vst [vmem:[%s386 + $0x3d8] sm:$0xff] %v633
          %v635 = vld [vmem:[%s385 + $0x3e0] sm:$0xff]
          %636 = vst [vmem:[%s386 + $0x3e0] sm:$0xff] %v635
          %v637 = vld [vmem:[%s385 + $0x3e8] sm:$0xff]
          %638 = vst [vmem:[%s386 + $0x3e8] sm:$0xff] %v637
          %v639 = vld [vmem:[%s385 + $0x3f0] sm:$0xff]
          %640 = vst [vmem:[%s386 + $0x3f0] sm:$0xff] %v639
          %v641 = vld [vmem:[%s385 + $0x3f8] sm:$0xff]
          %642 = vst [vmem:[%s386 + $0x3f8] sm:$0xff] %v641
          %v643 = vld [vmem:[%s385 + $0x400] sm:$0xff]
          %644 = vst [vmem:[%s386 + $0x400] sm:$0xff] %v643
          %v645 = vld [vmem:[%s385 + $0x408] sm:$0xff]
          %646 = vst [vmem:[%s386 + $0x408] sm:$0xff] %v645
          %v647 = vld [vmem:[%s385 + $0x410] sm:$0xff]
          %648 = vst [vmem:[%s386 + $0x410] sm:$0xff] %v647
          %v649 = vld [vmem:[%s385 + $0x418] sm:$0xff]
          %650 = vst [vmem:[%s386 + $0x418] sm:$0xff] %v649
          %v651 = vld [vmem:[%s385 + $0x420] sm:$0xff]
          %652 = vst [vmem:[%s386 + $0x420] sm:$0xff] %v651
          %v653 = vld [vmem:[%s385 + $0x428] sm:$0xff]
          %654 = vst [vmem:[%s386 + $0x428] sm:$0xff] %v653
          %v655 = vld [vmem:[%s385 + $0x430] sm:$0xff]
          %656 = vst [vmem:[%s386 + $0x430] sm:$0xff] %v655
          %v657 = vld [vmem:[%s385 + $0x438] sm:$0xff]
          %658 = vst [vmem:[%s386 + $0x438] sm:$0xff] %v657
          %v659 = vld [vmem:[%s385 + $0x440] sm:$0xff]
          %660 = vst [vmem:[%s386 + $0x440] sm:$0xff] %v659
          %v661 = vld [vmem:[%s385 + $0x448] sm:$0xff]
          %662 = vst [vmem:[%s386 + $0x448] sm:$0xff] %v661
          %v663 = vld [vmem:[%s385 + $0x450] sm:$0xff]
          %664 = vst [vmem:[%s386 + $0x450] sm:$0xff] %v663
          %v665 = vld [vmem:[%s385 + $0x458] sm:$0xff]
          %666 = vst [vmem:[%s386 + $0x458] sm:$0xff] %v665
          %v667 = vld [vmem:[%s385 + $0x460] sm:$0xff]
          %668 = vst [vmem:[%s386 + $0x460] sm:$0xff] %v667
          %v669 = vld [vmem:[%s385 + $0x468] sm:$0xff]
          %670 = vst [vmem:[%s386 + $0x468] sm:$0xff] %v669
          %v671 = vld [vmem:[%s385 + $0x470] sm:$0xff]
          %672 = vst [vmem:[%s386 + $0x470] sm:$0xff] %v671
          %v673 = vld [vmem:[%s385 + $0x478] sm:$0xff]
          %674 = vst [vmem:[%s386 + $0x478] sm:$0xff] %v673
          %v675 = vld [vmem:[%s385 + $0x480] sm:$0xff]
          %676 = vst [vmem:[%s386 + $0x480] sm:$0xff] %v675
          %v677 = vld [vmem:[%s385 + $0x488] sm:$0xff]
          %678 = vst [vmem:[%s386 + $0x488] sm:$0xff] %v677
          %v679 = vld [vmem:[%s385 + $0x490] sm:$0xff]
          %680 = vst [vmem:[%s386 + $0x490] sm:$0xff] %v679
          %v681 = vld [vmem:[%s385 + $0x498] sm:$0xff]
          %682 = vst [vmem:[%s386 + $0x498] sm:$0xff] %v681
          %v683 = vld [vmem:[%s385 + $0x4a0] sm:$0xff]
          %684 = vst [vmem:[%s386 + $0x4a0] sm:$0xff] %v683
          %v685 = vld [vmem:[%s385 + $0x4a8] sm:$0xff]
          %686 = vst [vmem:[%s386 + $0x4a8] sm:$0xff] %v685
          %v687 = vld [vmem:[%s385 + $0x4b0] sm:$0xff]
          %688 = vst [vmem:[%s386 + $0x4b0] sm:$0xff] %v687
          %v689 = vld [vmem:[%s385 + $0x4b8] sm:$0xff]
          %690 = vst [vmem:[%s386 + $0x4b8] sm:$0xff] %v689
          %v691 = vld [vmem:[%s385 + $0x4c0] sm:$0xff]
          %692 = vst [vmem:[%s386 + $0x4c0] sm:$0xff] %v691
          %v693 = vld [vmem:[%s385 + $0x4c8] sm:$0xff]
          %694 = vst [vmem:[%s386 + $0x4c8] sm:$0xff] %v693
          %v695 = vld [vmem:[%s385 + $0x4d0] sm:$0xff]
          %696 = vst [vmem:[%s386 + $0x4d0] sm:$0xff] %v695
          %v697 = vld [vmem:[%s385 + $0x4d8] sm:$0xff]
          %698 = vst [vmem:[%s386 + $0x4d8] sm:$0xff] %v697
          %v699 = vld [vmem:[%s385 + $0x4e0] sm:$0xff]
          %700 = vst [vmem:[%s386 + $0x4e0] sm:$0xff] %v699
          %v701 = vld [vmem:[%s385 + $0x4e8] sm:$0xff]
          %702 = vst [vmem:[%s386 + $0x4e8] sm:$0xff] %v701
          %v703 = vld [vmem:[%s385 + $0x4f0] sm:$0xff]
          %704 = vst [vmem:[%s386 + $0x4f0] sm:$0xff] %v703
          %v705 = vld [vmem:[%s385 + $0x4f8] sm:$0xff]
          %706 = vst [vmem:[%s386 + $0x4f8] sm:$0xff] %v705
          %v707 = vld [vmem:[%s385 + $0x500] sm:$0xff]
          %708 = vst [vmem:[%s386 + $0x500] sm:$0xff] %v707
          %v709 = vld [vmem:[%s385 + $0x508] sm:$0xff]
          %710 = vst [vmem:[%s386 + $0x508] sm:$0xff] %v709
          %v711 = vld [vmem:[%s385 + $0x510] sm:$0xff]
          %712 = vst [vmem:[%s386 + $0x510] sm:$0xff] %v711
          %v713 = vld [vmem:[%s385 + $0x518] sm:$0xff]
          %714 = vst [vmem:[%s386 + $0x518] sm:$0xff] %v713
          %v715 = vld [vmem:[%s385 + $0x520] sm:$0xff]
          %716 = vst [vmem:[%s386 + $0x520] sm:$0xff] %v715
          %v717 = vld [vmem:[%s385 + $0x528] sm:$0xff]
          %718 = vst [vmem:[%s386 + $0x528] sm:$0xff] %v717
          %v719 = vld [vmem:[%s385 + $0x530] sm:$0xff]
          %720 = vst [vmem:[%s386 + $0x530] sm:$0xff] %v719
          %v721 = vld [vmem:[%s385 + $0x538] sm:$0xff]
          %722 = vst [vmem:[%s386 + $0x538] sm:$0xff] %v721
        $region79: #{map_encoder_forward.1} parent=73 // loop_footer
          %s384 = sadd.s32 1, %s380
        $region80: #{map_encoder_forward.1} parent=73 // loop_footer_branch
          %379 = sbr.rel target = $region76
        $region81: #{map_encoder_forward.1} parent=73 // loop_exit
          _
      $region74: #{map_encoder_forward.1} parent=58 // pred_fallthru
        _
      %p723 = pneg %p375
      // Predicated region
      $region82: #{map_encoder_forward.1} parent=58 // pred_check
        _
      $region83: #{map_encoder_forward.1} parent=58 // pred_check_branch
        %725 = sbr.rel (%p375) target = $region85
      $region84: #{map_encoder_forward.1} parent=58 // pred_region
        %s726 = sand.u32 1344, 7
      $region85: #{map_encoder_forward.1} parent=58 // pred_fallthru
        _
    $region59: #{map_encoder_forward.1} parent=1 // pred_fallthru
      _
    // Predicated region
    $region60: #{map_encoder_forward.1} parent=1 // pred_check
      %p359 = pneg %p355
    $region61: #{map_encoder_forward.1} parent=1 // pred_check_branch
      %361 = sbr.rel (%p359) target = $region63
    $region62: #{map_encoder_forward.1} parent=1 // pred_region
      %s362 = sshll.u32 1, 1344
      %s363 = ssub.s32 %s362, 1
      loop: start=0, step=1, limit=1
      $region64: #{map_encoder_forward.1} parent=62 // loop_pre_header
        _
      $region65: #{map_encoder_forward.1} parent=62 // loop_header
        %s365 = sphi 0, %s369
        %p366 = scmp.ge.s32.totalorder %s365, 1
        %s370 = sphi %s6, %s6
        %s371 = sphi [#allocation4], [#allocation4]
      $region66: #{map_encoder_forward.1} parent=62 // loop_header_branch
        %368 = sbr.rel (%p366) target = $region70
      $region67: #{map_encoder_forward.1} parent=62 // loop_body
        %v372 = vld [vmem:[%s370] sm:%s363]
        %373 = vst [vmem:[%s371] sm:%s363] %v372
      $region68: #{map_encoder_forward.1} parent=62 // loop_footer
        %s369 = sadd.s32 1, %s365
      $region69: #{map_encoder_forward.1} parent=62 // loop_footer_branch
        %364 = sbr.rel target = $region65
      $region70: #{map_encoder_forward.1} parent=62 // loop_exit
        _
    $region63: #{map_encoder_forward.1} parent=1 // pred_fallthru
      _
    // Predicated region
    $region86: #{map_encoder_forward.1} parent=1 // pred_check
      _
    $region87: #{map_encoder_forward.1} parent=1 // pred_check_branch
      %729 = sbr.rel (0) target = $region89
    $region88: #{map_encoder_forward.1} parent=1 // pred_region
      %730 = vsyncadd %s353, 21504
    $region89: #{map_encoder_forward.1} parent=1 // pred_fallthru
      _
    %v731 = vld [vmem:[%s0] sm:$0xf]
    %v732 = vld [vmem:[%s0 + $0x4] sm:$0xf]
    %v733 = vld [vmem:[%s0 + $0x8] sm:$0xf]
    %v734 = vld [vmem:[%s0 + $0xc] sm:$0xf]
    %v735 = vld [vmem:[%s0 + $0x10] sm:$0xf]
    %v736 = vld [vmem:[%s0 + $0x14] sm:$0xf]
    %v737 = vld [vmem:[%s0 + $0x18] sm:$0xf]
    %v738 = vld [vmem:[%s0 + $0x1c] sm:$0xf]
    %v739 = vld [vmem:[%s0 + $0x20] sm:$0xf]
    %v740 = vld [vmem:[%s0 + $0x24] sm:$0xf]
    %v741 = vld [vmem:[%s0 + $0x28] sm:$0xf]
    %v742 = vld [vmem:[%s0 + $0x2c] sm:$0xf]
    %v743 = vld [vmem:[%s0 + $0x30] sm:$0xf]
    %v744 = vld [vmem:[%s0 + $0x34] sm:$0xf]
    %v745 = vld [vmem:[%s0 + $0x38] sm:$0xf]
    %v746 = vld [vmem:[%s0 + $0x3c] sm:$0xf]
    %v747 = vld [vmem:[%s1] sm:$0xff]
    %v748 = vld [vmem:[%s1 + $0x8] sm:$0xff]
    %v749 = vld [vmem:[%s1 + $0x10] sm:$0xff]
    %v750 = vld [vmem:[%s1 + $0x18] sm:$0xff]
    %v751 = vld [vmem:[%s1 + $0x20] sm:$0xff]
    %v752 = vld [vmem:[%s1 + $0x28] sm:$0xff]
    %v753 = vld [vmem:[%s1 + $0x30] sm:$0xff]
    %v754 = vld [vmem:[%s1 + $0x38] sm:$0xff]
    %v755 = vld [vmem:[%s1 + $0x40] sm:$0xff]
    %v756 = vld [vmem:[%s1 + $0x48] sm:$0xff]
    %v757 = vld [vmem:[%s1 + $0x50] sm:$0xff]
    %v758 = vld [vmem:[%s1 + $0x58] sm:$0xff]
    %v759 = vld [vmem:[%s1 + $0x60] sm:$0xff]
    %v760 = vld [vmem:[%s1 + $0x68] sm:$0xff]
    %v761 = vld [vmem:[%s1 + $0x70] sm:$0xff]
    %v762 = vld [vmem:[%s1 + $0x78] sm:$0xff]
    %v763 = vld [vmem:[%s2] sm:$0x3]
    %v765 = vlaneseq
    %v766 = vshrl.u32 %v765, 7
    %v767 = vsub.s32 0, %v766
    %v768 = vrot.slane %v763, %v767
    %v769 = vlaneseq
    %v770 = vshrl.u32 %v769, 7
    %v771 = vsub.s32 1, %v770
    %v772 = vrot.slane %v763, %v771
    %v791 = vunpack.c.l.b16 %v731
    %v792 = vunpack.c.l.b16 %v732
    %v793 = vunpack.c.l.b16 %v733
    %v794 = vunpack.c.l.b16 %v734
    %v795 = vunpack.c.l.b16 %v735
    %v796 = vunpack.c.l.b16 %v736
    %v797 = vunpack.c.l.b16 %v737
    %v798 = vunpack.c.l.b16 %v738
    %v799 = vunpack.c.l.b16 %v739
    %v800 = vunpack.c.l.b16 %v740
    %v801 = vunpack.c.l.b16 %v741
    %v802 = vunpack.c.l.b16 %v742
    %v803 = vunpack.c.l.b16 %v743
    %v804 = vunpack.c.l.b16 %v744
    %v805 = vunpack.c.l.b16 %v745
    %v806 = vunpack.c.l.b16 %v746
    %v807 = vpack.c.b16 %v792, %v791
    %v808 = vpack.c.b16 %v794, %v793
    %v809 = vpack.c.b16 %v796, %v795
    %v810 = vpack.c.b16 %v798, %v797
    %v811 = vpack.c.b16 %v800, %v799
    %v812 = vpack.c.b16 %v802, %v801
    %v813 = vpack.c.b16 %v804, %v803
    %v814 = vpack.c.b16 %v806, %v805
    %v839 = vunpack.c.l.b16 %v747
    %v840 = vunpack.c.h.b16 %v747
    %v841 = vunpack.c.l.b16 %v748
    %v842 = vunpack.c.h.b16 %v748
    %v843 = vunpack.c.l.b16 %v749
    %v844 = vunpack.c.h.b16 %v749
    %v845 = vunpack.c.l.b16 %v750
    %v846 = vunpack.c.h.b16 %v750
    %v847 = vunpack.c.l.b16 %v751
    %v848 = vunpack.c.h.b16 %v751
    %v849 = vunpack.c.l.b16 %v752
    %v850 = vunpack.c.h.b16 %v752
    %v851 = vunpack.c.l.b16 %v753
    %v852 = vunpack.c.h.b16 %v753
    %v853 = vunpack.c.l.b16 %v754
    %v854 = vunpack.c.h.b16 %v754
    %v855 = vunpack.c.l.b16 %v755
    %v856 = vunpack.c.h.b16 %v755
    %v857 = vunpack.c.l.b16 %v756
    %v858 = vunpack.c.h.b16 %v756
    %v859 = vunpack.c.l.b16 %v757
    %v860 = vunpack.c.h.b16 %v757
    %v861 = vunpack.c.l.b16 %v758
    %v862 = vunpack.c.h.b16 %v758
    %v863 = vunpack.c.l.b16 %v759
    %v864 = vunpack.c.h.b16 %v759
    %v865 = vunpack.c.l.b16 %v760
    %v866 = vunpack.c.h.b16 %v760
    %v867 = vunpack.c.l.b16 %v761
    %v868 = vunpack.c.h.b16 %v761
    %v869 = vunpack.c.l.b16 %v762
    %v870 = vunpack.c.h.b16 %v762
    %v871 = vpack.c.b16 %v841, %v839
    %v872 = vpack.c.b16 %v842, %v840
    %v873 = vpack.c.b16 %v845, %v843
    %v874 = vpack.c.b16 %v846, %v844
    %v875 = vpack.c.b16 %v849, %v847
    %v876 = vpack.c.b16 %v850, %v848
    %v877 = vpack.c.b16 %v853, %v851
    %v878 = vpack.c.b16 %v854, %v852
    %v879 = vpack.c.b16 %v857, %v855
    %v880 = vpack.c.b16 %v858, %v856
    %v881 = vpack.c.b16 %v861, %v859
    %v882 = vpack.c.b16 %v862, %v860
    %v883 = vpack.c.b16 %v865, %v863
    %v884 = vpack.c.b16 %v866, %v864
    %v885 = vpack.c.b16 %v869, %v867
    %v886 = vpack.c.b16 %v870, %v868
    %903 = vmatprep.subr.bf16.mxu0 %v886
    %904 = vmatpush1.bf16.msra.mxu0 %v885
    %905 = vmatprep.subr.bf16.mxu0 %v884
    %906 = vmatpush1.bf16.msra.mxu0 %v883
    %907 = vmatprep.subr.bf16.mxu0 %v882
    %908 = vmatpush1.bf16.msra.mxu0 %v881
    %909 = vmatprep.subr.bf16.mxu0 %v880
    %910 = vmatpush1.bf16.msra.mxu0 %v879
    %911 = vmatprep.subr.bf16.mxu0 %v878
    %912 = vmatpush1.bf16.msra.mxu0 %v877
    %913 = vmatprep.subr.bf16.mxu0 %v876
    %914 = vmatpush1.bf16.msra.mxu0 %v875
    %915 = vmatprep.subr.bf16.mxu0 %v874
    %916 = vmatpush1.bf16.msra.mxu0 %v873
    %917 = vmatprep.subr.bf16.mxu0 %v872
    %918 = vmatpush1.bf16.msra.mxu0 %v871
    %919 = vmatprep.subr.bf16.mxu0 0
    %920 = vmatpush2.bf16.msra.mxu0 0
    %921 = vmatprep.subr.bf16.mxu0 0
    %922 = vmatpush2.bf16.msra.mxu0 0
    %923 = vmatprep.subr.bf16.mxu0 0
    %924 = vmatpush2.bf16.msra.mxu0 0
    %925 = vmatprep.subr.bf16.mxu0 0
    %926 = vmatpush2.bf16.msra.mxu0 0
    %927 = vmatprep.subr.bf16.mxu0 0
    %928 = vmatpush2.bf16.msra.mxu0 0
    %929 = vmatprep.subr.bf16.mxu0 0
    %930 = vmatpush2.bf16.msra.mxu0 0
    %931 = vmatprep.subr.bf16.mxu0 0
    %932 = vmatpush2.bf16.msra.mxu0 0
    %933 = vmatprep.subr.bf16.mxu0 0
    %934 = vmatpush2.bf16.msra.mxu0 0
    %935 = vmatprep.mubr.bf16.mxu0 0
    %936 = vmatmul.mubr.bf16.gmra.mxu0 %v807
    %v937 = vpop.f32.mrf.mxu0
    %v938 = vadd.f32 %v768, %v937
    %v939 = vpop.f32.mrf.mxu0
    %v940 = vadd.f32 %v772, %v939
    %v941 = vpop.f32.mrf.mxu0
    %v942 = vadd.f32 %v768, %v941
    %v943 = vpop.f32.mrf.mxu0
    %v944 = vadd.f32 %v772, %v943
    %945 = vmatprep.mubr.bf16.mxu0 0
    %946 = vmatmul.mubr.bf16.gmra.mxu0 %v808
    %v947 = vpop.f32.mrf.mxu0
    %v948 = vadd.f32 %v768, %v947
    %v949 = vpop.f32.mrf.mxu0
    %v950 = vadd.f32 %v772, %v949
    %v951 = vpop.f32.mrf.mxu0
    %v952 = vadd.f32 %v768, %v951
    %v953 = vpop.f32.mrf.mxu0
    %v954 = vadd.f32 %v772, %v953
    %955 = vmatprep.mubr.bf16.mxu0 0
    %956 = vmatmul.mubr.bf16.gmra.mxu0 %v809
    %v957 = vpop.f32.mrf.mxu0
    %v958 = vadd.f32 %v768, %v957
    %v959 = vpop.f32.mrf.mxu0
    %v960 = vadd.f32 %v772, %v959
    %v961 = vpop.f32.mrf.mxu0
    %v962 = vadd.f32 %v768, %v961
    %v963 = vpop.f32.mrf.mxu0
    %v964 = vadd.f32 %v772, %v963
    %965 = vmatprep.mubr.bf16.mxu0 0
    %966 = vmatmul.mubr.bf16.gmra.mxu0 %v810
    %v967 = vpop.f32.mrf.mxu0
    %v968 = vadd.f32 %v768, %v967
    %v969 = vpop.f32.mrf.mxu0
    %v970 = vadd.f32 %v772, %v969
    %v971 = vpop.f32.mrf.mxu0
    %v972 = vadd.f32 %v768, %v971
    %v973 = vpop.f32.mrf.mxu0
    %v974 = vadd.f32 %v772, %v973
    %975 = vmatprep.mubr.bf16.mxu0 0
    %976 = vmatmul.mubr.bf16.gmra.mxu0 %v811
    %v977 = vpop.f32.mrf.mxu0
    %v978 = vadd.f32 %v768, %v977
    %v979 = vpop.f32.mrf.mxu0
    %v980 = vadd.f32 %v772, %v979
    %v981 = vpop.f32.mrf.mxu0
    %v982 = vadd.f32 %v768, %v981
    %v983 = vpop.f32.mrf.mxu0
    %v984 = vadd.f32 %v772, %v983
    %985 = vmatprep.mubr.bf16.mxu0 0
    %986 = vmatmul.mubr.bf16.gmra.mxu0 %v812
    %v987 = vpop.f32.mrf.mxu0
    %v988 = vadd.f32 %v768, %v987
    %v989 = vpop.f32.mrf.mxu0
    %v990 = vadd.f32 %v772, %v989
    %v991 = vpop.f32.mrf.mxu0
    %v992 = vadd.f32 %v768, %v991
    %v993 = vpop.f32.mrf.mxu0
    %v994 = vadd.f32 %v772, %v993
    %995 = vmatprep.mubr.bf16.mxu0 0
    %996 = vmatmul.mubr.bf16.gmra.mxu0 %v813
    %v997 = vpop.f32.mrf.mxu0
    %v998 = vadd.f32 %v768, %v997
    %v999 = vpop.f32.mrf.mxu0
    %v1000 = vadd.f32 %v772, %v999
    %v1001 = vpop.f32.mrf.mxu0
    %v1002 = vadd.f32 %v768, %v1001
    %v1003 = vpop.f32.mrf.mxu0
    %v1004 = vadd.f32 %v772, %v1003
    %1005 = vmatprep.mubr.bf16.mxu0 0
    %1006 = vmatmul.mubr.bf16.gmra.mxu0 %v814
    %v1007 = vpop.f32.mrf.mxu0
    %v1008 = vadd.f32 %v768, %v1007
    %v1009 = vpop.f32.mrf.mxu0
    %v1010 = vadd.f32 %v772, %v1009
    %v1011 = vpop.f32.mrf.mxu0
    %v1012 = vadd.f32 %v768, %v1011
    %v1013 = vpop.f32.mrf.mxu0
    %v1014 = vadd.f32 %v772, %v1013
    %1015 = vdwg.mxu0
    %v1016 = vmax.f32 %v938, 0.0
    %v1017 = vmax.f32 %v940, 0.0
    %v1018 = vmax.f32 %v942, 0.0
    %v1019 = vmax.f32 %v944, 0.0
    %v1020 = vmax.f32 %v948, 0.0
    %v1021 = vmax.f32 %v950, 0.0
    %v1022 = vmax.f32 %v952, 0.0
    %v1023 = vmax.f32 %v954, 0.0
    %v1024 = vmax.f32 %v958, 0.0
    %v1025 = vmax.f32 %v960, 0.0
    %v1026 = vmax.f32 %v962, 0.0
    %v1027 = vmax.f32 %v964, 0.0
    %v1028 = vmax.f32 %v968, 0.0
    %v1029 = vmax.f32 %v970, 0.0
    %v1030 = vmax.f32 %v972, 0.0
    %v1031 = vmax.f32 %v974, 0.0
    %v1032 = vmax.f32 %v978, 0.0
    %v1033 = vmax.f32 %v980, 0.0
    %v1034 = vmax.f32 %v982, 0.0
    %v1035 = vmax.f32 %v984, 0.0
    %v1036 = vmax.f32 %v988, 0.0
    %v1037 = vmax.f32 %v990, 0.0
    %v1038 = vmax.f32 %v992, 0.0
    %v1039 = vmax.f32 %v994, 0.0
    %v1040 = vmax.f32 %v998, 0.0
    %v1041 = vmax.f32 %v1000, 0.0
    %v1042 = vmax.f32 %v1002, 0.0
    %v1043 = vmax.f32 %v1004, 0.0
    %v1044 = vmax.f32 %v1008, 0.0
    %v1045 = vmax.f32 %v1010, 0.0
    %v1046 = vmax.f32 %v1012, 0.0
    %v1047 = vmax.f32 %v1014, 0.0
    %1048 = vst [vmem:[#allocation2] sm:$0xff] %v1016
    %1049 = vst [vmem:[#allocation2 + $0x8] sm:$0xff] %v1017
    %1050 = vst [vmem:[#allocation2 + $0x10] sm:$0xff] %v1018
    %1051 = vst [vmem:[#allocation2 + $0x18] sm:$0xff] %v1019
    %1052 = vst [vmem:[#allocation2 + $0x20] sm:$0xff] %v1020
    %1053 = vst [vmem:[#allocation2 + $0x28] sm:$0xff] %v1021
    %1054 = vst [vmem:[#allocation2 + $0x30] sm:$0xff] %v1022
    %1055 = vst [vmem:[#allocation2 + $0x38] sm:$0xff] %v1023
    %1056 = vst [vmem:[#allocation2 + $0x40] sm:$0xff] %v1024
    %1057 = vst [vmem:[#allocation2 + $0x48] sm:$0xff] %v1025
    %1058 = vst [vmem:[#allocation2 + $0x50] sm:$0xff] %v1026
    %1059 = vst [vmem:[#allocation2 + $0x58] sm:$0xff] %v1027
    %1060 = vst [vmem:[#allocation2 + $0x60] sm:$0xff] %v1028
    %1061 = vst [vmem:[#allocation2 + $0x68] sm:$0xff] %v1029
    %1062 = vst [vmem:[#allocation2 + $0x70] sm:$0xff] %v1030
    %1063 = vst [vmem:[#allocation2 + $0x78] sm:$0xff] %v1031
    %1064 = vst [vmem:[#allocation2 + $0x80] sm:$0xff] %v1032
    %1065 = vst [vmem:[#allocation2 + $0x88] sm:$0xff] %v1033
    %1066 = vst [vmem:[#allocation2 + $0x90] sm:$0xff] %v1034
    %1067 = vst [vmem:[#allocation2 + $0x98] sm:$0xff] %v1035
    %1068 = vst [vmem:[#allocation2 + $0xa0] sm:$0xff] %v1036
    %1069 = vst [vmem:[#allocation2 + $0xa8] sm:$0xff] %v1037
    %1070 = vst [vmem:[#allocation2 + $0xb0] sm:$0xff] %v1038
    %1071 = vst [vmem:[#allocation2 + $0xb8] sm:$0xff] %v1039
    %1072 = vst [vmem:[#allocation2 + $0xc0] sm:$0xff] %v1040
    %1073 = vst [vmem:[#allocation2 + $0xc8] sm:$0xff] %v1041
    %1074 = vst [vmem:[#allocation2 + $0xd0] sm:$0xff] %v1042
    %1075 = vst [vmem:[#allocation2 + $0xd8] sm:$0xff] %v1043
    %1076 = vst [vmem:[#allocation2 + $0xe0] sm:$0xff] %v1044
    %1077 = vst [vmem:[#allocation2 + $0xe8] sm:$0xff] %v1045
    %1078 = vst [vmem:[#allocation2 + $0xf0] sm:$0xff] %v1046
    %1079 = vst [vmem:[#allocation2 + $0xf8] sm:$0xff] %v1047
    %s1080 = smul.u32 4, 9
    %s1081 = smul.u32 %s1080, 32
    %s1082 = smul.u32 %s1081, 1
    %s1083 = sshll.u32 %s1082, 4
    %1084 = dma.done [#allocation6], %s1083
    %v1085 = vld [vmem:[#allocation2] sm:$0xff]
    %v1086 = vld [vmem:[#allocation2 + $0x8] sm:$0xff]
    %v1087 = vld [vmem:[#allocation2 + $0x10] sm:$0xff]
    %v1088 = vld [vmem:[#allocation2 + $0x18] sm:$0xff]
    %v1089 = vld [vmem:[#allocation2 + $0x20] sm:$0xff]
    %v1090 = vld [vmem:[#allocation2 + $0x28] sm:$0xff]
    %v1091 = vld [vmem:[#allocation2 + $0x30] sm:$0xff]
    %v1092 = vld [vmem:[#allocation2 + $0x38] sm:$0xff]
    %v1093 = vld [vmem:[#allocation2 + $0x40] sm:$0xff]
    %v1094 = vld [vmem:[#allocation2 + $0x48] sm:$0xff]
    %v1095 = vld [vmem:[#allocation2 + $0x50] sm:$0xff]
    %v1096 = vld [vmem:[#allocation2 + $0x58] sm:$0xff]
    %v1097 = vld [vmem:[#allocation2 + $0x60] sm:$0xff]
    %v1098 = vld [vmem:[#allocation2 + $0x68] sm:$0xff]
    %v1099 = vld [vmem:[#allocation2 + $0x70] sm:$0xff]
    %v1100 = vld [vmem:[#allocation2 + $0x78] sm:$0xff]
    %v1101 = vld [vmem:[#allocation2 + $0x80] sm:$0xff]
    %v1102 = vld [vmem:[#allocation2 + $0x88] sm:$0xff]
    %v1103 = vld [vmem:[#allocation2 + $0x90] sm:$0xff]
    %v1104 = vld [vmem:[#allocation2 + $0x98] sm:$0xff]
    %v1105 = vld [vmem:[#allocation2 + $0xa0] sm:$0xff]
    %v1106 = vld [vmem:[#allocation2 + $0xa8] sm:$0xff]
    %v1107 = vld [vmem:[#allocation2 + $0xb0] sm:$0xff]
    %v1108 = vld [vmem:[#allocation2 + $0xb8] sm:$0xff]
    %v1109 = vld [vmem:[#allocation2 + $0xc0] sm:$0xff]
    %v1110 = vld [vmem:[#allocation2 + $0xc8] sm:$0xff]
    %v1111 = vpack.c.bf16 %v1087, %v1085
    %v1112 = vpack.c.bf16 %v1088, %v1086
    %v1113 = vpack.c.bf16 %v1091, %v1089
    %v1114 = vpack.c.bf16 %v1092, %v1090
    %v1115 = vpack.c.bf16 %v1095, %v1093
    %v1116 = vpack.c.bf16 %v1096, %v1094
    %v1117 = vpack.c.bf16 %v1099, %v1097
    %v1118 = vpack.c.bf16 %v1100, %v1098
    %v1119 = vpack.c.bf16 %v1103, %v1101
    %v1120 = vpack.c.bf16 %v1104, %v1102
    %v1121 = vpack.c.bf16 %v1107, %v1105
    %v1122 = vpack.c.bf16 %v1108, %v1106
    %v1123 = vpack.c.bf16 %v1109, %v1109
    %v1124 = vpack.c.bf16 %v1110, %v1110
    %v1125 = vld [vmem:[#allocation3] sm:$0xf]
    %v1126 = vld [vmem:[#allocation3 + $0x4] sm:$0xf]
    %v1127 = vld [vmem:[#allocation3 + $0x8] sm:$0xf]
    %v1128 = vld [vmem:[#allocation3 + $0xc] sm:$0xf]
    %v1129 = vld [vmem:[#allocation3 + $0x10] sm:$0xf]
    %v1130 = vld [vmem:[#allocation3 + $0x14] sm:$0xf]
    %v1131 = vld [vmem:[#allocation3 + $0x18] sm:$0xf]
    %v1132 = vld [vmem:[#allocation3 + $0x1c] sm:$0xf]
    %v1133 = vld [vmem:[#allocation3 + $0x20] sm:$0xf]
    %v1134 = vld [vmem:[#allocation3 + $0x24] sm:$0xf]
    %v1135 = vld [vmem:[#allocation3 + $0x28] sm:$0xf]
    %v1136 = vld [vmem:[#allocation3 + $0x2c] sm:$0xf]
    %v1137 = vld [vmem:[#allocation3 + $0x30] sm:$0xf]
    %v1138 = vld [vmem:[#allocation3 + $0x34] sm:$0xf]
    %v1139 = vld [vmem:[#allocation3 + $0x38] sm:$0xf]
    %v1140 = vld [vmem:[#allocation3 + $0x3c] sm:$0xf]
    %v1141 = vld [vmem:[#allocation3 + $0x40] sm:$0xf]
    %v1142 = vld [vmem:[#allocation3 + $0x44] sm:$0xf]
    %v1143 = vld [vmem:[#allocation3 + $0x48] sm:$0xf]
    %v1144 = vld [vmem:[#allocation3 + $0x4c] sm:$0xf]
    %v1145 = vld [vmem:[#allocation3 + $0x50] sm:$0xf]
    %v1146 = vld [vmem:[#allocation3 + $0x54] sm:$0xf]
    %v1147 = vld [vmem:[#allocation3 + $0x58] sm:$0xf]
    %v1148 = vld [vmem:[#allocation3 + $0x5c] sm:$0xf]
    %v1149 = vld [vmem:[#allocation3 + $0x60] sm:$0xf]
    %v1150 = vld [vmem:[#allocation3 + $0x64] sm:$0xf]
    %v1151 = vld [vmem:[#allocation3 + $0x68] sm:$0xf]
    %v1152 = vld [vmem:[#allocation3 + $0x6c] sm:$0xf]
    %v1153 = vld [vmem:[#allocation3 + $0x70] sm:$0xf]
    %v1154 = vld [vmem:[#allocation3 + $0x74] sm:$0xf]
    %v1155 = vld [vmem:[#allocation3 + $0x78] sm:$0xf]
    %v1156 = vld [vmem:[#allocation3 + $0x7c] sm:$0xf]
    %v1157 = vld [vmem:[#allocation2] sm:$0xfe]
    %v1158 = vld [vmem:[#allocation2 + $0x8] sm:$0xfe]
    %v1159 = vld [vmem:[#allocation2 + $0xd0] sm:$0x1]
    %v1160 = vld [vmem:[#allocation2 + $0xd8] sm:$0x1]
    %v1161 = vpack.c.bf16 %v1087, %v1157
    %v1162 = vpack.c.bf16 %v1088, %v1158
    %v1163 = vpack.c.bf16 %v1159, %v1109
    %v1164 = vpack.c.bf16 %v1160, %v1110
    %s1165 = scalar_lea.vmem [#allocation3], 128
    %v1166 = vld [vmem:[%s1165] sm:$0xf]
    %v1167 = vld [vmem:[%s1165 + $0x4] sm:$0xf]
    %v1168 = vld [vmem:[%s1165 + $0x8] sm:$0xf]
    %v1169 = vld [vmem:[%s1165 + $0xc] sm:$0xf]
    %v1170 = vld [vmem:[%s1165 + $0x10] sm:$0xf]
    %v1171 = vld [vmem:[%s1165 + $0x14] sm:$0xf]
    %v1172 = vld [vmem:[%s1165 + $0x18] sm:$0xf]
    %v1173 = vld [vmem:[%s1165 + $0x1c] sm:$0xf]
    %v1174 = vld [vmem:[%s1165 + $0x20] sm:$0xf]
    %v1175 = vld [vmem:[%s1165 + $0x24] sm:$0xf]
    %v1176 = vld [vmem:[%s1165 + $0x28] sm:$0xf]
    %v1177 = vld [vmem:[%s1165 + $0x2c] sm:$0xf]
    %v1178 = vld [vmem:[%s1165 + $0x30] sm:$0xf]
    %v1179 = vld [vmem:[%s1165 + $0x34] sm:$0xf]
    %v1180 = vld [vmem:[%s1165 + $0x38] sm:$0xf]
    %v1181 = vld [vmem:[%s1165 + $0x3c] sm:$0xf]
    %v1182 = vld [vmem:[%s1165 + $0x40] sm:$0xf]
    %v1183 = vld [vmem:[%s1165 + $0x44] sm:$0xf]
    %v1184 = vld [vmem:[%s1165 + $0x48] sm:$0xf]
    %v1185 = vld [vmem:[%s1165 + $0x4c] sm:$0xf]
    %v1186 = vld [vmem:[%s1165 + $0x50] sm:$0xf]
    %v1187 = vld [vmem:[%s1165 + $0x54] sm:$0xf]
    %v1188 = vld [vmem:[%s1165 + $0x58] sm:$0xf]
    %v1189 = vld [vmem:[%s1165 + $0x5c] sm:$0xf]
    %v1190 = vld [vmem:[%s1165 + $0x60] sm:$0xf]
    %v1191 = vld [vmem:[%s1165 + $0x64] sm:$0xf]
    %v1192 = vld [vmem:[%s1165 + $0x68] sm:$0xf]
    %v1193 = vld [vmem:[%s1165 + $0x6c] sm:$0xf]
    %v1194 = vld [vmem:[%s1165 + $0x70] sm:$0xf]
    %v1195 = vld [vmem:[%s1165 + $0x74] sm:$0xf]
    %v1196 = vld [vmem:[%s1165 + $0x78] sm:$0xf]
    %v1197 = vld [vmem:[%s1165 + $0x7c] sm:$0xf]
    %vm1198 = vsmask.f32 7424
    %v1200 = vshrl.u32 %v1161, 16
    %v1202 = vshll.u32 %v1161, 16
    %v1204 = vrot.slane %v1202, 1
    %v1205 = vor.u32 %v1200, %v1204
    %v1207 = vshll.u32 %v1113, 16
    %v1209 = vrot.slane %v1207, 1
    %v1210 = vsel %vm1198, %v1205, %v1209
    %v1212 = vshrl.u32 %v1162, 16
    %v1214 = vshll.u32 %v1162, 16
    %v1216 = vrot.slane %v1214, 1
    %v1217 = vor.u32 %v1212, %v1216
    %v1219 = vshll.u32 %v1114, 16
    %v1221 = vrot.slane %v1219, 1
    %v1222 = vsel %vm1198, %v1217, %v1221
    %v1223 = vshrl.u32 %v1113, 16
    %v1225 = vor.u32 %v1223, %v1209
    %v1227 = vshll.u32 %v1115, 16
    %v1229 = vrot.slane %v1227, 1
    %v1230 = vsel %vm1198, %v1225, %v1229
    %v1231 = vshrl.u32 %v1114, 16
    %v1233 = vor.u32 %v1231, %v1221
    %v1235 = vshll.u32 %v1116, 16
    %v1237 = vrot.slane %v1235, 1
    %v1238 = vsel %vm1198, %v1233, %v1237
    %v1239 = vshrl.u32 %v1115, 16
    %v1241 = vor.u32 %v1239, %v1229
    %v1243 = vshll.u32 %v1117, 16
    %v1245 = vrot.slane %v1243, 1
    %v1246 = vsel %vm1198, %v1241, %v1245
    %v1247 = vshrl.u32 %v1116, 16
    %v1249 = vor.u32 %v1247, %v1237
    %v1251 = vshll.u32 %v1118, 16
    %v1253 = vrot.slane %v1251, 1
    %v1254 = vsel %vm1198, %v1249, %v1253
    %v1255 = vshrl.u32 %v1117, 16
    %v1257 = vor.u32 %v1255, %v1245
    %v1259 = vshll.u32 %v1119, 16
    %v1261 = vrot.slane %v1259, 1
    %v1262 = vsel %vm1198, %v1257, %v1261
    %v1263 = vshrl.u32 %v1118, 16
    %v1265 = vor.u32 %v1263, %v1253
    %v1267 = vshll.u32 %v1120, 16
    %v1269 = vrot.slane %v1267, 1
    %v1270 = vsel %vm1198, %v1265, %v1269
    %v1271 = vshrl.u32 %v1119, 16
    %v1273 = vor.u32 %v1271, %v1261
    %v1275 = vshll.u32 %v1121, 16
    %v1277 = vrot.slane %v1275, 1
    %v1278 = vsel %vm1198, %v1273, %v1277
    %v1279 = vshrl.u32 %v1120, 16
    %v1281 = vor.u32 %v1279, %v1269
    %v1283 = vshll.u32 %v1122, 16
    %v1285 = vrot.slane %v1283, 1
    %v1286 = vsel %vm1198, %v1281, %v1285
    %v1287 = vshrl.u32 %v1121, 16
    %v1289 = vor.u32 %v1287, %v1277
    %v1291 = vshll.u32 %v1163, 16
    %v1293 = vrot.slane %v1291, 1
    %v1294 = vsel %vm1198, %v1289, %v1293
    %v1295 = vshrl.u32 %v1122, 16
    %v1297 = vor.u32 %v1295, %v1285
    %v1299 = vshll.u32 %v1164, 16
    %v1301 = vrot.slane %v1299, 1
    %v1302 = vsel %vm1198, %v1297, %v1301
    %v1303 = vshrl.u32 %v1163, 16
    %v1305 = vor.u32 %v1303, %v1293
    %v1306 = vshrl.u32 %v1164, 16
    %v1308 = vor.u32 %v1306, %v1301
    %v1355 = vunpack.c.l.b16 %v1166
    %v1356 = vunpack.c.l.b16 %v1167
    %v1357 = vunpack.c.l.b16 %v1168
    %v1358 = vunpack.c.l.b16 %v1169
    %v1359 = vunpack.c.l.b16 %v1170
    %v1360 = vunpack.c.l.b16 %v1171
    %v1361 = vunpack.c.l.b16 %v1172
    %v1362 = vunpack.c.l.b16 %v1173
    %v1363 = vunpack.c.l.b16 %v1174
    %v1364 = vunpack.c.l.b16 %v1175
    %v1365 = vunpack.c.l.b16 %v1176
    %v1366 = vunpack.c.l.b16 %v1177
    %v1367 = vunpack.c.l.b16 %v1178
    %v1368 = vunpack.c.l.b16 %v1179
    %v1369 = vunpack.c.l.b16 %v1180
    %v1370 = vunpack.c.l.b16 %v1181
    %v1371 = vunpack.c.l.b16 %v1182
    %v1372 = vunpack.c.l.b16 %v1183
    %v1373 = vunpack.c.l.b16 %v1184
    %v1374 = vunpack.c.l.b16 %v1185
    %v1375 = vunpack.c.l.b16 %v1186
    %v1376 = vunpack.c.l.b16 %v1187
    %v1377 = vunpack.c.l.b16 %v1188
    %v1378 = vunpack.c.l.b16 %v1189
    %v1379 = vunpack.c.l.b16 %v1190
    %v1380 = vunpack.c.l.b16 %v1191
    %v1381 = vunpack.c.l.b16 %v1192
    %v1382 = vunpack.c.l.b16 %v1193
    %v1383 = vunpack.c.l.b16 %v1194
    %v1384 = vunpack.c.l.b16 %v1195
    %v1385 = vunpack.c.l.b16 %v1196
    %v1386 = vunpack.c.l.b16 %v1197
    %v1387 = vpack.c.b16 %v1356, %v1355
    %v1388 = vpack.c.b16 %v1358, %v1357
    %v1389 = vpack.c.b16 %v1360, %v1359
    %v1390 = vpack.c.b16 %v1362, %v1361
    %v1391 = vpack.c.b16 %v1364, %v1363
    %v1392 = vpack.c.b16 %v1366, %v1365
    %v1393 = vpack.c.b16 %v1368, %v1367
    %v1394 = vpack.c.b16 %v1370, %v1369
    %v1395 = vpack.c.b16 %v1372, %v1371
    %v1396 = vpack.c.b16 %v1374, %v1373
    %v1397 = vpack.c.b16 %v1376, %v1375
    %v1398 = vpack.c.b16 %v1378, %v1377
    %v1399 = vpack.c.b16 %v1380, %v1379
    %v1400 = vpack.c.b16 %v1382, %v1381
    %v1401 = vpack.c.b16 %v1384, %v1383
    %v1402 = vpack.c.b16 %v1386, %v1385
    %1419 = vmatprep.subr.bf16.mxu0 0
    %1420 = vmatpush1.bf16.msra.mxu0 %v1394
    %1421 = vmatprep.subr.bf16.mxu0 0
    %1422 = vmatpush1.bf16.msra.mxu0 %v1393
    %1423 = vmatprep.subr.bf16.mxu0 0
    %1424 = vmatpush1.bf16.msra.mxu0 %v1392
    %1425 = vmatprep.subr.bf16.mxu0 0
    %1426 = vmatpush1.bf16.msra.mxu0 %v1391
    %1427 = vmatprep.subr.bf16.mxu0 0
    %1428 = vmatpush1.bf16.msra.mxu0 %v1390
    %1429 = vmatprep.subr.bf16.mxu0 0
    %1430 = vmatpush1.bf16.msra.mxu0 %v1389
    %1431 = vmatprep.subr.bf16.mxu0 0
    %1432 = vmatpush1.bf16.msra.mxu0 %v1388
    %1433 = vmatprep.subr.bf16.mxu0 0
    %1434 = vmatpush1.bf16.msra.mxu0 %v1387
    %1435 = vmatprep.subr.bf16.mxu0 0
    %1436 = vmatpush2.bf16.msra.mxu0 %v1402
    %1437 = vmatprep.subr.bf16.mxu0 0
    %1438 = vmatpush2.bf16.msra.mxu0 %v1401
    %1439 = vmatprep.subr.bf16.mxu0 0
    %1440 = vmatpush2.bf16.msra.mxu0 %v1400
    %1441 = vmatprep.subr.bf16.mxu0 0
    %1442 = vmatpush2.bf16.msra.mxu0 %v1399
    %1443 = vmatprep.subr.bf16.mxu0 0
    %1444 = vmatpush2.bf16.msra.mxu0 %v1398
    %1445 = vmatprep.subr.bf16.mxu0 0
    %1446 = vmatpush2.bf16.msra.mxu0 %v1397
    %1447 = vmatprep.subr.bf16.mxu0 0
    %1448 = vmatpush2.bf16.msra.mxu0 %v1396
    %1449 = vmatprep.subr.bf16.mxu0 0
    %1450 = vmatpush2.bf16.msra.mxu0 %v1395
    %1451 = vmatprep.mubr.bf16.mxu0 %v1222
    %1452 = vmatmul.mubr.bf16.gmra.mxu0 %v1210
    %v1453 = vpop.f32.mrf.mxu0
    %v1454 = vadd.f32 0.0, %v1453
    %v1455 = vpop.f32.mrf.mxu0
    %v1456 = vpop.f32.mrf.mxu0
    %v1457 = vadd.f32 0.0, %v1456
    %v1458 = vpop.f32.mrf.mxu0
    %1459 = vmatprep.mubr.bf16.mxu0 %v1238
    %1460 = vmatmul.mubr.bf16.gmra.mxu0 %v1230
    %v1461 = vpop.f32.mrf.mxu0
    %v1462 = vadd.f32 0.0, %v1461
    %v1463 = vpop.f32.mrf.mxu0
    %v1464 = vpop.f32.mrf.mxu0
    %v1465 = vadd.f32 0.0, %v1464
    %v1466 = vpop.f32.mrf.mxu0
    %1467 = vmatprep.mubr.bf16.mxu0 %v1254
    %1468 = vmatmul.mubr.bf16.gmra.mxu0 %v1246
    %v1469 = vpop.f32.mrf.mxu0
    %v1470 = vadd.f32 0.0, %v1469
    %v1471 = vpop.f32.mrf.mxu0
    %v1472 = vpop.f32.mrf.mxu0
    %v1473 = vadd.f32 0.0, %v1472
    %v1474 = vpop.f32.mrf.mxu0
    %1475 = vmatprep.mubr.bf16.mxu0 %v1270
    %1476 = vmatmul.mubr.bf16.gmra.mxu0 %v1262
    %v1477 = vpop.f32.mrf.mxu0
    %v1478 = vadd.f32 0.0, %v1477
    %v1479 = vpop.f32.mrf.mxu0
    %v1480 = vpop.f32.mrf.mxu0
    %v1481 = vadd.f32 0.0, %v1480
    %v1482 = vpop.f32.mrf.mxu0
    %1483 = vmatprep.mubr.bf16.mxu0 %v1286
    %1484 = vmatmul.mubr.bf16.gmra.mxu0 %v1278
    %v1485 = vpop.f32.mrf.mxu0
    %v1486 = vadd.f32 0.0, %v1485
    %v1487 = vpop.f32.mrf.mxu0
    %v1488 = vpop.f32.mrf.mxu0
    %v1489 = vadd.f32 0.0, %v1488
    %v1490 = vpop.f32.mrf.mxu0
    %1491 = vmatprep.mubr.bf16.mxu0 %v1302
    %1492 = vmatmul.mubr.bf16.gmra.mxu0 %v1294
    %v1493 = vpop.f32.mrf.mxu0
    %v1494 = vadd.f32 0.0, %v1493
    %v1495 = vpop.f32.mrf.mxu0
    %v1496 = vpop.f32.mrf.mxu0
    %v1497 = vadd.f32 0.0, %v1496
    %v1498 = vpop.f32.mrf.mxu0
    %1499 = vmatprep.mubr.bf16.mxu0 %v1308
    %1500 = vmatmul.mubr.bf16.gmra.mxu0 %v1305
    %v1501 = vpop.f32.mrf.mxu0
    %v1502 = vadd.f32 0.0, %v1501
    %v1503 = vpop.f32.mrf.mxu0
    %v1504 = vpop.f32.mrf.mxu0
    %v1505 = vpop.f32.mrf.mxu0
    %1506 = vdwg.mxu0
    %v1539 = vunpack.c.l.b16 %v1125
    %v1540 = vunpack.c.l.b16 %v1126
    %v1541 = vunpack.c.l.b16 %v1127
    %v1542 = vunpack.c.l.b16 %v1128
    %v1543 = vunpack.c.l.b16 %v1129
    %v1544 = vunpack.c.l.b16 %v1130
    %v1545 = vunpack.c.l.b16 %v1131
    %v1546 = vunpack.c.l.b16 %v1132
    %v1547 = vunpack.c.l.b16 %v1133
    %v1548 = vunpack.c.l.b16 %v1134
    %v1549 = vunpack.c.l.b16 %v1135
    %v1550 = vunpack.c.l.b16 %v1136
    %v1551 = vunpack.c.l.b16 %v1137
    %v1552 = vunpack.c.l.b16 %v1138
    %v1553 = vunpack.c.l.b16 %v1139
    %v1554 = vunpack.c.l.b16 %v1140
    %v1555 = vunpack.c.l.b16 %v1141
    %v1556 = vunpack.c.l.b16 %v1142
    %v1557 = vunpack.c.l.b16 %v1143
    %v1558 = vunpack.c.l.b16 %v1144
    %v1559 = vunpack.c.l.b16 %v1145
    %v1560 = vunpack.c.l.b16 %v1146
    %v1561 = vunpack.c.l.b16 %v1147
    %v1562 = vunpack.c.l.b16 %v1148
    %v1563 = vunpack.c.l.b16 %v1149
    %v1564 = vunpack.c.l.b16 %v1150
    %v1565 = vunpack.c.l.b16 %v1151
    %v1566 = vunpack.c.l.b16 %v1152
    %v1567 = vunpack.c.l.b16 %v1153
    %v1568 = vunpack.c.l.b16 %v1154
    %v1569 = vunpack.c.l.b16 %v1155
    %v1570 = vunpack.c.l.b16 %v1156
    %v1571 = vpack.c.b16 %v1540, %v1539
    %v1572 = vpack.c.b16 %v1542, %v1541
    %v1573 = vpack.c.b16 %v1544, %v1543
    %v1574 = vpack.c.b16 %v1546, %v1545
    %v1575 = vpack.c.b16 %v1548, %v1547
    %v1576 = vpack.c.b16 %v1550, %v1549
    %v1577 = vpack.c.b16 %v1552, %v1551
    %v1578 = vpack.c.b16 %v1554, %v1553
    %v1579 = vpack.c.b16 %v1556, %v1555
    %v1580 = vpack.c.b16 %v1558, %v1557
    %v1581 = vpack.c.b16 %v1560, %v1559
    %v1582 = vpack.c.b16 %v1562, %v1561
    %v1583 = vpack.c.b16 %v1564, %v1563
    %v1584 = vpack.c.b16 %v1566, %v1565
    %v1585 = vpack.c.b16 %v1568, %v1567
    %v1586 = vpack.c.b16 %v1570, %v1569
    %1603 = vmatprep.subr.bf16.mxu0 0
    %1604 = vmatpush1.bf16.msra.mxu0 %v1578
    %1605 = vmatprep.subr.bf16.mxu0 0
    %1606 = vmatpush1.bf16.msra.mxu0 %v1577
    %1607 = vmatprep.subr.bf16.mxu0 0
    %1608 = vmatpush1.bf16.msra.mxu0 %v1576
    %1609 = vmatprep.subr.bf16.mxu0 0
    %1610 = vmatpush1.bf16.msra.mxu0 %v1575
    %1611 = vmatprep.subr.bf16.mxu0 0
    %1612 = vmatpush1.bf16.msra.mxu0 %v1574
    %1613 = vmatprep.subr.bf16.mxu0 0
    %1614 = vmatpush1.bf16.msra.mxu0 %v1573
    %1615 = vmatprep.subr.bf16.mxu0 0
    %1616 = vmatpush1.bf16.msra.mxu0 %v1572
    %1617 = vmatprep.subr.bf16.mxu0 0
    %1618 = vmatpush1.bf16.msra.mxu0 %v1571
    %1619 = vmatprep.subr.bf16.mxu0 0
    %1620 = vmatpush2.bf16.msra.mxu0 %v1586
    %1621 = vmatprep.subr.bf16.mxu0 0
    %1622 = vmatpush2.bf16.msra.mxu0 %v1585
    %1623 = vmatprep.subr.bf16.mxu0 0
    %1624 = vmatpush2.bf16.msra.mxu0 %v1584
    %1625 = vmatprep.subr.bf16.mxu0 0
    %1626 = vmatpush2.bf16.msra.mxu0 %v1583
    %1627 = vmatprep.subr.bf16.mxu0 0
    %1628 = vmatpush2.bf16.msra.mxu0 %v1582
    %1629 = vmatprep.subr.bf16.mxu0 0
    %1630 = vmatpush2.bf16.msra.mxu0 %v1581
    %1631 = vmatprep.subr.bf16.mxu0 0
    %1632 = vmatpush2.bf16.msra.mxu0 %v1580
    %1633 = vmatprep.subr.bf16.mxu0 0
    %1634 = vmatpush2.bf16.msra.mxu0 %v1579
    %1635 = vmatprep.mubr.bf16.mxu0 %v1112
    %1636 = vmatmul.mubr.bf16.gmra.mxu0 %v1111
    %v1637 = vpop.f32.mrf.mxu0
    %v1638 = vadd.f32 %v1454, %v1637
    %v1639 = vpop.f32.mrf.mxu0
    %v1640 = vpop.f32.mrf.mxu0
    %v1641 = vadd.f32 %v1457, %v1640
    %v1642 = vpop.f32.mrf.mxu0
    %1643 = vmatprep.mubr.bf16.mxu0 %v1114
    %1644 = vmatmul.mubr.bf16.gmra.mxu0 %v1113
    %v1645 = vpop.f32.mrf.mxu0
    %v1646 = vadd.f32 %v1462, %v1645
    %v1647 = vpop.f32.mrf.mxu0
    %v1648 = vpop.f32.mrf.mxu0
    %v1649 = vadd.f32 %v1465, %v1648
    %v1650 = vpop.f32.mrf.mxu0
    %1651 = vmatprep.mubr.bf16.mxu0 %v1116
    %1652 = vmatmul.mubr.bf16.gmra.mxu0 %v1115
    %v1653 = vpop.f32.mrf.mxu0
    %v1654 = vadd.f32 %v1470, %v1653
    %v1655 = vpop.f32.mrf.mxu0
    %v1656 = vpop.f32.mrf.mxu0
    %v1657 = vadd.f32 %v1473, %v1656
    %v1658 = vpop.f32.mrf.mxu0
    %1659 = vmatprep.mubr.bf16.mxu0 %v1118
    %1660 = vmatmul.mubr.bf16.gmra.mxu0 %v1117
    %v1661 = vpop.f32.mrf.mxu0
    %v1662 = vadd.f32 %v1478, %v1661
    %v1663 = vpop.f32.mrf.mxu0
    %v1664 = vpop.f32.mrf.mxu0
    %v1665 = vadd.f32 %v1481, %v1664
    %v1666 = vpop.f32.mrf.mxu0
    %1667 = vmatprep.mubr.bf16.mxu0 %v1120
    %1668 = vmatmul.mubr.bf16.gmra.mxu0 %v1119
    %v1669 = vpop.f32.mrf.mxu0
    %v1670 = vadd.f32 %v1486, %v1669
    %v1671 = vpop.f32.mrf.mxu0
    %v1672 = vpop.f32.mrf.mxu0
    %v1673 = vadd.f32 %v1489, %v1672
    %v1674 = vpop.f32.mrf.mxu0
    %1675 = vmatprep.mubr.bf16.mxu0 %v1122
    %1676 = vmatmul.mubr.bf16.gmra.mxu0 %v1121
    %v1677 = vpop.f32.mrf.mxu0
    %v1678 = vadd.f32 %v1494, %v1677
    %v1679 = vpop.f32.mrf.mxu0
    %v1680 = vpop.f32.mrf.mxu0
    %v1681 = vadd.f32 %v1497, %v1680
    %v1682 = vpop.f32.mrf.mxu0
    %1683 = vmatprep.mubr.bf16.mxu0 %v1124
    %1684 = vmatmul.mubr.bf16.gmra.mxu0 %v1123
    %v1685 = vpop.f32.mrf.mxu0
    %v1686 = vadd.f32 %v1502, %v1685
    %v1687 = vpop.f32.mrf.mxu0
    %v1688 = vpop.f32.mrf.mxu0
    %v1689 = vpop.f32.mrf.mxu0
    %1690 = vdwg.mxu0
    %v1691 = vld [vmem:[#allocation2] sm:$0xfc]
    %v1692 = vld [vmem:[#allocation2 + $0x8] sm:$0xfc]
    %v1693 = vld [vmem:[#allocation2 + $0xd0] sm:$0x3]
    %v1694 = vld [vmem:[#allocation2 + $0xd8] sm:$0x3]
    %v1695 = vpack.c.bf16 %v1087, %v1691
    %v1696 = vpack.c.bf16 %v1088, %v1692
    %v1697 = vpack.c.bf16 %v1693, %v1109
    %v1698 = vpack.c.bf16 %v1694, %v1110
    %s1699 = scalar_lea.vmem [#allocation3], 256
    %v1700 = vld [vmem:[%s1699] sm:$0xf]
    %v1701 = vld [vmem:[%s1699 + $0x4] sm:$0xf]
    %v1702 = vld [vmem:[%s1699 + $0x8] sm:$0xf]
    %v1703 = vld [vmem:[%s1699 + $0xc] sm:$0xf]
    %v1704 = vld [vmem:[%s1699 + $0x10] sm:$0xf]
    %v1705 = vld [vmem:[%s1699 + $0x14] sm:$0xf]
    %v1706 = vld [vmem:[%s1699 + $0x18] sm:$0xf]
    %v1707 = vld [vmem:[%s1699 + $0x1c] sm:$0xf]
    %v1708 = vld [vmem:[%s1699 + $0x20] sm:$0xf]
    %v1709 = vld [vmem:[%s1699 + $0x24] sm:$0xf]
    %v1710 = vld [vmem:[%s1699 + $0x28] sm:$0xf]
    %v1711 = vld [vmem:[%s1699 + $0x2c] sm:$0xf]
    %v1712 = vld [vmem:[%s1699 + $0x30] sm:$0xf]
    %v1713 = vld [vmem:[%s1699 + $0x34] sm:$0xf]
    %v1714 = vld [vmem:[%s1699 + $0x38] sm:$0xf]
    %v1715 = vld [vmem:[%s1699 + $0x3c] sm:$0xf]
    %v1716 = vld [vmem:[%s1699 + $0x40] sm:$0xf]
    %v1717 = vld [vmem:[%s1699 + $0x44] sm:$0xf]
    %v1718 = vld [vmem:[%s1699 + $0x48] sm:$0xf]
    %v1719 = vld [vmem:[%s1699 + $0x4c] sm:$0xf]
    %v1720 = vld [vmem:[%s1699 + $0x50] sm:$0xf]
    %v1721 = vld [vmem:[%s1699 + $0x54] sm:$0xf]
    %v1722 = vld [vmem:[%s1699 + $0x58] sm:$0xf]
    %v1723 = vld [vmem:[%s1699 + $0x5c] sm:$0xf]
    %v1724 = vld [vmem:[%s1699 + $0x60] sm:$0xf]
    %v1725 = vld [vmem:[%s1699 + $0x64] sm:$0xf]
    %v1726 = vld [vmem:[%s1699 + $0x68] sm:$0xf]
    %v1727 = vld [vmem:[%s1699 + $0x6c] sm:$0xf]
    %v1728 = vld [vmem:[%s1699 + $0x70] sm:$0xf]
    %v1729 = vld [vmem:[%s1699 + $0x74] sm:$0xf]
    %v1730 = vld [vmem:[%s1699 + $0x78] sm:$0xf]
    %v1731 = vld [vmem:[%s1699 + $0x7c] sm:$0xf]
    %vm1746 = vcmask 1046528
    %v1747 = vrot.slane %v1695, 1
    %v1748 = vrot.slane %v1113, 1
    %v1749 = vsel %vm1746, %v1747, %v1748
    %v1750 = vrot.slane %v1696, 1
    %v1751 = vrot.slane %v1114, 1
    %v1752 = vsel %vm1746, %v1750, %v1751
    %v1753 = vrot.slane %v1115, 1
    %v1754 = vsel %vm1746, %v1748, %v1753
    %v1755 = vrot.slane %v1116, 1
    %v1756 = vsel %vm1746, %v1751, %v1755
    %v1757 = vrot.slane %v1117, 1
    %v1758 = vsel %vm1746, %v1753, %v1757
    %v1759 = vrot.slane %v1118, 1
    %v1760 = vsel %vm1746, %v1755, %v1759
    %v1761 = vrot.slane %v1119, 1
    %v1762 = vsel %vm1746, %v1757, %v1761
    %v1763 = vrot.slane %v1120, 1
    %v1764 = vsel %vm1746, %v1759, %v1763
    %v1765 = vrot.slane %v1121, 1
    %v1766 = vsel %vm1746, %v1761, %v1765
    %v1767 = vrot.slane %v1122, 1
    %v1768 = vsel %vm1746, %v1763, %v1767
    %v1769 = vrot.slane %v1697, 1
    %v1770 = vsel %vm1746, %v1765, %v1769
    %v1771 = vrot.slane %v1698, 1
    %v1772 = vsel %vm1746, %v1767, %v1771
    %v1819 = vunpack.c.l.b16 %v1700
    %v1820 = vunpack.c.l.b16 %v1701
    %v1821 = vunpack.c.l.b16 %v1702
    %v1822 = vunpack.c.l.b16 %v1703
    %v1823 = vunpack.c.l.b16 %v1704
    %v1824 = vunpack.c.l.b16 %v1705
    %v1825 = vunpack.c.l.b16 %v1706
    %v1826 = vunpack.c.l.b16 %v1707
    %v1827 = vunpack.c.l.b16 %v1708
    %v1828 = vunpack.c.l.b16 %v1709
    %v1829 = vunpack.c.l.b16 %v1710
    %v1830 = vunpack.c.l.b16 %v1711
    %v1831 = vunpack.c.l.b16 %v1712
    %v1832 = vunpack.c.l.b16 %v1713
    %v1833 = vunpack.c.l.b16 %v1714
    %v1834 = vunpack.c.l.b16 %v1715
    %v1835 = vunpack.c.l.b16 %v1716
    %v1836 = vunpack.c.l.b16 %v1717
    %v1837 = vunpack.c.l.b16 %v1718
    %v1838 = vunpack.c.l.b16 %v1719
    %v1839 = vunpack.c.l.b16 %v1720
    %v1840 = vunpack.c.l.b16 %v1721
    %v1841 = vunpack.c.l.b16 %v1722
    %v1842 = vunpack.c.l.b16 %v1723
    %v1843 = vunpack.c.l.b16 %v1724
    %v1844 = vunpack.c.l.b16 %v1725
    %v1845 = vunpack.c.l.b16 %v1726
    %v1846 = vunpack.c.l.b16 %v1727
    %v1847 = vunpack.c.l.b16 %v1728
    %v1848 = vunpack.c.l.b16 %v1729
    %v1849 = vunpack.c.l.b16 %v1730
    %v1850 = vunpack.c.l.b16 %v1731
    %v1851 = vpack.c.b16 %v1820, %v1819
    %v1852 = vpack.c.b16 %v1822, %v1821
    %v1853 = vpack.c.b16 %v1824, %v1823
    %v1854 = vpack.c.b16 %v1826, %v1825
    %v1855 = vpack.c.b16 %v1828, %v1827
    %v1856 = vpack.c.b16 %v1830, %v1829
    %v1857 = vpack.c.b16 %v1832, %v1831
    %v1858 = vpack.c.b16 %v1834, %v1833
    %v1859 = vpack.c.b16 %v1836, %v1835
    %v1860 = vpack.c.b16 %v1838, %v1837
    %v1861 = vpack.c.b16 %v1840, %v1839
    %v1862 = vpack.c.b16 %v1842, %v1841
    %v1863 = vpack.c.b16 %v1844, %v1843
    %v1864 = vpack.c.b16 %v1846, %v1845
    %v1865 = vpack.c.b16 %v1848, %v1847
    %v1866 = vpack.c.b16 %v1850, %v1849
    %1883 = vmatprep.subr.bf16.mxu0 0
    %1884 = vmatpush1.bf16.msra.mxu0 %v1858
    %1885 = vmatprep.subr.bf16.mxu0 0
    %1886 = vmatpush1.bf16.msra.mxu0 %v1857
    %1887 = vmatprep.subr.bf16.mxu0 0
    %1888 = vmatpush1.bf16.msra.mxu0 %v1856
    %1889 = vmatprep.subr.bf16.mxu0 0
    %1890 = vmatpush1.bf16.msra.mxu0 %v1855
    %1891 = vmatprep.subr.bf16.mxu0 0
    %1892 = vmatpush1.bf16.msra.mxu0 %v1854
    %1893 = vmatprep.subr.bf16.mxu0 0
    %1894 = vmatpush1.bf16.msra.mxu0 %v1853
    %1895 = vmatprep.subr.bf16.mxu0 0
    %1896 = vmatpush1.bf16.msra.mxu0 %v1852
    %1897 = vmatprep.subr.bf16.mxu0 0
    %1898 = vmatpush1.bf16.msra.mxu0 %v1851
    %1899 = vmatprep.subr.bf16.mxu0 0
    %1900 = vmatpush2.bf16.msra.mxu0 %v1866
    %1901 = vmatprep.subr.bf16.mxu0 0
    %1902 = vmatpush2.bf16.msra.mxu0 %v1865
    %1903 = vmatprep.subr.bf16.mxu0 0
    %1904 = vmatpush2.bf16.msra.mxu0 %v1864
    %1905 = vmatprep.subr.bf16.mxu0 0
    %1906 = vmatpush2.bf16.msra.mxu0 %v1863
    %1907 = vmatprep.subr.bf16.mxu0 0
    %1908 = vmatpush2.bf16.msra.mxu0 %v1862
    %1909 = vmatprep.subr.bf16.mxu0 0
    %1910 = vmatpush2.bf16.msra.mxu0 %v1861
    %1911 = vmatprep.subr.bf16.mxu0 0
    %1912 = vmatpush2.bf16.msra.mxu0 %v1860
    %1913 = vmatprep.subr.bf16.mxu0 0
    %1914 = vmatpush2.bf16.msra.mxu0 %v1859
    %1915 = vmatprep.mubr.bf16.mxu0 %v1752
    %1916 = vmatmul.mubr.bf16.gmra.mxu0 %v1749
    %v1917 = vpop.f32.mrf.mxu0
    %v1918 = vadd.f32 0.0, %v1917
    %v1919 = vpop.f32.mrf.mxu0
    %v1920 = vpop.f32.mrf.mxu0
    %v1921 = vadd.f32 0.0, %v1920
    %v1922 = vpop.f32.mrf.mxu0
    %1923 = vmatprep.mubr.bf16.mxu0 %v1756
    %1924 = vmatmul.mubr.bf16.gmra.mxu0 %v1754
    %v1925 = vpop.f32.mrf.mxu0
    %v1926 = vadd.f32 0.0, %v1925
    %v1927 = vpop.f32.mrf.mxu0
    %v1928 = vpop.f32.mrf.mxu0
    %v1929 = vadd.f32 0.0, %v1928
    %v1930 = vpop.f32.mrf.mxu0
    %1931 = vmatprep.mubr.bf16.mxu0 %v1760
    %1932 = vmatmul.mubr.bf16.gmra.mxu0 %v1758
    %v1933 = vpop.f32.mrf.mxu0
    %v1934 = vadd.f32 0.0, %v1933
    %v1935 = vpop.f32.mrf.mxu0
    %v1936 = vpop.f32.mrf.mxu0
    %v1937 = vadd.f32 0.0, %v1936
    %v1938 = vpop.f32.mrf.mxu0
    %1939 = vmatprep.mubr.bf16.mxu0 %v1764
    %1940 = vmatmul.mubr.bf16.gmra.mxu0 %v1762
    %v1941 = vpop.f32.mrf.mxu0
    %v1942 = vadd.f32 0.0, %v1941
    %v1943 = vpop.f32.mrf.mxu0
    %v1944 = vpop.f32.mrf.mxu0
    %v1945 = vadd.f32 0.0, %v1944
    %v1946 = vpop.f32.mrf.mxu0
    %1947 = vmatprep.mubr.bf16.mxu0 %v1768
    %1948 = vmatmul.mubr.bf16.gmra.mxu0 %v1766
    %v1949 = vpop.f32.mrf.mxu0
    %v1950 = vadd.f32 0.0, %v1949
    %v1951 = vpop.f32.mrf.mxu0
    %v1952 = vpop.f32.mrf.mxu0
    %v1953 = vadd.f32 0.0, %v1952
    %v1954 = vpop.f32.mrf.mxu0
    %1955 = vmatprep.mubr.bf16.mxu0 %v1772
    %1956 = vmatmul.mubr.bf16.gmra.mxu0 %v1770
    %v1957 = vpop.f32.mrf.mxu0
    %v1958 = vadd.f32 0.0, %v1957
    %v1959 = vpop.f32.mrf.mxu0
    %v1960 = vpop.f32.mrf.mxu0
    %v1961 = vadd.f32 0.0, %v1960
    %v1962 = vpop.f32.mrf.mxu0
    %1963 = vmatprep.mubr.bf16.mxu0 %v1771
    %1964 = vmatmul.mubr.bf16.gmra.mxu0 %v1769
    %v1965 = vpop.f32.mrf.mxu0
    %v1966 = vadd.f32 0.0, %v1965
    %v1967 = vpop.f32.mrf.mxu0
    %v1968 = vpop.f32.mrf.mxu0
    %v1969 = vpop.f32.mrf.mxu0
    %1970 = vdwg.mxu0
    %v1971 = vadd.f32 %v1638, %v1918
    %v1972 = vadd.f32 %v1641, %v1921
    %v1973 = vadd.f32 %v1646, %v1926
    %v1974 = vadd.f32 %v1649, %v1929
    %v1975 = vadd.f32 %v1654, %v1934
    %v1976 = vadd.f32 %v1657, %v1937
    %v1977 = vadd.f32 %v1662, %v1942
    %v1978 = vadd.f32 %v1665, %v1945
    %v1979 = vadd.f32 %v1670, %v1950
    %v1980 = vadd.f32 %v1673, %v1953
    %v1981 = vadd.f32 %v1678, %v1958
    %v1982 = vadd.f32 %v1681, %v1961
    %v1983 = vadd.f32 %v1686, %v1966
    %v1984 = vld [vmem:[#allocation2 + $0x10] sm:$0xf8]
    %v1985 = vld [vmem:[#allocation2 + $0x18] sm:$0xf8]
    %v1986 = vld [vmem:[#allocation2 + $0x20] sm:$0xff]
    %v1987 = vld [vmem:[#allocation2 + $0x28] sm:$0xff]
    %v1988 = vld [vmem:[#allocation2 + $0x30] sm:$0xff]
    %v1989 = vld [vmem:[#allocation2 + $0x38] sm:$0xff]
    %v1990 = vld [vmem:[#allocation2 + $0x40] sm:$0xff]
    %v1991 = vld [vmem:[#allocation2 + $0x48] sm:$0xff]
    %v1992 = vld [vmem:[#allocation2 + $0x50] sm:$0xff]
    %v1993 = vld [vmem:[#allocation2 + $0x58] sm:$0xff]
    %v1994 = vld [vmem:[#allocation2 + $0x60] sm:$0xff]
    %v1995 = vld [vmem:[#allocation2 + $0x68] sm:$0xff]
    %v1996 = vld [vmem:[#allocation2 + $0x70] sm:$0xff]
    %v1997 = vld [vmem:[#allocation2 + $0x78] sm:$0xff]
    %v1998 = vld [vmem:[#allocation2 + $0x80] sm:$0xff]
    %v1999 = vld [vmem:[#allocation2 + $0x88] sm:$0xff]
    %v2000 = vld [vmem:[#allocation2 + $0x90] sm:$0xff]
    %v2001 = vld [vmem:[#allocation2 + $0x98] sm:$0xff]
    %v2002 = vld [vmem:[#allocation2 + $0xa0] sm:$0xff]
    %v2003 = vld [vmem:[#allocation2 + $0xa8] sm:$0xff]
    %v2004 = vld [vmem:[#allocation2 + $0xb0] sm:$0xff]
    %v2005 = vld [vmem:[#allocation2 + $0xb8] sm:$0xff]
    %v2006 = vld [vmem:[#allocation2 + $0xc0] sm:$0xff]
    %v2007 = vld [vmem:[#allocation2 + $0xc8] sm:$0xff]
    %v2008 = vld [vmem:[#allocation2 + $0xd0] sm:$0xff]
    %v2009 = vld [vmem:[#allocation2 + $0xd8] sm:$0xff]
    %v2010 = vld [vmem:[#allocation2 + $0xe0] sm:$0x7]
    %v2011 = vld [vmem:[#allocation2 + $0xe8] sm:$0x7]
    %v2012 = vpack.c.bf16 %v1986, %v1984
    %v2013 = vpack.c.bf16 %v1987, %v1985
    %v2014 = vpack.c.bf16 %v1990, %v1988
    %v2015 = vpack.c.bf16 %v1991, %v1989
    %v2016 = vpack.c.bf16 %v1994, %v1992
    %v2017 = vpack.c.bf16 %v1995, %v1993
    %v2018 = vpack.c.bf16 %v1998, %v1996
    %v2019 = vpack.c.bf16 %v1999, %v1997
    %v2020 = vpack.c.bf16 %v2002, %v2000
    %v2021 = vpack.c.bf16 %v2003, %v2001
    %v2022 = vpack.c.bf16 %v2006, %v2004
    %v2023 = vpack.c.bf16 %v2007, %v2005
    %v2024 = vpack.c.bf16 %v2010, %v2008
    %v2025 = vpack.c.bf16 %v2011, %v2009
    %s2026 = scalar_lea.vmem [#allocation3], 384
    %v2027 = vld [vmem:[%s2026] sm:$0xf]
    %v2028 = vld [vmem:[%s2026 + $0x4] sm:$0xf]
    %v2029 = vld [vmem:[%s2026 + $0x8] sm:$0xf]
    %v2030 = vld [vmem:[%s2026 + $0xc] sm:$0xf]
    %v2031 = vld [vmem:[%s2026 + $0x10] sm:$0xf]
    %v2032 = vld [vmem:[%s2026 + $0x14] sm:$0xf]
    %v2033 = vld [vmem:[%s2026 + $0x18] sm:$0xf]
    %v2034 = vld [vmem:[%s2026 + $0x1c] sm:$0xf]
    %v2035 = vld [vmem:[%s2026 + $0x20] sm:$0xf]
    %v2036 = vld [vmem:[%s2026 + $0x24] sm:$0xf]
    %v2037 = vld [vmem:[%s2026 + $0x28] sm:$0xf]
    %v2038 = vld [vmem:[%s2026 + $0x2c] sm:$0xf]
    %v2039 = vld [vmem:[%s2026 + $0x30] sm:$0xf]
    %v2040 = vld [vmem:[%s2026 + $0x34] sm:$0xf]
    %v2041 = vld [vmem:[%s2026 + $0x38] sm:$0xf]
    %v2042 = vld [vmem:[%s2026 + $0x3c] sm:$0xf]
    %v2043 = vld [vmem:[%s2026 + $0x40] sm:$0xf]
    %v2044 = vld [vmem:[%s2026 + $0x44] sm:$0xf]
    %v2045 = vld [vmem:[%s2026 + $0x48] sm:$0xf]
    %v2046 = vld [vmem:[%s2026 + $0x4c] sm:$0xf]
    %v2047 = vld [vmem:[%s2026 + $0x50] sm:$0xf]
    %v2048 = vld [vmem:[%s2026 + $0x54] sm:$0xf]
    %v2049 = vld [vmem:[%s2026 + $0x58] sm:$0xf]
    %v2050 = vld [vmem:[%s2026 + $0x5c] sm:$0xf]
    %v2051 = vld [vmem:[%s2026 + $0x60] sm:$0xf]
    %v2052 = vld [vmem:[%s2026 + $0x64] sm:$0xf]
    %v2053 = vld [vmem:[%s2026 + $0x68] sm:$0xf]
    %v2054 = vld [vmem:[%s2026 + $0x6c] sm:$0xf]
    %v2055 = vld [vmem:[%s2026 + $0x70] sm:$0xf]
    %v2056 = vld [vmem:[%s2026 + $0x74] sm:$0xf]
    %v2057 = vld [vmem:[%s2026 + $0x78] sm:$0xf]
    %v2058 = vld [vmem:[%s2026 + $0x7c] sm:$0xf]
    %vm2059 = vsmask.f32 6400
    %v2061 = vshrl.u32 %v2012, 16
    %v2063 = vrot.slane %v2061, 1
    %v2064 = vshll.u32 %v2012, 16
    %v2066 = vrot.slane %v2064, 2
    %v2067 = vor.u32 %v2063, %v2066
    %v2069 = vshrl.u32 %v2014, 16
    %v2071 = vrot.slane %v2069, 1
    %v2072 = vshll.u32 %v2014, 16
    %v2074 = vrot.slane %v2072, 2
    %v2075 = vor.u32 %v2071, %v2074
    %v2076 = vsel %vm2059, %v2067, %v2075
    %v2078 = vshrl.u32 %v2013, 16
    %v2080 = vrot.slane %v2078, 1
    %v2081 = vshll.u32 %v2013, 16
    %v2083 = vrot.slane %v2081, 2
    %v2084 = vor.u32 %v2080, %v2083
    %v2086 = vshrl.u32 %v2015, 16
    %v2088 = vrot.slane %v2086, 1
    %v2089 = vshll.u32 %v2015, 16
    %v2091 = vrot.slane %v2089, 2
    %v2092 = vor.u32 %v2088, %v2091
    %v2093 = vsel %vm2059, %v2084, %v2092
    %v2095 = vshrl.u32 %v2016, 16
    %v2097 = vrot.slane %v2095, 1
    %v2098 = vshll.u32 %v2016, 16
    %v2100 = vrot.slane %v2098, 2
    %v2101 = vor.u32 %v2097, %v2100
    %v2102 = vsel %vm2059, %v2075, %v2101
    %v2104 = vshrl.u32 %v2017, 16
    %v2106 = vrot.slane %v2104, 1
    %v2107 = vshll.u32 %v2017, 16
    %v2109 = vrot.slane %v2107, 2
    %v2110 = vor.u32 %v2106, %v2109
    %v2111 = vsel %vm2059, %v2092, %v2110
    %v2113 = vshrl.u32 %v2018, 16
    %v2115 = vrot.slane %v2113, 1
    %v2116 = vshll.u32 %v2018, 16
    %v2118 = vrot.slane %v2116, 2
    %v2119 = vor.u32 %v2115, %v2118
    %v2120 = vsel %vm2059, %v2101, %v2119
    %v2122 = vshrl.u32 %v2019, 16
    %v2124 = vrot.slane %v2122, 1
    %v2125 = vshll.u32 %v2019, 16
    %v2127 = vrot.slane %v2125, 2
    %v2128 = vor.u32 %v2124, %v2127
    %v2129 = vsel %vm2059, %v2110, %v2128
    %v2131 = vshrl.u32 %v2020, 16
    %v2133 = vrot.slane %v2131, 1
    %v2134 = vshll.u32 %v2020, 16
    %v2136 = vrot.slane %v2134, 2
    %v2137 = vor.u32 %v2133, %v2136
    %v2138 = vsel %vm2059, %v2119, %v2137
    %v2140 = vshrl.u32 %v2021, 16
    %v2142 = vrot.slane %v2140, 1
    %v2143 = vshll.u32 %v2021, 16
    %v2145 = vrot.slane %v2143, 2
    %v2146 = vor.u32 %v2142, %v2145
    %v2147 = vsel %vm2059, %v2128, %v2146
    %v2149 = vshrl.u32 %v2022, 16
    %v2151 = vrot.slane %v2149, 1
    %v2152 = vshll.u32 %v2022, 16
    %v2154 = vrot.slane %v2152, 2
    %v2155 = vor.u32 %v2151, %v2154
    %v2156 = vsel %vm2059, %v2137, %v2155
    %v2158 = vshrl.u32 %v2023, 16
    %v2160 = vrot.slane %v2158, 1
    %v2161 = vshll.u32 %v2023, 16
    %v2163 = vrot.slane %v2161, 2
    %v2164 = vor.u32 %v2160, %v2163
    %v2165 = vsel %vm2059, %v2146, %v2164
    %v2167 = vshrl.u32 %v2024, 16
    %v2169 = vrot.slane %v2167, 1
    %v2170 = vshll.u32 %v2024, 16
    %v2172 = vrot.slane %v2170, 2
    %v2173 = vor.u32 %v2169, %v2172
    %v2174 = vsel %vm2059, %v2155, %v2173
    %v2176 = vshrl.u32 %v2025, 16
    %v2178 = vrot.slane %v2176, 1
    %v2179 = vshll.u32 %v2025, 16
    %v2181 = vrot.slane %v2179, 2
    %v2182 = vor.u32 %v2178, %v2181
    %v2183 = vsel %vm2059, %v2164, %v2182
    %v2230 = vunpack.c.l.b16 %v2027
    %v2231 = vunpack.c.l.b16 %v2028
    %v2232 = vunpack.c.l.b16 %v2029
    %v2233 = vunpack.c.l.b16 %v2030
    %v2234 = vunpack.c.l.b16 %v2031
    %v2235 = vunpack.c.l.b16 %v2032
    %v2236 = vunpack.c.l.b16 %v2033
    %v2237 = vunpack.c.l.b16 %v2034
    %v2238 = vunpack.c.l.b16 %v2035
    %v2239 = vunpack.c.l.b16 %v2036
    %v2240 = vunpack.c.l.b16 %v2037
    %v2241 = vunpack.c.l.b16 %v2038
    %v2242 = vunpack.c.l.b16 %v2039
    %v2243 = vunpack.c.l.b16 %v2040
    %v2244 = vunpack.c.l.b16 %v2041
    %v2245 = vunpack.c.l.b16 %v2042
    %v2246 = vunpack.c.l.b16 %v2043
    %v2247 = vunpack.c.l.b16 %v2044
    %v2248 = vunpack.c.l.b16 %v2045
    %v2249 = vunpack.c.l.b16 %v2046
    %v2250 = vunpack.c.l.b16 %v2047
    %v2251 = vunpack.c.l.b16 %v2048
    %v2252 = vunpack.c.l.b16 %v2049
    %v2253 = vunpack.c.l.b16 %v2050
    %v2254 = vunpack.c.l.b16 %v2051
    %v2255 = vunpack.c.l.b16 %v2052
    %v2256 = vunpack.c.l.b16 %v2053
    %v2257 = vunpack.c.l.b16 %v2054
    %v2258 = vunpack.c.l.b16 %v2055
    %v2259 = vunpack.c.l.b16 %v2056
    %v2260 = vunpack.c.l.b16 %v2057
    %v2261 = vunpack.c.l.b16 %v2058
    %v2262 = vpack.c.b16 %v2231, %v2230
    %v2263 = vpack.c.b16 %v2233, %v2232
    %v2264 = vpack.c.b16 %v2235, %v2234
    %v2265 = vpack.c.b16 %v2237, %v2236
    %v2266 = vpack.c.b16 %v2239, %v2238
    %v2267 = vpack.c.b16 %v2241, %v2240
    %v2268 = vpack.c.b16 %v2243, %v2242
    %v2269 = vpack.c.b16 %v2245, %v2244
    %v2270 = vpack.c.b16 %v2247, %v2246
    %v2271 = vpack.c.b16 %v2249, %v2248
    %v2272 = vpack.c.b16 %v2251, %v2250
    %v2273 = vpack.c.b16 %v2253, %v2252
    %v2274 = vpack.c.b16 %v2255, %v2254
    %v2275 = vpack.c.b16 %v2257, %v2256
    %v2276 = vpack.c.b16 %v2259, %v2258
    %v2277 = vpack.c.b16 %v2261, %v2260
    %2294 = vmatprep.subr.bf16.mxu0 0
    %2295 = vmatpush1.bf16.msra.mxu0 %v2269
    %2296 = vmatprep.subr.bf16.mxu0 0
    %2297 = vmatpush1.bf16.msra.mxu0 %v2268
    %2298 = vmatprep.subr.bf16.mxu0 0
    %2299 = vmatpush1.bf16.msra.mxu0 %v2267
    %2300 = vmatprep.subr.bf16.mxu0 0
    %2301 = vmatpush1.bf16.msra.mxu0 %v2266
    %2302 = vmatprep.subr.bf16.mxu0 0
    %2303 = vmatpush1.bf16.msra.mxu0 %v2265
    %2304 = vmatprep.subr.bf16.mxu0 0
    %2305 = vmatpush1.bf16.msra.mxu0 %v2264
    %2306 = vmatprep.subr.bf16.mxu0 0
    %2307 = vmatpush1.bf16.msra.mxu0 %v2263
    %2308 = vmatprep.subr.bf16.mxu0 0
    %2309 = vmatpush1.bf16.msra.mxu0 %v2262
    %2310 = vmatprep.subr.bf16.mxu0 0
    %2311 = vmatpush2.bf16.msra.mxu0 %v2277
    %2312 = vmatprep.subr.bf16.mxu0 0
    %2313 = vmatpush2.bf16.msra.mxu0 %v2276
    %2314 = vmatprep.subr.bf16.mxu0 0
    %2315 = vmatpush2.bf16.msra.mxu0 %v2275
    %2316 = vmatprep.subr.bf16.mxu0 0
    %2317 = vmatpush2.bf16.msra.mxu0 %v2274
    %2318 = vmatprep.subr.bf16.mxu0 0
    %2319 = vmatpush2.bf16.msra.mxu0 %v2273
    %2320 = vmatprep.subr.bf16.mxu0 0
    %2321 = vmatpush2.bf16.msra.mxu0 %v2272
    %2322 = vmatprep.subr.bf16.mxu0 0
    %2323 = vmatpush2.bf16.msra.mxu0 %v2271
    %2324 = vmatprep.subr.bf16.mxu0 0
    %2325 = vmatpush2.bf16.msra.mxu0 %v2270
    %2326 = vmatprep.mubr.bf16.mxu0 %v2093
    %2327 = vmatmul.mubr.bf16.gmra.mxu0 %v2076
    %v2328 = vpop.f32.mrf.mxu0
    %v2329 = vadd.f32 0.0, %v2328
    %v2330 = vpop.f32.mrf.mxu0
    %v2331 = vpop.f32.mrf.mxu0
    %v2332 = vadd.f32 0.0, %v2331
    %v2333 = vpop.f32.mrf.mxu0
    %2334 = vmatprep.mubr.bf16.mxu0 %v2111
    %2335 = vmatmul.mubr.bf16.gmra.mxu0 %v2102
    %v2336 = vpop.f32.mrf.mxu0
    %v2337 = vadd.f32 0.0, %v2336
    %v2338 = vpop.f32.mrf.mxu0
    %v2339 = vpop.f32.mrf.mxu0
    %v2340 = vadd.f32 0.0, %v2339
    %v2341 = vpop.f32.mrf.mxu0
    %2342 = vmatprep.mubr.bf16.mxu0 %v2129
    %2343 = vmatmul.mubr.bf16.gmra.mxu0 %v2120
    %v2344 = vpop.f32.mrf.mxu0
    %v2345 = vadd.f32 0.0, %v2344
    %v2346 = vpop.f32.mrf.mxu0
    %v2347 = vpop.f32.mrf.mxu0
    %v2348 = vadd.f32 0.0, %v2347
    %v2349 = vpop.f32.mrf.mxu0
    %2350 = vmatprep.mubr.bf16.mxu0 %v2147
    %2351 = vmatmul.mubr.bf16.gmra.mxu0 %v2138
    %v2352 = vpop.f32.mrf.mxu0
    %v2353 = vadd.f32 0.0, %v2352
    %v2354 = vpop.f32.mrf.mxu0
    %v2355 = vpop.f32.mrf.mxu0
    %v2356 = vadd.f32 0.0, %v2355
    %v2357 = vpop.f32.mrf.mxu0
    %2358 = vmatprep.mubr.bf16.mxu0 %v2165
    %2359 = vmatmul.mubr.bf16.gmra.mxu0 %v2156
    %v2360 = vpop.f32.mrf.mxu0
    %v2361 = vadd.f32 0.0, %v2360
    %v2362 = vpop.f32.mrf.mxu0
    %v2363 = vpop.f32.mrf.mxu0
    %v2364 = vadd.f32 0.0, %v2363
    %v2365 = vpop.f32.mrf.mxu0
    %2366 = vmatprep.mubr.bf16.mxu0 %v2183
    %2367 = vmatmul.mubr.bf16.gmra.mxu0 %v2174
    %v2368 = vpop.f32.mrf.mxu0
    %v2369 = vadd.f32 0.0, %v2368
    %v2370 = vpop.f32.mrf.mxu0
    %v2371 = vpop.f32.mrf.mxu0
    %v2372 = vadd.f32 0.0, %v2371
    %v2373 = vpop.f32.mrf.mxu0
    %2374 = vmatprep.mubr.bf16.mxu0 %v2182
    %2375 = vmatmul.mubr.bf16.gmra.mxu0 %v2173
    %v2376 = vpop.f32.mrf.mxu0
    %v2377 = vadd.f32 0.0, %v2376
    %v2378 = vpop.f32.mrf.mxu0
    %v2379 = vpop.f32.mrf.mxu0
    %v2380 = vpop.f32.mrf.mxu0
    %2381 = vdwg.mxu0
    %v2382 = vadd.f32 %v1971, %v2329
    %v2383 = vadd.f32 %v1972, %v2332
    %v2384 = vadd.f32 %v1973, %v2337
    %v2385 = vadd.f32 %v1974, %v2340
    %v2386 = vadd.f32 %v1975, %v2345
    %v2387 = vadd.f32 %v1976, %v2348
    %v2388 = vadd.f32 %v1977, %v2353
    %v2389 = vadd.f32 %v1978, %v2356
    %v2390 = vadd.f32 %v1979, %v2361
    %v2391 = vadd.f32 %v1980, %v2364
    %v2392 = vadd.f32 %v1981, %v2369
    %v2393 = vadd.f32 %v1982, %v2372
    %v2394 = vadd.f32 %v1983, %v2377
    %v2395 = vld [vmem:[#allocation2 + $0x10] sm:$0xf0]
    %v2396 = vld [vmem:[#allocation2 + $0x18] sm:$0xf0]
    %v2397 = vld [vmem:[#allocation2 + $0xe0] sm:$0xf]
    %v2398 = vld [vmem:[#allocation2 + $0xe8] sm:$0xf]
    %v2399 = vpack.c.bf16 %v1986, %v2395
    %v2400 = vpack.c.bf16 %v1987, %v2396
    %v2401 = vpack.c.bf16 %v2397, %v2008
    %v2402 = vpack.c.bf16 %v2398, %v2009
    %s2403 = scalar_lea.vmem [#allocation3], 512
    %v2404 = vld [vmem:[%s2403] sm:$0xf]
    %v2405 = vld [vmem:[%s2403 + $0x4] sm:$0xf]
    %v2406 = vld [vmem:[%s2403 + $0x8] sm:$0xf]
    %v2407 = vld [vmem:[%s2403 + $0xc] sm:$0xf]
    %v2408 = vld [vmem:[%s2403 + $0x10] sm:$0xf]
    %v2409 = vld [vmem:[%s2403 + $0x14] sm:$0xf]
    %v2410 = vld [vmem:[%s2403 + $0x18] sm:$0xf]
    %v2411 = vld [vmem:[%s2403 + $0x1c] sm:$0xf]
    %v2412 = vld [vmem:[%s2403 + $0x20] sm:$0xf]
    %v2413 = vld [vmem:[%s2403 + $0x24] sm:$0xf]
    %v2414 = vld [vmem:[%s2403 + $0x28] sm:$0xf]
    %v2415 = vld [vmem:[%s2403 + $0x2c] sm:$0xf]
    %v2416 = vld [vmem:[%s2403 + $0x30] sm:$0xf]
    %v2417 = vld [vmem:[%s2403 + $0x34] sm:$0xf]
    %v2418 = vld [vmem:[%s2403 + $0x38] sm:$0xf]
    %v2419 = vld [vmem:[%s2403 + $0x3c] sm:$0xf]
    %v2420 = vld [vmem:[%s2403 + $0x40] sm:$0xf]
    %v2421 = vld [vmem:[%s2403 + $0x44] sm:$0xf]
    %v2422 = vld [vmem:[%s2403 + $0x48] sm:$0xf]
    %v2423 = vld [vmem:[%s2403 + $0x4c] sm:$0xf]
    %v2424 = vld [vmem:[%s2403 + $0x50] sm:$0xf]
    %v2425 = vld [vmem:[%s2403 + $0x54] sm:$0xf]
    %v2426 = vld [vmem:[%s2403 + $0x58] sm:$0xf]
    %v2427 = vld [vmem:[%s2403 + $0x5c] sm:$0xf]
    %v2428 = vld [vmem:[%s2403 + $0x60] sm:$0xf]
    %v2429 = vld [vmem:[%s2403 + $0x64] sm:$0xf]
    %v2430 = vld [vmem:[%s2403 + $0x68] sm:$0xf]
    %v2431 = vld [vmem:[%s2403 + $0x6c] sm:$0xf]
    %v2432 = vld [vmem:[%s2403 + $0x70] sm:$0xf]
    %v2433 = vld [vmem:[%s2403 + $0x74] sm:$0xf]
    %v2434 = vld [vmem:[%s2403 + $0x78] sm:$0xf]
    %v2435 = vld [vmem:[%s2403 + $0x7c] sm:$0xf]
    %vm2450 = vcmask 1045504
    %v2451 = vrot.slane %v2399, 2
    %v2452 = vrot.slane %v2014, 2
    %v2453 = vsel %vm2450, %v2451, %v2452
    %v2454 = vrot.slane %v2400, 2
    %v2455 = vrot.slane %v2015, 2
    %v2456 = vsel %vm2450, %v2454, %v2455
    %v2457 = vrot.slane %v2016, 2
    %v2458 = vsel %vm2450, %v2452, %v2457
    %v2459 = vrot.slane %v2017, 2
    %v2460 = vsel %vm2450, %v2455, %v2459
    %v2461 = vrot.slane %v2018, 2
    %v2462 = vsel %vm2450, %v2457, %v2461
    %v2463 = vrot.slane %v2019, 2
    %v2464 = vsel %vm2450, %v2459, %v2463
    %v2465 = vrot.slane %v2020, 2
    %v2466 = vsel %vm2450, %v2461, %v2465
    %v2467 = vrot.slane %v2021, 2
    %v2468 = vsel %vm2450, %v2463, %v2467
    %v2469 = vrot.slane %v2022, 2
    %v2470 = vsel %vm2450, %v2465, %v2469
    %v2471 = vrot.slane %v2023, 2
    %v2472 = vsel %vm2450, %v2467, %v2471
    %v2473 = vrot.slane %v2401, 2
    %v2474 = vsel %vm2450, %v2469, %v2473
    %v2475 = vrot.slane %v2402, 2
    %v2476 = vsel %vm2450, %v2471, %v2475
    %v2523 = vunpack.c.l.b16 %v2404
    %v2524 = vunpack.c.l.b16 %v2405
    %v2525 = vunpack.c.l.b16 %v2406
    %v2526 = vunpack.c.l.b16 %v2407
    %v2527 = vunpack.c.l.b16 %v2408
    %v2528 = vunpack.c.l.b16 %v2409
    %v2529 = vunpack.c.l.b16 %v2410
    %v2530 = vunpack.c.l.b16 %v2411
    %v2531 = vunpack.c.l.b16 %v2412
    %v2532 = vunpack.c.l.b16 %v2413
    %v2533 = vunpack.c.l.b16 %v2414
    %v2534 = vunpack.c.l.b16 %v2415
    %v2535 = vunpack.c.l.b16 %v2416
    %v2536 = vunpack.c.l.b16 %v2417
    %v2537 = vunpack.c.l.b16 %v2418
    %v2538 = vunpack.c.l.b16 %v2419
    %v2539 = vunpack.c.l.b16 %v2420
    %v2540 = vunpack.c.l.b16 %v2421
    %v2541 = vunpack.c.l.b16 %v2422
    %v2542 = vunpack.c.l.b16 %v2423
    %v2543 = vunpack.c.l.b16 %v2424
    %v2544 = vunpack.c.l.b16 %v2425
    %v2545 = vunpack.c.l.b16 %v2426
    %v2546 = vunpack.c.l.b16 %v2427
    %v2547 = vunpack.c.l.b16 %v2428
    %v2548 = vunpack.c.l.b16 %v2429
    %v2549 = vunpack.c.l.b16 %v2430
    %v2550 = vunpack.c.l.b16 %v2431
    %v2551 = vunpack.c.l.b16 %v2432
    %v2552 = vunpack.c.l.b16 %v2433
    %v2553 = vunpack.c.l.b16 %v2434
    %v2554 = vunpack.c.l.b16 %v2435
    %v2555 = vpack.c.b16 %v2524, %v2523
    %v2556 = vpack.c.b16 %v2526, %v2525
    %v2557 = vpack.c.b16 %v2528, %v2527
    %v2558 = vpack.c.b16 %v2530, %v2529
    %v2559 = vpack.c.b16 %v2532, %v2531
    %v2560 = vpack.c.b16 %v2534, %v2533
    %v2561 = vpack.c.b16 %v2536, %v2535
    %v2562 = vpack.c.b16 %v2538, %v2537
    %v2563 = vpack.c.b16 %v2540, %v2539
    %v2564 = vpack.c.b16 %v2542, %v2541
    %v2565 = vpack.c.b16 %v2544, %v2543
    %v2566 = vpack.c.b16 %v2546, %v2545
    %v2567 = vpack.c.b16 %v2548, %v2547
    %v2568 = vpack.c.b16 %v2550, %v2549
    %v2569 = vpack.c.b16 %v2552, %v2551
    %v2570 = vpack.c.b16 %v2554, %v2553
    %2587 = vmatprep.subr.bf16.mxu0 0
    %2588 = vmatpush1.bf16.msra.mxu0 %v2562
    %2589 = vmatprep.subr.bf16.mxu0 0
    %2590 = vmatpush1.bf16.msra.mxu0 %v2561
    %2591 = vmatprep.subr.bf16.mxu0 0
    %2592 = vmatpush1.bf16.msra.mxu0 %v2560
    %2593 = vmatprep.subr.bf16.mxu0 0
    %2594 = vmatpush1.bf16.msra.mxu0 %v2559
    %2595 = vmatprep.subr.bf16.mxu0 0
    %2596 = vmatpush1.bf16.msra.mxu0 %v2558
    %2597 = vmatprep.subr.bf16.mxu0 0
    %2598 = vmatpush1.bf16.msra.mxu0 %v2557
    %2599 = vmatprep.subr.bf16.mxu0 0
    %2600 = vmatpush1.bf16.msra.mxu0 %v2556
    %2601 = vmatprep.subr.bf16.mxu0 0
    %2602 = vmatpush1.bf16.msra.mxu0 %v2555
    %2603 = vmatprep.subr.bf16.mxu0 0
    %2604 = vmatpush2.bf16.msra.mxu0 %v2570
    %2605 = vmatprep.subr.bf16.mxu0 0
    %2606 = vmatpush2.bf16.msra.mxu0 %v2569
    %2607 = vmatprep.subr.bf16.mxu0 0
    %2608 = vmatpush2.bf16.msra.mxu0 %v2568
    %2609 = vmatprep.subr.bf16.mxu0 0
    %2610 = vmatpush2.bf16.msra.mxu0 %v2567
    %2611 = vmatprep.subr.bf16.mxu0 0
    %2612 = vmatpush2.bf16.msra.mxu0 %v2566
    %2613 = vmatprep.subr.bf16.mxu0 0
    %2614 = vmatpush2.bf16.msra.mxu0 %v2565
    %2615 = vmatprep.subr.bf16.mxu0 0
    %2616 = vmatpush2.bf16.msra.mxu0 %v2564
    %2617 = vmatprep.subr.bf16.mxu0 0
    %2618 = vmatpush2.bf16.msra.mxu0 %v2563
    %2619 = vmatprep.mubr.bf16.mxu0 %v2456
    %2620 = vmatmul.mubr.bf16.gmra.mxu0 %v2453
    %v2621 = vpop.f32.mrf.mxu0
    %v2622 = vadd.f32 0.0, %v2621
    %v2623 = vpop.f32.mrf.mxu0
    %v2624 = vpop.f32.mrf.mxu0
    %v2625 = vadd.f32 0.0, %v2624
    %v2626 = vpop.f32.mrf.mxu0
    %2627 = vmatprep.mubr.bf16.mxu0 %v2460
    %2628 = vmatmul.mubr.bf16.gmra.mxu0 %v2458
    %v2629 = vpop.f32.mrf.mxu0
    %v2630 = vadd.f32 0.0, %v2629
    %v2631 = vpop.f32.mrf.mxu0
    %v2632 = vpop.f32.mrf.mxu0
    %v2633 = vadd.f32 0.0, %v2632
    %v2634 = vpop.f32.mrf.mxu0
    %2635 = vmatprep.mubr.bf16.mxu0 %v2464
    %2636 = vmatmul.mubr.bf16.gmra.mxu0 %v2462
    %v2637 = vpop.f32.mrf.mxu0
    %v2638 = vadd.f32 0.0, %v2637
    %v2639 = vpop.f32.mrf.mxu0
    %v2640 = vpop.f32.mrf.mxu0
    %v2641 = vadd.f32 0.0, %v2640
    %v2642 = vpop.f32.mrf.mxu0
    %2643 = vmatprep.mubr.bf16.mxu0 %v2468
    %2644 = vmatmul.mubr.bf16.gmra.mxu0 %v2466
    %v2645 = vpop.f32.mrf.mxu0
    %v2646 = vadd.f32 0.0, %v2645
    %v2647 = vpop.f32.mrf.mxu0
    %v2648 = vpop.f32.mrf.mxu0
    %v2649 = vadd.f32 0.0, %v2648
    %v2650 = vpop.f32.mrf.mxu0
    %2651 = vmatprep.mubr.bf16.mxu0 %v2472
    %2652 = vmatmul.mubr.bf16.gmra.mxu0 %v2470
    %v2653 = vpop.f32.mrf.mxu0
    %v2654 = vadd.f32 0.0, %v2653
    %v2655 = vpop.f32.mrf.mxu0
    %v2656 = vpop.f32.mrf.mxu0
    %v2657 = vadd.f32 0.0, %v2656
    %v2658 = vpop.f32.mrf.mxu0
    %2659 = vmatprep.mubr.bf16.mxu0 %v2476
    %2660 = vmatmul.mubr.bf16.gmra.mxu0 %v2474
    %v2661 = vpop.f32.mrf.mxu0
    %v2662 = vadd.f32 0.0, %v2661
    %v2663 = vpop.f32.mrf.mxu0
    %v2664 = vpop.f32.mrf.mxu0
    %v2665 = vadd.f32 0.0, %v2664
    %v2666 = vpop.f32.mrf.mxu0
    %2667 = vmatprep.mubr.bf16.mxu0 %v2475
    %2668 = vmatmul.mubr.bf16.gmra.mxu0 %v2473
    %v2669 = vpop.f32.mrf.mxu0
    %v2670 = vadd.f32 0.0, %v2669
    %v2671 = vpop.f32.mrf.mxu0
    %v2672 = vpop.f32.mrf.mxu0
    %v2673 = vpop.f32.mrf.mxu0
    %2674 = vdwg.mxu0
    %v2675 = vadd.f32 %v2382, %v2622
    %v2676 = vadd.f32 %v2383, %v2625
    %v2677 = vadd.f32 %v2384, %v2630
    %v2678 = vadd.f32 %v2385, %v2633
    %v2679 = vadd.f32 %v2386, %v2638
    %v2680 = vadd.f32 %v2387, %v2641
    %v2681 = vadd.f32 %v2388, %v2646
    %v2682 = vadd.f32 %v2389, %v2649
    %v2683 = vadd.f32 %v2390, %v2654
    %v2684 = vadd.f32 %v2391, %v2657
    %v2685 = vadd.f32 %v2392, %v2662
    %v2686 = vadd.f32 %v2393, %v2665
    %v2687 = vadd.f32 %v2394, %v2670
    %v2688 = vld [vmem:[#allocation2 + $0x10] sm:$0xe0]
    %v2689 = vld [vmem:[#allocation2 + $0x18] sm:$0xe0]
    %v2690 = vld [vmem:[#allocation2 + $0xe0] sm:$0x1f]
    %v2691 = vld [vmem:[#allocation2 + $0xe8] sm:$0x1f]
    %v2692 = vpack.c.bf16 %v1986, %v2688
    %v2693 = vpack.c.bf16 %v1987, %v2689
    %v2694 = vpack.c.bf16 %v2690, %v2008
    %v2695 = vpack.c.bf16 %v2691, %v2009
    %s2696 = scalar_lea.vmem [#allocation3], 640
    %v2697 = vld [vmem:[%s2696] sm:$0xf]
    %v2698 = vld [vmem:[%s2696 + $0x4] sm:$0xf]
    %v2699 = vld [vmem:[%s2696 + $0x8] sm:$0xf]
    %v2700 = vld [vmem:[%s2696 + $0xc] sm:$0xf]
    %v2701 = vld [vmem:[%s2696 + $0x10] sm:$0xf]
    %v2702 = vld [vmem:[%s2696 + $0x14] sm:$0xf]
    %v2703 = vld [vmem:[%s2696 + $0x18] sm:$0xf]
    %v2704 = vld [vmem:[%s2696 + $0x1c] sm:$0xf]
    %v2705 = vld [vmem:[%s2696 + $0x20] sm:$0xf]
    %v2706 = vld [vmem:[%s2696 + $0x24] sm:$0xf]
    %v2707 = vld [vmem:[%s2696 + $0x28] sm:$0xf]
    %v2708 = vld [vmem:[%s2696 + $0x2c] sm:$0xf]
    %v2709 = vld [vmem:[%s2696 + $0x30] sm:$0xf]
    %v2710 = vld [vmem:[%s2696 + $0x34] sm:$0xf]
    %v2711 = vld [vmem:[%s2696 + $0x38] sm:$0xf]
    %v2712 = vld [vmem:[%s2696 + $0x3c] sm:$0xf]
    %v2713 = vld [vmem:[%s2696 + $0x40] sm:$0xf]
    %v2714 = vld [vmem:[%s2696 + $0x44] sm:$0xf]
    %v2715 = vld [vmem:[%s2696 + $0x48] sm:$0xf]
    %v2716 = vld [vmem:[%s2696 + $0x4c] sm:$0xf]
    %v2717 = vld [vmem:[%s2696 + $0x50] sm:$0xf]
    %v2718 = vld [vmem:[%s2696 + $0x54] sm:$0xf]
    %v2719 = vld [vmem:[%s2696 + $0x58] sm:$0xf]
    %v2720 = vld [vmem:[%s2696 + $0x5c] sm:$0xf]
    %v2721 = vld [vmem:[%s2696 + $0x60] sm:$0xf]
    %v2722 = vld [vmem:[%s2696 + $0x64] sm:$0xf]
    %v2723 = vld [vmem:[%s2696 + $0x68] sm:$0xf]
    %v2724 = vld [vmem:[%s2696 + $0x6c] sm:$0xf]
    %v2725 = vld [vmem:[%s2696 + $0x70] sm:$0xf]
    %v2726 = vld [vmem:[%s2696 + $0x74] sm:$0xf]
    %v2727 = vld [vmem:[%s2696 + $0x78] sm:$0xf]
    %v2728 = vld [vmem:[%s2696 + $0x7c] sm:$0xf]
    %vm2729 = vsmask.f32 5376
    %v2731 = vshrl.u32 %v2692, 16
    %v2733 = vrot.slane %v2731, 2
    %v2734 = vshll.u32 %v2692, 16
    %v2736 = vrot.slane %v2734, 3
    %v2737 = vor.u32 %v2733, %v2736
    %v2738 = vrot.slane %v2069, 2
    %v2739 = vrot.slane %v2072, 3
    %v2740 = vor.u32 %v2738, %v2739
    %v2741 = vsel %vm2729, %v2737, %v2740
    %v2743 = vshrl.u32 %v2693, 16
    %v2745 = vrot.slane %v2743, 2
    %v2746 = vshll.u32 %v2693, 16
    %v2748 = vrot.slane %v2746, 3
    %v2749 = vor.u32 %v2745, %v2748
    %v2750 = vrot.slane %v2086, 2
    %v2751 = vrot.slane %v2089, 3
    %v2752 = vor.u32 %v2750, %v2751
    %v2753 = vsel %vm2729, %v2749, %v2752
    %v2754 = vrot.slane %v2095, 2
    %v2755 = vrot.slane %v2098, 3
    %v2756 = vor.u32 %v2754, %v2755
    %v2757 = vsel %vm2729, %v2740, %v2756
    %v2758 = vrot.slane %v2104, 2
    %v2759 = vrot.slane %v2107, 3
    %v2760 = vor.u32 %v2758, %v2759
    %v2761 = vsel %vm2729, %v2752, %v2760
    %v2762 = vrot.slane %v2113, 2
    %v2763 = vrot.slane %v2116, 3
    %v2764 = vor.u32 %v2762, %v2763
    %v2765 = vsel %vm2729, %v2756, %v2764
    %v2766 = vrot.slane %v2122, 2
    %v2767 = vrot.slane %v2125, 3
    %v2768 = vor.u32 %v2766, %v2767
    %v2769 = vsel %vm2729, %v2760, %v2768
    %v2770 = vrot.slane %v2131, 2
    %v2771 = vrot.slane %v2134, 3
    %v2772 = vor.u32 %v2770, %v2771
    %v2773 = vsel %vm2729, %v2764, %v2772
    %v2774 = vrot.slane %v2140, 2
    %v2775 = vrot.slane %v2143, 3
    %v2776 = vor.u32 %v2774, %v2775
    %v2777 = vsel %vm2729, %v2768, %v2776
    %v2778 = vrot.slane %v2149, 2
    %v2779 = vrot.slane %v2152, 3
    %v2780 = vor.u32 %v2778, %v2779
    %v2781 = vsel %vm2729, %v2772, %v2780
    %v2782 = vrot.slane %v2158, 2
    %v2783 = vrot.slane %v2161, 3
    %v2784 = vor.u32 %v2782, %v2783
    %v2785 = vsel %vm2729, %v2776, %v2784
    %v2787 = vshrl.u32 %v2694, 16
    %v2789 = vrot.slane %v2787, 2
    %v2790 = vshll.u32 %v2694, 16
    %v2792 = vrot.slane %v2790, 3
    %v2793 = vor.u32 %v2789, %v2792
    %v2794 = vsel %vm2729, %v2780, %v2793
    %v2796 = vshrl.u32 %v2695, 16
    %v2798 = vrot.slane %v2796, 2
    %v2799 = vshll.u32 %v2695, 16
    %v2801 = vrot.slane %v2799, 3
    %v2802 = vor.u32 %v2798, %v2801
    %v2803 = vsel %vm2729, %v2784, %v2802
    %v2850 = vunpack.c.l.b16 %v2697
    %v2851 = vunpack.c.l.b16 %v2698
    %v2852 = vunpack.c.l.b16 %v2699
    %v2853 = vunpack.c.l.b16 %v2700
    %v2854 = vunpack.c.l.b16 %v2701
    %v2855 = vunpack.c.l.b16 %v2702
    %v2856 = vunpack.c.l.b16 %v2703
    %v2857 = vunpack.c.l.b16 %v2704
    %v2858 = vunpack.c.l.b16 %v2705
    %v2859 = vunpack.c.l.b16 %v2706
    %v2860 = vunpack.c.l.b16 %v2707
    %v2861 = vunpack.c.l.b16 %v2708
    %v2862 = vunpack.c.l.b16 %v2709
    %v2863 = vunpack.c.l.b16 %v2710
    %v2864 = vunpack.c.l.b16 %v2711
    %v2865 = vunpack.c.l.b16 %v2712
    %v2866 = vunpack.c.l.b16 %v2713
    %v2867 = vunpack.c.l.b16 %v2714
    %v2868 = vunpack.c.l.b16 %v2715
    %v2869 = vunpack.c.l.b16 %v2716
    %v2870 = vunpack.c.l.b16 %v2717
    %v2871 = vunpack.c.l.b16 %v2718
    %v2872 = vunpack.c.l.b16 %v2719
    %v2873 = vunpack.c.l.b16 %v2720
    %v2874 = vunpack.c.l.b16 %v2721
    %v2875 = vunpack.c.l.b16 %v2722
    %v2876 = vunpack.c.l.b16 %v2723
    %v2877 = vunpack.c.l.b16 %v2724
    %v2878 = vunpack.c.l.b16 %v2725
    %v2879 = vunpack.c.l.b16 %v2726
    %v2880 = vunpack.c.l.b16 %v2727
    %v2881 = vunpack.c.l.b16 %v2728
    %v2882 = vpack.c.b16 %v2851, %v2850
    %v2883 = vpack.c.b16 %v2853, %v2852
    %v2884 = vpack.c.b16 %v2855, %v2854
    %v2885 = vpack.c.b16 %v2857, %v2856
    %v2886 = vpack.c.b16 %v2859, %v2858
    %v2887 = vpack.c.b16 %v2861, %v2860
    %v2888 = vpack.c.b16 %v2863, %v2862
    %v2889 = vpack.c.b16 %v2865, %v2864
    %v2890 = vpack.c.b16 %v2867, %v2866
    %v2891 = vpack.c.b16 %v2869, %v2868
    %v2892 = vpack.c.b16 %v2871, %v2870
    %v2893 = vpack.c.b16 %v2873, %v2872
    %v2894 = vpack.c.b16 %v2875, %v2874
    %v2895 = vpack.c.b16 %v2877, %v2876
    %v2896 = vpack.c.b16 %v2879, %v2878
    %v2897 = vpack.c.b16 %v2881, %v2880
    %2914 = vmatprep.subr.bf16.mxu0 0
    %2915 = vmatpush1.bf16.msra.mxu0 %v2889
    %2916 = vmatprep.subr.bf16.mxu0 0
    %2917 = vmatpush1.bf16.msra.mxu0 %v2888
    %2918 = vmatprep.subr.bf16.mxu0 0
    %2919 = vmatpush1.bf16.msra.mxu0 %v2887
    %2920 = vmatprep.subr.bf16.mxu0 0
    %2921 = vmatpush1.bf16.msra.mxu0 %v2886
    %2922 = vmatprep.subr.bf16.mxu0 0
    %2923 = vmatpush1.bf16.msra.mxu0 %v2885
    %2924 = vmatprep.subr.bf16.mxu0 0
    %2925 = vmatpush1.bf16.msra.mxu0 %v2884
    %2926 = vmatprep.subr.bf16.mxu0 0
    %2927 = vmatpush1.bf16.msra.mxu0 %v2883
    %2928 = vmatprep.subr.bf16.mxu0 0
    %2929 = vmatpush1.bf16.msra.mxu0 %v2882
    %2930 = vmatprep.subr.bf16.mxu0 0
    %2931 = vmatpush2.bf16.msra.mxu0 %v2897
    %2932 = vmatprep.subr.bf16.mxu0 0
    %2933 = vmatpush2.bf16.msra.mxu0 %v2896
    %2934 = vmatprep.subr.bf16.mxu0 0
    %2935 = vmatpush2.bf16.msra.mxu0 %v2895
    %2936 = vmatprep.subr.bf16.mxu0 0
    %2937 = vmatpush2.bf16.msra.mxu0 %v2894
    %2938 = vmatprep.subr.bf16.mxu0 0
    %2939 = vmatpush2.bf16.msra.mxu0 %v2893
    %2940 = vmatprep.subr.bf16.mxu0 0
    %2941 = vmatpush2.bf16.msra.mxu0 %v2892
    %2942 = vmatprep.subr.bf16.mxu0 0
    %2943 = vmatpush2.bf16.msra.mxu0 %v2891
    %2944 = vmatprep.subr.bf16.mxu0 0
    %2945 = vmatpush2.bf16.msra.mxu0 %v2890
    %2946 = vmatprep.mubr.bf16.mxu0 %v2753
    %2947 = vmatmul.mubr.bf16.gmra.mxu0 %v2741
    %v2948 = vpop.f32.mrf.mxu0
    %v2949 = vadd.f32 0.0, %v2948
    %v2950 = vpop.f32.mrf.mxu0
    %v2951 = vpop.f32.mrf.mxu0
    %v2952 = vadd.f32 0.0, %v2951
    %v2953 = vpop.f32.mrf.mxu0
    %2954 = vmatprep.mubr.bf16.mxu0 %v2761
    %2955 = vmatmul.mubr.bf16.gmra.mxu0 %v2757
    %v2956 = vpop.f32.mrf.mxu0
    %v2957 = vadd.f32 0.0, %v2956
    %v2958 = vpop.f32.mrf.mxu0
    %v2959 = vpop.f32.mrf.mxu0
    %v2960 = vadd.f32 0.0, %v2959
    %v2961 = vpop.f32.mrf.mxu0
    %2962 = vmatprep.mubr.bf16.mxu0 %v2769
    %2963 = vmatmul.mubr.bf16.gmra.mxu0 %v2765
    %v2964 = vpop.f32.mrf.mxu0
    %v2965 = vadd.f32 0.0, %v2964
    %v2966 = vpop.f32.mrf.mxu0
    %v2967 = vpop.f32.mrf.mxu0
    %v2968 = vadd.f32 0.0, %v2967
    %v2969 = vpop.f32.mrf.mxu0
    %2970 = vmatprep.mubr.bf16.mxu0 %v2777
    %2971 = vmatmul.mubr.bf16.gmra.mxu0 %v2773
    %v2972 = vpop.f32.mrf.mxu0
    %v2973 = vadd.f32 0.0, %v2972
    %v2974 = vpop.f32.mrf.mxu0
    %v2975 = vpop.f32.mrf.mxu0
    %v2976 = vadd.f32 0.0, %v2975
    %v2977 = vpop.f32.mrf.mxu0
    %2978 = vmatprep.mubr.bf16.mxu0 %v2785
    %2979 = vmatmul.mubr.bf16.gmra.mxu0 %v2781
    %v2980 = vpop.f32.mrf.mxu0
    %v2981 = vadd.f32 0.0, %v2980
    %v2982 = vpop.f32.mrf.mxu0
    %v2983 = vpop.f32.mrf.mxu0
    %v2984 = vadd.f32 0.0, %v2983
    %v2985 = vpop.f32.mrf.mxu0
    %2986 = vmatprep.mubr.bf16.mxu0 %v2803
    %2987 = vmatmul.mubr.bf16.gmra.mxu0 %v2794
    %v2988 = vpop.f32.mrf.mxu0
    %v2989 = vadd.f32 0.0, %v2988
    %v2990 = vpop.f32.mrf.mxu0
    %v2991 = vpop.f32.mrf.mxu0
    %v2992 = vadd.f32 0.0, %v2991
    %v2993 = vpop.f32.mrf.mxu0
    %2994 = vmatprep.mubr.bf16.mxu0 %v2802
    %2995 = vmatmul.mubr.bf16.gmra.mxu0 %v2793
    %v2996 = vpop.f32.mrf.mxu0
    %v2997 = vadd.f32 0.0, %v2996
    %v2998 = vpop.f32.mrf.mxu0
    %v2999 = vpop.f32.mrf.mxu0
    %v3000 = vpop.f32.mrf.mxu0
    %3001 = vdwg.mxu0
    %v3002 = vadd.f32 %v2675, %v2949
    %v3003 = vadd.f32 %v2676, %v2952
    %v3004 = vadd.f32 %v2677, %v2957
    %v3005 = vadd.f32 %v2678, %v2960
    %v3006 = vadd.f32 %v2679, %v2965
    %v3007 = vadd.f32 %v2680, %v2968
    %v3008 = vadd.f32 %v2681, %v2973
    %v3009 = vadd.f32 %v2682, %v2976
    %v3010 = vadd.f32 %v2683, %v2981
    %v3011 = vadd.f32 %v2684, %v2984
    %v3012 = vadd.f32 %v2685, %v2989
    %v3013 = vadd.f32 %v2686, %v2992
    %v3014 = vadd.f32 %v2687, %v2997
    %v3015 = vld [vmem:[#allocation2 + $0x20] sm:$0xc0]
    %v3016 = vld [vmem:[#allocation2 + $0x28] sm:$0xc0]
    %v3017 = vld [vmem:[#allocation2 + $0x30] sm:$0xff]
    %v3018 = vld [vmem:[#allocation2 + $0x38] sm:$0xff]
    %v3019 = vld [vmem:[#allocation2 + $0x40] sm:$0xff]
    %v3020 = vld [vmem:[#allocation2 + $0x48] sm:$0xff]
    %v3021 = vld [vmem:[#allocation2 + $0x50] sm:$0xff]
    %v3022 = vld [vmem:[#allocation2 + $0x58] sm:$0xff]
    %v3023 = vld [vmem:[#allocation2 + $0x60] sm:$0xff]
    %v3024 = vld [vmem:[#allocation2 + $0x68] sm:$0xff]
    %v3025 = vld [vmem:[#allocation2 + $0x70] sm:$0xff]
    %v3026 = vld [vmem:[#allocation2 + $0x78] sm:$0xff]
    %v3027 = vld [vmem:[#allocation2 + $0x80] sm:$0xff]
    %v3028 = vld [vmem:[#allocation2 + $0x88] sm:$0xff]
    %v3029 = vld [vmem:[#allocation2 + $0x90] sm:$0xff]
    %v3030 = vld [vmem:[#allocation2 + $0x98] sm:$0xff]
    %v3031 = vld [vmem:[#allocation2 + $0xa0] sm:$0xff]
    %v3032 = vld [vmem:[#allocation2 + $0xa8] sm:$0xff]
    %v3033 = vld [vmem:[#allocation2 + $0xb0] sm:$0xff]
    %v3034 = vld [vmem:[#allocation2 + $0xb8] sm:$0xff]
    %v3035 = vld [vmem:[#allocation2 + $0xc0] sm:$0xff]
    %v3036 = vld [vmem:[#allocation2 + $0xc8] sm:$0xff]
    %v3037 = vld [vmem:[#allocation2 + $0xd0] sm:$0xff]
    %v3038 = vld [vmem:[#allocation2 + $0xd8] sm:$0xff]
    %v3039 = vld [vmem:[#allocation2 + $0xe0] sm:$0xff]
    %v3040 = vld [vmem:[#allocation2 + $0xe8] sm:$0xff]
    %v3041 = vld [vmem:[#allocation2 + $0xf0] sm:$0x3f]
    %v3042 = vld [vmem:[#allocation2 + $0xf8] sm:$0x3f]
    %v3043 = vpack.c.bf16 %v3017, %v3015
    %v3044 = vpack.c.bf16 %v3018, %v3016
    %v3045 = vpack.c.bf16 %v3021, %v3019
    %v3046 = vpack.c.bf16 %v3022, %v3020
    %v3047 = vpack.c.bf16 %v3025, %v3023
    %v3048 = vpack.c.bf16 %v3026, %v3024
    %v3049 = vpack.c.bf16 %v3029, %v3027
    %v3050 = vpack.c.bf16 %v3030, %v3028
    %v3051 = vpack.c.bf16 %v3033, %v3031
    %v3052 = vpack.c.bf16 %v3034, %v3032
    %v3053 = vpack.c.bf16 %v3037, %v3035
    %v3054 = vpack.c.bf16 %v3038, %v3036
    %v3055 = vpack.c.bf16 %v3041, %v3039
    %v3056 = vpack.c.bf16 %v3042, %v3040
    %s3057 = scalar_lea.vmem [#allocation3], 768
    %v3058 = vld [vmem:[%s3057] sm:$0xf]
    %v3059 = vld [vmem:[%s3057 + $0x4] sm:$0xf]
    %v3060 = vld [vmem:[%s3057 + $0x8] sm:$0xf]
    %v3061 = vld [vmem:[%s3057 + $0xc] sm:$0xf]
    %v3062 = vld [vmem:[%s3057 + $0x10] sm:$0xf]
    %v3063 = vld [vmem:[%s3057 + $0x14] sm:$0xf]
    %v3064 = vld [vmem:[%s3057 + $0x18] sm:$0xf]
    %v3065 = vld [vmem:[%s3057 + $0x1c] sm:$0xf]
    %v3066 = vld [vmem:[%s3057 + $0x20] sm:$0xf]
    %v3067 = vld [vmem:[%s3057 + $0x24] sm:$0xf]
    %v3068 = vld [vmem:[%s3057 + $0x28] sm:$0xf]
    %v3069 = vld [vmem:[%s3057 + $0x2c] sm:$0xf]
    %v3070 = vld [vmem:[%s3057 + $0x30] sm:$0xf]
    %v3071 = vld [vmem:[%s3057 + $0x34] sm:$0xf]
    %v3072 = vld [vmem:[%s3057 + $0x38] sm:$0xf]
    %v3073 = vld [vmem:[%s3057 + $0x3c] sm:$0xf]
    %v3074 = vld [vmem:[%s3057 + $0x40] sm:$0xf]
    %v3075 = vld [vmem:[%s3057 + $0x44] sm:$0xf]
    %v3076 = vld [vmem:[%s3057 + $0x48] sm:$0xf]
    %v3077 = vld [vmem:[%s3057 + $0x4c] sm:$0xf]
    %v3078 = vld [vmem:[%s3057 + $0x50] sm:$0xf]
    %v3079 = vld [vmem:[%s3057 + $0x54] sm:$0xf]
    %v3080 = vld [vmem:[%s3057 + $0x58] sm:$0xf]
    %v3081 = vld [vmem:[%s3057 + $0x5c] sm:$0xf]
    %v3082 = vld [vmem:[%s3057 + $0x60] sm:$0xf]
    %v3083 = vld [vmem:[%s3057 + $0x64] sm:$0xf]
    %v3084 = vld [vmem:[%s3057 + $0x68] sm:$0xf]
    %v3085 = vld [vmem:[%s3057 + $0x6c] sm:$0xf]
    %v3086 = vld [vmem:[%s3057 + $0x70] sm:$0xf]
    %v3087 = vld [vmem:[%s3057 + $0x74] sm:$0xf]
    %v3088 = vld [vmem:[%s3057 + $0x78] sm:$0xf]
    %v3089 = vld [vmem:[%s3057 + $0x7c] sm:$0xf]
    %vm3104 = vcmask 1044480
    %v3105 = vrot.slane %v3043, 3
    %v3106 = vrot.slane %v3045, 3
    %v3107 = vsel %vm3104, %v3105, %v3106
    %v3108 = vrot.slane %v3044, 3
    %v3109 = vrot.slane %v3046, 3
    %v3110 = vsel %vm3104, %v3108, %v3109
    %v3111 = vrot.slane %v3047, 3
    %v3112 = vsel %vm3104, %v3106, %v3111
    %v3113 = vrot.slane %v3048, 3
    %v3114 = vsel %vm3104, %v3109, %v3113
    %v3115 = vrot.slane %v3049, 3
    %v3116 = vsel %vm3104, %v3111, %v3115
    %v3117 = vrot.slane %v3050, 3
    %v3118 = vsel %vm3104, %v3113, %v3117
    %v3119 = vrot.slane %v3051, 3
    %v3120 = vsel %vm3104, %v3115, %v3119
    %v3121 = vrot.slane %v3052, 3
    %v3122 = vsel %vm3104, %v3117, %v3121
    %v3123 = vrot.slane %v3053, 3
    %v3124 = vsel %vm3104, %v3119, %v3123
    %v3125 = vrot.slane %v3054, 3
    %v3126 = vsel %vm3104, %v3121, %v3125
    %v3127 = vrot.slane %v3055, 3
    %v3128 = vsel %vm3104, %v3123, %v3127
    %v3129 = vrot.slane %v3056, 3
    %v3130 = vsel %vm3104, %v3125, %v3129
    %v3177 = vunpack.c.l.b16 %v3058
    %v3178 = vunpack.c.l.b16 %v3059
    %v3179 = vunpack.c.l.b16 %v3060
    %v3180 = vunpack.c.l.b16 %v3061
    %v3181 = vunpack.c.l.b16 %v3062
    %v3182 = vunpack.c.l.b16 %v3063
    %v3183 = vunpack.c.l.b16 %v3064
    %v3184 = vunpack.c.l.b16 %v3065
    %v3185 = vunpack.c.l.b16 %v3066
    %v3186 = vunpack.c.l.b16 %v3067
    %v3187 = vunpack.c.l.b16 %v3068
    %v3188 = vunpack.c.l.b16 %v3069
    %v3189 = vunpack.c.l.b16 %v3070
    %v3190 = vunpack.c.l.b16 %v3071
    %v3191 = vunpack.c.l.b16 %v3072
    %v3192 = vunpack.c.l.b16 %v3073
    %v3193 = vunpack.c.l.b16 %v3074
    %v3194 = vunpack.c.l.b16 %v3075
    %v3195 = vunpack.c.l.b16 %v3076
    %v3196 = vunpack.c.l.b16 %v3077
    %v3197 = vunpack.c.l.b16 %v3078
    %v3198 = vunpack.c.l.b16 %v3079
    %v3199 = vunpack.c.l.b16 %v3080
    %v3200 = vunpack.c.l.b16 %v3081
    %v3201 = vunpack.c.l.b16 %v3082
    %v3202 = vunpack.c.l.b16 %v3083
    %v3203 = vunpack.c.l.b16 %v3084
    %v3204 = vunpack.c.l.b16 %v3085
    %v3205 = vunpack.c.l.b16 %v3086
    %v3206 = vunpack.c.l.b16 %v3087
    %v3207 = vunpack.c.l.b16 %v3088
    %v3208 = vunpack.c.l.b16 %v3089
    %v3209 = vpack.c.b16 %v3178, %v3177
    %v3210 = vpack.c.b16 %v3180, %v3179
    %v3211 = vpack.c.b16 %v3182, %v3181
    %v3212 = vpack.c.b16 %v3184, %v3183
    %v3213 = vpack.c.b16 %v3186, %v3185
    %v3214 = vpack.c.b16 %v3188, %v3187
    %v3215 = vpack.c.b16 %v3190, %v3189
    %v3216 = vpack.c.b16 %v3192, %v3191
    %v3217 = vpack.c.b16 %v3194, %v3193
    %v3218 = vpack.c.b16 %v3196, %v3195
    %v3219 = vpack.c.b16 %v3198, %v3197
    %v3220 = vpack.c.b16 %v3200, %v3199
    %v3221 = vpack.c.b16 %v3202, %v3201
    %v3222 = vpack.c.b16 %v3204, %v3203
    %v3223 = vpack.c.b16 %v3206, %v3205
    %v3224 = vpack.c.b16 %v3208, %v3207
    %3241 = vmatprep.subr.bf16.mxu0 0
    %3242 = vmatpush1.bf16.msra.mxu0 %v3216
    %3243 = vmatprep.subr.bf16.mxu0 0
    %3244 = vmatpush1.bf16.msra.mxu0 %v3215
    %3245 = vmatprep.subr.bf16.mxu0 0
    %3246 = vmatpush1.bf16.msra.mxu0 %v3214
    %3247 = vmatprep.subr.bf16.mxu0 0
    %3248 = vmatpush1.bf16.msra.mxu0 %v3213
    %3249 = vmatprep.subr.bf16.mxu0 0
    %3250 = vmatpush1.bf16.msra.mxu0 %v3212
    %3251 = vmatprep.subr.bf16.mxu0 0
    %3252 = vmatpush1.bf16.msra.mxu0 %v3211
    %3253 = vmatprep.subr.bf16.mxu0 0
    %3254 = vmatpush1.bf16.msra.mxu0 %v3210
    %3255 = vmatprep.subr.bf16.mxu0 0
    %3256 = vmatpush1.bf16.msra.mxu0 %v3209
    %3257 = vmatprep.subr.bf16.mxu0 0
    %3258 = vmatpush2.bf16.msra.mxu0 %v3224
    %3259 = vmatprep.subr.bf16.mxu0 0
    %3260 = vmatpush2.bf16.msra.mxu0 %v3223
    %3261 = vmatprep.subr.bf16.mxu0 0
    %3262 = vmatpush2.bf16.msra.mxu0 %v3222
    %3263 = vmatprep.subr.bf16.mxu0 0
    %3264 = vmatpush2.bf16.msra.mxu0 %v3221
    %3265 = vmatprep.subr.bf16.mxu0 0
    %3266 = vmatpush2.bf16.msra.mxu0 %v3220
    %3267 = vmatprep.subr.bf16.mxu0 0
    %3268 = vmatpush2.bf16.msra.mxu0 %v3219
    %3269 = vmatprep.subr.bf16.mxu0 0
    %3270 = vmatpush2.bf16.msra.mxu0 %v3218
    %3271 = vmatprep.subr.bf16.mxu0 0
    %3272 = vmatpush2.bf16.msra.mxu0 %v3217
    %3273 = vmatprep.mubr.bf16.mxu0 %v3110
    %3274 = vmatmul.mubr.bf16.gmra.mxu0 %v3107
    %v3275 = vpop.f32.mrf.mxu0
    %v3276 = vadd.f32 0.0, %v3275
    %v3277 = vpop.f32.mrf.mxu0
    %v3278 = vpop.f32.mrf.mxu0
    %v3279 = vadd.f32 0.0, %v3278
    %v3280 = vpop.f32.mrf.mxu0
    %3281 = vmatprep.mubr.bf16.mxu0 %v3114
    %3282 = vmatmul.mubr.bf16.gmra.mxu0 %v3112
    %v3283 = vpop.f32.mrf.mxu0
    %v3284 = vadd.f32 0.0, %v3283
    %v3285 = vpop.f32.mrf.mxu0
    %v3286 = vpop.f32.mrf.mxu0
    %v3287 = vadd.f32 0.0, %v3286
    %v3288 = vpop.f32.mrf.mxu0
    %3289 = vmatprep.mubr.bf16.mxu0 %v3118
    %3290 = vmatmul.mubr.bf16.gmra.mxu0 %v3116
    %v3291 = vpop.f32.mrf.mxu0
    %v3292 = vadd.f32 0.0, %v3291
    %v3293 = vpop.f32.mrf.mxu0
    %v3294 = vpop.f32.mrf.mxu0
    %v3295 = vadd.f32 0.0, %v3294
    %v3296 = vpop.f32.mrf.mxu0
    %3297 = vmatprep.mubr.bf16.mxu0 %v3122
    %3298 = vmatmul.mubr.bf16.gmra.mxu0 %v3120
    %v3299 = vpop.f32.mrf.mxu0
    %v3300 = vadd.f32 0.0, %v3299
    %v3301 = vpop.f32.mrf.mxu0
    %v3302 = vpop.f32.mrf.mxu0
    %v3303 = vadd.f32 0.0, %v3302
    %v3304 = vpop.f32.mrf.mxu0
    %3305 = vmatprep.mubr.bf16.mxu0 %v3126
    %3306 = vmatmul.mubr.bf16.gmra.mxu0 %v3124
    %v3307 = vpop.f32.mrf.mxu0
    %v3308 = vadd.f32 0.0, %v3307
    %v3309 = vpop.f32.mrf.mxu0
    %v3310 = vpop.f32.mrf.mxu0
    %v3311 = vadd.f32 0.0, %v3310
    %v3312 = vpop.f32.mrf.mxu0
    %3313 = vmatprep.mubr.bf16.mxu0 %v3130
    %3314 = vmatmul.mubr.bf16.gmra.mxu0 %v3128
    %v3315 = vpop.f32.mrf.mxu0
    %v3316 = vadd.f32 0.0, %v3315
    %v3317 = vpop.f32.mrf.mxu0
    %v3318 = vpop.f32.mrf.mxu0
    %v3319 = vadd.f32 0.0, %v3318
    %v3320 = vpop.f32.mrf.mxu0
    %3321 = vmatprep.mubr.bf16.mxu0 %v3129
    %3322 = vmatmul.mubr.bf16.gmra.mxu0 %v3127
    %v3323 = vpop.f32.mrf.mxu0
    %v3324 = vadd.f32 0.0, %v3323
    %v3325 = vpop.f32.mrf.mxu0
    %v3326 = vpop.f32.mrf.mxu0
    %v3327 = vpop.f32.mrf.mxu0
    %3328 = vdwg.mxu0
    %v3329 = vadd.f32 %v3002, %v3276
    %v3330 = vadd.f32 %v3003, %v3279
    %v3331 = vadd.f32 %v3004, %v3284
    %v3332 = vadd.f32 %v3005, %v3287
    %v3333 = vadd.f32 %v3006, %v3292
    %v3334 = vadd.f32 %v3007, %v3295
    %v3335 = vadd.f32 %v3008, %v3300
    %v3336 = vadd.f32 %v3009, %v3303
    %v3337 = vadd.f32 %v3010, %v3308
    %v3338 = vadd.f32 %v3011, %v3311
    %v3339 = vadd.f32 %v3012, %v3316
    %v3340 = vadd.f32 %v3013, %v3319
    %v3341 = vadd.f32 %v3014, %v3324
    %v3342 = vld [vmem:[#allocation2 + $0x20] sm:$0x80]
    %v3343 = vld [vmem:[#allocation2 + $0x28] sm:$0x80]
    %v3344 = vld [vmem:[#allocation2 + $0xf0] sm:$0x7f]
    %v3345 = vld [vmem:[#allocation2 + $0xf8] sm:$0x7f]
    %v3346 = vpack.c.bf16 %v3017, %v3342
    %v3347 = vpack.c.bf16 %v3018, %v3343
    %v3348 = vpack.c.bf16 %v3344, %v3039
    %v3349 = vpack.c.bf16 %v3345, %v3040
    %s3350 = scalar_lea.vmem [#allocation3], 896
    %v3351 = vld [vmem:[%s3350] sm:$0xf]
    %v3352 = vld [vmem:[%s3350 + $0x4] sm:$0xf]
    %v3353 = vld [vmem:[%s3350 + $0x8] sm:$0xf]
    %v3354 = vld [vmem:[%s3350 + $0xc] sm:$0xf]
    %v3355 = vld [vmem:[%s3350 + $0x10] sm:$0xf]
    %v3356 = vld [vmem:[%s3350 + $0x14] sm:$0xf]
    %v3357 = vld [vmem:[%s3350 + $0x18] sm:$0xf]
    %v3358 = vld [vmem:[%s3350 + $0x1c] sm:$0xf]
    %v3359 = vld [vmem:[%s3350 + $0x20] sm:$0xf]
    %v3360 = vld [vmem:[%s3350 + $0x24] sm:$0xf]
    %v3361 = vld [vmem:[%s3350 + $0x28] sm:$0xf]
    %v3362 = vld [vmem:[%s3350 + $0x2c] sm:$0xf]
    %v3363 = vld [vmem:[%s3350 + $0x30] sm:$0xf]
    %v3364 = vld [vmem:[%s3350 + $0x34] sm:$0xf]
    %v3365 = vld [vmem:[%s3350 + $0x38] sm:$0xf]
    %v3366 = vld [vmem:[%s3350 + $0x3c] sm:$0xf]
    %v3367 = vld [vmem:[%s3350 + $0x40] sm:$0xf]
    %v3368 = vld [vmem:[%s3350 + $0x44] sm:$0xf]
    %v3369 = vld [vmem:[%s3350 + $0x48] sm:$0xf]
    %v3370 = vld [vmem:[%s3350 + $0x4c] sm:$0xf]
    %v3371 = vld [vmem:[%s3350 + $0x50] sm:$0xf]
    %v3372 = vld [vmem:[%s3350 + $0x54] sm:$0xf]
    %v3373 = vld [vmem:[%s3350 + $0x58] sm:$0xf]
    %v3374 = vld [vmem:[%s3350 + $0x5c] sm:$0xf]
    %v3375 = vld [vmem:[%s3350 + $0x60] sm:$0xf]
    %v3376 = vld [vmem:[%s3350 + $0x64] sm:$0xf]
    %v3377 = vld [vmem:[%s3350 + $0x68] sm:$0xf]
    %v3378 = vld [vmem:[%s3350 + $0x6c] sm:$0xf]
    %v3379 = vld [vmem:[%s3350 + $0x70] sm:$0xf]
    %v3380 = vld [vmem:[%s3350 + $0x74] sm:$0xf]
    %v3381 = vld [vmem:[%s3350 + $0x78] sm:$0xf]
    %v3382 = vld [vmem:[%s3350 + $0x7c] sm:$0xf]
    %vm3383 = vsmask.f32 4352
    %v3385 = vshrl.u32 %v3346, 16
    %v3387 = vrot.slane %v3385, 3
    %v3388 = vshll.u32 %v3346, 16
    %v3390 = vrot.slane %v3388, 4
    %v3391 = vor.u32 %v3387, %v3390
    %v3393 = vshrl.u32 %v3045, 16
    %v3395 = vrot.slane %v3393, 3
    %v3396 = vshll.u32 %v3045, 16
    %v3398 = vrot.slane %v3396, 4
    %v3399 = vor.u32 %v3395, %v3398
    %v3400 = vsel %vm3383, %v3391, %v3399
    %v3402 = vshrl.u32 %v3347, 16
    %v3404 = vrot.slane %v3402, 3
    %v3405 = vshll.u32 %v3347, 16
    %v3407 = vrot.slane %v3405, 4
    %v3408 = vor.u32 %v3404, %v3407
    %v3410 = vshrl.u32 %v3046, 16
    %v3412 = vrot.slane %v3410, 3
    %v3413 = vshll.u32 %v3046, 16
    %v3415 = vrot.slane %v3413, 4
    %v3416 = vor.u32 %v3412, %v3415
    %v3417 = vsel %vm3383, %v3408, %v3416
    %v3419 = vshrl.u32 %v3047, 16
    %v3421 = vrot.slane %v3419, 3
    %v3422 = vshll.u32 %v3047, 16
    %v3424 = vrot.slane %v3422, 4
    %v3425 = vor.u32 %v3421, %v3424
    %v3426 = vsel %vm3383, %v3399, %v3425
    %v3428 = vshrl.u32 %v3048, 16
    %v3430 = vrot.slane %v3428, 3
    %v3431 = vshll.u32 %v3048, 16
    %v3433 = vrot.slane %v3431, 4
    %v3434 = vor.u32 %v3430, %v3433
    %v3435 = vsel %vm3383, %v3416, %v3434
    %v3437 = vshrl.u32 %v3049, 16
    %v3439 = vrot.slane %v3437, 3
    %v3440 = vshll.u32 %v3049, 16
    %v3442 = vrot.slane %v3440, 4
    %v3443 = vor.u32 %v3439, %v3442
    %v3444 = vsel %vm3383, %v3425, %v3443
    %v3446 = vshrl.u32 %v3050, 16
    %v3448 = vrot.slane %v3446, 3
    %v3449 = vshll.u32 %v3050, 16
    %v3451 = vrot.slane %v3449, 4
    %v3452 = vor.u32 %v3448, %v3451
    %v3453 = vsel %vm3383, %v3434, %v3452
    %v3455 = vshrl.u32 %v3051, 16
    %v3457 = vrot.slane %v3455, 3
    %v3458 = vshll.u32 %v3051, 16
    %v3460 = vrot.slane %v3458, 4
    %v3461 = vor.u32 %v3457, %v3460
    %v3462 = vsel %vm3383, %v3443, %v3461
    %v3464 = vshrl.u32 %v3052, 16
    %v3466 = vrot.slane %v3464, 3
    %v3467 = vshll.u32 %v3052, 16
    %v3469 = vrot.slane %v3467, 4
    %v3470 = vor.u32 %v3466, %v3469
    %v3471 = vsel %vm3383, %v3452, %v3470
    %v3473 = vshrl.u32 %v3053, 16
    %v3475 = vrot.slane %v3473, 3
    %v3476 = vshll.u32 %v3053, 16
    %v3478 = vrot.slane %v3476, 4
    %v3479 = vor.u32 %v3475, %v3478
    %v3480 = vsel %vm3383, %v3461, %v3479
    %v3482 = vshrl.u32 %v3054, 16
    %v3484 = vrot.slane %v3482, 3
    %v3485 = vshll.u32 %v3054, 16
    %v3487 = vrot.slane %v3485, 4
    %v3488 = vor.u32 %v3484, %v3487
    %v3489 = vsel %vm3383, %v3470, %v3488
    %v3491 = vshrl.u32 %v3348, 16
    %v3493 = vrot.slane %v3491, 3
    %v3494 = vshll.u32 %v3348, 16
    %v3496 = vrot.slane %v3494, 4
    %v3497 = vor.u32 %v3493, %v3496
    %v3498 = vsel %vm3383, %v3479, %v3497
    %v3500 = vshrl.u32 %v3349, 16
    %v3502 = vrot.slane %v3500, 3
    %v3503 = vshll.u32 %v3349, 16
    %v3505 = vrot.slane %v3503, 4
    %v3506 = vor.u32 %v3502, %v3505
    %v3507 = vsel %vm3383, %v3488, %v3506
    %v3554 = vunpack.c.l.b16 %v3351
    %v3555 = vunpack.c.l.b16 %v3352
    %v3556 = vunpack.c.l.b16 %v3353
    %v3557 = vunpack.c.l.b16 %v3354
    %v3558 = vunpack.c.l.b16 %v3355
    %v3559 = vunpack.c.l.b16 %v3356
    %v3560 = vunpack.c.l.b16 %v3357
    %v3561 = vunpack.c.l.b16 %v3358
    %v3562 = vunpack.c.l.b16 %v3359
    %v3563 = vunpack.c.l.b16 %v3360
    %v3564 = vunpack.c.l.b16 %v3361
    %v3565 = vunpack.c.l.b16 %v3362
    %v3566 = vunpack.c.l.b16 %v3363
    %v3567 = vunpack.c.l.b16 %v3364
    %v3568 = vunpack.c.l.b16 %v3365
    %v3569 = vunpack.c.l.b16 %v3366
    %v3570 = vunpack.c.l.b16 %v3367
    %v3571 = vunpack.c.l.b16 %v3368
    %v3572 = vunpack.c.l.b16 %v3369
    %v3573 = vunpack.c.l.b16 %v3370
    %v3574 = vunpack.c.l.b16 %v3371
    %v3575 = vunpack.c.l.b16 %v3372
    %v3576 = vunpack.c.l.b16 %v3373
    %v3577 = vunpack.c.l.b16 %v3374
    %v3578 = vunpack.c.l.b16 %v3375
    %v3579 = vunpack.c.l.b16 %v3376
    %v3580 = vunpack.c.l.b16 %v3377
    %v3581 = vunpack.c.l.b16 %v3378
    %v3582 = vunpack.c.l.b16 %v3379
    %v3583 = vunpack.c.l.b16 %v3380
    %v3584 = vunpack.c.l.b16 %v3381
    %v3585 = vunpack.c.l.b16 %v3382
    %v3586 = vpack.c.b16 %v3555, %v3554
    %v3587 = vpack.c.b16 %v3557, %v3556
    %v3588 = vpack.c.b16 %v3559, %v3558
    %v3589 = vpack.c.b16 %v3561, %v3560
    %v3590 = vpack.c.b16 %v3563, %v3562
    %v3591 = vpack.c.b16 %v3565, %v3564
    %v3592 = vpack.c.b16 %v3567, %v3566
    %v3593 = vpack.c.b16 %v3569, %v3568
    %v3594 = vpack.c.b16 %v3571, %v3570
    %v3595 = vpack.c.b16 %v3573, %v3572
    %v3596 = vpack.c.b16 %v3575, %v3574
    %v3597 = vpack.c.b16 %v3577, %v3576
    %v3598 = vpack.c.b16 %v3579, %v3578
    %v3599 = vpack.c.b16 %v3581, %v3580
    %v3600 = vpack.c.b16 %v3583, %v3582
    %v3601 = vpack.c.b16 %v3585, %v3584
    %3618 = vmatprep.subr.bf16.mxu0 0
    %3619 = vmatpush1.bf16.msra.mxu0 %v3593
    %3620 = vmatprep.subr.bf16.mxu0 0
    %3621 = vmatpush1.bf16.msra.mxu0 %v3592
    %3622 = vmatprep.subr.bf16.mxu0 0
    %3623 = vmatpush1.bf16.msra.mxu0 %v3591
    %3624 = vmatprep.subr.bf16.mxu0 0
    %3625 = vmatpush1.bf16.msra.mxu0 %v3590
    %3626 = vmatprep.subr.bf16.mxu0 0
    %3627 = vmatpush1.bf16.msra.mxu0 %v3589
    %3628 = vmatprep.subr.bf16.mxu0 0
    %3629 = vmatpush1.bf16.msra.mxu0 %v3588
    %3630 = vmatprep.subr.bf16.mxu0 0
    %3631 = vmatpush1.bf16.msra.mxu0 %v3587
    %3632 = vmatprep.subr.bf16.mxu0 0
    %3633 = vmatpush1.bf16.msra.mxu0 %v3586
    %3634 = vmatprep.subr.bf16.mxu0 0
    %3635 = vmatpush2.bf16.msra.mxu0 %v3601
    %3636 = vmatprep.subr.bf16.mxu0 0
    %3637 = vmatpush2.bf16.msra.mxu0 %v3600
    %3638 = vmatprep.subr.bf16.mxu0 0
    %3639 = vmatpush2.bf16.msra.mxu0 %v3599
    %3640 = vmatprep.subr.bf16.mxu0 0
    %3641 = vmatpush2.bf16.msra.mxu0 %v3598
    %3642 = vmatprep.subr.bf16.mxu0 0
    %3643 = vmatpush2.bf16.msra.mxu0 %v3597
    %3644 = vmatprep.subr.bf16.mxu0 0
    %3645 = vmatpush2.bf16.msra.mxu0 %v3596
    %3646 = vmatprep.subr.bf16.mxu0 0
    %3647 = vmatpush2.bf16.msra.mxu0 %v3595
    %3648 = vmatprep.subr.bf16.mxu0 0
    %3649 = vmatpush2.bf16.msra.mxu0 %v3594
    %3650 = vmatprep.mubr.bf16.mxu0 %v3417
    %3651 = vmatmul.mubr.bf16.gmra.mxu0 %v3400
    %v3652 = vpop.f32.mrf.mxu0
    %v3653 = vadd.f32 0.0, %v3652
    %v3654 = vpop.f32.mrf.mxu0
    %v3655 = vpop.f32.mrf.mxu0
    %v3656 = vadd.f32 0.0, %v3655
    %v3657 = vpop.f32.mrf.mxu0
    %3658 = vmatprep.mubr.bf16.mxu0 %v3435
    %3659 = vmatmul.mubr.bf16.gmra.mxu0 %v3426
    %v3660 = vpop.f32.mrf.mxu0
    %v3661 = vadd.f32 0.0, %v3660
    %v3662 = vpop.f32.mrf.mxu0
    %v3663 = vpop.f32.mrf.mxu0
    %v3664 = vadd.f32 0.0, %v3663
    %v3665 = vpop.f32.mrf.mxu0
    %3666 = vmatprep.mubr.bf16.mxu0 %v3453
    %3667 = vmatmul.mubr.bf16.gmra.mxu0 %v3444
    %v3668 = vpop.f32.mrf.mxu0
    %v3669 = vadd.f32 0.0, %v3668
    %v3670 = vpop.f32.mrf.mxu0
    %v3671 = vpop.f32.mrf.mxu0
    %v3672 = vadd.f32 0.0, %v3671
    %v3673 = vpop.f32.mrf.mxu0
    %3674 = vmatprep.mubr.bf16.mxu0 %v3471
    %3675 = vmatmul.mubr.bf16.gmra.mxu0 %v3462
    %v3676 = vpop.f32.mrf.mxu0
    %v3677 = vadd.f32 0.0, %v3676
    %v3678 = vpop.f32.mrf.mxu0
    %v3679 = vpop.f32.mrf.mxu0
    %v3680 = vadd.f32 0.0, %v3679
    %v3681 = vpop.f32.mrf.mxu0
    %3682 = vmatprep.mubr.bf16.mxu0 %v3489
    %3683 = vmatmul.mubr.bf16.gmra.mxu0 %v3480
    %v3684 = vpop.f32.mrf.mxu0
    %v3685 = vadd.f32 0.0, %v3684
    %v3686 = vpop.f32.mrf.mxu0
    %v3687 = vpop.f32.mrf.mxu0
    %v3688 = vadd.f32 0.0, %v3687
    %v3689 = vpop.f32.mrf.mxu0
    %3690 = vmatprep.mubr.bf16.mxu0 %v3507
    %3691 = vmatmul.mubr.bf16.gmra.mxu0 %v3498
    %v3692 = vpop.f32.mrf.mxu0
    %v3693 = vadd.f32 0.0, %v3692
    %v3694 = vpop.f32.mrf.mxu0
    %v3695 = vpop.f32.mrf.mxu0
    %v3696 = vadd.f32 0.0, %v3695
    %v3697 = vpop.f32.mrf.mxu0
    %3698 = vmatprep.mubr.bf16.mxu0 %v3506
    %3699 = vmatmul.mubr.bf16.gmra.mxu0 %v3497
    %v3700 = vpop.f32.mrf.mxu0
    %v3701 = vadd.f32 0.0, %v3700
    %v3702 = vpop.f32.mrf.mxu0
    %v3703 = vpop.f32.mrf.mxu0
    %v3704 = vpop.f32.mrf.mxu0
    %3705 = vdwg.mxu0
    %v3706 = vadd.f32 %v3329, %v3653
    %v3707 = vadd.f32 %v3330, %v3656
    %v3708 = vadd.f32 %v3331, %v3661
    %v3709 = vadd.f32 %v3332, %v3664
    %v3710 = vadd.f32 %v3333, %v3669
    %v3711 = vadd.f32 %v3334, %v3672
    %v3712 = vadd.f32 %v3335, %v3677
    %v3713 = vadd.f32 %v3336, %v3680
    %v3714 = vadd.f32 %v3337, %v3685
    %v3715 = vadd.f32 %v3338, %v3688
    %v3716 = vadd.f32 %v3339, %v3693
    %v3717 = vadd.f32 %v3340, %v3696
    %v3718 = vadd.f32 %v3341, %v3701
    %v3719 = vld [vmem:[#allocation2 + $0xf0] sm:$0xff]
    %v3720 = vld [vmem:[#allocation2 + $0xf8] sm:$0xff]
    %v3721 = vpack.c.bf16 %v3019, %v3017
    %v3722 = vpack.c.bf16 %v3020, %v3018
    %v3723 = vpack.c.bf16 %v3023, %v3021
    %v3724 = vpack.c.bf16 %v3024, %v3022
    %v3725 = vpack.c.bf16 %v3027, %v3025
    %v3726 = vpack.c.bf16 %v3028, %v3026
    %v3727 = vpack.c.bf16 %v3031, %v3029
    %v3728 = vpack.c.bf16 %v3032, %v3030
    %v3729 = vpack.c.bf16 %v3035, %v3033
    %v3730 = vpack.c.bf16 %v3036, %v3034
    %v3731 = vpack.c.bf16 %v3039, %v3037
    %v3732 = vpack.c.bf16 %v3040, %v3038
    %v3733 = vpack.c.bf16 %v3719, %v3719
    %v3734 = vpack.c.bf16 %v3720, %v3720
    %s3735 = scalar_lea.vmem [#allocation3], 1024
    %v3736 = vld [vmem:[%s3735] sm:$0xf]
    %v3737 = vld [vmem:[%s3735 + $0x4] sm:$0xf]
    %v3738 = vld [vmem:[%s3735 + $0x8] sm:$0xf]
    %v3739 = vld [vmem:[%s3735 + $0xc] sm:$0xf]
    %v3740 = vld [vmem:[%s3735 + $0x10] sm:$0xf]
    %v3741 = vld [vmem:[%s3735 + $0x14] sm:$0xf]
    %v3742 = vld [vmem:[%s3735 + $0x18] sm:$0xf]
    %v3743 = vld [vmem:[%s3735 + $0x1c] sm:$0xf]
    %v3744 = vld [vmem:[%s3735 + $0x20] sm:$0xf]
    %v3745 = vld [vmem:[%s3735 + $0x24] sm:$0xf]
    %v3746 = vld [vmem:[%s3735 + $0x28] sm:$0xf]
    %v3747 = vld [vmem:[%s3735 + $0x2c] sm:$0xf]
    %v3748 = vld [vmem:[%s3735 + $0x30] sm:$0xf]
    %v3749 = vld [vmem:[%s3735 + $0x34] sm:$0xf]
    %v3750 = vld [vmem:[%s3735 + $0x38] sm:$0xf]
    %v3751 = vld [vmem:[%s3735 + $0x3c] sm:$0xf]
    %v3752 = vld [vmem:[%s3735 + $0x40] sm:$0xf]
    %v3753 = vld [vmem:[%s3735 + $0x44] sm:$0xf]
    %v3754 = vld [vmem:[%s3735 + $0x48] sm:$0xf]
    %v3755 = vld [vmem:[%s3735 + $0x4c] sm:$0xf]
    %v3756 = vld [vmem:[%s3735 + $0x50] sm:$0xf]
    %v3757 = vld [vmem:[%s3735 + $0x54] sm:$0xf]
    %v3758 = vld [vmem:[%s3735 + $0x58] sm:$0xf]
    %v3759 = vld [vmem:[%s3735 + $0x5c] sm:$0xf]
    %v3760 = vld [vmem:[%s3735 + $0x60] sm:$0xf]
    %v3761 = vld [vmem:[%s3735 + $0x64] sm:$0xf]
    %v3762 = vld [vmem:[%s3735 + $0x68] sm:$0xf]
    %v3763 = vld [vmem:[%s3735 + $0x6c] sm:$0xf]
    %v3764 = vld [vmem:[%s3735 + $0x70] sm:$0xf]
    %v3765 = vld [vmem:[%s3735 + $0x74] sm:$0xf]
    %v3766 = vld [vmem:[%s3735 + $0x78] sm:$0xf]
    %v3767 = vld [vmem:[%s3735 + $0x7c] sm:$0xf]
    %v3800 = vunpack.c.l.b16 %v3736
    %v3801 = vunpack.c.l.b16 %v3737
    %v3802 = vunpack.c.l.b16 %v3738
    %v3803 = vunpack.c.l.b16 %v3739
    %v3804 = vunpack.c.l.b16 %v3740
    %v3805 = vunpack.c.l.b16 %v3741
    %v3806 = vunpack.c.l.b16 %v3742
    %v3807 = vunpack.c.l.b16 %v3743
    %v3808 = vunpack.c.l.b16 %v3744
    %v3809 = vunpack.c.l.b16 %v3745
    %v3810 = vunpack.c.l.b16 %v3746
    %v3811 = vunpack.c.l.b16 %v3747
    %v3812 = vunpack.c.l.b16 %v3748
    %v3813 = vunpack.c.l.b16 %v3749
    %v3814 = vunpack.c.l.b16 %v3750
    %v3815 = vunpack.c.l.b16 %v3751
    %v3816 = vunpack.c.l.b16 %v3752
    %v3817 = vunpack.c.l.b16 %v3753
    %v3818 = vunpack.c.l.b16 %v3754
    %v3819 = vunpack.c.l.b16 %v3755
    %v3820 = vunpack.c.l.b16 %v3756
    %v3821 = vunpack.c.l.b16 %v3757
    %v3822 = vunpack.c.l.b16 %v3758
    %v3823 = vunpack.c.l.b16 %v3759
    %v3824 = vunpack.c.l.b16 %v3760
    %v3825 = vunpack.c.l.b16 %v3761
    %v3826 = vunpack.c.l.b16 %v3762
    %v3827 = vunpack.c.l.b16 %v3763
    %v3828 = vunpack.c.l.b16 %v3764
    %v3829 = vunpack.c.l.b16 %v3765
    %v3830 = vunpack.c.l.b16 %v3766
    %v3831 = vunpack.c.l.b16 %v3767
    %v3832 = vpack.c.b16 %v3801, %v3800
    %v3833 = vpack.c.b16 %v3803, %v3802
    %v3834 = vpack.c.b16 %v3805, %v3804
    %v3835 = vpack.c.b16 %v3807, %v3806
    %v3836 = vpack.c.b16 %v3809, %v3808
    %v3837 = vpack.c.b16 %v3811, %v3810
    %v3838 = vpack.c.b16 %v3813, %v3812
    %v3839 = vpack.c.b16 %v3815, %v3814
    %v3840 = vpack.c.b16 %v3817, %v3816
    %v3841 = vpack.c.b16 %v3819, %v3818
    %v3842 = vpack.c.b16 %v3821, %v3820
    %v3843 = vpack.c.b16 %v3823, %v3822
    %v3844 = vpack.c.b16 %v3825, %v3824
    %v3845 = vpack.c.b16 %v3827, %v3826
    %v3846 = vpack.c.b16 %v3829, %v3828
    %v3847 = vpack.c.b16 %v3831, %v3830
    %3864 = vmatprep.subr.bf16.mxu0 0
    %3865 = vmatpush1.bf16.msra.mxu0 %v3839
    %3866 = vmatprep.subr.bf16.mxu0 0
    %3867 = vmatpush1.bf16.msra.mxu0 %v3838
    %3868 = vmatprep.subr.bf16.mxu0 0
    %3869 = vmatpush1.bf16.msra.mxu0 %v3837
    %3870 = vmatprep.subr.bf16.mxu0 0
    %3871 = vmatpush1.bf16.msra.mxu0 %v3836
    %3872 = vmatprep.subr.bf16.mxu0 0
    %3873 = vmatpush1.bf16.msra.mxu0 %v3835
    %3874 = vmatprep.subr.bf16.mxu0 0
    %3875 = vmatpush1.bf16.msra.mxu0 %v3834
    %3876 = vmatprep.subr.bf16.mxu0 0
    %3877 = vmatpush1.bf16.msra.mxu0 %v3833
    %3878 = vmatprep.subr.bf16.mxu0 0
    %3879 = vmatpush1.bf16.msra.mxu0 %v3832
    %3880 = vmatprep.subr.bf16.mxu0 0
    %3881 = vmatpush2.bf16.msra.mxu0 %v3847
    %3882 = vmatprep.subr.bf16.mxu0 0
    %3883 = vmatpush2.bf16.msra.mxu0 %v3846
    %3884 = vmatprep.subr.bf16.mxu0 0
    %3885 = vmatpush2.bf16.msra.mxu0 %v3845
    %3886 = vmatprep.subr.bf16.mxu0 0
    %3887 = vmatpush2.bf16.msra.mxu0 %v3844
    %3888 = vmatprep.subr.bf16.mxu0 0
    %3889 = vmatpush2.bf16.msra.mxu0 %v3843
    %3890 = vmatprep.subr.bf16.mxu0 0
    %3891 = vmatpush2.bf16.msra.mxu0 %v3842
    %3892 = vmatprep.subr.bf16.mxu0 0
    %3893 = vmatpush2.bf16.msra.mxu0 %v3841
    %3894 = vmatprep.subr.bf16.mxu0 0
    %3895 = vmatpush2.bf16.msra.mxu0 %v3840
    %3896 = vmatprep.mubr.bf16.mxu0 %v3722
    %3897 = vmatmul.mubr.bf16.gmra.mxu0 %v3721
    %v3898 = vpop.f32.mrf.mxu0
    %v3899 = vadd.f32 0.0, %v3898
    %v3900 = vpop.f32.mrf.mxu0
    %v3901 = vpop.f32.mrf.mxu0
    %v3902 = vadd.f32 0.0, %v3901
    %v3903 = vpop.f32.mrf.mxu0
    %3904 = vmatprep.mubr.bf16.mxu0 %v3724
    %3905 = vmatmul.mubr.bf16.gmra.mxu0 %v3723
    %v3906 = vpop.f32.mrf.mxu0
    %v3907 = vadd.f32 0.0, %v3906
    %v3908 = vpop.f32.mrf.mxu0
    %v3909 = vpop.f32.mrf.mxu0
    %v3910 = vadd.f32 0.0, %v3909
    %v3911 = vpop.f32.mrf.mxu0
    %3912 = vmatprep.mubr.bf16.mxu0 %v3726
    %3913 = vmatmul.mubr.bf16.gmra.mxu0 %v3725
    %v3914 = vpop.f32.mrf.mxu0
    %v3915 = vadd.f32 0.0, %v3914
    %v3916 = vpop.f32.mrf.mxu0
    %v3917 = vpop.f32.mrf.mxu0
    %v3918 = vadd.f32 0.0, %v3917
    %v3919 = vpop.f32.mrf.mxu0
    %3920 = vmatprep.mubr.bf16.mxu0 %v3728
    %3921 = vmatmul.mubr.bf16.gmra.mxu0 %v3727
    %v3922 = vpop.f32.mrf.mxu0
    %v3923 = vadd.f32 0.0, %v3922
    %v3924 = vpop.f32.mrf.mxu0
    %v3925 = vpop.f32.mrf.mxu0
    %v3926 = vadd.f32 0.0, %v3925
    %v3927 = vpop.f32.mrf.mxu0
    %3928 = vmatprep.mubr.bf16.mxu0 %v3730
    %3929 = vmatmul.mubr.bf16.gmra.mxu0 %v3729
    %v3930 = vpop.f32.mrf.mxu0
    %v3931 = vadd.f32 0.0, %v3930
    %v3932 = vpop.f32.mrf.mxu0
    %v3933 = vpop.f32.mrf.mxu0
    %v3934 = vadd.f32 0.0, %v3933
    %v3935 = vpop.f32.mrf.mxu0
    %3936 = vmatprep.mubr.bf16.mxu0 %v3732
    %3937 = vmatmul.mubr.bf16.gmra.mxu0 %v3731
    %v3938 = vpop.f32.mrf.mxu0
    %v3939 = vadd.f32 0.0, %v3938
    %v3940 = vpop.f32.mrf.mxu0
    %v3941 = vpop.f32.mrf.mxu0
    %v3942 = vadd.f32 0.0, %v3941
    %v3943 = vpop.f32.mrf.mxu0
    %3944 = vmatprep.mubr.bf16.mxu0 %v3734
    %3945 = vmatmul.mubr.bf16.gmra.mxu0 %v3733
    %v3946 = vpop.f32.mrf.mxu0
    %v3947 = vadd.f32 0.0, %v3946
    %v3948 = vpop.f32.mrf.mxu0
    %v3949 = vpop.f32.mrf.mxu0
    %v3950 = vpop.f32.mrf.mxu0
    %3951 = vdwg.mxu0
    %v3952 = vadd.f32 %v3706, %v3899
    %v3953 = vadd.f32 %v3707, %v3902
    %v3954 = vadd.f32 %v3708, %v3907
    %v3955 = vadd.f32 %v3709, %v3910
    %v3956 = vadd.f32 %v3710, %v3915
    %v3957 = vadd.f32 %v3711, %v3918
    %v3958 = vadd.f32 %v3712, %v3923
    %v3959 = vadd.f32 %v3713, %v3926
    %v3960 = vadd.f32 %v3714, %v3931
    %v3961 = vadd.f32 %v3715, %v3934
    %v3962 = vadd.f32 %v3716, %v3939
    %v3963 = vadd.f32 %v3717, %v3942
    %v3964 = vadd.f32 %v3718, %v3947
    %v3965 = vld [vmem:[%s3] sm:$0x1]
    %v3967 = vlaneseq
    %v3968 = vshrl.u32 %v3967, 7
    %v3969 = vsub.s32 0, %v3968
    %v3970 = vrot.slane %v3965, %v3969
    %v3972 = vadd.f32 %v3952, %v3970
    %v3973 = vadd.f32 %v3953, %v3970
    %v3974 = vadd.f32 %v3954, %v3970
    %v3975 = vadd.f32 %v3955, %v3970
    %v3976 = vadd.f32 %v3956, %v3970
    %v3977 = vadd.f32 %v3957, %v3970
    %v3978 = vadd.f32 %v3958, %v3970
    %v3979 = vadd.f32 %v3959, %v3970
    %v3980 = vadd.f32 %v3960, %v3970
    %v3981 = vadd.f32 %v3961, %v3970
    %v3982 = vadd.f32 %v3962, %v3970
    %v3983 = vadd.f32 %v3963, %v3970
    %v3984 = vadd.f32 %v3964, %v3970
    %v3985 = vmax.f32 %v3972, 0.0
    %v3986 = vmax.f32 %v3973, 0.0
    %v3987 = vmax.f32 %v3974, 0.0
    %v3988 = vmax.f32 %v3975, 0.0
    %v3989 = vmax.f32 %v3976, 0.0
    %v3990 = vmax.f32 %v3977, 0.0
    %v3991 = vmax.f32 %v3978, 0.0
    %v3992 = vmax.f32 %v3979, 0.0
    %v3993 = vmax.f32 %v3980, 0.0
    %v3994 = vmax.f32 %v3981, 0.0
    %v3995 = vmax.f32 %v3982, 0.0
    %v3996 = vmax.f32 %v3983, 0.0
    %v3997 = vmax.f32 %v3984, 0.0
    %v3998 = vlaneseq
    %vm3999 = vcmp.ge.s32.totalorder %v3998, 0
    %vm4000 = vcmp.lt.s32.totalorder %v3998, 384
    %vm4001 = vmand %vm3999, %vm4000
    %4002 = vst.msk [vmem:[#allocation5 + $0x51] sm:$0x7] %vm4001, 0.0
    %vm4003 = vcmp.lt.s32.totalorder %v3998, 128
    %vm4004 = vmand %vm3999, %vm4003
    %4005 = vst.msk [vmem:[#allocation5] sm:$0x1] %vm4004, %v3985
    %v4008 = vunpack.c.l.s4 1966171168
    %v4009 = vunpack.c.0.s8 %v4008
    %v4010 = vlaneseq
    %v4011 = vshrl.u32 %v4010, 7
    %v4012 = vsub.s32 %v4009, %v4011
    %v4013 = vrot.slane %v3985, %v4012
    %v4014 = vcombine.high %v4013, %v4013
    %v4016 = vunpack.c.l.s4 1966171168
    %v4017 = vunpack.c.0.s8 %v4016
    %v4018 = vlaneseq
    %v4019 = vshrl.u32 %v4018, 7
    %v4020 = vsub.s32 %v4017, %v4019
    %v4021 = vrot.slane %v4013, %v4020
    %v4023 = vunpack.c.l.s4 1966171168
    %v4024 = vunpack.c.0.s8 %v4023
    %v4025 = vlaneseq
    %v4026 = vshrl.u32 %v4025, 7
    %v4027 = vsub.s32 %v4024, %v4026
    %v4028 = vrot.slane %v4014, %v4027
    %4030 = vst.msk [vmem:[#allocation5 + $0x1] sm:$0x1] %vm4004, %v4028
    %v4031 = vcombine.high %v4021, %v4021
    %4033 = vst.msk [vmem:[#allocation5 + $0x2] sm:$0x1] %vm4004, %v4031
    %v4034 = vcombine.high %v4028, %v4028
    %4036 = vst.msk [vmem:[#allocation5 + $0x3] sm:$0x1] %vm4004, %v4034
    %v4037 = vcombine.high %v3985, %v3985
    %v4039 = vunpack.c.l.s4 1966171168
    %v4040 = vunpack.c.0.s8 %v4039
    %v4041 = vlaneseq
    %v4042 = vshrl.u32 %v4041, 7
    %v4043 = vsub.s32 %v4040, %v4042
    %v4044 = vrot.slane %v4037, %v4043
    %v4046 = vunpack.c.l.s4 1966171168
    %v4047 = vunpack.c.0.s8 %v4046
    %v4048 = vlaneseq
    %v4049 = vshrl.u32 %v4048, 7
    %v4050 = vsub.s32 %v4047, %v4049
    %v4051 = vrot.slane %v4044, %v4050
    %4053 = vst.msk [vmem:[#allocation5 + $0x4] sm:$0x1] %vm4004, %v4051
    %v4054 = vcombine.high %v4044, %v4044
    %v4056 = vunpack.c.l.s4 1966171168
    %v4057 = vunpack.c.0.s8 %v4056
    %v4058 = vlaneseq
    %v4059 = vshrl.u32 %v4058, 7
    %v4060 = vsub.s32 %v4057, %v4059
    %v4061 = vrot.slane %v4054, %v4060
    %4063 = vst.msk [vmem:[#allocation5 + $0x5] sm:$0x1] %vm4004, %v4061
    %v4064 = vcombine.high %v4051, %v4051
    %4066 = vst.msk [vmem:[#allocation5 + $0x6] sm:$0x1] %vm4004, %v4064
    %v4067 = vcombine.high %v4061, %v4061
    %4069 = vst.msk [vmem:[#allocation5 + $0x7] sm:$0x1] %vm4004, %v4067
    %4070 = vst.msk [vmem:[#allocation5 + $0x8] sm:$0x1] %vm4004, %v3986
    %v4073 = vunpack.c.l.s4 1966171168
    %v4074 = vunpack.c.0.s8 %v4073
    %v4075 = vlaneseq
    %v4076 = vshrl.u32 %v4075, 7
    %v4077 = vsub.s32 %v4074, %v4076
    %v4078 = vrot.slane %v3986, %v4077
    %v4079 = vcombine.high %v4078, %v4078
    %v4081 = vunpack.c.l.s4 1966171168
    %v4082 = vunpack.c.0.s8 %v4081
    %v4083 = vlaneseq
    %v4084 = vshrl.u32 %v4083, 7
    %v4085 = vsub.s32 %v4082, %v4084
    %v4086 = vrot.slane %v4079, %v4085
    %v4087 = vcombine.high %v4086, %v4086
    %4089 = vst.msk [vmem:[#allocation5 + $0x9] sm:$0x1] %vm4004, %v4087
    %v4090 = vcombine.high %v3986, %v3986
    %v4092 = vunpack.c.l.s4 1966171168
    %v4093 = vunpack.c.0.s8 %v4092
    %v4094 = vlaneseq
    %v4095 = vshrl.u32 %v4094, 7
    %v4096 = vsub.s32 %v4093, %v4095
    %v4097 = vrot.slane %v4090, %v4096
    %v4099 = vunpack.c.l.s4 1966171168
    %v4100 = vunpack.c.0.s8 %v4099
    %v4101 = vlaneseq
    %v4102 = vshrl.u32 %v4101, 7
    %v4103 = vsub.s32 %v4100, %v4102
    %v4104 = vrot.slane %v4097, %v4103
    %4106 = vst.msk [vmem:[#allocation5 + $0xa] sm:$0x1] %vm4004, %v4104
    %v4107 = vcombine.high %v4097, %v4097
    %v4109 = vunpack.c.l.s4 1966171168
    %v4110 = vunpack.c.0.s8 %v4109
    %v4111 = vlaneseq
    %v4112 = vshrl.u32 %v4111, 7
    %v4113 = vsub.s32 %v4110, %v4112
    %v4114 = vrot.slane %v4107, %v4113
    %4116 = vst.msk [vmem:[#allocation5 + $0xb] sm:$0x1] %vm4004, %v4114
    %v4117 = vcombine.high %v4104, %v4104
    %4119 = vst.msk [vmem:[#allocation5 + $0xc] sm:$0x1] %vm4004, %v4117
    %v4120 = vcombine.high %v4114, %v4114
    %4122 = vst.msk [vmem:[#allocation5 + $0xd] sm:$0x1] %vm4004, %v4120
    %4123 = vst.msk [vmem:[#allocation5 + $0xe] sm:$0x1] %vm4004, %v3987
    %v4126 = vunpack.c.l.s4 1966171168
    %v4127 = vunpack.c.0.s8 %v4126
    %v4128 = vlaneseq
    %v4129 = vshrl.u32 %v4128, 7
    %v4130 = vsub.s32 %v4127, %v4129
    %v4131 = vrot.slane %v3987, %v4130
    %v4132 = vcombine.high %v4131, %v4131
    %v4134 = vunpack.c.l.s4 1966171168
    %v4135 = vunpack.c.0.s8 %v4134
    %v4136 = vlaneseq
    %v4137 = vshrl.u32 %v4136, 7
    %v4138 = vsub.s32 %v4135, %v4137
    %v4139 = vrot.slane %v4131, %v4138
    %v4141 = vunpack.c.l.s4 1966171168
    %v4142 = vunpack.c.0.s8 %v4141
    %v4143 = vlaneseq
    %v4144 = vshrl.u32 %v4143, 7
    %v4145 = vsub.s32 %v4142, %v4144
    %v4146 = vrot.slane %v4132, %v4145
    %4148 = vst.msk [vmem:[#allocation5 + $0xf] sm:$0x1] %vm4004, %v4146
    %v4149 = vcombine.high %v4139, %v4139
    %4151 = vst.msk [vmem:[#allocation5 + $0x10] sm:$0x1] %vm4004, %v4149
    %v4152 = vcombine.high %v4146, %v4146
    %4154 = vst.msk [vmem:[#allocation5 + $0x11] sm:$0x1] %vm4004, %v4152
    %v4155 = vcombine.high %v3987, %v3987
    %v4157 = vunpack.c.l.s4 1966171168
    %v4158 = vunpack.c.0.s8 %v4157
    %v4159 = vlaneseq
    %v4160 = vshrl.u32 %v4159, 7
    %v4161 = vsub.s32 %v4158, %v4160
    %v4162 = vrot.slane %v4155, %v4161
    %v4164 = vunpack.c.l.s4 1966171168
    %v4165 = vunpack.c.0.s8 %v4164
    %v4166 = vlaneseq
    %v4167 = vshrl.u32 %v4166, 7
    %v4168 = vsub.s32 %v4165, %v4167
    %v4169 = vrot.slane %v4162, %v4168
    %v4170 = vcombine.high %v4169, %v4169
    %4172 = vst.msk [vmem:[#allocation5 + $0x12] sm:$0x1] %vm4004, %v4170
    %v4173 = vcombine.high %v4162, %v4162
    %v4175 = vunpack.c.l.s4 1966171168
    %v4176 = vunpack.c.0.s8 %v4175
    %v4177 = vlaneseq
    %v4178 = vshrl.u32 %v4177, 7
    %v4179 = vsub.s32 %v4176, %v4178
    %v4180 = vrot.slane %v4173, %v4179
    %v4181 = vcombine.high %v4180, %v4180
    %4183 = vst.msk [vmem:[#allocation5 + $0x13] sm:$0x1] %vm4004, %v4181
    %4184 = vst.msk [vmem:[#allocation5 + $0x14] sm:$0x1] %vm4004, %v3988
    %v4187 = vunpack.c.l.s4 1966171168
    %v4188 = vunpack.c.0.s8 %v4187
    %v4189 = vlaneseq
    %v4190 = vshrl.u32 %v4189, 7
    %v4191 = vsub.s32 %v4188, %v4190
    %v4192 = vrot.slane %v3988, %v4191
    %v4193 = vcombine.high %v4192, %v4192
    %v4195 = vunpack.c.l.s4 1966171168
    %v4196 = vunpack.c.0.s8 %v4195
    %v4197 = vlaneseq
    %v4198 = vshrl.u32 %v4197, 7
    %v4199 = vsub.s32 %v4196, %v4198
    %v4200 = vrot.slane %v4192, %v4199
    %v4202 = vunpack.c.l.s4 1966171168
    %v4203 = vunpack.c.0.s8 %v4202
    %v4204 = vlaneseq
    %v4205 = vshrl.u32 %v4204, 7
    %v4206 = vsub.s32 %v4203, %v4205
    %v4207 = vrot.slane %v4193, %v4206
    %4209 = vst.msk [vmem:[#allocation5 + $0x15] sm:$0x1] %vm4004, %v4207
    %v4210 = vcombine.high %v4200, %v4200
    %4212 = vst.msk [vmem:[#allocation5 + $0x16] sm:$0x1] %vm4004, %v4210
    %v4213 = vcombine.high %v4207, %v4207
    %4215 = vst.msk [vmem:[#allocation5 + $0x17] sm:$0x1] %vm4004, %v4213
    %v4216 = vcombine.high %v3988, %v3988
    %v4218 = vunpack.c.l.s4 1966171168
    %v4219 = vunpack.c.0.s8 %v4218
    %v4220 = vlaneseq
    %v4221 = vshrl.u32 %v4220, 7
    %v4222 = vsub.s32 %v4219, %v4221
    %v4223 = vrot.slane %v4216, %v4222
    %v4225 = vunpack.c.l.s4 1966171168
    %v4226 = vunpack.c.0.s8 %v4225
    %v4227 = vlaneseq
    %v4228 = vshrl.u32 %v4227, 7
    %v4229 = vsub.s32 %v4226, %v4228
    %v4230 = vrot.slane %v4223, %v4229
    %4232 = vst.msk [vmem:[#allocation5 + $0x18] sm:$0x1] %vm4004, %v4230
    %v4233 = vcombine.high %v4223, %v4223
    %v4235 = vunpack.c.l.s4 1966171168
    %v4236 = vunpack.c.0.s8 %v4235
    %v4237 = vlaneseq
    %v4238 = vshrl.u32 %v4237, 7
    %v4239 = vsub.s32 %v4236, %v4238
    %v4240 = vrot.slane %v4233, %v4239
    %4242 = vst.msk [vmem:[#allocation5 + $0x19] sm:$0x1] %vm4004, %v4240
    %v4243 = vcombine.high %v4230, %v4230
    %4245 = vst.msk [vmem:[#allocation5 + $0x1a] sm:$0x1] %vm4004, %v4243
    %v4248 = vunpack.c.l.s4 1966171168
    %v4249 = vunpack.c.0.s8 %v4248
    %v4250 = vlaneseq
    %v4251 = vshrl.u32 %v4250, 7
    %v4252 = vsub.s32 %v4249, %v4251
    %v4253 = vrot.slane %v3989, %v4252
    %v4254 = vcombine.high %v4253, %v4253
    %v4256 = vunpack.c.l.s4 1966171168
    %v4257 = vunpack.c.0.s8 %v4256
    %v4258 = vlaneseq
    %v4259 = vshrl.u32 %v4258, 7
    %v4260 = vsub.s32 %v4257, %v4259
    %v4261 = vrot.slane %v4253, %v4260
    %v4263 = vunpack.c.l.s4 1966171168
    %v4264 = vunpack.c.0.s8 %v4263
    %v4265 = vlaneseq
    %v4266 = vshrl.u32 %v4265, 7
    %v4267 = vsub.s32 %v4264, %v4266
    %v4268 = vrot.slane %v4254, %v4267
    %4270 = vst.msk [vmem:[#allocation5 + $0x1b] sm:$0x1] %vm4004, %v4268
    %v4271 = vcombine.high %v4261, %v4261
    %4273 = vst.msk [vmem:[#allocation5 + $0x1c] sm:$0x1] %vm4004, %v4271
    %v4274 = vcombine.high %v4268, %v4268
    %4276 = vst.msk [vmem:[#allocation5 + $0x1d] sm:$0x1] %vm4004, %v4274
    %v4277 = vcombine.high %v3989, %v3989
    %v4279 = vunpack.c.l.s4 1966171168
    %v4280 = vunpack.c.0.s8 %v4279
    %v4281 = vlaneseq
    %v4282 = vshrl.u32 %v4281, 7
    %v4283 = vsub.s32 %v4280, %v4282
    %v4284 = vrot.slane %v4277, %v4283
    %v4286 = vunpack.c.l.s4 1966171168
    %v4287 = vunpack.c.0.s8 %v4286
    %v4288 = vlaneseq
    %v4289 = vshrl.u32 %v4288, 7
    %v4290 = vsub.s32 %v4287, %v4289
    %v4291 = vrot.slane %v4284, %v4290
    %4293 = vst.msk [vmem:[#allocation5 + $0x1e] sm:$0x1] %vm4004, %v4291
    %v4294 = vcombine.high %v4284, %v4284
    %v4296 = vunpack.c.l.s4 1966171168
    %v4297 = vunpack.c.0.s8 %v4296
    %v4298 = vlaneseq
    %v4299 = vshrl.u32 %v4298, 7
    %v4300 = vsub.s32 %v4297, %v4299
    %v4301 = vrot.slane %v4294, %v4300
    %4303 = vst.msk [vmem:[#allocation5 + $0x1f] sm:$0x1] %vm4004, %v4301
    %v4304 = vcombine.high %v4291, %v4291
    %4306 = vst.msk [vmem:[#allocation5 + $0x20] sm:$0x1] %vm4004, %v4304
    %v4307 = vcombine.high %v4301, %v4301
    %4309 = vst.msk [vmem:[#allocation5 + $0x21] sm:$0x1] %vm4004, %v4307
    %4310 = vst.msk [vmem:[#allocation5 + $0x22] sm:$0x1] %vm4004, %v3990
    %v4313 = vunpack.c.l.s4 1966171168
    %v4314 = vunpack.c.0.s8 %v4313
    %v4315 = vlaneseq
    %v4316 = vshrl.u32 %v4315, 7
    %v4317 = vsub.s32 %v4314, %v4316
    %v4318 = vrot.slane %v3990, %v4317
    %v4319 = vcombine.high %v4318, %v4318
    %v4321 = vunpack.c.l.s4 1966171168
    %v4322 = vunpack.c.0.s8 %v4321
    %v4323 = vlaneseq
    %v4324 = vshrl.u32 %v4323, 7
    %v4325 = vsub.s32 %v4322, %v4324
    %v4326 = vrot.slane %v4319, %v4325
    %4328 = vst.msk [vmem:[#allocation5 + $0x23] sm:$0x1] %vm4004, %v4326
    %v4329 = vcombine.high %v3990, %v3990
    %v4331 = vunpack.c.l.s4 1966171168
    %v4332 = vunpack.c.0.s8 %v4331
    %v4333 = vlaneseq
    %v4334 = vshrl.u32 %v4333, 7
    %v4335 = vsub.s32 %v4332, %v4334
    %v4336 = vrot.slane %v4329, %v4335
    %v4338 = vunpack.c.l.s4 1966171168
    %v4339 = vunpack.c.0.s8 %v4338
    %v4340 = vlaneseq
    %v4341 = vshrl.u32 %v4340, 7
    %v4342 = vsub.s32 %v4339, %v4341
    %v4343 = vrot.slane %v4336, %v4342
    %4345 = vst.msk [vmem:[#allocation5 + $0x24] sm:$0x1] %vm4004, %v4343
    %v4346 = vcombine.high %v4336, %v4336
    %v4348 = vunpack.c.l.s4 1966171168
    %v4349 = vunpack.c.0.s8 %v4348
    %v4350 = vlaneseq
    %v4351 = vshrl.u32 %v4350, 7
    %v4352 = vsub.s32 %v4349, %v4351
    %v4353 = vrot.slane %v4346, %v4352
    %4355 = vst.msk [vmem:[#allocation5 + $0x25] sm:$0x1] %vm4004, %v4353
    %v4356 = vcombine.high %v4343, %v4343
    %4358 = vst.msk [vmem:[#allocation5 + $0x26] sm:$0x1] %vm4004, %v4356
    %v4359 = vcombine.high %v4353, %v4353
    %4361 = vst.msk [vmem:[#allocation5 + $0x27] sm:$0x1] %vm4004, %v4359
    %4362 = vst.msk [vmem:[#allocation5 + $0x28] sm:$0x1] %vm4004, %v3991
    %v4365 = vunpack.c.l.s4 1966171168
    %v4366 = vunpack.c.0.s8 %v4365
    %v4367 = vlaneseq
    %v4368 = vshrl.u32 %v4367, 7
    %v4369 = vsub.s32 %v4366, %v4368
    %v4370 = vrot.slane %v3991, %v4369
    %v4371 = vcombine.high %v4370, %v4370
    %v4373 = vunpack.c.l.s4 1966171168
    %v4374 = vunpack.c.0.s8 %v4373
    %v4375 = vlaneseq
    %v4376 = vshrl.u32 %v4375, 7
    %v4377 = vsub.s32 %v4374, %v4376
    %v4378 = vrot.slane %v4370, %v4377
    %v4380 = vunpack.c.l.s4 1966171168
    %v4381 = vunpack.c.0.s8 %v4380
    %v4382 = vlaneseq
    %v4383 = vshrl.u32 %v4382, 7
    %v4384 = vsub.s32 %v4381, %v4383
    %v4385 = vrot.slane %v4371, %v4384
    %4387 = vst.msk [vmem:[#allocation5 + $0x29] sm:$0x1] %vm4004, %v4385
    %v4388 = vcombine.high %v4378, %v4378
    %4390 = vst.msk [vmem:[#allocation5 + $0x2a] sm:$0x1] %vm4004, %v4388
    %v4391 = vcombine.high %v4385, %v4385
    %4393 = vst.msk [vmem:[#allocation5 + $0x2b] sm:$0x1] %vm4004, %v4391
    %v4394 = vcombine.high %v3991, %v3991
    %v4396 = vunpack.c.l.s4 1966171168
    %v4397 = vunpack.c.0.s8 %v4396
    %v4398 = vlaneseq
    %v4399 = vshrl.u32 %v4398, 7
    %v4400 = vsub.s32 %v4397, %v4399
    %v4401 = vrot.slane %v4394, %v4400
    %v4403 = vunpack.c.l.s4 1966171168
    %v4404 = vunpack.c.0.s8 %v4403
    %v4405 = vlaneseq
    %v4406 = vshrl.u32 %v4405, 7
    %v4407 = vsub.s32 %v4404, %v4406
    %v4408 = vrot.slane %v4401, %v4407
    %4410 = vst.msk [vmem:[#allocation5 + $0x2c] sm:$0x1] %vm4004, %v4408
    %v4411 = vcombine.high %v4401, %v4401
    %v4413 = vunpack.c.l.s4 1966171168
    %v4414 = vunpack.c.0.s8 %v4413
    %v4415 = vlaneseq
    %v4416 = vshrl.u32 %v4415, 7
    %v4417 = vsub.s32 %v4414, %v4416
    %v4418 = vrot.slane %v4411, %v4417
    %v4419 = vcombine.high %v4418, %v4418
    %4421 = vst.msk [vmem:[#allocation5 + $0x2d] sm:$0x1] %vm4004, %v4419
    %4422 = vst.msk [vmem:[#allocation5 + $0x2e] sm:$0x1] %vm4004, %v3992
    %v4425 = vunpack.c.l.s4 1966171168
    %v4426 = vunpack.c.0.s8 %v4425
    %v4427 = vlaneseq
    %v4428 = vshrl.u32 %v4427, 7
    %v4429 = vsub.s32 %v4426, %v4428
    %v4430 = vrot.slane %v3992, %v4429
    %v4431 = vcombine.high %v4430, %v4430
    %v4433 = vunpack.c.l.s4 1966171168
    %v4434 = vunpack.c.0.s8 %v4433
    %v4435 = vlaneseq
    %v4436 = vshrl.u32 %v4435, 7
    %v4437 = vsub.s32 %v4434, %v4436
    %v4438 = vrot.slane %v4430, %v4437
    %v4440 = vunpack.c.l.s4 1966171168
    %v4441 = vunpack.c.0.s8 %v4440
    %v4442 = vlaneseq
    %v4443 = vshrl.u32 %v4442, 7
    %v4444 = vsub.s32 %v4441, %v4443
    %v4445 = vrot.slane %v4431, %v4444
    %4447 = vst.msk [vmem:[#allocation5 + $0x2f] sm:$0x1] %vm4004, %v4445
    %v4448 = vcombine.high %v4438, %v4438
    %4450 = vst.msk [vmem:[#allocation5 + $0x30] sm:$0x1] %vm4004, %v4448
    %v4451 = vcombine.high %v4445, %v4445
    %4453 = vst.msk [vmem:[#allocation5 + $0x31] sm:$0x1] %vm4004, %v4451
    %v4454 = vcombine.high %v3992, %v3992
    %v4456 = vunpack.c.l.s4 1966171168
    %v4457 = vunpack.c.0.s8 %v4456
    %v4458 = vlaneseq
    %v4459 = vshrl.u32 %v4458, 7
    %v4460 = vsub.s32 %v4457, %v4459
    %v4461 = vrot.slane %v4454, %v4460
    %v4463 = vunpack.c.l.s4 1966171168
    %v4464 = vunpack.c.0.s8 %v4463
    %v4465 = vlaneseq
    %v4466 = vshrl.u32 %v4465, 7
    %v4467 = vsub.s32 %v4464, %v4466
    %v4468 = vrot.slane %v4461, %v4467
    %4470 = vst.msk [vmem:[#allocation5 + $0x32] sm:$0x1] %vm4004, %v4468
    %v4471 = vcombine.high %v4461, %v4461
    %v4473 = vunpack.c.l.s4 1966171168
    %v4474 = vunpack.c.0.s8 %v4473
    %v4475 = vlaneseq
    %v4476 = vshrl.u32 %v4475, 7
    %v4477 = vsub.s32 %v4474, %v4476
    %v4478 = vrot.slane %v4471, %v4477
    %4480 = vst.msk [vmem:[#allocation5 + $0x33] sm:$0x1] %vm4004, %v4478
    %v4481 = vcombine.high %v4468, %v4468
    %4483 = vst.msk [vmem:[#allocation5 + $0x34] sm:$0x1] %vm4004, %v4481
    %v4484 = vcombine.high %v4478, %v4478
    %4486 = vst.msk [vmem:[#allocation5 + $0x35] sm:$0x1] %vm4004, %v4484
    %v4489 = vunpack.c.l.s4 1966171168
    %v4490 = vunpack.c.0.s8 %v4489
    %v4491 = vlaneseq
    %v4492 = vshrl.u32 %v4491, 7
    %v4493 = vsub.s32 %v4490, %v4492
    %v4494 = vrot.slane %v3993, %v4493
    %v4496 = vunpack.c.l.s4 1966171168
    %v4497 = vunpack.c.0.s8 %v4496
    %v4498 = vlaneseq
    %v4499 = vshrl.u32 %v4498, 7
    %v4500 = vsub.s32 %v4497, %v4499
    %v4501 = vrot.slane %v4494, %v4500
    %v4502 = vcombine.high %v4501, %v4501
    %4504 = vst.msk [vmem:[#allocation5 + $0x36] sm:$0x1] %vm4004, %v4502
    %v4505 = vcombine.high %v4494, %v4494
    %v4507 = vunpack.c.l.s4 1966171168
    %v4508 = vunpack.c.0.s8 %v4507
    %v4509 = vlaneseq
    %v4510 = vshrl.u32 %v4509, 7
    %v4511 = vsub.s32 %v4508, %v4510
    %v4512 = vrot.slane %v4505, %v4511
    %v4513 = vcombine.high %v4512, %v4512
    %4515 = vst.msk [vmem:[#allocation5 + $0x37] sm:$0x1] %vm4004, %v4513
    %v4516 = vcombine.high %v3993, %v3993
    %v4518 = vunpack.c.l.s4 1966171168
    %v4519 = vunpack.c.0.s8 %v4518
    %v4520 = vlaneseq
    %v4521 = vshrl.u32 %v4520, 7
    %v4522 = vsub.s32 %v4519, %v4521
    %v4523 = vrot.slane %v4516, %v4522
    %v4525 = vunpack.c.l.s4 1966171168
    %v4526 = vunpack.c.0.s8 %v4525
    %v4527 = vlaneseq
    %v4528 = vshrl.u32 %v4527, 7
    %v4529 = vsub.s32 %v4526, %v4528
    %v4530 = vrot.slane %v4523, %v4529
    %4532 = vst.msk [vmem:[#allocation5 + $0x38] sm:$0x1] %vm4004, %v4530
    %v4533 = vcombine.high %v4523, %v4523
    %v4535 = vunpack.c.l.s4 1966171168
    %v4536 = vunpack.c.0.s8 %v4535
    %v4537 = vlaneseq
    %v4538 = vshrl.u32 %v4537, 7
    %v4539 = vsub.s32 %v4536, %v4538
    %v4540 = vrot.slane %v4533, %v4539
    %4542 = vst.msk [vmem:[#allocation5 + $0x39] sm:$0x1] %vm4004, %v4540
    %v4543 = vcombine.high %v4530, %v4530
    %4545 = vst.msk [vmem:[#allocation5 + $0x3a] sm:$0x1] %vm4004, %v4543
    %v4546 = vcombine.high %v4540, %v4540
    %4548 = vst.msk [vmem:[#allocation5 + $0x3b] sm:$0x1] %vm4004, %v4546
    %4549 = vst.msk [vmem:[#allocation5 + $0x3c] sm:$0x1] %vm4004, %v3994
    %v4552 = vunpack.c.l.s4 1966171168
    %v4553 = vunpack.c.0.s8 %v4552
    %v4554 = vlaneseq
    %v4555 = vshrl.u32 %v4554, 7
    %v4556 = vsub.s32 %v4553, %v4555
    %v4557 = vrot.slane %v3994, %v4556
    %v4558 = vcombine.high %v4557, %v4557
    %v4560 = vunpack.c.l.s4 1966171168
    %v4561 = vunpack.c.0.s8 %v4560
    %v4562 = vlaneseq
    %v4563 = vshrl.u32 %v4562, 7
    %v4564 = vsub.s32 %v4561, %v4563
    %v4565 = vrot.slane %v4557, %v4564
    %v4567 = vunpack.c.l.s4 1966171168
    %v4568 = vunpack.c.0.s8 %v4567
    %v4569 = vlaneseq
    %v4570 = vshrl.u32 %v4569, 7
    %v4571 = vsub.s32 %v4568, %v4570
    %v4572 = vrot.slane %v4558, %v4571
    %4574 = vst.msk [vmem:[#allocation5 + $0x3d] sm:$0x1] %vm4004, %v4572
    %v4575 = vcombine.high %v4565, %v4565
    %4577 = vst.msk [vmem:[#allocation5 + $0x3e] sm:$0x1] %vm4004, %v4575
    %v4578 = vcombine.high %v3994, %v3994
    %v4580 = vunpack.c.l.s4 1966171168
    %v4581 = vunpack.c.0.s8 %v4580
    %v4582 = vlaneseq
    %v4583 = vshrl.u32 %v4582, 7
    %v4584 = vsub.s32 %v4581, %v4583
    %v4585 = vrot.slane %v4578, %v4584
    %v4586 = vcombine.high %v4585, %v4585
    %v4588 = vunpack.c.l.s4 1966171168
    %v4589 = vunpack.c.0.s8 %v4588
    %v4590 = vlaneseq
    %v4591 = vshrl.u32 %v4590, 7
    %v4592 = vsub.s32 %v4589, %v4591
    %v4593 = vrot.slane %v4586, %v4592
    %4595 = vst.msk [vmem:[#allocation5 + $0x3f] sm:$0x1] %vm4004, %v4593
    %v4597 = vunpack.c.l.s4 1966171168
    %v4598 = vunpack.c.0.s8 %v4597
    %v4599 = vlaneseq
    %v4600 = vshrl.u32 %v4599, 7
    %v4601 = vsub.s32 %v4598, %v4600
    %v4602 = vrot.slane %v4585, %v4601
    %v4603 = vcombine.high %v4602, %v4602
    %4605 = vst.msk [vmem:[#allocation5 + $0x40] sm:$0x1] %vm4004, %v4603
    %v4606 = vcombine.high %v4593, %v4593
    %4608 = vst.msk [vmem:[#allocation5 + $0x41] sm:$0x1] %vm4004, %v4606
    %4609 = vst.msk [vmem:[#allocation5 + $0x42] sm:$0x1] %vm4004, %v3995
    %v4612 = vunpack.c.l.s4 1966171168
    %v4613 = vunpack.c.0.s8 %v4612
    %v4614 = vlaneseq
    %v4615 = vshrl.u32 %v4614, 7
    %v4616 = vsub.s32 %v4613, %v4615
    %v4617 = vrot.slane %v3995, %v4616
    %v4618 = vcombine.high %v4617, %v4617
    %v4620 = vunpack.c.l.s4 1966171168
    %v4621 = vunpack.c.0.s8 %v4620
    %v4622 = vlaneseq
    %v4623 = vshrl.u32 %v4622, 7
    %v4624 = vsub.s32 %v4621, %v4623
    %v4625 = vrot.slane %v4617, %v4624
    %v4627 = vunpack.c.l.s4 1966171168
    %v4628 = vunpack.c.0.s8 %v4627
    %v4629 = vlaneseq
    %v4630 = vshrl.u32 %v4629, 7
    %v4631 = vsub.s32 %v4628, %v4630
    %v4632 = vrot.slane %v4618, %v4631
    %4634 = vst.msk [vmem:[#allocation5 + $0x43] sm:$0x1] %vm4004, %v4632
    %v4635 = vcombine.high %v4625, %v4625
    %4637 = vst.msk [vmem:[#allocation5 + $0x44] sm:$0x1] %vm4004, %v4635
    %v4638 = vcombine.high %v4632, %v4632
    %4640 = vst.msk [vmem:[#allocation5 + $0x45] sm:$0x1] %vm4004, %v4638
    %v4641 = vcombine.high %v3995, %v3995
    %v4643 = vunpack.c.l.s4 1966171168
    %v4644 = vunpack.c.0.s8 %v4643
    %v4645 = vlaneseq
    %v4646 = vshrl.u32 %v4645, 7
    %v4647 = vsub.s32 %v4644, %v4646
    %v4648 = vrot.slane %v4641, %v4647
    %v4650 = vunpack.c.l.s4 1966171168
    %v4651 = vunpack.c.0.s8 %v4650
    %v4652 = vlaneseq
    %v4653 = vshrl.u32 %v4652, 7
    %v4654 = vsub.s32 %v4651, %v4653
    %v4655 = vrot.slane %v4648, %v4654
    %4657 = vst.msk [vmem:[#allocation5 + $0x46] sm:$0x1] %vm4004, %v4655
    %v4658 = vcombine.high %v4648, %v4648
    %v4660 = vunpack.c.l.s4 1966171168
    %v4661 = vunpack.c.0.s8 %v4660
    %v4662 = vlaneseq
    %v4663 = vshrl.u32 %v4662, 7
    %v4664 = vsub.s32 %v4661, %v4663
    %v4665 = vrot.slane %v4658, %v4664
    %4667 = vst.msk [vmem:[#allocation5 + $0x47] sm:$0x1] %vm4004, %v4665
    %4668 = vst.msk [vmem:[#allocation5 + $0x48] sm:$0x1] %vm4004, %v3996
    %v4671 = vunpack.c.l.s4 1966171168
    %v4672 = vunpack.c.0.s8 %v4671
    %v4673 = vlaneseq
    %v4674 = vshrl.u32 %v4673, 7
    %v4675 = vsub.s32 %v4672, %v4674
    %v4676 = vrot.slane %v3996, %v4675
    %v4677 = vcombine.high %v4676, %v4676
    %v4679 = vunpack.c.l.s4 1966171168
    %v4680 = vunpack.c.0.s8 %v4679
    %v4681 = vlaneseq
    %v4682 = vshrl.u32 %v4681, 7
    %v4683 = vsub.s32 %v4680, %v4682
    %v4684 = vrot.slane %v4676, %v4683
    %v4686 = vunpack.c.l.s4 1966171168
    %v4687 = vunpack.c.0.s8 %v4686
    %v4688 = vlaneseq
    %v4689 = vshrl.u32 %v4688, 7
    %v4690 = vsub.s32 %v4687, %v4689
    %v4691 = vrot.slane %v4677, %v4690
    %4693 = vst.msk [vmem:[#allocation5 + $0x49] sm:$0x1] %vm4004, %v4691
    %v4694 = vcombine.high %v4684, %v4684
    %4696 = vst.msk [vmem:[#allocation5 + $0x4a] sm:$0x1] %vm4004, %v4694
    %v4697 = vcombine.high %v4691, %v4691
    %4699 = vst.msk [vmem:[#allocation5 + $0x4b] sm:$0x1] %vm4004, %v4697
    %v4700 = vcombine.high %v3996, %v3996
    %v4702 = vunpack.c.l.s4 1966171168
    %v4703 = vunpack.c.0.s8 %v4702
    %v4704 = vlaneseq
    %v4705 = vshrl.u32 %v4704, 7
    %v4706 = vsub.s32 %v4703, %v4705
    %v4707 = vrot.slane %v4700, %v4706
    %v4709 = vunpack.c.l.s4 1966171168
    %v4710 = vunpack.c.0.s8 %v4709
    %v4711 = vlaneseq
    %v4712 = vshrl.u32 %v4711, 7
    %v4713 = vsub.s32 %v4710, %v4712
    %v4714 = vrot.slane %v4707, %v4713
    %4716 = vst.msk [vmem:[#allocation5 + $0x4c] sm:$0x1] %vm4004, %v4714
    %v4717 = vcombine.high %v4707, %v4707
    %v4719 = vunpack.c.l.s4 1966171168
    %v4720 = vunpack.c.0.s8 %v4719
    %v4721 = vlaneseq
    %v4722 = vshrl.u32 %v4721, 7
    %v4723 = vsub.s32 %v4720, %v4722
    %v4724 = vrot.slane %v4717, %v4723
    %4726 = vst.msk [vmem:[#allocation5 + $0x4d] sm:$0x1] %vm4004, %v4724
    %v4727 = vcombine.high %v4714, %v4714
    %4729 = vst.msk [vmem:[#allocation5 + $0x4e] sm:$0x1] %vm4004, %v4727
    %v4730 = vcombine.high %v4724, %v4724
    %4732 = vst.msk [vmem:[#allocation5 + $0x4f] sm:$0x1] %vm4004, %v4730
    %4733 = vst.msk [vmem:[#allocation5 + $0x50] sm:$0x1] %vm4004, %v3997
    %s4734 = smul.u32 4, 336
    %s4735 = smul.u32 %s4734, 1
    %s4736 = sshll.u32 %s4735, 4
    %4737 = dma.done %s353, %s4736
    %v4738 = vld [vmem:[#allocation5] sm:$0xff]
    %v4739 = vld [vmem:[#allocation5 + $0x8] sm:$0xff]
    %v4740 = vld [vmem:[#allocation5 + $0x10] sm:$0xff]
    %v4741 = vld [vmem:[#allocation5 + $0x18] sm:$0xff]
    %v4742 = vld [vmem:[#allocation5 + $0x20] sm:$0xff]
    %v4743 = vld [vmem:[#allocation5 + $0x28] sm:$0xff]
    %v4744 = vld [vmem:[#allocation5 + $0x30] sm:$0xff]
    %v4745 = vld [vmem:[#allocation5 + $0x38] sm:$0xff]
    %v4746 = vld [vmem:[#allocation5 + $0x40] sm:$0xff]
    %v4747 = vld [vmem:[#allocation5 + $0x48] sm:$0xff]
    %v4748 = vld [vmem:[#allocation5 + $0x50] sm:$0xf]
    %v4760 = vlaneseq
    %v4761 = vshrl.u32 %v4760, 7
    %v4762 = vsub.s32 0, %v4761
    %v4763 = vrot.slane %v4738, %v4762
    %v4764 = vlaneseq
    %v4765 = vshrl.u32 %v4764, 7
    %v4766 = vsub.s32 1, %v4765
    %v4767 = vrot.slane %v4738, %v4766
    %v4768 = vlaneseq
    %v4769 = vshrl.u32 %v4768, 7
    %v4770 = vsub.s32 2, %v4769
    %v4771 = vrot.slane %v4738, %v4770
    %v4772 = vlaneseq
    %v4773 = vshrl.u32 %v4772, 7
    %v4774 = vsub.s32 3, %v4773
    %v4775 = vrot.slane %v4738, %v4774
    %v4776 = vlaneseq
    %v4777 = vshrl.u32 %v4776, 7
    %v4778 = vsub.s32 4, %v4777
    %v4779 = vrot.slane %v4738, %v4778
    %v4780 = vlaneseq
    %v4781 = vshrl.u32 %v4780, 7
    %v4782 = vsub.s32 5, %v4781
    %v4783 = vrot.slane %v4738, %v4782
    %v4784 = vlaneseq
    %v4785 = vshrl.u32 %v4784, 7
    %v4786 = vsub.s32 6, %v4785
    %v4787 = vrot.slane %v4738, %v4786
    %v4788 = vlaneseq
    %v4789 = vshrl.u32 %v4788, 7
    %v4790 = vsub.s32 7, %v4789
    %v4791 = vrot.slane %v4738, %v4790
    %v4792 = vlaneseq
    %v4793 = vshrl.u32 %v4792, 7
    %v4794 = vsub.s32 0, %v4793
    %v4795 = vrot.slane %v4739, %v4794
    %v4796 = vlaneseq
    %v4797 = vshrl.u32 %v4796, 7
    %v4798 = vsub.s32 1, %v4797
    %v4799 = vrot.slane %v4739, %v4798
    %v4800 = vlaneseq
    %v4801 = vshrl.u32 %v4800, 7
    %v4802 = vsub.s32 2, %v4801
    %v4803 = vrot.slane %v4739, %v4802
    %v4804 = vlaneseq
    %v4805 = vshrl.u32 %v4804, 7
    %v4806 = vsub.s32 3, %v4805
    %v4807 = vrot.slane %v4739, %v4806
    %v4808 = vlaneseq
    %v4809 = vshrl.u32 %v4808, 7
    %v4810 = vsub.s32 4, %v4809
    %v4811 = vrot.slane %v4739, %v4810
    %v4812 = vlaneseq
    %v4813 = vshrl.u32 %v4812, 7
    %v4814 = vsub.s32 5, %v4813
    %v4815 = vrot.slane %v4739, %v4814
    %v4816 = vlaneseq
    %v4817 = vshrl.u32 %v4816, 7
    %v4818 = vsub.s32 6, %v4817
    %v4819 = vrot.slane %v4739, %v4818
    %v4820 = vlaneseq
    %v4821 = vshrl.u32 %v4820, 7
    %v4822 = vsub.s32 7, %v4821
    %v4823 = vrot.slane %v4739, %v4822
    %v4824 = vlaneseq
    %v4825 = vshrl.u32 %v4824, 7
    %v4826 = vsub.s32 0, %v4825
    %v4827 = vrot.slane %v4740, %v4826
    %v4828 = vlaneseq
    %v4829 = vshrl.u32 %v4828, 7
    %v4830 = vsub.s32 1, %v4829
    %v4831 = vrot.slane %v4740, %v4830
    %v4832 = vlaneseq
    %v4833 = vshrl.u32 %v4832, 7
    %v4834 = vsub.s32 2, %v4833
    %v4835 = vrot.slane %v4740, %v4834
    %v4836 = vlaneseq
    %v4837 = vshrl.u32 %v4836, 7
    %v4838 = vsub.s32 3, %v4837
    %v4839 = vrot.slane %v4740, %v4838
    %v4840 = vlaneseq
    %v4841 = vshrl.u32 %v4840, 7
    %v4842 = vsub.s32 4, %v4841
    %v4843 = vrot.slane %v4740, %v4842
    %v4844 = vlaneseq
    %v4845 = vshrl.u32 %v4844, 7
    %v4846 = vsub.s32 5, %v4845
    %v4847 = vrot.slane %v4740, %v4846
    %v4848 = vlaneseq
    %v4849 = vshrl.u32 %v4848, 7
    %v4850 = vsub.s32 6, %v4849
    %v4851 = vrot.slane %v4740, %v4850
    %v4852 = vlaneseq
    %v4853 = vshrl.u32 %v4852, 7
    %v4854 = vsub.s32 7, %v4853
    %v4855 = vrot.slane %v4740, %v4854
    %v4856 = vlaneseq
    %v4857 = vshrl.u32 %v4856, 7
    %v4858 = vsub.s32 0, %v4857
    %v4859 = vrot.slane %v4741, %v4858
    %v4860 = vlaneseq
    %v4861 = vshrl.u32 %v4860, 7
    %v4862 = vsub.s32 1, %v4861
    %v4863 = vrot.slane %v4741, %v4862
    %v4864 = vlaneseq
    %v4865 = vshrl.u32 %v4864, 7
    %v4866 = vsub.s32 2, %v4865
    %v4867 = vrot.slane %v4741, %v4866
    %v4868 = vlaneseq
    %v4869 = vshrl.u32 %v4868, 7
    %v4870 = vsub.s32 3, %v4869
    %v4871 = vrot.slane %v4741, %v4870
    %v4872 = vlaneseq
    %v4873 = vshrl.u32 %v4872, 7
    %v4874 = vsub.s32 4, %v4873
    %v4875 = vrot.slane %v4741, %v4874
    %v4876 = vlaneseq
    %v4877 = vshrl.u32 %v4876, 7
    %v4878 = vsub.s32 5, %v4877
    %v4879 = vrot.slane %v4741, %v4878
    %v4880 = vlaneseq
    %v4881 = vshrl.u32 %v4880, 7
    %v4882 = vsub.s32 6, %v4881
    %v4883 = vrot.slane %v4741, %v4882
    %v4884 = vlaneseq
    %v4885 = vshrl.u32 %v4884, 7
    %v4886 = vsub.s32 7, %v4885
    %v4887 = vrot.slane %v4741, %v4886
    %v4888 = vlaneseq
    %v4889 = vshrl.u32 %v4888, 7
    %v4890 = vsub.s32 0, %v4889
    %v4891 = vrot.slane %v4742, %v4890
    %v4892 = vlaneseq
    %v4893 = vshrl.u32 %v4892, 7
    %v4894 = vsub.s32 1, %v4893
    %v4895 = vrot.slane %v4742, %v4894
    %v4896 = vlaneseq
    %v4897 = vshrl.u32 %v4896, 7
    %v4898 = vsub.s32 2, %v4897
    %v4899 = vrot.slane %v4742, %v4898
    %v4900 = vlaneseq
    %v4901 = vshrl.u32 %v4900, 7
    %v4902 = vsub.s32 3, %v4901
    %v4903 = vrot.slane %v4742, %v4902
    %v4904 = vlaneseq
    %v4905 = vshrl.u32 %v4904, 7
    %v4906 = vsub.s32 4, %v4905
    %v4907 = vrot.slane %v4742, %v4906
    %v4908 = vlaneseq
    %v4909 = vshrl.u32 %v4908, 7
    %v4910 = vsub.s32 5, %v4909
    %v4911 = vrot.slane %v4742, %v4910
    %v4912 = vlaneseq
    %v4913 = vshrl.u32 %v4912, 7
    %v4914 = vsub.s32 6, %v4913
    %v4915 = vrot.slane %v4742, %v4914
    %v4916 = vlaneseq
    %v4917 = vshrl.u32 %v4916, 7
    %v4918 = vsub.s32 7, %v4917
    %v4919 = vrot.slane %v4742, %v4918
    %v4920 = vlaneseq
    %v4921 = vshrl.u32 %v4920, 7
    %v4922 = vsub.s32 0, %v4921
    %v4923 = vrot.slane %v4743, %v4922
    %v4924 = vlaneseq
    %v4925 = vshrl.u32 %v4924, 7
    %v4926 = vsub.s32 1, %v4925
    %v4927 = vrot.slane %v4743, %v4926
    %v4928 = vlaneseq
    %v4929 = vshrl.u32 %v4928, 7
    %v4930 = vsub.s32 2, %v4929
    %v4931 = vrot.slane %v4743, %v4930
    %v4932 = vlaneseq
    %v4933 = vshrl.u32 %v4932, 7
    %v4934 = vsub.s32 3, %v4933
    %v4935 = vrot.slane %v4743, %v4934
    %v4936 = vlaneseq
    %v4937 = vshrl.u32 %v4936, 7
    %v4938 = vsub.s32 4, %v4937
    %v4939 = vrot.slane %v4743, %v4938
    %v4940 = vlaneseq
    %v4941 = vshrl.u32 %v4940, 7
    %v4942 = vsub.s32 5, %v4941
    %v4943 = vrot.slane %v4743, %v4942
    %v4944 = vlaneseq
    %v4945 = vshrl.u32 %v4944, 7
    %v4946 = vsub.s32 6, %v4945
    %v4947 = vrot.slane %v4743, %v4946
    %v4948 = vlaneseq
    %v4949 = vshrl.u32 %v4948, 7
    %v4950 = vsub.s32 7, %v4949
    %v4951 = vrot.slane %v4743, %v4950
    %v4952 = vlaneseq
    %v4953 = vshrl.u32 %v4952, 7
    %v4954 = vsub.s32 0, %v4953
    %v4955 = vrot.slane %v4744, %v4954
    %v4956 = vlaneseq
    %v4957 = vshrl.u32 %v4956, 7
    %v4958 = vsub.s32 1, %v4957
    %v4959 = vrot.slane %v4744, %v4958
    %v4960 = vlaneseq
    %v4961 = vshrl.u32 %v4960, 7
    %v4962 = vsub.s32 2, %v4961
    %v4963 = vrot.slane %v4744, %v4962
    %v4964 = vlaneseq
    %v4965 = vshrl.u32 %v4964, 7
    %v4966 = vsub.s32 3, %v4965
    %v4967 = vrot.slane %v4744, %v4966
    %v4968 = vlaneseq
    %v4969 = vshrl.u32 %v4968, 7
    %v4970 = vsub.s32 4, %v4969
    %v4971 = vrot.slane %v4744, %v4970
    %v4972 = vlaneseq
    %v4973 = vshrl.u32 %v4972, 7
    %v4974 = vsub.s32 5, %v4973
    %v4975 = vrot.slane %v4744, %v4974
    %v4976 = vlaneseq
    %v4977 = vshrl.u32 %v4976, 7
    %v4978 = vsub.s32 6, %v4977
    %v4979 = vrot.slane %v4744, %v4978
    %v4980 = vlaneseq
    %v4981 = vshrl.u32 %v4980, 7
    %v4982 = vsub.s32 7, %v4981
    %v4983 = vrot.slane %v4744, %v4982
    %v4984 = vlaneseq
    %v4985 = vshrl.u32 %v4984, 7
    %v4986 = vsub.s32 0, %v4985
    %v4987 = vrot.slane %v4745, %v4986
    %v4988 = vlaneseq
    %v4989 = vshrl.u32 %v4988, 7
    %v4990 = vsub.s32 1, %v4989
    %v4991 = vrot.slane %v4745, %v4990
    %v4992 = vlaneseq
    %v4993 = vshrl.u32 %v4992, 7
    %v4994 = vsub.s32 2, %v4993
    %v4995 = vrot.slane %v4745, %v4994
    %v4996 = vlaneseq
    %v4997 = vshrl.u32 %v4996, 7
    %v4998 = vsub.s32 3, %v4997
    %v4999 = vrot.slane %v4745, %v4998
    %v5000 = vlaneseq
    %v5001 = vshrl.u32 %v5000, 7
    %v5002 = vsub.s32 4, %v5001
    %v5003 = vrot.slane %v4745, %v5002
    %v5004 = vlaneseq
    %v5005 = vshrl.u32 %v5004, 7
    %v5006 = vsub.s32 5, %v5005
    %v5007 = vrot.slane %v4745, %v5006
    %v5008 = vlaneseq
    %v5009 = vshrl.u32 %v5008, 7
    %v5010 = vsub.s32 6, %v5009
    %v5011 = vrot.slane %v4745, %v5010
    %v5012 = vlaneseq
    %v5013 = vshrl.u32 %v5012, 7
    %v5014 = vsub.s32 7, %v5013
    %v5015 = vrot.slane %v4745, %v5014
    %v5016 = vlaneseq
    %v5017 = vshrl.u32 %v5016, 7
    %v5018 = vsub.s32 0, %v5017
    %v5019 = vrot.slane %v4746, %v5018
    %v5020 = vlaneseq
    %v5021 = vshrl.u32 %v5020, 7
    %v5022 = vsub.s32 1, %v5021
    %v5023 = vrot.slane %v4746, %v5022
    %v5024 = vlaneseq
    %v5025 = vshrl.u32 %v5024, 7
    %v5026 = vsub.s32 2, %v5025
    %v5027 = vrot.slane %v4746, %v5026
    %v5028 = vlaneseq
    %v5029 = vshrl.u32 %v5028, 7
    %v5030 = vsub.s32 3, %v5029
    %v5031 = vrot.slane %v4746, %v5030
    %v5032 = vlaneseq
    %v5033 = vshrl.u32 %v5032, 7
    %v5034 = vsub.s32 4, %v5033
    %v5035 = vrot.slane %v4746, %v5034
    %v5036 = vlaneseq
    %v5037 = vshrl.u32 %v5036, 7
    %v5038 = vsub.s32 5, %v5037
    %v5039 = vrot.slane %v4746, %v5038
    %v5040 = vlaneseq
    %v5041 = vshrl.u32 %v5040, 7
    %v5042 = vsub.s32 6, %v5041
    %v5043 = vrot.slane %v4746, %v5042
    %v5044 = vlaneseq
    %v5045 = vshrl.u32 %v5044, 7
    %v5046 = vsub.s32 7, %v5045
    %v5047 = vrot.slane %v4746, %v5046
    %v5048 = vlaneseq
    %v5049 = vshrl.u32 %v5048, 7
    %v5050 = vsub.s32 0, %v5049
    %v5051 = vrot.slane %v4747, %v5050
    %v5052 = vlaneseq
    %v5053 = vshrl.u32 %v5052, 7
    %v5054 = vsub.s32 1, %v5053
    %v5055 = vrot.slane %v4747, %v5054
    %v5056 = vlaneseq
    %v5057 = vshrl.u32 %v5056, 7
    %v5058 = vsub.s32 2, %v5057
    %v5059 = vrot.slane %v4747, %v5058
    %v5060 = vlaneseq
    %v5061 = vshrl.u32 %v5060, 7
    %v5062 = vsub.s32 3, %v5061
    %v5063 = vrot.slane %v4747, %v5062
    %v5064 = vlaneseq
    %v5065 = vshrl.u32 %v5064, 7
    %v5066 = vsub.s32 4, %v5065
    %v5067 = vrot.slane %v4747, %v5066
    %v5068 = vlaneseq
    %v5069 = vshrl.u32 %v5068, 7
    %v5070 = vsub.s32 5, %v5069
    %v5071 = vrot.slane %v4747, %v5070
    %v5072 = vlaneseq
    %v5073 = vshrl.u32 %v5072, 7
    %v5074 = vsub.s32 6, %v5073
    %v5075 = vrot.slane %v4747, %v5074
    %v5076 = vlaneseq
    %v5077 = vshrl.u32 %v5076, 7
    %v5078 = vsub.s32 7, %v5077
    %v5079 = vrot.slane %v4747, %v5078
    %v5080 = vlaneseq
    %v5081 = vshrl.u32 %v5080, 7
    %v5082 = vsub.s32 0, %v5081
    %v5083 = vrot.slane %v4748, %v5082
    %v5084 = vlaneseq
    %v5085 = vshrl.u32 %v5084, 7
    %v5086 = vsub.s32 1, %v5085
    %v5087 = vrot.slane %v4748, %v5086
    %v5088 = vlaneseq
    %v5089 = vshrl.u32 %v5088, 7
    %v5090 = vsub.s32 2, %v5089
    %v5091 = vrot.slane %v4748, %v5090
    %v5092 = vlaneseq
    %v5093 = vshrl.u32 %v5092, 7
    %v5094 = vsub.s32 3, %v5093
    %v5095 = vrot.slane %v4748, %v5094
    %v5180 = vpack.c.bf16 %v4763, %v4763
    %v5181 = vpack.c.bf16 %v4767, %v4767
    %v5182 = vpack.c.bf16 %v4771, %v4771
    %v5183 = vpack.c.bf16 %v4775, %v4775
    %v5184 = vpack.c.bf16 %v4779, %v4779
    %v5185 = vpack.c.bf16 %v4783, %v4783
    %v5186 = vpack.c.bf16 %v4787, %v4787
    %v5187 = vpack.c.bf16 %v4791, %v4791
    %v5188 = vpack.c.bf16 %v4795, %v4795
    %v5189 = vpack.c.bf16 %v4799, %v4799
    %v5190 = vpack.c.bf16 %v4803, %v4803
    %v5191 = vpack.c.bf16 %v4807, %v4807
    %v5192 = vpack.c.bf16 %v4811, %v4811
    %v5193 = vpack.c.bf16 %v4815, %v4815
    %v5194 = vpack.c.bf16 %v4819, %v4819
    %v5195 = vpack.c.bf16 %v4823, %v4823
    %v5196 = vpack.c.bf16 %v4827, %v4827
    %v5197 = vpack.c.bf16 %v4831, %v4831
    %v5198 = vpack.c.bf16 %v4835, %v4835
    %v5199 = vpack.c.bf16 %v4839, %v4839
    %v5200 = vpack.c.bf16 %v4843, %v4843
    %v5201 = vpack.c.bf16 %v4847, %v4847
    %v5202 = vpack.c.bf16 %v4851, %v4851
    %v5203 = vpack.c.bf16 %v4855, %v4855
    %v5204 = vpack.c.bf16 %v4859, %v4859
    %v5205 = vpack.c.bf16 %v4863, %v4863
    %v5206 = vpack.c.bf16 %v4867, %v4867
    %v5207 = vpack.c.bf16 %v4871, %v4871
    %v5208 = vpack.c.bf16 %v4875, %v4875
    %v5209 = vpack.c.bf16 %v4879, %v4879
    %v5210 = vpack.c.bf16 %v4883, %v4883
    %v5211 = vpack.c.bf16 %v4887, %v4887
    %v5212 = vpack.c.bf16 %v4891, %v4891
    %v5213 = vpack.c.bf16 %v4895, %v4895
    %v5214 = vpack.c.bf16 %v4899, %v4899
    %v5215 = vpack.c.bf16 %v4903, %v4903
    %v5216 = vpack.c.bf16 %v4907, %v4907
    %v5217 = vpack.c.bf16 %v4911, %v4911
    %v5218 = vpack.c.bf16 %v4915, %v4915
    %v5219 = vpack.c.bf16 %v4919, %v4919
    %v5220 = vpack.c.bf16 %v4923, %v4923
    %v5221 = vpack.c.bf16 %v4927, %v4927
    %v5222 = vpack.c.bf16 %v4931, %v4931
    %v5223 = vpack.c.bf16 %v4935, %v4935
    %v5224 = vpack.c.bf16 %v4939, %v4939
    %v5225 = vpack.c.bf16 %v4943, %v4943
    %v5226 = vpack.c.bf16 %v4947, %v4947
    %v5227 = vpack.c.bf16 %v4951, %v4951
    %v5228 = vpack.c.bf16 %v4955, %v4955
    %v5229 = vpack.c.bf16 %v4959, %v4959
    %v5230 = vpack.c.bf16 %v4963, %v4963
    %v5231 = vpack.c.bf16 %v4967, %v4967
    %v5232 = vpack.c.bf16 %v4971, %v4971
    %v5233 = vpack.c.bf16 %v4975, %v4975
    %v5234 = vpack.c.bf16 %v4979, %v4979
    %v5235 = vpack.c.bf16 %v4983, %v4983
    %v5236 = vpack.c.bf16 %v4987, %v4987
    %v5237 = vpack.c.bf16 %v4991, %v4991
    %v5238 = vpack.c.bf16 %v4995, %v4995
    %v5239 = vpack.c.bf16 %v4999, %v4999
    %v5240 = vpack.c.bf16 %v5003, %v5003
    %v5241 = vpack.c.bf16 %v5007, %v5007
    %v5242 = vpack.c.bf16 %v5011, %v5011
    %v5243 = vpack.c.bf16 %v5015, %v5015
    %v5244 = vpack.c.bf16 %v5019, %v5019
    %v5245 = vpack.c.bf16 %v5023, %v5023
    %v5246 = vpack.c.bf16 %v5027, %v5027
    %v5247 = vpack.c.bf16 %v5031, %v5031
    %v5248 = vpack.c.bf16 %v5035, %v5035
    %v5249 = vpack.c.bf16 %v5039, %v5039
    %v5250 = vpack.c.bf16 %v5043, %v5043
    %v5251 = vpack.c.bf16 %v5047, %v5047
    %v5252 = vpack.c.bf16 %v5051, %v5051
    %v5253 = vpack.c.bf16 %v5055, %v5055
    %v5254 = vpack.c.bf16 %v5059, %v5059
    %v5255 = vpack.c.bf16 %v5063, %v5063
    %v5256 = vpack.c.bf16 %v5067, %v5067
    %v5257 = vpack.c.bf16 %v5071, %v5071
    %v5258 = vpack.c.bf16 %v5075, %v5075
    %v5259 = vpack.c.bf16 %v5079, %v5079
    %v5260 = vpack.c.bf16 %v5083, %v5083
    %v5261 = vpack.c.bf16 %v5087, %v5087
    %v5262 = vpack.c.bf16 %v5091, %v5091
    %v5263 = vpack.c.bf16 %v5095, %v5095
    %v5264 = vld [vmem:[#allocation4] sm:$0xf]
    %v5265 = vld [vmem:[#allocation4 + $0x4] sm:$0xf]
    %v5266 = vld [vmem:[#allocation4 + $0x8] sm:$0xf]
    %v5267 = vld [vmem:[#allocation4 + $0xc] sm:$0xf]
    %v5268 = vld [vmem:[#allocation4 + $0x10] sm:$0xf]
    %v5269 = vld [vmem:[#allocation4 + $0x14] sm:$0xf]
    %v5270 = vld [vmem:[#allocation4 + $0x18] sm:$0xf]
    %v5271 = vld [vmem:[#allocation4 + $0x1c] sm:$0xf]
    %v5272 = vld [vmem:[#allocation4 + $0x20] sm:$0xf]
    %v5273 = vld [vmem:[#allocation4 + $0x24] sm:$0xf]
    %v5274 = vld [vmem:[#allocation4 + $0x28] sm:$0xf]
    %v5275 = vld [vmem:[#allocation4 + $0x2c] sm:$0xf]
    %v5276 = vld [vmem:[#allocation4 + $0x30] sm:$0xf]
    %v5277 = vld [vmem:[#allocation4 + $0x34] sm:$0xf]
    %v5278 = vld [vmem:[#allocation4 + $0x38] sm:$0xf]
    %v5279 = vld [vmem:[#allocation4 + $0x3c] sm:$0xf]
    %v5280 = vld [vmem:[#allocation4 + $0x40] sm:$0xf]
    %v5281 = vld [vmem:[#allocation4 + $0x44] sm:$0xf]
    %v5282 = vld [vmem:[#allocation4 + $0x48] sm:$0xf]
    %v5283 = vld [vmem:[#allocation4 + $0x4c] sm:$0xf]
    %v5284 = vld [vmem:[#allocation4 + $0x50] sm:$0xf]
    %v5285 = vld [vmem:[#allocation4 + $0x54] sm:$0xf]
    %v5286 = vld [vmem:[#allocation4 + $0x58] sm:$0xf]
    %v5287 = vld [vmem:[#allocation4 + $0x5c] sm:$0xf]
    %v5288 = vld [vmem:[#allocation4 + $0x60] sm:$0xf]
    %v5289 = vld [vmem:[#allocation4 + $0x64] sm:$0xf]
    %v5290 = vld [vmem:[#allocation4 + $0x68] sm:$0xf]
    %v5291 = vld [vmem:[#allocation4 + $0x6c] sm:$0xf]
    %v5292 = vld [vmem:[#allocation4 + $0x70] sm:$0xf]
    %v5293 = vld [vmem:[#allocation4 + $0x74] sm:$0xf]
    %v5294 = vld [vmem:[#allocation4 + $0x78] sm:$0xf]
    %v5295 = vld [vmem:[#allocation4 + $0x7c] sm:$0xf]
    %v5296 = vld [vmem:[#allocation4 + $0x80] sm:$0xf]
    %v5297 = vld [vmem:[#allocation4 + $0x84] sm:$0xf]
    %v5298 = vld [vmem:[#allocation4 + $0x88] sm:$0xf]
    %v5299 = vld [vmem:[#allocation4 + $0x8c] sm:$0xf]
    %v5300 = vld [vmem:[#allocation4 + $0x90] sm:$0xf]
    %v5301 = vld [vmem:[#allocation4 + $0x94] sm:$0xf]
    %v5302 = vld [vmem:[#allocation4 + $0x98] sm:$0xf]
    %v5303 = vld [vmem:[#allocation4 + $0x9c] sm:$0xf]
    %v5304 = vld [vmem:[#allocation4 + $0xa0] sm:$0xf]
    %v5305 = vld [vmem:[#allocation4 + $0xa4] sm:$0xf]
    %v5306 = vld [vmem:[#allocation4 + $0xa8] sm:$0xf]
    %v5307 = vld [vmem:[#allocation4 + $0xac] sm:$0xf]
    %v5308 = vld [vmem:[#allocation4 + $0xb0] sm:$0xf]
    %v5309 = vld [vmem:[#allocation4 + $0xb4] sm:$0xf]
    %v5310 = vld [vmem:[#allocation4 + $0xb8] sm:$0xf]
    %v5311 = vld [vmem:[#allocation4 + $0xbc] sm:$0xf]
    %v5312 = vld [vmem:[#allocation4 + $0xc0] sm:$0xf]
    %v5313 = vld [vmem:[#allocation4 + $0xc4] sm:$0xf]
    %v5314 = vld [vmem:[#allocation4 + $0xc8] sm:$0xf]
    %v5315 = vld [vmem:[#allocation4 + $0xcc] sm:$0xf]
    %v5316 = vld [vmem:[#allocation4 + $0xd0] sm:$0xf]
    %v5317 = vld [vmem:[#allocation4 + $0xd4] sm:$0xf]
    %v5318 = vld [vmem:[#allocation4 + $0xd8] sm:$0xf]
    %v5319 = vld [vmem:[#allocation4 + $0xdc] sm:$0xf]
    %v5320 = vld [vmem:[#allocation4 + $0xe0] sm:$0xf]
    %v5321 = vld [vmem:[#allocation4 + $0xe4] sm:$0xf]
    %v5322 = vld [vmem:[#allocation4 + $0xe8] sm:$0xf]
    %v5323 = vld [vmem:[#allocation4 + $0xec] sm:$0xf]
    %v5324 = vld [vmem:[#allocation4 + $0xf0] sm:$0xf]
    %v5325 = vld [vmem:[#allocation4 + $0xf4] sm:$0xf]
    %v5326 = vld [vmem:[#allocation4 + $0xf8] sm:$0xf]
    %v5327 = vld [vmem:[#allocation4 + $0xfc] sm:$0xf]
    %v5328 = vld [vmem:[#allocation4 + $0x100] sm:$0xf]
    %v5329 = vld [vmem:[#allocation4 + $0x104] sm:$0xf]
    %v5330 = vld [vmem:[#allocation4 + $0x108] sm:$0xf]
    %v5331 = vld [vmem:[#allocation4 + $0x10c] sm:$0xf]
    %v5332 = vld [vmem:[#allocation4 + $0x110] sm:$0xf]
    %v5333 = vld [vmem:[#allocation4 + $0x114] sm:$0xf]
    %v5334 = vld [vmem:[#allocation4 + $0x118] sm:$0xf]
    %v5335 = vld [vmem:[#allocation4 + $0x11c] sm:$0xf]
    %v5336 = vld [vmem:[#allocation4 + $0x120] sm:$0xf]
    %v5337 = vld [vmem:[#allocation4 + $0x124] sm:$0xf]
    %v5338 = vld [vmem:[#allocation4 + $0x128] sm:$0xf]
    %v5339 = vld [vmem:[#allocation4 + $0x12c] sm:$0xf]
    %v5340 = vld [vmem:[#allocation4 + $0x130] sm:$0xf]
    %v5341 = vld [vmem:[#allocation4 + $0x134] sm:$0xf]
    %v5342 = vld [vmem:[#allocation4 + $0x138] sm:$0xf]
    %v5343 = vld [vmem:[#allocation4 + $0x13c] sm:$0xf]
    %v5344 = vld [vmem:[#allocation4 + $0x140] sm:$0xf]
    %v5345 = vld [vmem:[#allocation4 + $0x144] sm:$0xf]
    %v5346 = vld [vmem:[#allocation4 + $0x148] sm:$0xf]
    %v5347 = vld [vmem:[#allocation4 + $0x14c] sm:$0xf]
    %v5348 = vld [vmem:[#allocation4 + $0x150] sm:$0xf]
    %v5349 = vld [vmem:[#allocation4 + $0x154] sm:$0xf]
    %v5350 = vld [vmem:[#allocation4 + $0x158] sm:$0xf]
    %v5351 = vld [vmem:[#allocation4 + $0x15c] sm:$0xf]
    %v5352 = vld [vmem:[#allocation4 + $0x160] sm:$0xf]
    %v5353 = vld [vmem:[#allocation4 + $0x164] sm:$0xf]
    %v5354 = vld [vmem:[#allocation4 + $0x168] sm:$0xf]
    %v5355 = vld [vmem:[#allocation4 + $0x16c] sm:$0xf]
    %v5356 = vld [vmem:[#allocation4 + $0x170] sm:$0xf]
    %v5357 = vld [vmem:[#allocation4 + $0x174] sm:$0xf]
    %v5358 = vld [vmem:[#allocation4 + $0x178] sm:$0xf]
    %v5359 = vld [vmem:[#allocation4 + $0x17c] sm:$0xf]
    %v5360 = vld [vmem:[#allocation4 + $0x180] sm:$0xf]
    %v5361 = vld [vmem:[#allocation4 + $0x184] sm:$0xf]
    %v5362 = vld [vmem:[#allocation4 + $0x188] sm:$0xf]
    %v5363 = vld [vmem:[#allocation4 + $0x18c] sm:$0xf]
    %v5364 = vld [vmem:[#allocation4 + $0x190] sm:$0xf]
    %v5365 = vld [vmem:[#allocation4 + $0x194] sm:$0xf]
    %v5366 = vld [vmem:[#allocation4 + $0x198] sm:$0xf]
    %v5367 = vld [vmem:[#allocation4 + $0x19c] sm:$0xf]
    %v5368 = vld [vmem:[#allocation4 + $0x1a0] sm:$0xf]
    %v5369 = vld [vmem:[#allocation4 + $0x1a4] sm:$0xf]
    %v5370 = vld [vmem:[#allocation4 + $0x1a8] sm:$0xf]
    %v5371 = vld [vmem:[#allocation4 + $0x1ac] sm:$0xf]
    %v5372 = vld [vmem:[#allocation4 + $0x1b0] sm:$0xf]
    %v5373 = vld [vmem:[#allocation4 + $0x1b4] sm:$0xf]
    %v5374 = vld [vmem:[#allocation4 + $0x1b8] sm:$0xf]
    %v5375 = vld [vmem:[#allocation4 + $0x1bc] sm:$0xf]
    %v5376 = vld [vmem:[#allocation4 + $0x1c0] sm:$0xf]
    %v5377 = vld [vmem:[#allocation4 + $0x1c4] sm:$0xf]
    %v5378 = vld [vmem:[#allocation4 + $0x1c8] sm:$0xf]
    %v5379 = vld [vmem:[#allocation4 + $0x1cc] sm:$0xf]
    %v5380 = vld [vmem:[#allocation4 + $0x1d0] sm:$0xf]
    %v5381 = vld [vmem:[#allocation4 + $0x1d4] sm:$0xf]
    %v5382 = vld [vmem:[#allocation4 + $0x1d8] sm:$0xf]
    %v5383 = vld [vmem:[#allocation4 + $0x1dc] sm:$0xf]
    %v5384 = vld [vmem:[#allocation4 + $0x1e0] sm:$0xf]
    %v5385 = vld [vmem:[#allocation4 + $0x1e4] sm:$0xf]
    %v5386 = vld [vmem:[#allocation4 + $0x1e8] sm:$0xf]
    %v5387 = vld [vmem:[#allocation4 + $0x1ec] sm:$0xf]
    %v5388 = vld [vmem:[#allocation4 + $0x1f0] sm:$0xf]
    %v5389 = vld [vmem:[#allocation4 + $0x1f4] sm:$0xf]
    %v5390 = vld [vmem:[#allocation4 + $0x1f8] sm:$0xf]
    %v5391 = vld [vmem:[#allocation4 + $0x1fc] sm:$0xf]
    %v5392 = vld [vmem:[#allocation4 + $0x200] sm:$0xf]
    %v5393 = vld [vmem:[#allocation4 + $0x204] sm:$0xf]
    %v5394 = vld [vmem:[#allocation4 + $0x208] sm:$0xf]
    %v5395 = vld [vmem:[#allocation4 + $0x20c] sm:$0xf]
    %v5396 = vld [vmem:[#allocation4 + $0x210] sm:$0xf]
    %v5397 = vld [vmem:[#allocation4 + $0x214] sm:$0xf]
    %v5398 = vld [vmem:[#allocation4 + $0x218] sm:$0xf]
    %v5399 = vld [vmem:[#allocation4 + $0x21c] sm:$0xf]
    %v5400 = vld [vmem:[#allocation4 + $0x220] sm:$0xf]
    %v5401 = vld [vmem:[#allocation4 + $0x224] sm:$0xf]
    %v5402 = vld [vmem:[#allocation4 + $0x228] sm:$0xf]
    %v5403 = vld [vmem:[#allocation4 + $0x22c] sm:$0xf]
    %v5404 = vld [vmem:[#allocation4 + $0x230] sm:$0xf]
    %v5405 = vld [vmem:[#allocation4 + $0x234] sm:$0xf]
    %v5406 = vld [vmem:[#allocation4 + $0x238] sm:$0xf]
    %v5407 = vld [vmem:[#allocation4 + $0x23c] sm:$0xf]
    %v5408 = vld [vmem:[#allocation4 + $0x240] sm:$0xf]
    %v5409 = vld [vmem:[#allocation4 + $0x244] sm:$0xf]
    %v5410 = vld [vmem:[#allocation4 + $0x248] sm:$0xf]
    %v5411 = vld [vmem:[#allocation4 + $0x24c] sm:$0xf]
    %v5412 = vld [vmem:[#allocation4 + $0x250] sm:$0xf]
    %v5413 = vld [vmem:[#allocation4 + $0x254] sm:$0xf]
    %v5414 = vld [vmem:[#allocation4 + $0x258] sm:$0xf]
    %v5415 = vld [vmem:[#allocation4 + $0x25c] sm:$0xf]
    %v5416 = vld [vmem:[#allocation4 + $0x260] sm:$0xf]
    %v5417 = vld [vmem:[#allocation4 + $0x264] sm:$0xf]
    %v5418 = vld [vmem:[#allocation4 + $0x268] sm:$0xf]
    %v5419 = vld [vmem:[#allocation4 + $0x26c] sm:$0xf]
    %v5420 = vld [vmem:[#allocation4 + $0x270] sm:$0xf]
    %v5421 = vld [vmem:[#allocation4 + $0x274] sm:$0xf]
    %v5422 = vld [vmem:[#allocation4 + $0x278] sm:$0xf]
    %v5423 = vld [vmem:[#allocation4 + $0x27c] sm:$0xf]
    %v5424 = vld [vmem:[#allocation4 + $0x280] sm:$0xf]
    %v5425 = vld [vmem:[#allocation4 + $0x284] sm:$0xf]
    %v5426 = vld [vmem:[#allocation4 + $0x288] sm:$0xf]
    %v5427 = vld [vmem:[#allocation4 + $0x28c] sm:$0xf]
    %v5428 = vld [vmem:[#allocation4 + $0x290] sm:$0xf]
    %v5429 = vld [vmem:[#allocation4 + $0x294] sm:$0xf]
    %v5430 = vld [vmem:[#allocation4 + $0x298] sm:$0xf]
    %v5431 = vld [vmem:[#allocation4 + $0x29c] sm:$0xf]
    %v5432 = vld [vmem:[#allocation4 + $0x2a0] sm:$0xf]
    %v5433 = vld [vmem:[#allocation4 + $0x2a4] sm:$0xf]
    %v5434 = vld [vmem:[#allocation4 + $0x2a8] sm:$0xf]
    %v5435 = vld [vmem:[#allocation4 + $0x2ac] sm:$0xf]
    %v5436 = vld [vmem:[#allocation4 + $0x2b0] sm:$0xf]
    %v5437 = vld [vmem:[#allocation4 + $0x2b4] sm:$0xf]
    %v5438 = vld [vmem:[#allocation4 + $0x2b8] sm:$0xf]
    %v5439 = vld [vmem:[#allocation4 + $0x2bc] sm:$0xf]
    %v5440 = vld [vmem:[#allocation4 + $0x2c0] sm:$0xf]
    %v5441 = vld [vmem:[#allocation4 + $0x2c4] sm:$0xf]
    %v5442 = vld [vmem:[#allocation4 + $0x2c8] sm:$0xf]
    %v5443 = vld [vmem:[#allocation4 + $0x2cc] sm:$0xf]
    %v5444 = vld [vmem:[#allocation4 + $0x2d0] sm:$0xf]
    %v5445 = vld [vmem:[#allocation4 + $0x2d4] sm:$0xf]
    %v5446 = vld [vmem:[#allocation4 + $0x2d8] sm:$0xf]
    %v5447 = vld [vmem:[#allocation4 + $0x2dc] sm:$0xf]
    %v5448 = vld [vmem:[#allocation4 + $0x2e0] sm:$0xf]
    %v5449 = vld [vmem:[#allocation4 + $0x2e4] sm:$0xf]
    %v5450 = vld [vmem:[#allocation4 + $0x2e8] sm:$0xf]
    %v5451 = vld [vmem:[#allocation4 + $0x2ec] sm:$0xf]
    %v5452 = vld [vmem:[#allocation4 + $0x2f0] sm:$0xf]
    %v5453 = vld [vmem:[#allocation4 + $0x2f4] sm:$0xf]
    %v5454 = vld [vmem:[#allocation4 + $0x2f8] sm:$0xf]
    %v5455 = vld [vmem:[#allocation4 + $0x2fc] sm:$0xf]
    %v5456 = vld [vmem:[#allocation4 + $0x300] sm:$0xf]
    %v5457 = vld [vmem:[#allocation4 + $0x304] sm:$0xf]
    %v5458 = vld [vmem:[#allocation4 + $0x308] sm:$0xf]
    %v5459 = vld [vmem:[#allocation4 + $0x30c] sm:$0xf]
    %v5460 = vld [vmem:[#allocation4 + $0x310] sm:$0xf]
    %v5461 = vld [vmem:[#allocation4 + $0x314] sm:$0xf]
    %v5462 = vld [vmem:[#allocation4 + $0x318] sm:$0xf]
    %v5463 = vld [vmem:[#allocation4 + $0x31c] sm:$0xf]
    %v5464 = vld [vmem:[#allocation4 + $0x320] sm:$0xf]
    %v5465 = vld [vmem:[#allocation4 + $0x324] sm:$0xf]
    %v5466 = vld [vmem:[#allocation4 + $0x328] sm:$0xf]
    %v5467 = vld [vmem:[#allocation4 + $0x32c] sm:$0xf]
    %v5468 = vld [vmem:[#allocation4 + $0x330] sm:$0xf]
    %v5469 = vld [vmem:[#allocation4 + $0x334] sm:$0xf]
    %v5470 = vld [vmem:[#allocation4 + $0x338] sm:$0xf]
    %v5471 = vld [vmem:[#allocation4 + $0x33c] sm:$0xf]
    %v5472 = vld [vmem:[#allocation4 + $0x340] sm:$0xf]
    %v5473 = vld [vmem:[#allocation4 + $0x344] sm:$0xf]
    %v5474 = vld [vmem:[#allocation4 + $0x348] sm:$0xf]
    %v5475 = vld [vmem:[#allocation4 + $0x34c] sm:$0xf]
    %v5476 = vld [vmem:[#allocation4 + $0x350] sm:$0xf]
    %v5477 = vld [vmem:[#allocation4 + $0x354] sm:$0xf]
    %v5478 = vld [vmem:[#allocation4 + $0x358] sm:$0xf]
    %v5479 = vld [vmem:[#allocation4 + $0x35c] sm:$0xf]
    %v5480 = vld [vmem:[#allocation4 + $0x360] sm:$0xf]
    %v5481 = vld [vmem:[#allocation4 + $0x364] sm:$0xf]
    %v5482 = vld [vmem:[#allocation4 + $0x368] sm:$0xf]
    %v5483 = vld [vmem:[#allocation4 + $0x36c] sm:$0xf]
    %v5484 = vld [vmem:[#allocation4 + $0x370] sm:$0xf]
    %v5485 = vld [vmem:[#allocation4 + $0x374] sm:$0xf]
    %v5486 = vld [vmem:[#allocation4 + $0x378] sm:$0xf]
    %v5487 = vld [vmem:[#allocation4 + $0x37c] sm:$0xf]
    %v5488 = vld [vmem:[#allocation4 + $0x380] sm:$0xf]
    %v5489 = vld [vmem:[#allocation4 + $0x384] sm:$0xf]
    %v5490 = vld [vmem:[#allocation4 + $0x388] sm:$0xf]
    %v5491 = vld [vmem:[#allocation4 + $0x38c] sm:$0xf]
    %v5492 = vld [vmem:[#allocation4 + $0x390] sm:$0xf]
    %v5493 = vld [vmem:[#allocation4 + $0x394] sm:$0xf]
    %v5494 = vld [vmem:[#allocation4 + $0x398] sm:$0xf]
    %v5495 = vld [vmem:[#allocation4 + $0x39c] sm:$0xf]
    %v5496 = vld [vmem:[#allocation4 + $0x3a0] sm:$0xf]
    %v5497 = vld [vmem:[#allocation4 + $0x3a4] sm:$0xf]
    %v5498 = vld [vmem:[#allocation4 + $0x3a8] sm:$0xf]
    %v5499 = vld [vmem:[#allocation4 + $0x3ac] sm:$0xf]
    %v5500 = vld [vmem:[#allocation4 + $0x3b0] sm:$0xf]
    %v5501 = vld [vmem:[#allocation4 + $0x3b4] sm:$0xf]
    %v5502 = vld [vmem:[#allocation4 + $0x3b8] sm:$0xf]
    %v5503 = vld [vmem:[#allocation4 + $0x3bc] sm:$0xf]
    %v5504 = vld [vmem:[#allocation4 + $0x3c0] sm:$0xf]
    %v5505 = vld [vmem:[#allocation4 + $0x3c4] sm:$0xf]
    %v5506 = vld [vmem:[#allocation4 + $0x3c8] sm:$0xf]
    %v5507 = vld [vmem:[#allocation4 + $0x3cc] sm:$0xf]
    %v5508 = vld [vmem:[#allocation4 + $0x3d0] sm:$0xf]
    %v5509 = vld [vmem:[#allocation4 + $0x3d4] sm:$0xf]
    %v5510 = vld [vmem:[#allocation4 + $0x3d8] sm:$0xf]
    %v5511 = vld [vmem:[#allocation4 + $0x3dc] sm:$0xf]
    %v5512 = vld [vmem:[#allocation4 + $0x3e0] sm:$0xf]
    %v5513 = vld [vmem:[#allocation4 + $0x3e4] sm:$0xf]
    %v5514 = vld [vmem:[#allocation4 + $0x3e8] sm:$0xf]
    %v5515 = vld [vmem:[#allocation4 + $0x3ec] sm:$0xf]
    %v5516 = vld [vmem:[#allocation4 + $0x3f0] sm:$0xf]
    %v5517 = vld [vmem:[#allocation4 + $0x3f4] sm:$0xf]
    %v5518 = vld [vmem:[#allocation4 + $0x3f8] sm:$0xf]
    %v5519 = vld [vmem:[#allocation4 + $0x3fc] sm:$0xf]
    %v5520 = vld [vmem:[#allocation4 + $0x400] sm:$0xf]
    %v5521 = vld [vmem:[#allocation4 + $0x404] sm:$0xf]
    %v5522 = vld [vmem:[#allocation4 + $0x408] sm:$0xf]
    %v5523 = vld [vmem:[#allocation4 + $0x40c] sm:$0xf]
    %v5524 = vld [vmem:[#allocation4 + $0x410] sm:$0xf]
    %v5525 = vld [vmem:[#allocation4 + $0x414] sm:$0xf]
    %v5526 = vld [vmem:[#allocation4 + $0x418] sm:$0xf]
    %v5527 = vld [vmem:[#allocation4 + $0x41c] sm:$0xf]
    %v5528 = vld [vmem:[#allocation4 + $0x420] sm:$0xf]
    %v5529 = vld [vmem:[#allocation4 + $0x424] sm:$0xf]
    %v5530 = vld [vmem:[#allocation4 + $0x428] sm:$0xf]
    %v5531 = vld [vmem:[#allocation4 + $0x42c] sm:$0xf]
    %v5532 = vld [vmem:[#allocation4 + $0x430] sm:$0xf]
    %v5533 = vld [vmem:[#allocation4 + $0x434] sm:$0xf]
    %v5534 = vld [vmem:[#allocation4 + $0x438] sm:$0xf]
    %v5535 = vld [vmem:[#allocation4 + $0x43c] sm:$0xf]
    %v5536 = vld [vmem:[#allocation4 + $0x440] sm:$0xf]
    %v5537 = vld [vmem:[#allocation4 + $0x444] sm:$0xf]
    %v5538 = vld [vmem:[#allocation4 + $0x448] sm:$0xf]
    %v5539 = vld [vmem:[#allocation4 + $0x44c] sm:$0xf]
    %v5540 = vld [vmem:[#allocation4 + $0x450] sm:$0xf]
    %v5541 = vld [vmem:[#allocation4 + $0x454] sm:$0xf]
    %v5542 = vld [vmem:[#allocation4 + $0x458] sm:$0xf]
    %v5543 = vld [vmem:[#allocation4 + $0x45c] sm:$0xf]
    %v5544 = vld [vmem:[#allocation4 + $0x460] sm:$0xf]
    %v5545 = vld [vmem:[#allocation4 + $0x464] sm:$0xf]
    %v5546 = vld [vmem:[#allocation4 + $0x468] sm:$0xf]
    %v5547 = vld [vmem:[#allocation4 + $0x46c] sm:$0xf]
    %v5548 = vld [vmem:[#allocation4 + $0x470] sm:$0xf]
    %v5549 = vld [vmem:[#allocation4 + $0x474] sm:$0xf]
    %v5550 = vld [vmem:[#allocation4 + $0x478] sm:$0xf]
    %v5551 = vld [vmem:[#allocation4 + $0x47c] sm:$0xf]
    %v5552 = vld [vmem:[#allocation4 + $0x480] sm:$0xf]
    %v5553 = vld [vmem:[#allocation4 + $0x484] sm:$0xf]
    %v5554 = vld [vmem:[#allocation4 + $0x488] sm:$0xf]
    %v5555 = vld [vmem:[#allocation4 + $0x48c] sm:$0xf]
    %v5556 = vld [vmem:[#allocation4 + $0x490] sm:$0xf]
    %v5557 = vld [vmem:[#allocation4 + $0x494] sm:$0xf]
    %v5558 = vld [vmem:[#allocation4 + $0x498] sm:$0xf]
    %v5559 = vld [vmem:[#allocation4 + $0x49c] sm:$0xf]
    %v5560 = vld [vmem:[#allocation4 + $0x4a0] sm:$0xf]
    %v5561 = vld [vmem:[#allocation4 + $0x4a4] sm:$0xf]
    %v5562 = vld [vmem:[#allocation4 + $0x4a8] sm:$0xf]
    %v5563 = vld [vmem:[#allocation4 + $0x4ac] sm:$0xf]
    %v5564 = vld [vmem:[#allocation4 + $0x4b0] sm:$0xf]
    %v5565 = vld [vmem:[#allocation4 + $0x4b4] sm:$0xf]
    %v5566 = vld [vmem:[#allocation4 + $0x4b8] sm:$0xf]
    %v5567 = vld [vmem:[#allocation4 + $0x4bc] sm:$0xf]
    %v5568 = vld [vmem:[#allocation4 + $0x4c0] sm:$0xf]
    %v5569 = vld [vmem:[#allocation4 + $0x4c4] sm:$0xf]
    %v5570 = vld [vmem:[#allocation4 + $0x4c8] sm:$0xf]
    %v5571 = vld [vmem:[#allocation4 + $0x4cc] sm:$0xf]
    %v5572 = vld [vmem:[#allocation4 + $0x4d0] sm:$0xf]
    %v5573 = vld [vmem:[#allocation4 + $0x4d4] sm:$0xf]
    %v5574 = vld [vmem:[#allocation4 + $0x4d8] sm:$0xf]
    %v5575 = vld [vmem:[#allocation4 + $0x4dc] sm:$0xf]
    %v5576 = vld [vmem:[#allocation4 + $0x4e0] sm:$0xf]
    %v5577 = vld [vmem:[#allocation4 + $0x4e4] sm:$0xf]
    %v5578 = vld [vmem:[#allocation4 + $0x4e8] sm:$0xf]
    %v5579 = vld [vmem:[#allocation4 + $0x4ec] sm:$0xf]
    %v5580 = vld [vmem:[#allocation4 + $0x4f0] sm:$0xf]
    %v5581 = vld [vmem:[#allocation4 + $0x4f4] sm:$0xf]
    %v5582 = vld [vmem:[#allocation4 + $0x4f8] sm:$0xf]
    %v5583 = vld [vmem:[#allocation4 + $0x4fc] sm:$0xf]
    %v5584 = vld [vmem:[#allocation4 + $0x500] sm:$0xf]
    %v5585 = vld [vmem:[#allocation4 + $0x504] sm:$0xf]
    %v5586 = vld [vmem:[#allocation4 + $0x508] sm:$0xf]
    %v5587 = vld [vmem:[#allocation4 + $0x50c] sm:$0xf]
    %v5588 = vld [vmem:[#allocation4 + $0x510] sm:$0xf]
    %v5589 = vld [vmem:[#allocation4 + $0x514] sm:$0xf]
    %v5590 = vld [vmem:[#allocation4 + $0x518] sm:$0xf]
    %v5591 = vld [vmem:[#allocation4 + $0x51c] sm:$0xf]
    %v5592 = vld [vmem:[#allocation4 + $0x520] sm:$0xf]
    %v5593 = vld [vmem:[#allocation4 + $0x524] sm:$0xf]
    %v5594 = vld [vmem:[#allocation4 + $0x528] sm:$0xf]
    %v5595 = vld [vmem:[#allocation4 + $0x52c] sm:$0xf]
    %v5596 = vld [vmem:[#allocation4 + $0x530] sm:$0xf]
    %v5597 = vld [vmem:[#allocation4 + $0x534] sm:$0xf]
    %v5598 = vld [vmem:[#allocation4 + $0x538] sm:$0xf]
    %v5599 = vld [vmem:[#allocation4 + $0x53c] sm:$0xf]
    %v5600 = vld [vmem:[%s4] sm:$0x1]
    %v5937 = vunpack.c.l.b16 %v5264
    %v5938 = vunpack.c.l.b16 %v5265
    %v5939 = vunpack.c.l.b16 %v5266
    %v5940 = vunpack.c.l.b16 %v5267
    %v5941 = vunpack.c.l.b16 %v5268
    %v5942 = vunpack.c.l.b16 %v5269
    %v5943 = vunpack.c.l.b16 %v5270
    %v5944 = vunpack.c.l.b16 %v5271
    %v5945 = vunpack.c.l.b16 %v5272
    %v5946 = vunpack.c.l.b16 %v5273
    %v5947 = vunpack.c.l.b16 %v5274
    %v5948 = vunpack.c.l.b16 %v5275
    %v5949 = vunpack.c.l.b16 %v5276
    %v5950 = vunpack.c.l.b16 %v5277
    %v5951 = vunpack.c.l.b16 %v5278
    %v5952 = vunpack.c.l.b16 %v5279
    %v5953 = vunpack.c.l.b16 %v5280
    %v5954 = vunpack.c.l.b16 %v5281
    %v5955 = vunpack.c.l.b16 %v5282
    %v5956 = vunpack.c.l.b16 %v5283
    %v5957 = vunpack.c.l.b16 %v5284
    %v5958 = vunpack.c.l.b16 %v5285
    %v5959 = vunpack.c.l.b16 %v5286
    %v5960 = vunpack.c.l.b16 %v5287
    %v5961 = vunpack.c.l.b16 %v5288
    %v5962 = vunpack.c.l.b16 %v5289
    %v5963 = vunpack.c.l.b16 %v5290
    %v5964 = vunpack.c.l.b16 %v5291
    %v5965 = vunpack.c.l.b16 %v5292
    %v5966 = vunpack.c.l.b16 %v5293
    %v5967 = vunpack.c.l.b16 %v5294
    %v5968 = vunpack.c.l.b16 %v5295
    %v5969 = vunpack.c.l.b16 %v5296
    %v5970 = vunpack.c.l.b16 %v5297
    %v5971 = vunpack.c.l.b16 %v5298
    %v5972 = vunpack.c.l.b16 %v5299
    %v5973 = vunpack.c.l.b16 %v5300
    %v5974 = vunpack.c.l.b16 %v5301
    %v5975 = vunpack.c.l.b16 %v5302
    %v5976 = vunpack.c.l.b16 %v5303
    %v5977 = vunpack.c.l.b16 %v5304
    %v5978 = vunpack.c.l.b16 %v5305
    %v5979 = vunpack.c.l.b16 %v5306
    %v5980 = vunpack.c.l.b16 %v5307
    %v5981 = vunpack.c.l.b16 %v5308
    %v5982 = vunpack.c.l.b16 %v5309
    %v5983 = vunpack.c.l.b16 %v5310
    %v5984 = vunpack.c.l.b16 %v5311
    %v5985 = vunpack.c.l.b16 %v5312
    %v5986 = vunpack.c.l.b16 %v5313
    %v5987 = vunpack.c.l.b16 %v5314
    %v5988 = vunpack.c.l.b16 %v5315
    %v5989 = vunpack.c.l.b16 %v5316
    %v5990 = vunpack.c.l.b16 %v5317
    %v5991 = vunpack.c.l.b16 %v5318
    %v5992 = vunpack.c.l.b16 %v5319
    %v5993 = vunpack.c.l.b16 %v5320
    %v5994 = vunpack.c.l.b16 %v5321
    %v5995 = vunpack.c.l.b16 %v5322
    %v5996 = vunpack.c.l.b16 %v5323
    %v5997 = vunpack.c.l.b16 %v5324
    %v5998 = vunpack.c.l.b16 %v5325
    %v5999 = vunpack.c.l.b16 %v5326
    %v6000 = vunpack.c.l.b16 %v5327
    %v6001 = vunpack.c.l.b16 %v5328
    %v6002 = vunpack.c.l.b16 %v5329
    %v6003 = vunpack.c.l.b16 %v5330
    %v6004 = vunpack.c.l.b16 %v5331
    %v6005 = vunpack.c.l.b16 %v5332
    %v6006 = vunpack.c.l.b16 %v5333
    %v6007 = vunpack.c.l.b16 %v5334
    %v6008 = vunpack.c.l.b16 %v5335
    %v6009 = vunpack.c.l.b16 %v5336
    %v6010 = vunpack.c.l.b16 %v5337
    %v6011 = vunpack.c.l.b16 %v5338
    %v6012 = vunpack.c.l.b16 %v5339
    %v6013 = vunpack.c.l.b16 %v5340
    %v6014 = vunpack.c.l.b16 %v5341
    %v6015 = vunpack.c.l.b16 %v5342
    %v6016 = vunpack.c.l.b16 %v5343
    %v6017 = vunpack.c.l.b16 %v5344
    %v6018 = vunpack.c.l.b16 %v5345
    %v6019 = vunpack.c.l.b16 %v5346
    %v6020 = vunpack.c.l.b16 %v5347
    %v6021 = vunpack.c.l.b16 %v5348
    %v6022 = vunpack.c.l.b16 %v5349
    %v6023 = vunpack.c.l.b16 %v5350
    %v6024 = vunpack.c.l.b16 %v5351
    %v6025 = vunpack.c.l.b16 %v5352
    %v6026 = vunpack.c.l.b16 %v5353
    %v6027 = vunpack.c.l.b16 %v5354
    %v6028 = vunpack.c.l.b16 %v5355
    %v6029 = vunpack.c.l.b16 %v5356
    %v6030 = vunpack.c.l.b16 %v5357
    %v6031 = vunpack.c.l.b16 %v5358
    %v6032 = vunpack.c.l.b16 %v5359
    %v6033 = vunpack.c.l.b16 %v5360
    %v6034 = vunpack.c.l.b16 %v5361
    %v6035 = vunpack.c.l.b16 %v5362
    %v6036 = vunpack.c.l.b16 %v5363
    %v6037 = vunpack.c.l.b16 %v5364
    %v6038 = vunpack.c.l.b16 %v5365
    %v6039 = vunpack.c.l.b16 %v5366
    %v6040 = vunpack.c.l.b16 %v5367
    %v6041 = vunpack.c.l.b16 %v5368
    %v6042 = vunpack.c.l.b16 %v5369
    %v6043 = vunpack.c.l.b16 %v5370
    %v6044 = vunpack.c.l.b16 %v5371
    %v6045 = vunpack.c.l.b16 %v5372
    %v6046 = vunpack.c.l.b16 %v5373
    %v6047 = vunpack.c.l.b16 %v5374
    %v6048 = vunpack.c.l.b16 %v5375
    %v6049 = vunpack.c.l.b16 %v5376
    %v6050 = vunpack.c.l.b16 %v5377
    %v6051 = vunpack.c.l.b16 %v5378
    %v6052 = vunpack.c.l.b16 %v5379
    %v6053 = vunpack.c.l.b16 %v5380
    %v6054 = vunpack.c.l.b16 %v5381
    %v6055 = vunpack.c.l.b16 %v5382
    %v6056 = vunpack.c.l.b16 %v5383
    %v6057 = vunpack.c.l.b16 %v5384
    %v6058 = vunpack.c.l.b16 %v5385
    %v6059 = vunpack.c.l.b16 %v5386
    %v6060 = vunpack.c.l.b16 %v5387
    %v6061 = vunpack.c.l.b16 %v5388
    %v6062 = vunpack.c.l.b16 %v5389
    %v6063 = vunpack.c.l.b16 %v5390
    %v6064 = vunpack.c.l.b16 %v5391
    %v6065 = vunpack.c.l.b16 %v5392
    %v6066 = vunpack.c.l.b16 %v5393
    %v6067 = vunpack.c.l.b16 %v5394
    %v6068 = vunpack.c.l.b16 %v5395
    %v6069 = vunpack.c.l.b16 %v5396
    %v6070 = vunpack.c.l.b16 %v5397
    %v6071 = vunpack.c.l.b16 %v5398
    %v6072 = vunpack.c.l.b16 %v5399
    %v6073 = vunpack.c.l.b16 %v5400
    %v6074 = vunpack.c.l.b16 %v5401
    %v6075 = vunpack.c.l.b16 %v5402
    %v6076 = vunpack.c.l.b16 %v5403
    %v6077 = vunpack.c.l.b16 %v5404
    %v6078 = vunpack.c.l.b16 %v5405
    %v6079 = vunpack.c.l.b16 %v5406
    %v6080 = vunpack.c.l.b16 %v5407
    %v6081 = vunpack.c.l.b16 %v5408
    %v6082 = vunpack.c.l.b16 %v5409
    %v6083 = vunpack.c.l.b16 %v5410
    %v6084 = vunpack.c.l.b16 %v5411
    %v6085 = vunpack.c.l.b16 %v5412
    %v6086 = vunpack.c.l.b16 %v5413
    %v6087 = vunpack.c.l.b16 %v5414
    %v6088 = vunpack.c.l.b16 %v5415
    %v6089 = vunpack.c.l.b16 %v5416
    %v6090 = vunpack.c.l.b16 %v5417
    %v6091 = vunpack.c.l.b16 %v5418
    %v6092 = vunpack.c.l.b16 %v5419
    %v6093 = vunpack.c.l.b16 %v5420
    %v6094 = vunpack.c.l.b16 %v5421
    %v6095 = vunpack.c.l.b16 %v5422
    %v6096 = vunpack.c.l.b16 %v5423
    %v6097 = vunpack.c.l.b16 %v5424
    %v6098 = vunpack.c.l.b16 %v5425
    %v6099 = vunpack.c.l.b16 %v5426
    %v6100 = vunpack.c.l.b16 %v5427
    %v6101 = vunpack.c.l.b16 %v5428
    %v6102 = vunpack.c.l.b16 %v5429
    %v6103 = vunpack.c.l.b16 %v5430
    %v6104 = vunpack.c.l.b16 %v5431
    %v6105 = vunpack.c.l.b16 %v5432
    %v6106 = vunpack.c.l.b16 %v5433
    %v6107 = vunpack.c.l.b16 %v5434
    %v6108 = vunpack.c.l.b16 %v5435
    %v6109 = vunpack.c.l.b16 %v5436
    %v6110 = vunpack.c.l.b16 %v5437
    %v6111 = vunpack.c.l.b16 %v5438
    %v6112 = vunpack.c.l.b16 %v5439
    %v6113 = vunpack.c.l.b16 %v5440
    %v6114 = vunpack.c.l.b16 %v5441
    %v6115 = vunpack.c.l.b16 %v5442
    %v6116 = vunpack.c.l.b16 %v5443
    %v6117 = vunpack.c.l.b16 %v5444
    %v6118 = vunpack.c.l.b16 %v5445
    %v6119 = vunpack.c.l.b16 %v5446
    %v6120 = vunpack.c.l.b16 %v5447
    %v6121 = vunpack.c.l.b16 %v5448
    %v6122 = vunpack.c.l.b16 %v5449
    %v6123 = vunpack.c.l.b16 %v5450
    %v6124 = vunpack.c.l.b16 %v5451
    %v6125 = vunpack.c.l.b16 %v5452
    %v6126 = vunpack.c.l.b16 %v5453
    %v6127 = vunpack.c.l.b16 %v5454
    %v6128 = vunpack.c.l.b16 %v5455
    %v6129 = vunpack.c.l.b16 %v5456
    %v6130 = vunpack.c.l.b16 %v5457
    %v6131 = vunpack.c.l.b16 %v5458
    %v6132 = vunpack.c.l.b16 %v5459
    %v6133 = vunpack.c.l.b16 %v5460
    %v6134 = vunpack.c.l.b16 %v5461
    %v6135 = vunpack.c.l.b16 %v5462
    %v6136 = vunpack.c.l.b16 %v5463
    %v6137 = vunpack.c.l.b16 %v5464
    %v6138 = vunpack.c.l.b16 %v5465
    %v6139 = vunpack.c.l.b16 %v5466
    %v6140 = vunpack.c.l.b16 %v5467
    %v6141 = vunpack.c.l.b16 %v5468
    %v6142 = vunpack.c.l.b16 %v5469
    %v6143 = vunpack.c.l.b16 %v5470
    %v6144 = vunpack.c.l.b16 %v5471
    %v6145 = vunpack.c.l.b16 %v5472
    %v6146 = vunpack.c.l.b16 %v5473
    %v6147 = vunpack.c.l.b16 %v5474
    %v6148 = vunpack.c.l.b16 %v5475
    %v6149 = vunpack.c.l.b16 %v5476
    %v6150 = vunpack.c.l.b16 %v5477
    %v6151 = vunpack.c.l.b16 %v5478
    %v6152 = vunpack.c.l.b16 %v5479
    %v6153 = vunpack.c.l.b16 %v5480
    %v6154 = vunpack.c.l.b16 %v5481
    %v6155 = vunpack.c.l.b16 %v5482
    %v6156 = vunpack.c.l.b16 %v5483
    %v6157 = vunpack.c.l.b16 %v5484
    %v6158 = vunpack.c.l.b16 %v5485
    %v6159 = vunpack.c.l.b16 %v5486
    %v6160 = vunpack.c.l.b16 %v5487
    %v6161 = vunpack.c.l.b16 %v5488
    %v6162 = vunpack.c.l.b16 %v5489
    %v6163 = vunpack.c.l.b16 %v5490
    %v6164 = vunpack.c.l.b16 %v5491
    %v6165 = vunpack.c.l.b16 %v5492
    %v6166 = vunpack.c.l.b16 %v5493
    %v6167 = vunpack.c.l.b16 %v5494
    %v6168 = vunpack.c.l.b16 %v5495
    %v6169 = vunpack.c.l.b16 %v5496
    %v6170 = vunpack.c.l.b16 %v5497
    %v6171 = vunpack.c.l.b16 %v5498
    %v6172 = vunpack.c.l.b16 %v5499
    %v6173 = vunpack.c.l.b16 %v5500
    %v6174 = vunpack.c.l.b16 %v5501
    %v6175 = vunpack.c.l.b16 %v5502
    %v6176 = vunpack.c.l.b16 %v5503
    %v6177 = vunpack.c.l.b16 %v5504
    %v6178 = vunpack.c.l.b16 %v5505
    %v6179 = vunpack.c.l.b16 %v5506
    %v6180 = vunpack.c.l.b16 %v5507
    %v6181 = vunpack.c.l.b16 %v5508
    %v6182 = vunpack.c.l.b16 %v5509
    %v6183 = vunpack.c.l.b16 %v5510
    %v6184 = vunpack.c.l.b16 %v5511
    %v6185 = vunpack.c.l.b16 %v5512
    %v6186 = vunpack.c.l.b16 %v5513
    %v6187 = vunpack.c.l.b16 %v5514
    %v6188 = vunpack.c.l.b16 %v5515
    %v6189 = vunpack.c.l.b16 %v5516
    %v6190 = vunpack.c.l.b16 %v5517
    %v6191 = vunpack.c.l.b16 %v5518
    %v6192 = vunpack.c.l.b16 %v5519
    %v6193 = vunpack.c.l.b16 %v5520
    %v6194 = vunpack.c.l.b16 %v5521
    %v6195 = vunpack.c.l.b16 %v5522
    %v6196 = vunpack.c.l.b16 %v5523
    %v6197 = vunpack.c.l.b16 %v5524
    %v6198 = vunpack.c.l.b16 %v5525
    %v6199 = vunpack.c.l.b16 %v5526
    %v6200 = vunpack.c.l.b16 %v5527
    %v6201 = vunpack.c.l.b16 %v5528
    %v6202 = vunpack.c.l.b16 %v5529
    %v6203 = vunpack.c.l.b16 %v5530
    %v6204 = vunpack.c.l.b16 %v5531
    %v6205 = vunpack.c.l.b16 %v5532
    %v6206 = vunpack.c.l.b16 %v5533
    %v6207 = vunpack.c.l.b16 %v5534
    %v6208 = vunpack.c.l.b16 %v5535
    %v6209 = vunpack.c.l.b16 %v5536
    %v6210 = vunpack.c.l.b16 %v5537
    %v6211 = vunpack.c.l.b16 %v5538
    %v6212 = vunpack.c.l.b16 %v5539
    %v6213 = vunpack.c.l.b16 %v5540
    %v6214 = vunpack.c.l.b16 %v5541
    %v6215 = vunpack.c.l.b16 %v5542
    %v6216 = vunpack.c.l.b16 %v5543
    %v6217 = vunpack.c.l.b16 %v5544
    %v6218 = vunpack.c.l.b16 %v5545
    %v6219 = vunpack.c.l.b16 %v5546
    %v6220 = vunpack.c.l.b16 %v5547
    %v6221 = vunpack.c.l.b16 %v5548
    %v6222 = vunpack.c.l.b16 %v5549
    %v6223 = vunpack.c.l.b16 %v5550
    %v6224 = vunpack.c.l.b16 %v5551
    %v6225 = vunpack.c.l.b16 %v5552
    %v6226 = vunpack.c.l.b16 %v5553
    %v6227 = vunpack.c.l.b16 %v5554
    %v6228 = vunpack.c.l.b16 %v5555
    %v6229 = vunpack.c.l.b16 %v5556
    %v6230 = vunpack.c.l.b16 %v5557
    %v6231 = vunpack.c.l.b16 %v5558
    %v6232 = vunpack.c.l.b16 %v5559
    %v6233 = vunpack.c.l.b16 %v5560
    %v6234 = vunpack.c.l.b16 %v5561
    %v6235 = vunpack.c.l.b16 %v5562
    %v6236 = vunpack.c.l.b16 %v5563
    %v6237 = vunpack.c.l.b16 %v5564
    %v6238 = vunpack.c.l.b16 %v5565
    %v6239 = vunpack.c.l.b16 %v5566
    %v6240 = vunpack.c.l.b16 %v5567
    %v6241 = vunpack.c.l.b16 %v5568
    %v6242 = vunpack.c.l.b16 %v5569
    %v6243 = vunpack.c.l.b16 %v5570
    %v6244 = vunpack.c.l.b16 %v5571
    %v6245 = vunpack.c.l.b16 %v5572
    %v6246 = vunpack.c.l.b16 %v5573
    %v6247 = vunpack.c.l.b16 %v5574
    %v6248 = vunpack.c.l.b16 %v5575
    %v6249 = vunpack.c.l.b16 %v5576
    %v6250 = vunpack.c.l.b16 %v5577
    %v6251 = vunpack.c.l.b16 %v5578
    %v6252 = vunpack.c.l.b16 %v5579
    %v6253 = vunpack.c.l.b16 %v5580
    %v6254 = vunpack.c.l.b16 %v5581
    %v6255 = vunpack.c.l.b16 %v5582
    %v6256 = vunpack.c.l.b16 %v5583
    %v6257 = vunpack.c.l.b16 %v5584
    %v6258 = vunpack.c.l.b16 %v5585
    %v6259 = vunpack.c.l.b16 %v5586
    %v6260 = vunpack.c.l.b16 %v5587
    %v6261 = vunpack.c.l.b16 %v5588
    %v6262 = vunpack.c.l.b16 %v5589
    %v6263 = vunpack.c.l.b16 %v5590
    %v6264 = vunpack.c.l.b16 %v5591
    %v6265 = vunpack.c.l.b16 %v5592
    %v6266 = vunpack.c.l.b16 %v5593
    %v6267 = vunpack.c.l.b16 %v5594
    %v6268 = vunpack.c.l.b16 %v5595
    %v6269 = vunpack.c.l.b16 %v5596
    %v6270 = vunpack.c.l.b16 %v5597
    %v6271 = vunpack.c.l.b16 %v5598
    %v6272 = vunpack.c.l.b16 %v5599
    %v6273 = vpack.c.b16 %v5938, %v5937
    %v6274 = vpack.c.b16 %v5940, %v5939
    %v6275 = vpack.c.b16 %v5942, %v5941
    %v6276 = vpack.c.b16 %v5944, %v5943
    %v6277 = vpack.c.b16 %v5946, %v5945
    %v6278 = vpack.c.b16 %v5948, %v5947
    %v6279 = vpack.c.b16 %v5950, %v5949
    %v6280 = vpack.c.b16 %v5952, %v5951
    %v6281 = vpack.c.b16 %v5954, %v5953
    %v6282 = vpack.c.b16 %v5956, %v5955
    %v6283 = vpack.c.b16 %v5958, %v5957
    %v6284 = vpack.c.b16 %v5960, %v5959
    %v6285 = vpack.c.b16 %v5962, %v5961
    %v6286 = vpack.c.b16 %v5964, %v5963
    %v6287 = vpack.c.b16 %v5966, %v5965
    %v6288 = vpack.c.b16 %v5968, %v5967
    %v6289 = vpack.c.b16 %v5970, %v5969
    %v6290 = vpack.c.b16 %v5972, %v5971
    %v6291 = vpack.c.b16 %v5974, %v5973
    %v6292 = vpack.c.b16 %v5976, %v5975
    %v6293 = vpack.c.b16 %v5978, %v5977
    %v6294 = vpack.c.b16 %v5980, %v5979
    %v6295 = vpack.c.b16 %v5982, %v5981
    %v6296 = vpack.c.b16 %v5984, %v5983
    %v6297 = vpack.c.b16 %v5986, %v5985
    %v6298 = vpack.c.b16 %v5988, %v5987
    %v6299 = vpack.c.b16 %v5990, %v5989
    %v6300 = vpack.c.b16 %v5992, %v5991
    %v6301 = vpack.c.b16 %v5994, %v5993
    %v6302 = vpack.c.b16 %v5996, %v5995
    %v6303 = vpack.c.b16 %v5998, %v5997
    %v6304 = vpack.c.b16 %v6000, %v5999
    %v6305 = vpack.c.b16 %v6002, %v6001
    %v6306 = vpack.c.b16 %v6004, %v6003
    %v6307 = vpack.c.b16 %v6006, %v6005
    %v6308 = vpack.c.b16 %v6008, %v6007
    %v6309 = vpack.c.b16 %v6010, %v6009
    %v6310 = vpack.c.b16 %v6012, %v6011
    %v6311 = vpack.c.b16 %v6014, %v6013
    %v6312 = vpack.c.b16 %v6016, %v6015
    %v6313 = vpack.c.b16 %v6018, %v6017
    %v6314 = vpack.c.b16 %v6020, %v6019
    %v6315 = vpack.c.b16 %v6022, %v6021
    %v6316 = vpack.c.b16 %v6024, %v6023
    %v6317 = vpack.c.b16 %v6026, %v6025
    %v6318 = vpack.c.b16 %v6028, %v6027
    %v6319 = vpack.c.b16 %v6030, %v6029
    %v6320 = vpack.c.b16 %v6032, %v6031
    %v6321 = vpack.c.b16 %v6034, %v6033
    %v6322 = vpack.c.b16 %v6036, %v6035
    %v6323 = vpack.c.b16 %v6038, %v6037
    %v6324 = vpack.c.b16 %v6040, %v6039
    %v6325 = vpack.c.b16 %v6042, %v6041
    %v6326 = vpack.c.b16 %v6044, %v6043
    %v6327 = vpack.c.b16 %v6046, %v6045
    %v6328 = vpack.c.b16 %v6048, %v6047
    %v6329 = vpack.c.b16 %v6050, %v6049
    %v6330 = vpack.c.b16 %v6052, %v6051
    %v6331 = vpack.c.b16 %v6054, %v6053
    %v6332 = vpack.c.b16 %v6056, %v6055
    %v6333 = vpack.c.b16 %v6058, %v6057
    %v6334 = vpack.c.b16 %v6060, %v6059
    %v6335 = vpack.c.b16 %v6062, %v6061
    %v6336 = vpack.c.b16 %v6064, %v6063
    %v6337 = vpack.c.b16 %v6066, %v6065
    %v6338 = vpack.c.b16 %v6068, %v6067
    %v6339 = vpack.c.b16 %v6070, %v6069
    %v6340 = vpack.c.b16 %v6072, %v6071
    %v6341 = vpack.c.b16 %v6074, %v6073
    %v6342 = vpack.c.b16 %v6076, %v6075
    %v6343 = vpack.c.b16 %v6078, %v6077
    %v6344 = vpack.c.b16 %v6080, %v6079
    %v6345 = vpack.c.b16 %v6082, %v6081
    %v6346 = vpack.c.b16 %v6084, %v6083
    %v6347 = vpack.c.b16 %v6086, %v6085
    %v6348 = vpack.c.b16 %v6088, %v6087
    %v6349 = vpack.c.b16 %v6090, %v6089
    %v6350 = vpack.c.b16 %v6092, %v6091
    %v6351 = vpack.c.b16 %v6094, %v6093
    %v6352 = vpack.c.b16 %v6096, %v6095
    %v6353 = vpack.c.b16 %v6098, %v6097
    %v6354 = vpack.c.b16 %v6100, %v6099
    %v6355 = vpack.c.b16 %v6102, %v6101
    %v6356 = vpack.c.b16 %v6104, %v6103
    %v6357 = vpack.c.b16 %v6106, %v6105
    %v6358 = vpack.c.b16 %v6108, %v6107
    %v6359 = vpack.c.b16 %v6110, %v6109
    %v6360 = vpack.c.b16 %v6112, %v6111
    %v6361 = vpack.c.b16 %v6114, %v6113
    %v6362 = vpack.c.b16 %v6116, %v6115
    %v6363 = vpack.c.b16 %v6118, %v6117
    %v6364 = vpack.c.b16 %v6120, %v6119
    %v6365 = vpack.c.b16 %v6122, %v6121
    %v6366 = vpack.c.b16 %v6124, %v6123
    %v6367 = vpack.c.b16 %v6126, %v6125
    %v6368 = vpack.c.b16 %v6128, %v6127
    %v6369 = vpack.c.b16 %v6130, %v6129
    %v6370 = vpack.c.b16 %v6132, %v6131
    %v6371 = vpack.c.b16 %v6134, %v6133
    %v6372 = vpack.c.b16 %v6136, %v6135
    %v6373 = vpack.c.b16 %v6138, %v6137
    %v6374 = vpack.c.b16 %v6140, %v6139
    %v6375 = vpack.c.b16 %v6142, %v6141
    %v6376 = vpack.c.b16 %v6144, %v6143
    %v6377 = vpack.c.b16 %v6146, %v6145
    %v6378 = vpack.c.b16 %v6148, %v6147
    %v6379 = vpack.c.b16 %v6150, %v6149
    %v6380 = vpack.c.b16 %v6152, %v6151
    %v6381 = vpack.c.b16 %v6154, %v6153
    %v6382 = vpack.c.b16 %v6156, %v6155
    %v6383 = vpack.c.b16 %v6158, %v6157
    %v6384 = vpack.c.b16 %v6160, %v6159
    %v6385 = vpack.c.b16 %v6162, %v6161
    %v6386 = vpack.c.b16 %v6164, %v6163
    %v6387 = vpack.c.b16 %v6166, %v6165
    %v6388 = vpack.c.b16 %v6168, %v6167
    %v6389 = vpack.c.b16 %v6170, %v6169
    %v6390 = vpack.c.b16 %v6172, %v6171
    %v6391 = vpack.c.b16 %v6174, %v6173
    %v6392 = vpack.c.b16 %v6176, %v6175
    %v6393 = vpack.c.b16 %v6178, %v6177
    %v6394 = vpack.c.b16 %v6180, %v6179
    %v6395 = vpack.c.b16 %v6182, %v6181
    %v6396 = vpack.c.b16 %v6184, %v6183
    %v6397 = vpack.c.b16 %v6186, %v6185
    %v6398 = vpack.c.b16 %v6188, %v6187
    %v6399 = vpack.c.b16 %v6190, %v6189
    %v6400 = vpack.c.b16 %v6192, %v6191
    %v6401 = vpack.c.b16 %v6194, %v6193
    %v6402 = vpack.c.b16 %v6196, %v6195
    %v6403 = vpack.c.b16 %v6198, %v6197
    %v6404 = vpack.c.b16 %v6200, %v6199
    %v6405 = vpack.c.b16 %v6202, %v6201
    %v6406 = vpack.c.b16 %v6204, %v6203
    %v6407 = vpack.c.b16 %v6206, %v6205
    %v6408 = vpack.c.b16 %v6208, %v6207
    %v6409 = vpack.c.b16 %v6210, %v6209
    %v6410 = vpack.c.b16 %v6212, %v6211
    %v6411 = vpack.c.b16 %v6214, %v6213
    %v6412 = vpack.c.b16 %v6216, %v6215
    %v6413 = vpack.c.b16 %v6218, %v6217
    %v6414 = vpack.c.b16 %v6220, %v6219
    %v6415 = vpack.c.b16 %v6222, %v6221
    %v6416 = vpack.c.b16 %v6224, %v6223
    %v6417 = vpack.c.b16 %v6226, %v6225
    %v6418 = vpack.c.b16 %v6228, %v6227
    %v6419 = vpack.c.b16 %v6230, %v6229
    %v6420 = vpack.c.b16 %v6232, %v6231
    %v6421 = vpack.c.b16 %v6234, %v6233
    %v6422 = vpack.c.b16 %v6236, %v6235
    %v6423 = vpack.c.b16 %v6238, %v6237
    %v6424 = vpack.c.b16 %v6240, %v6239
    %v6425 = vpack.c.b16 %v6242, %v6241
    %v6426 = vpack.c.b16 %v6244, %v6243
    %v6427 = vpack.c.b16 %v6246, %v6245
    %v6428 = vpack.c.b16 %v6248, %v6247
    %v6429 = vpack.c.b16 %v6250, %v6249
    %v6430 = vpack.c.b16 %v6252, %v6251
    %v6431 = vpack.c.b16 %v6254, %v6253
    %v6432 = vpack.c.b16 %v6256, %v6255
    %v6433 = vpack.c.b16 %v6258, %v6257
    %v6434 = vpack.c.b16 %v6260, %v6259
    %v6435 = vpack.c.b16 %v6262, %v6261
    %v6436 = vpack.c.b16 %v6264, %v6263
    %v6437 = vpack.c.b16 %v6266, %v6265
    %v6438 = vpack.c.b16 %v6268, %v6267
    %v6439 = vpack.c.b16 %v6270, %v6269
    %v6440 = vpack.c.b16 %v6272, %v6271
    %6609 = vmatprep.subr.bf16.mxu0 0
    %6610 = vmatpush1.bf16.msra.mxu0 %v6280
    %6611 = vmatprep.subr.bf16.mxu0 0
    %6612 = vmatpush1.bf16.msra.mxu0 %v6279
    %6613 = vmatprep.subr.bf16.mxu0 0
    %6614 = vmatpush1.bf16.msra.mxu0 %v6278
    %6615 = vmatprep.subr.bf16.mxu0 0
    %6616 = vmatpush1.bf16.msra.mxu0 %v6277
    %6617 = vmatprep.subr.bf16.mxu0 0
    %6618 = vmatpush1.bf16.msra.mxu0 %v6276
    %6619 = vmatprep.subr.bf16.mxu0 0
    %6620 = vmatpush1.bf16.msra.mxu0 %v6275
    %6621 = vmatprep.subr.bf16.mxu0 0
    %6622 = vmatpush1.bf16.msra.mxu0 %v6274
    %6623 = vmatprep.subr.bf16.mxu0 0
    %6624 = vmatpush1.bf16.msra.mxu0 %v6273
    %6625 = vmatprep.subr.bf16.mxu0 0
    %6626 = vmatpush2.bf16.msra.mxu0 %v6288
    %6627 = vmatprep.subr.bf16.mxu0 0
    %6628 = vmatpush2.bf16.msra.mxu0 %v6287
    %6629 = vmatprep.subr.bf16.mxu0 0
    %6630 = vmatpush2.bf16.msra.mxu0 %v6286
    %6631 = vmatprep.subr.bf16.mxu0 0
    %6632 = vmatpush2.bf16.msra.mxu0 %v6285
    %6633 = vmatprep.subr.bf16.mxu0 0
    %6634 = vmatpush2.bf16.msra.mxu0 %v6284
    %6635 = vmatprep.subr.bf16.mxu0 0
    %6636 = vmatpush2.bf16.msra.mxu0 %v6283
    %6637 = vmatprep.subr.bf16.mxu0 0
    %6638 = vmatpush2.bf16.msra.mxu0 %v6282
    %6639 = vmatprep.subr.bf16.mxu0 0
    %6640 = vmatpush2.bf16.msra.mxu0 %v6281
    %6641 = vmatprep.mubr.bf16.mxu0 %v5181
    %6642 = vmatmul.mubr.bf16.gmra.mxu0 %v5180
    %v6643 = vpop.f32.mrf.mxu0
    %v6644 = vadd.f32 0.0, %v6643
    %v6645 = vpop.f32.mrf.mxu0
    %v6646 = vpop.f32.mrf.mxu0
    %v6647 = vpop.f32.mrf.mxu0
    %6648 = vdwg.mxu0
    %6649 = vmatprep.subr.bf16.mxu0 0
    %6650 = vmatpush1.bf16.msra.mxu0 %v6296
    %6651 = vmatprep.subr.bf16.mxu0 0
    %6652 = vmatpush1.bf16.msra.mxu0 %v6295
    %6653 = vmatprep.subr.bf16.mxu0 0
    %6654 = vmatpush1.bf16.msra.mxu0 %v6294
    %6655 = vmatprep.subr.bf16.mxu0 0
    %6656 = vmatpush1.bf16.msra.mxu0 %v6293
    %6657 = vmatprep.subr.bf16.mxu0 0
    %6658 = vmatpush1.bf16.msra.mxu0 %v6292
    %6659 = vmatprep.subr.bf16.mxu0 0
    %6660 = vmatpush1.bf16.msra.mxu0 %v6291
    %6661 = vmatprep.subr.bf16.mxu0 0
    %6662 = vmatpush1.bf16.msra.mxu0 %v6290
    %6663 = vmatprep.subr.bf16.mxu0 0
    %6664 = vmatpush1.bf16.msra.mxu0 %v6289
    %6665 = vmatprep.subr.bf16.mxu0 0
    %6666 = vmatpush2.bf16.msra.mxu0 %v6304
    %6667 = vmatprep.subr.bf16.mxu0 0
    %6668 = vmatpush2.bf16.msra.mxu0 %v6303
    %6669 = vmatprep.subr.bf16.mxu0 0
    %6670 = vmatpush2.bf16.msra.mxu0 %v6302
    %6671 = vmatprep.subr.bf16.mxu0 0
    %6672 = vmatpush2.bf16.msra.mxu0 %v6301
    %6673 = vmatprep.subr.bf16.mxu0 0
    %6674 = vmatpush2.bf16.msra.mxu0 %v6300
    %6675 = vmatprep.subr.bf16.mxu0 0
    %6676 = vmatpush2.bf16.msra.mxu0 %v6299
    %6677 = vmatprep.subr.bf16.mxu0 0
    %6678 = vmatpush2.bf16.msra.mxu0 %v6298
    %6679 = vmatprep.subr.bf16.mxu0 0
    %6680 = vmatpush2.bf16.msra.mxu0 %v6297
    %6681 = vmatprep.mubr.bf16.mxu0 %v5183
    %6682 = vmatmul.mubr.bf16.gmra.mxu0 %v5182
    %v6683 = vpop.f32.mrf.mxu0
    %v6684 = vadd.f32 %v6644, %v6683
    %v6685 = vpop.f32.mrf.mxu0
    %v6686 = vpop.f32.mrf.mxu0
    %v6687 = vpop.f32.mrf.mxu0
    %6688 = vdwg.mxu0
    %6689 = vmatprep.subr.bf16.mxu0 0
    %6690 = vmatpush1.bf16.msra.mxu0 %v6312
    %6691 = vmatprep.subr.bf16.mxu0 0
    %6692 = vmatpush1.bf16.msra.mxu0 %v6311
    %6693 = vmatprep.subr.bf16.mxu0 0
    %6694 = vmatpush1.bf16.msra.mxu0 %v6310
    %6695 = vmatprep.subr.bf16.mxu0 0
    %6696 = vmatpush1.bf16.msra.mxu0 %v6309
    %6697 = vmatprep.subr.bf16.mxu0 0
    %6698 = vmatpush1.bf16.msra.mxu0 %v6308
    %6699 = vmatprep.subr.bf16.mxu0 0
    %6700 = vmatpush1.bf16.msra.mxu0 %v6307
    %6701 = vmatprep.subr.bf16.mxu0 0
    %6702 = vmatpush1.bf16.msra.mxu0 %v6306
    %6703 = vmatprep.subr.bf16.mxu0 0
    %6704 = vmatpush1.bf16.msra.mxu0 %v6305
    %6705 = vmatprep.subr.bf16.mxu0 0
    %6706 = vmatpush2.bf16.msra.mxu0 %v6320
    %6707 = vmatprep.subr.bf16.mxu0 0
    %6708 = vmatpush2.bf16.msra.mxu0 %v6319
    %6709 = vmatprep.subr.bf16.mxu0 0
    %6710 = vmatpush2.bf16.msra.mxu0 %v6318
    %6711 = vmatprep.subr.bf16.mxu0 0
    %6712 = vmatpush2.bf16.msra.mxu0 %v6317
    %6713 = vmatprep.subr.bf16.mxu0 0
    %6714 = vmatpush2.bf16.msra.mxu0 %v6316
    %6715 = vmatprep.subr.bf16.mxu0 0
    %6716 = vmatpush2.bf16.msra.mxu0 %v6315
    %6717 = vmatprep.subr.bf16.mxu0 0
    %6718 = vmatpush2.bf16.msra.mxu0 %v6314
    %6719 = vmatprep.subr.bf16.mxu0 0
    %6720 = vmatpush2.bf16.msra.mxu0 %v6313
    %6721 = vmatprep.mubr.bf16.mxu0 %v5185
    %6722 = vmatmul.mubr.bf16.gmra.mxu0 %v5184
    %v6723 = vpop.f32.mrf.mxu0
    %v6724 = vadd.f32 %v6684, %v6723
    %v6725 = vpop.f32.mrf.mxu0
    %v6726 = vpop.f32.mrf.mxu0
    %v6727 = vpop.f32.mrf.mxu0
    %6728 = vdwg.mxu0
    %6729 = vmatprep.subr.bf16.mxu0 0
    %6730 = vmatpush1.bf16.msra.mxu0 %v6328
    %6731 = vmatprep.subr.bf16.mxu0 0
    %6732 = vmatpush1.bf16.msra.mxu0 %v6327
    %6733 = vmatprep.subr.bf16.mxu0 0
    %6734 = vmatpush1.bf16.msra.mxu0 %v6326
    %6735 = vmatprep.subr.bf16.mxu0 0
    %6736 = vmatpush1.bf16.msra.mxu0 %v6325
    %6737 = vmatprep.subr.bf16.mxu0 0
    %6738 = vmatpush1.bf16.msra.mxu0 %v6324
    %6739 = vmatprep.subr.bf16.mxu0 0
    %6740 = vmatpush1.bf16.msra.mxu0 %v6323
    %6741 = vmatprep.subr.bf16.mxu0 0
    %6742 = vmatpush1.bf16.msra.mxu0 %v6322
    %6743 = vmatprep.subr.bf16.mxu0 0
    %6744 = vmatpush1.bf16.msra.mxu0 %v6321
    %6745 = vmatprep.subr.bf16.mxu0 0
    %6746 = vmatpush2.bf16.msra.mxu0 %v6336
    %6747 = vmatprep.subr.bf16.mxu0 0
    %6748 = vmatpush2.bf16.msra.mxu0 %v6335
    %6749 = vmatprep.subr.bf16.mxu0 0
    %6750 = vmatpush2.bf16.msra.mxu0 %v6334
    %6751 = vmatprep.subr.bf16.mxu0 0
    %6752 = vmatpush2.bf16.msra.mxu0 %v6333
    %6753 = vmatprep.subr.bf16.mxu0 0
    %6754 = vmatpush2.bf16.msra.mxu0 %v6332
    %6755 = vmatprep.subr.bf16.mxu0 0
    %6756 = vmatpush2.bf16.msra.mxu0 %v6331
    %6757 = vmatprep.subr.bf16.mxu0 0
    %6758 = vmatpush2.bf16.msra.mxu0 %v6330
    %6759 = vmatprep.subr.bf16.mxu0 0
    %6760 = vmatpush2.bf16.msra.mxu0 %v6329
    %6761 = vmatprep.mubr.bf16.mxu0 %v5187
    %6762 = vmatmul.mubr.bf16.gmra.mxu0 %v5186
    %v6763 = vpop.f32.mrf.mxu0
    %v6764 = vadd.f32 %v6724, %v6763
    %v6765 = vpop.f32.mrf.mxu0
    %v6766 = vpop.f32.mrf.mxu0
    %v6767 = vpop.f32.mrf.mxu0
    %6768 = vdwg.mxu0
    %6769 = vmatprep.subr.bf16.mxu0 0
    %6770 = vmatpush1.bf16.msra.mxu0 %v6344
    %6771 = vmatprep.subr.bf16.mxu0 0
    %6772 = vmatpush1.bf16.msra.mxu0 %v6343
    %6773 = vmatprep.subr.bf16.mxu0 0
    %6774 = vmatpush1.bf16.msra.mxu0 %v6342
    %6775 = vmatprep.subr.bf16.mxu0 0
    %6776 = vmatpush1.bf16.msra.mxu0 %v6341
    %6777 = vmatprep.subr.bf16.mxu0 0
    %6778 = vmatpush1.bf16.msra.mxu0 %v6340
    %6779 = vmatprep.subr.bf16.mxu0 0
    %6780 = vmatpush1.bf16.msra.mxu0 %v6339
    %6781 = vmatprep.subr.bf16.mxu0 0
    %6782 = vmatpush1.bf16.msra.mxu0 %v6338
    %6783 = vmatprep.subr.bf16.mxu0 0
    %6784 = vmatpush1.bf16.msra.mxu0 %v6337
    %6785 = vmatprep.subr.bf16.mxu0 0
    %6786 = vmatpush2.bf16.msra.mxu0 %v6352
    %6787 = vmatprep.subr.bf16.mxu0 0
    %6788 = vmatpush2.bf16.msra.mxu0 %v6351
    %6789 = vmatprep.subr.bf16.mxu0 0
    %6790 = vmatpush2.bf16.msra.mxu0 %v6350
    %6791 = vmatprep.subr.bf16.mxu0 0
    %6792 = vmatpush2.bf16.msra.mxu0 %v6349
    %6793 = vmatprep.subr.bf16.mxu0 0
    %6794 = vmatpush2.bf16.msra.mxu0 %v6348
    %6795 = vmatprep.subr.bf16.mxu0 0
    %6796 = vmatpush2.bf16.msra.mxu0 %v6347
    %6797 = vmatprep.subr.bf16.mxu0 0
    %6798 = vmatpush2.bf16.msra.mxu0 %v6346
    %6799 = vmatprep.subr.bf16.mxu0 0
    %6800 = vmatpush2.bf16.msra.mxu0 %v6345
    %6801 = vmatprep.mubr.bf16.mxu0 %v5189
    %6802 = vmatmul.mubr.bf16.gmra.mxu0 %v5188
    %v6803 = vpop.f32.mrf.mxu0
    %v6804 = vadd.f32 %v6764, %v6803
    %v6805 = vpop.f32.mrf.mxu0
    %v6806 = vpop.f32.mrf.mxu0
    %v6807 = vpop.f32.mrf.mxu0
    %6808 = vdwg.mxu0
    %6809 = vmatprep.subr.bf16.mxu0 0
    %6810 = vmatpush1.bf16.msra.mxu0 %v6360
    %6811 = vmatprep.subr.bf16.mxu0 0
    %6812 = vmatpush1.bf16.msra.mxu0 %v6359
    %6813 = vmatprep.subr.bf16.mxu0 0
    %6814 = vmatpush1.bf16.msra.mxu0 %v6358
    %6815 = vmatprep.subr.bf16.mxu0 0
    %6816 = vmatpush1.bf16.msra.mxu0 %v6357
    %6817 = vmatprep.subr.bf16.mxu0 0
    %6818 = vmatpush1.bf16.msra.mxu0 %v6356
    %6819 = vmatprep.subr.bf16.mxu0 0
    %6820 = vmatpush1.bf16.msra.mxu0 %v6355
    %6821 = vmatprep.subr.bf16.mxu0 0
    %6822 = vmatpush1.bf16.msra.mxu0 %v6354
    %6823 = vmatprep.subr.bf16.mxu0 0
    %6824 = vmatpush1.bf16.msra.mxu0 %v6353
    %6825 = vmatprep.subr.bf16.mxu0 0
    %6826 = vmatpush2.bf16.msra.mxu0 %v6368
    %6827 = vmatprep.subr.bf16.mxu0 0
    %6828 = vmatpush2.bf16.msra.mxu0 %v6367
    %6829 = vmatprep.subr.bf16.mxu0 0
    %6830 = vmatpush2.bf16.msra.mxu0 %v6366
    %6831 = vmatprep.subr.bf16.mxu0 0
    %6832 = vmatpush2.bf16.msra.mxu0 %v6365
    %6833 = vmatprep.subr.bf16.mxu0 0
    %6834 = vmatpush2.bf16.msra.mxu0 %v6364
    %6835 = vmatprep.subr.bf16.mxu0 0
    %6836 = vmatpush2.bf16.msra.mxu0 %v6363
    %6837 = vmatprep.subr.bf16.mxu0 0
    %6838 = vmatpush2.bf16.msra.mxu0 %v6362
    %6839 = vmatprep.subr.bf16.mxu0 0
    %6840 = vmatpush2.bf16.msra.mxu0 %v6361
    %6841 = vmatprep.mubr.bf16.mxu0 %v5191
    %6842 = vmatmul.mubr.bf16.gmra.mxu0 %v5190
    %v6843 = vpop.f32.mrf.mxu0
    %v6844 = vadd.f32 %v6804, %v6843
    %v6845 = vpop.f32.mrf.mxu0
    %v6846 = vpop.f32.mrf.mxu0
    %v6847 = vpop.f32.mrf.mxu0
    %6848 = vdwg.mxu0
    %6849 = vmatprep.subr.bf16.mxu0 0
    %6850 = vmatpush1.bf16.msra.mxu0 %v6376
    %6851 = vmatprep.subr.bf16.mxu0 0
    %6852 = vmatpush1.bf16.msra.mxu0 %v6375
    %6853 = vmatprep.subr.bf16.mxu0 0
    %6854 = vmatpush1.bf16.msra.mxu0 %v6374
    %6855 = vmatprep.subr.bf16.mxu0 0
    %6856 = vmatpush1.bf16.msra.mxu0 %v6373
    %6857 = vmatprep.subr.bf16.mxu0 0
    %6858 = vmatpush1.bf16.msra.mxu0 %v6372
    %6859 = vmatprep.subr.bf16.mxu0 0
    %6860 = vmatpush1.bf16.msra.mxu0 %v6371
    %6861 = vmatprep.subr.bf16.mxu0 0
    %6862 = vmatpush1.bf16.msra.mxu0 %v6370
    %6863 = vmatprep.subr.bf16.mxu0 0
    %6864 = vmatpush1.bf16.msra.mxu0 %v6369
    %6865 = vmatprep.subr.bf16.mxu0 0
    %6866 = vmatpush2.bf16.msra.mxu0 %v6384
    %6867 = vmatprep.subr.bf16.mxu0 0
    %6868 = vmatpush2.bf16.msra.mxu0 %v6383
    %6869 = vmatprep.subr.bf16.mxu0 0
    %6870 = vmatpush2.bf16.msra.mxu0 %v6382
    %6871 = vmatprep.subr.bf16.mxu0 0
    %6872 = vmatpush2.bf16.msra.mxu0 %v6381
    %6873 = vmatprep.subr.bf16.mxu0 0
    %6874 = vmatpush2.bf16.msra.mxu0 %v6380
    %6875 = vmatprep.subr.bf16.mxu0 0
    %6876 = vmatpush2.bf16.msra.mxu0 %v6379
    %6877 = vmatprep.subr.bf16.mxu0 0
    %6878 = vmatpush2.bf16.msra.mxu0 %v6378
    %6879 = vmatprep.subr.bf16.mxu0 0
    %6880 = vmatpush2.bf16.msra.mxu0 %v6377
    %6881 = vmatprep.mubr.bf16.mxu0 %v5193
    %6882 = vmatmul.mubr.bf16.gmra.mxu0 %v5192
    %v6883 = vpop.f32.mrf.mxu0
    %v6884 = vadd.f32 %v6844, %v6883
    %v6885 = vpop.f32.mrf.mxu0
    %v6886 = vpop.f32.mrf.mxu0
    %v6887 = vpop.f32.mrf.mxu0
    %6888 = vdwg.mxu0
    %6889 = vmatprep.subr.bf16.mxu0 0
    %6890 = vmatpush1.bf16.msra.mxu0 %v6392
    %6891 = vmatprep.subr.bf16.mxu0 0
    %6892 = vmatpush1.bf16.msra.mxu0 %v6391
    %6893 = vmatprep.subr.bf16.mxu0 0
    %6894 = vmatpush1.bf16.msra.mxu0 %v6390
    %6895 = vmatprep.subr.bf16.mxu0 0
    %6896 = vmatpush1.bf16.msra.mxu0 %v6389
    %6897 = vmatprep.subr.bf16.mxu0 0
    %6898 = vmatpush1.bf16.msra.mxu0 %v6388
    %6899 = vmatprep.subr.bf16.mxu0 0
    %6900 = vmatpush1.bf16.msra.mxu0 %v6387
    %6901 = vmatprep.subr.bf16.mxu0 0
    %6902 = vmatpush1.bf16.msra.mxu0 %v6386
    %6903 = vmatprep.subr.bf16.mxu0 0
    %6904 = vmatpush1.bf16.msra.mxu0 %v6385
    %6905 = vmatprep.subr.bf16.mxu0 0
    %6906 = vmatpush2.bf16.msra.mxu0 %v6400
    %6907 = vmatprep.subr.bf16.mxu0 0
    %6908 = vmatpush2.bf16.msra.mxu0 %v6399
    %6909 = vmatprep.subr.bf16.mxu0 0
    %6910 = vmatpush2.bf16.msra.mxu0 %v6398
    %6911 = vmatprep.subr.bf16.mxu0 0
    %6912 = vmatpush2.bf16.msra.mxu0 %v6397
    %6913 = vmatprep.subr.bf16.mxu0 0
    %6914 = vmatpush2.bf16.msra.mxu0 %v6396
    %6915 = vmatprep.subr.bf16.mxu0 0
    %6916 = vmatpush2.bf16.msra.mxu0 %v6395
    %6917 = vmatprep.subr.bf16.mxu0 0
    %6918 = vmatpush2.bf16.msra.mxu0 %v6394
    %6919 = vmatprep.subr.bf16.mxu0 0
    %6920 = vmatpush2.bf16.msra.mxu0 %v6393
    %6921 = vmatprep.mubr.bf16.mxu0 %v5195
    %6922 = vmatmul.mubr.bf16.gmra.mxu0 %v5194
    %v6923 = vpop.f32.mrf.mxu0
    %v6924 = vadd.f32 %v6884, %v6923
    %v6925 = vpop.f32.mrf.mxu0
    %v6926 = vpop.f32.mrf.mxu0
    %v6927 = vpop.f32.mrf.mxu0
    %6928 = vdwg.mxu0
    %6929 = vmatprep.subr.bf16.mxu0 0
    %6930 = vmatpush1.bf16.msra.mxu0 %v6408
    %6931 = vmatprep.subr.bf16.mxu0 0
    %6932 = vmatpush1.bf16.msra.mxu0 %v6407
    %6933 = vmatprep.subr.bf16.mxu0 0
    %6934 = vmatpush1.bf16.msra.mxu0 %v6406
    %6935 = vmatprep.subr.bf16.mxu0 0
    %6936 = vmatpush1.bf16.msra.mxu0 %v6405
    %6937 = vmatprep.subr.bf16.mxu0 0
    %6938 = vmatpush1.bf16.msra.mxu0 %v6404
    %6939 = vmatprep.subr.bf16.mxu0 0
    %6940 = vmatpush1.bf16.msra.mxu0 %v6403
    %6941 = vmatprep.subr.bf16.mxu0 0
    %6942 = vmatpush1.bf16.msra.mxu0 %v6402
    %6943 = vmatprep.subr.bf16.mxu0 0
    %6944 = vmatpush1.bf16.msra.mxu0 %v6401
    %6945 = vmatprep.subr.bf16.mxu0 0
    %6946 = vmatpush2.bf16.msra.mxu0 %v6416
    %6947 = vmatprep.subr.bf16.mxu0 0
    %6948 = vmatpush2.bf16.msra.mxu0 %v6415
    %6949 = vmatprep.subr.bf16.mxu0 0
    %6950 = vmatpush2.bf16.msra.mxu0 %v6414
    %6951 = vmatprep.subr.bf16.mxu0 0
    %6952 = vmatpush2.bf16.msra.mxu0 %v6413
    %6953 = vmatprep.subr.bf16.mxu0 0
    %6954 = vmatpush2.bf16.msra.mxu0 %v6412
    %6955 = vmatprep.subr.bf16.mxu0 0
    %6956 = vmatpush2.bf16.msra.mxu0 %v6411
    %6957 = vmatprep.subr.bf16.mxu0 0
    %6958 = vmatpush2.bf16.msra.mxu0 %v6410
    %6959 = vmatprep.subr.bf16.mxu0 0
    %6960 = vmatpush2.bf16.msra.mxu0 %v6409
    %6961 = vmatprep.mubr.bf16.mxu0 %v5197
    %6962 = vmatmul.mubr.bf16.gmra.mxu0 %v5196
    %v6963 = vpop.f32.mrf.mxu0
    %v6964 = vadd.f32 %v6924, %v6963
    %v6965 = vpop.f32.mrf.mxu0
    %v6966 = vpop.f32.mrf.mxu0
    %v6967 = vpop.f32.mrf.mxu0
    %6968 = vdwg.mxu0
    %6969 = vmatprep.subr.bf16.mxu0 0
    %6970 = vmatpush1.bf16.msra.mxu0 %v6424
    %6971 = vmatprep.subr.bf16.mxu0 0
    %6972 = vmatpush1.bf16.msra.mxu0 %v6423
    %6973 = vmatprep.subr.bf16.mxu0 0
    %6974 = vmatpush1.bf16.msra.mxu0 %v6422
    %6975 = vmatprep.subr.bf16.mxu0 0
    %6976 = vmatpush1.bf16.msra.mxu0 %v6421
    %6977 = vmatprep.subr.bf16.mxu0 0
    %6978 = vmatpush1.bf16.msra.mxu0 %v6420
    %6979 = vmatprep.subr.bf16.mxu0 0
    %6980 = vmatpush1.bf16.msra.mxu0 %v6419
    %6981 = vmatprep.subr.bf16.mxu0 0
    %6982 = vmatpush1.bf16.msra.mxu0 %v6418
    %6983 = vmatprep.subr.bf16.mxu0 0
    %6984 = vmatpush1.bf16.msra.mxu0 %v6417
    %6985 = vmatprep.subr.bf16.mxu0 0
    %6986 = vmatpush2.bf16.msra.mxu0 %v6432
    %6987 = vmatprep.subr.bf16.mxu0 0
    %6988 = vmatpush2.bf16.msra.mxu0 %v6431
    %6989 = vmatprep.subr.bf16.mxu0 0
    %6990 = vmatpush2.bf16.msra.mxu0 %v6430
    %6991 = vmatprep.subr.bf16.mxu0 0
    %6992 = vmatpush2.bf16.msra.mxu0 %v6429
    %6993 = vmatprep.subr.bf16.mxu0 0
    %6994 = vmatpush2.bf16.msra.mxu0 %v6428
    %6995 = vmatprep.subr.bf16.mxu0 0
    %6996 = vmatpush2.bf16.msra.mxu0 %v6427
    %6997 = vmatprep.subr.bf16.mxu0 0
    %6998 = vmatpush2.bf16.msra.mxu0 %v6426
    %6999 = vmatprep.subr.bf16.mxu0 0
    %7000 = vmatpush2.bf16.msra.mxu0 %v6425
    %7001 = vmatprep.mubr.bf16.mxu0 %v5199
    %7002 = vmatmul.mubr.bf16.gmra.mxu0 %v5198
    %v7003 = vpop.f32.mrf.mxu0
    %v7004 = vadd.f32 %v6964, %v7003
    %v7005 = vpop.f32.mrf.mxu0
    %v7006 = vpop.f32.mrf.mxu0
    %v7007 = vpop.f32.mrf.mxu0
    %7008 = vdwg.mxu0
    %7009 = vmatprep.subr.bf16.mxu0 0
    %7010 = vmatpush1.bf16.msra.mxu0 %v6440
    %7011 = vmatprep.subr.bf16.mxu0 0
    %7012 = vmatpush1.bf16.msra.mxu0 %v6439
    %7013 = vmatprep.subr.bf16.mxu0 0
    %7014 = vmatpush1.bf16.msra.mxu0 %v6438
    %7015 = vmatprep.subr.bf16.mxu0 0
    %7016 = vmatpush1.bf16.msra.mxu0 %v6437
    %7017 = vmatprep.subr.bf16.mxu0 0
    %7018 = vmatpush1.bf16.msra.mxu0 %v6436
    %7019 = vmatprep.subr.bf16.mxu0 0
    %7020 = vmatpush1.bf16.msra.mxu0 %v6435
    %7021 = vmatprep.subr.bf16.mxu0 0
    %7022 = vmatpush1.bf16.msra.mxu0 %v6434
    %7023 = vmatprep.subr.bf16.mxu0 0
    %7024 = vmatpush1.bf16.msra.mxu0 %v6433
    %7025 = vmatprep.subr.bf16.mxu0 0
    %7026 = vmatpush2.bf16.msra.mxu0 0
    %7027 = vmatprep.subr.bf16.mxu0 0
    %7028 = vmatpush2.bf16.msra.mxu0 0
    %7029 = vmatprep.subr.bf16.mxu0 0
    %7030 = vmatpush2.bf16.msra.mxu0 0
    %7031 = vmatprep.subr.bf16.mxu0 0
    %7032 = vmatpush2.bf16.msra.mxu0 0
    %7033 = vmatprep.subr.bf16.mxu0 0
    %7034 = vmatpush2.bf16.msra.mxu0 0
    %7035 = vmatprep.subr.bf16.mxu0 0
    %7036 = vmatpush2.bf16.msra.mxu0 0
    %7037 = vmatprep.subr.bf16.mxu0 0
    %7038 = vmatpush2.bf16.msra.mxu0 0
    %7039 = vmatprep.subr.bf16.mxu0 0
    %7040 = vmatpush2.bf16.msra.mxu0 0
    %7041 = vmatprep.mubr.bf16.mxu0 0
    %7042 = vmatmul.mubr.bf16.gmra.mxu0 %v5200
    %v7043 = vpop.f32.mrf.mxu0
    %v7044 = vadd.f32 %v7004, %v7043
    %v7045 = vpop.f32.mrf.mxu0
    %v7046 = vpop.f32.mrf.mxu0
    %v7047 = vpop.f32.mrf.mxu0
    %7048 = vdwg.mxu0
    %v7049 = vadd.f32 %v5600, %v7044
    %7050 = vmatprep.subr.bf16.mxu0 0
    %7051 = vmatpush1.bf16.msra.mxu0 %v6280
    %7052 = vmatprep.subr.bf16.mxu0 0
    %7053 = vmatpush1.bf16.msra.mxu0 %v6279
    %7054 = vmatprep.subr.bf16.mxu0 0
    %7055 = vmatpush1.bf16.msra.mxu0 %v6278
    %7056 = vmatprep.subr.bf16.mxu0 0
    %7057 = vmatpush1.bf16.msra.mxu0 %v6277
    %7058 = vmatprep.subr.bf16.mxu0 0
    %7059 = vmatpush1.bf16.msra.mxu0 %v6276
    %7060 = vmatprep.subr.bf16.mxu0 0
    %7061 = vmatpush1.bf16.msra.mxu0 %v6275
    %7062 = vmatprep.subr.bf16.mxu0 0
    %7063 = vmatpush1.bf16.msra.mxu0 %v6274
    %7064 = vmatprep.subr.bf16.mxu0 0
    %7065 = vmatpush1.bf16.msra.mxu0 %v6273
    %7066 = vmatprep.subr.bf16.mxu0 0
    %7067 = vmatpush2.bf16.msra.mxu0 %v6288
    %7068 = vmatprep.subr.bf16.mxu0 0
    %7069 = vmatpush2.bf16.msra.mxu0 %v6287
    %7070 = vmatprep.subr.bf16.mxu0 0
    %7071 = vmatpush2.bf16.msra.mxu0 %v6286
    %7072 = vmatprep.subr.bf16.mxu0 0
    %7073 = vmatpush2.bf16.msra.mxu0 %v6285
    %7074 = vmatprep.subr.bf16.mxu0 0
    %7075 = vmatpush2.bf16.msra.mxu0 %v6284
    %7076 = vmatprep.subr.bf16.mxu0 0
    %7077 = vmatpush2.bf16.msra.mxu0 %v6283
    %7078 = vmatprep.subr.bf16.mxu0 0
    %7079 = vmatpush2.bf16.msra.mxu0 %v6282
    %7080 = vmatprep.subr.bf16.mxu0 0
    %7081 = vmatpush2.bf16.msra.mxu0 %v6281
    %7082 = vmatprep.mubr.bf16.mxu0 %v5202
    %7083 = vmatmul.mubr.bf16.gmra.mxu0 %v5201
    %v7084 = vpop.f32.mrf.mxu0
    %v7085 = vadd.f32 0.0, %v7084
    %v7086 = vpop.f32.mrf.mxu0
    %v7087 = vpop.f32.mrf.mxu0
    %v7088 = vpop.f32.mrf.mxu0
    %7089 = vdwg.mxu0
    %7090 = vmatprep.subr.bf16.mxu0 0
    %7091 = vmatpush1.bf16.msra.mxu0 %v6296
    %7092 = vmatprep.subr.bf16.mxu0 0
    %7093 = vmatpush1.bf16.msra.mxu0 %v6295
    %7094 = vmatprep.subr.bf16.mxu0 0
    %7095 = vmatpush1.bf16.msra.mxu0 %v6294
    %7096 = vmatprep.subr.bf16.mxu0 0
    %7097 = vmatpush1.bf16.msra.mxu0 %v6293
    %7098 = vmatprep.subr.bf16.mxu0 0
    %7099 = vmatpush1.bf16.msra.mxu0 %v6292
    %7100 = vmatprep.subr.bf16.mxu0 0
    %7101 = vmatpush1.bf16.msra.mxu0 %v6291
    %7102 = vmatprep.subr.bf16.mxu0 0
    %7103 = vmatpush1.bf16.msra.mxu0 %v6290
    %7104 = vmatprep.subr.bf16.mxu0 0
    %7105 = vmatpush1.bf16.msra.mxu0 %v6289
    %7106 = vmatprep.subr.bf16.mxu0 0
    %7107 = vmatpush2.bf16.msra.mxu0 %v6304
    %7108 = vmatprep.subr.bf16.mxu0 0
    %7109 = vmatpush2.bf16.msra.mxu0 %v6303
    %7110 = vmatprep.subr.bf16.mxu0 0
    %7111 = vmatpush2.bf16.msra.mxu0 %v6302
    %7112 = vmatprep.subr.bf16.mxu0 0
    %7113 = vmatpush2.bf16.msra.mxu0 %v6301
    %7114 = vmatprep.subr.bf16.mxu0 0
    %7115 = vmatpush2.bf16.msra.mxu0 %v6300
    %7116 = vmatprep.subr.bf16.mxu0 0
    %7117 = vmatpush2.bf16.msra.mxu0 %v6299
    %7118 = vmatprep.subr.bf16.mxu0 0
    %7119 = vmatpush2.bf16.msra.mxu0 %v6298
    %7120 = vmatprep.subr.bf16.mxu0 0
    %7121 = vmatpush2.bf16.msra.mxu0 %v6297
    %7122 = vmatprep.mubr.bf16.mxu0 %v5204
    %7123 = vmatmul.mubr.bf16.gmra.mxu0 %v5203
    %v7124 = vpop.f32.mrf.mxu0
    %v7125 = vadd.f32 %v7085, %v7124
    %v7126 = vpop.f32.mrf.mxu0
    %v7127 = vpop.f32.mrf.mxu0
    %v7128 = vpop.f32.mrf.mxu0
    %7129 = vdwg.mxu0
    %7130 = vmatprep.subr.bf16.mxu0 0
    %7131 = vmatpush1.bf16.msra.mxu0 %v6312
    %7132 = vmatprep.subr.bf16.mxu0 0
    %7133 = vmatpush1.bf16.msra.mxu0 %v6311
    %7134 = vmatprep.subr.bf16.mxu0 0
    %7135 = vmatpush1.bf16.msra.mxu0 %v6310
    %7136 = vmatprep.subr.bf16.mxu0 0
    %7137 = vmatpush1.bf16.msra.mxu0 %v6309
    %7138 = vmatprep.subr.bf16.mxu0 0
    %7139 = vmatpush1.bf16.msra.mxu0 %v6308
    %7140 = vmatprep.subr.bf16.mxu0 0
    %7141 = vmatpush1.bf16.msra.mxu0 %v6307
    %7142 = vmatprep.subr.bf16.mxu0 0
    %7143 = vmatpush1.bf16.msra.mxu0 %v6306
    %7144 = vmatprep.subr.bf16.mxu0 0
    %7145 = vmatpush1.bf16.msra.mxu0 %v6305
    %7146 = vmatprep.subr.bf16.mxu0 0
    %7147 = vmatpush2.bf16.msra.mxu0 %v6320
    %7148 = vmatprep.subr.bf16.mxu0 0
    %7149 = vmatpush2.bf16.msra.mxu0 %v6319
    %7150 = vmatprep.subr.bf16.mxu0 0
    %7151 = vmatpush2.bf16.msra.mxu0 %v6318
    %7152 = vmatprep.subr.bf16.mxu0 0
    %7153 = vmatpush2.bf16.msra.mxu0 %v6317
    %7154 = vmatprep.subr.bf16.mxu0 0
    %7155 = vmatpush2.bf16.msra.mxu0 %v6316
    %7156 = vmatprep.subr.bf16.mxu0 0
    %7157 = vmatpush2.bf16.msra.mxu0 %v6315
    %7158 = vmatprep.subr.bf16.mxu0 0
    %7159 = vmatpush2.bf16.msra.mxu0 %v6314
    %7160 = vmatprep.subr.bf16.mxu0 0
    %7161 = vmatpush2.bf16.msra.mxu0 %v6313
    %7162 = vmatprep.mubr.bf16.mxu0 %v5206
    %7163 = vmatmul.mubr.bf16.gmra.mxu0 %v5205
    %v7164 = vpop.f32.mrf.mxu0
    %v7165 = vadd.f32 %v7125, %v7164
    %v7166 = vpop.f32.mrf.mxu0
    %v7167 = vpop.f32.mrf.mxu0
    %v7168 = vpop.f32.mrf.mxu0
    %7169 = vdwg.mxu0
    %7170 = vmatprep.subr.bf16.mxu0 0
    %7171 = vmatpush1.bf16.msra.mxu0 %v6328
    %7172 = vmatprep.subr.bf16.mxu0 0
    %7173 = vmatpush1.bf16.msra.mxu0 %v6327
    %7174 = vmatprep.subr.bf16.mxu0 0
    %7175 = vmatpush1.bf16.msra.mxu0 %v6326
    %7176 = vmatprep.subr.bf16.mxu0 0
    %7177 = vmatpush1.bf16.msra.mxu0 %v6325
    %7178 = vmatprep.subr.bf16.mxu0 0
    %7179 = vmatpush1.bf16.msra.mxu0 %v6324
    %7180 = vmatprep.subr.bf16.mxu0 0
    %7181 = vmatpush1.bf16.msra.mxu0 %v6323
    %7182 = vmatprep.subr.bf16.mxu0 0
    %7183 = vmatpush1.bf16.msra.mxu0 %v6322
    %7184 = vmatprep.subr.bf16.mxu0 0
    %7185 = vmatpush1.bf16.msra.mxu0 %v6321
    %7186 = vmatprep.subr.bf16.mxu0 0
    %7187 = vmatpush2.bf16.msra.mxu0 %v6336
    %7188 = vmatprep.subr.bf16.mxu0 0
    %7189 = vmatpush2.bf16.msra.mxu0 %v6335
    %7190 = vmatprep.subr.bf16.mxu0 0
    %7191 = vmatpush2.bf16.msra.mxu0 %v6334
    %7192 = vmatprep.subr.bf16.mxu0 0
    %7193 = vmatpush2.bf16.msra.mxu0 %v6333
    %7194 = vmatprep.subr.bf16.mxu0 0
    %7195 = vmatpush2.bf16.msra.mxu0 %v6332
    %7196 = vmatprep.subr.bf16.mxu0 0
    %7197 = vmatpush2.bf16.msra.mxu0 %v6331
    %7198 = vmatprep.subr.bf16.mxu0 0
    %7199 = vmatpush2.bf16.msra.mxu0 %v6330
    %7200 = vmatprep.subr.bf16.mxu0 0
    %7201 = vmatpush2.bf16.msra.mxu0 %v6329
    %7202 = vmatprep.mubr.bf16.mxu0 %v5208
    %7203 = vmatmul.mubr.bf16.gmra.mxu0 %v5207
    %v7204 = vpop.f32.mrf.mxu0
    %v7205 = vadd.f32 %v7165, %v7204
    %v7206 = vpop.f32.mrf.mxu0
    %v7207 = vpop.f32.mrf.mxu0
    %v7208 = vpop.f32.mrf.mxu0
    %7209 = vdwg.mxu0
    %7210 = vmatprep.subr.bf16.mxu0 0
    %7211 = vmatpush1.bf16.msra.mxu0 %v6344
    %7212 = vmatprep.subr.bf16.mxu0 0
    %7213 = vmatpush1.bf16.msra.mxu0 %v6343
    %7214 = vmatprep.subr.bf16.mxu0 0
    %7215 = vmatpush1.bf16.msra.mxu0 %v6342
    %7216 = vmatprep.subr.bf16.mxu0 0
    %7217 = vmatpush1.bf16.msra.mxu0 %v6341
    %7218 = vmatprep.subr.bf16.mxu0 0
    %7219 = vmatpush1.bf16.msra.mxu0 %v6340
    %7220 = vmatprep.subr.bf16.mxu0 0
    %7221 = vmatpush1.bf16.msra.mxu0 %v6339
    %7222 = vmatprep.subr.bf16.mxu0 0
    %7223 = vmatpush1.bf16.msra.mxu0 %v6338
    %7224 = vmatprep.subr.bf16.mxu0 0
    %7225 = vmatpush1.bf16.msra.mxu0 %v6337
    %7226 = vmatprep.subr.bf16.mxu0 0
    %7227 = vmatpush2.bf16.msra.mxu0 %v6352
    %7228 = vmatprep.subr.bf16.mxu0 0
    %7229 = vmatpush2.bf16.msra.mxu0 %v6351
    %7230 = vmatprep.subr.bf16.mxu0 0
    %7231 = vmatpush2.bf16.msra.mxu0 %v6350
    %7232 = vmatprep.subr.bf16.mxu0 0
    %7233 = vmatpush2.bf16.msra.mxu0 %v6349
    %7234 = vmatprep.subr.bf16.mxu0 0
    %7235 = vmatpush2.bf16.msra.mxu0 %v6348
    %7236 = vmatprep.subr.bf16.mxu0 0
    %7237 = vmatpush2.bf16.msra.mxu0 %v6347
    %7238 = vmatprep.subr.bf16.mxu0 0
    %7239 = vmatpush2.bf16.msra.mxu0 %v6346
    %7240 = vmatprep.subr.bf16.mxu0 0
    %7241 = vmatpush2.bf16.msra.mxu0 %v6345
    %7242 = vmatprep.mubr.bf16.mxu0 %v5210
    %7243 = vmatmul.mubr.bf16.gmra.mxu0 %v5209
    %v7244 = vpop.f32.mrf.mxu0
    %v7245 = vadd.f32 %v7205, %v7244
    %v7246 = vpop.f32.mrf.mxu0
    %v7247 = vpop.f32.mrf.mxu0
    %v7248 = vpop.f32.mrf.mxu0
    %7249 = vdwg.mxu0
    %7250 = vmatprep.subr.bf16.mxu0 0
    %7251 = vmatpush1.bf16.msra.mxu0 %v6360
    %7252 = vmatprep.subr.bf16.mxu0 0
    %7253 = vmatpush1.bf16.msra.mxu0 %v6359
    %7254 = vmatprep.subr.bf16.mxu0 0
    %7255 = vmatpush1.bf16.msra.mxu0 %v6358
    %7256 = vmatprep.subr.bf16.mxu0 0
    %7257 = vmatpush1.bf16.msra.mxu0 %v6357
    %7258 = vmatprep.subr.bf16.mxu0 0
    %7259 = vmatpush1.bf16.msra.mxu0 %v6356
    %7260 = vmatprep.subr.bf16.mxu0 0
    %7261 = vmatpush1.bf16.msra.mxu0 %v6355
    %7262 = vmatprep.subr.bf16.mxu0 0
    %7263 = vmatpush1.bf16.msra.mxu0 %v6354
    %7264 = vmatprep.subr.bf16.mxu0 0
    %7265 = vmatpush1.bf16.msra.mxu0 %v6353
    %7266 = vmatprep.subr.bf16.mxu0 0
    %7267 = vmatpush2.bf16.msra.mxu0 %v6368
    %7268 = vmatprep.subr.bf16.mxu0 0
    %7269 = vmatpush2.bf16.msra.mxu0 %v6367
    %7270 = vmatprep.subr.bf16.mxu0 0
    %7271 = vmatpush2.bf16.msra.mxu0 %v6366
    %7272 = vmatprep.subr.bf16.mxu0 0
    %7273 = vmatpush2.bf16.msra.mxu0 %v6365
    %7274 = vmatprep.subr.bf16.mxu0 0
    %7275 = vmatpush2.bf16.msra.mxu0 %v6364
    %7276 = vmatprep.subr.bf16.mxu0 0
    %7277 = vmatpush2.bf16.msra.mxu0 %v6363
    %7278 = vmatprep.subr.bf16.mxu0 0
    %7279 = vmatpush2.bf16.msra.mxu0 %v6362
    %7280 = vmatprep.subr.bf16.mxu0 0
    %7281 = vmatpush2.bf16.msra.mxu0 %v6361
    %7282 = vmatprep.mubr.bf16.mxu0 %v5212
    %7283 = vmatmul.mubr.bf16.gmra.mxu0 %v5211
    %v7284 = vpop.f32.mrf.mxu0
    %v7285 = vadd.f32 %v7245, %v7284
    %v7286 = vpop.f32.mrf.mxu0
    %v7287 = vpop.f32.mrf.mxu0
    %v7288 = vpop.f32.mrf.mxu0
    %7289 = vdwg.mxu0
    %7290 = vmatprep.subr.bf16.mxu0 0
    %7291 = vmatpush1.bf16.msra.mxu0 %v6376
    %7292 = vmatprep.subr.bf16.mxu0 0
    %7293 = vmatpush1.bf16.msra.mxu0 %v6375
    %7294 = vmatprep.subr.bf16.mxu0 0
    %7295 = vmatpush1.bf16.msra.mxu0 %v6374
    %7296 = vmatprep.subr.bf16.mxu0 0
    %7297 = vmatpush1.bf16.msra.mxu0 %v6373
    %7298 = vmatprep.subr.bf16.mxu0 0
    %7299 = vmatpush1.bf16.msra.mxu0 %v6372
    %7300 = vmatprep.subr.bf16.mxu0 0
    %7301 = vmatpush1.bf16.msra.mxu0 %v6371
    %7302 = vmatprep.subr.bf16.mxu0 0
    %7303 = vmatpush1.bf16.msra.mxu0 %v6370
    %7304 = vmatprep.subr.bf16.mxu0 0
    %7305 = vmatpush1.bf16.msra.mxu0 %v6369
    %7306 = vmatprep.subr.bf16.mxu0 0
    %7307 = vmatpush2.bf16.msra.mxu0 %v6384
    %7308 = vmatprep.subr.bf16.mxu0 0
    %7309 = vmatpush2.bf16.msra.mxu0 %v6383
    %7310 = vmatprep.subr.bf16.mxu0 0
    %7311 = vmatpush2.bf16.msra.mxu0 %v6382
    %7312 = vmatprep.subr.bf16.mxu0 0
    %7313 = vmatpush2.bf16.msra.mxu0 %v6381
    %7314 = vmatprep.subr.bf16.mxu0 0
    %7315 = vmatpush2.bf16.msra.mxu0 %v6380
    %7316 = vmatprep.subr.bf16.mxu0 0
    %7317 = vmatpush2.bf16.msra.mxu0 %v6379
    %7318 = vmatprep.subr.bf16.mxu0 0
    %7319 = vmatpush2.bf16.msra.mxu0 %v6378
    %7320 = vmatprep.subr.bf16.mxu0 0
    %7321 = vmatpush2.bf16.msra.mxu0 %v6377
    %7322 = vmatprep.mubr.bf16.mxu0 %v5214
    %7323 = vmatmul.mubr.bf16.gmra.mxu0 %v5213
    %v7324 = vpop.f32.mrf.mxu0
    %v7325 = vadd.f32 %v7285, %v7324
    %v7326 = vpop.f32.mrf.mxu0
    %v7327 = vpop.f32.mrf.mxu0
    %v7328 = vpop.f32.mrf.mxu0
    %7329 = vdwg.mxu0
    %7330 = vmatprep.subr.bf16.mxu0 0
    %7331 = vmatpush1.bf16.msra.mxu0 %v6392
    %7332 = vmatprep.subr.bf16.mxu0 0
    %7333 = vmatpush1.bf16.msra.mxu0 %v6391
    %7334 = vmatprep.subr.bf16.mxu0 0
    %7335 = vmatpush1.bf16.msra.mxu0 %v6390
    %7336 = vmatprep.subr.bf16.mxu0 0
    %7337 = vmatpush1.bf16.msra.mxu0 %v6389
    %7338 = vmatprep.subr.bf16.mxu0 0
    %7339 = vmatpush1.bf16.msra.mxu0 %v6388
    %7340 = vmatprep.subr.bf16.mxu0 0
    %7341 = vmatpush1.bf16.msra.mxu0 %v6387
    %7342 = vmatprep.subr.bf16.mxu0 0
    %7343 = vmatpush1.bf16.msra.mxu0 %v6386
    %7344 = vmatprep.subr.bf16.mxu0 0
    %7345 = vmatpush1.bf16.msra.mxu0 %v6385
    %7346 = vmatprep.subr.bf16.mxu0 0
    %7347 = vmatpush2.bf16.msra.mxu0 %v6400
    %7348 = vmatprep.subr.bf16.mxu0 0
    %7349 = vmatpush2.bf16.msra.mxu0 %v6399
    %7350 = vmatprep.subr.bf16.mxu0 0
    %7351 = vmatpush2.bf16.msra.mxu0 %v6398
    %7352 = vmatprep.subr.bf16.mxu0 0
    %7353 = vmatpush2.bf16.msra.mxu0 %v6397
    %7354 = vmatprep.subr.bf16.mxu0 0
    %7355 = vmatpush2.bf16.msra.mxu0 %v6396
    %7356 = vmatprep.subr.bf16.mxu0 0
    %7357 = vmatpush2.bf16.msra.mxu0 %v6395
    %7358 = vmatprep.subr.bf16.mxu0 0
    %7359 = vmatpush2.bf16.msra.mxu0 %v6394
    %7360 = vmatprep.subr.bf16.mxu0 0
    %7361 = vmatpush2.bf16.msra.mxu0 %v6393
    %7362 = vmatprep.mubr.bf16.mxu0 %v5216
    %7363 = vmatmul.mubr.bf16.gmra.mxu0 %v5215
    %v7364 = vpop.f32.mrf.mxu0
    %v7365 = vadd.f32 %v7325, %v7364
    %v7366 = vpop.f32.mrf.mxu0
    %v7367 = vpop.f32.mrf.mxu0
    %v7368 = vpop.f32.mrf.mxu0
    %7369 = vdwg.mxu0
    %7370 = vmatprep.subr.bf16.mxu0 0
    %7371 = vmatpush1.bf16.msra.mxu0 %v6408
    %7372 = vmatprep.subr.bf16.mxu0 0
    %7373 = vmatpush1.bf16.msra.mxu0 %v6407
    %7374 = vmatprep.subr.bf16.mxu0 0
    %7375 = vmatpush1.bf16.msra.mxu0 %v6406
    %7376 = vmatprep.subr.bf16.mxu0 0
    %7377 = vmatpush1.bf16.msra.mxu0 %v6405
    %7378 = vmatprep.subr.bf16.mxu0 0
    %7379 = vmatpush1.bf16.msra.mxu0 %v6404
    %7380 = vmatprep.subr.bf16.mxu0 0
    %7381 = vmatpush1.bf16.msra.mxu0 %v6403
    %7382 = vmatprep.subr.bf16.mxu0 0
    %7383 = vmatpush1.bf16.msra.mxu0 %v6402
    %7384 = vmatprep.subr.bf16.mxu0 0
    %7385 = vmatpush1.bf16.msra.mxu0 %v6401
    %7386 = vmatprep.subr.bf16.mxu0 0
    %7387 = vmatpush2.bf16.msra.mxu0 %v6416
    %7388 = vmatprep.subr.bf16.mxu0 0
    %7389 = vmatpush2.bf16.msra.mxu0 %v6415
    %7390 = vmatprep.subr.bf16.mxu0 0
    %7391 = vmatpush2.bf16.msra.mxu0 %v6414
    %7392 = vmatprep.subr.bf16.mxu0 0
    %7393 = vmatpush2.bf16.msra.mxu0 %v6413
    %7394 = vmatprep.subr.bf16.mxu0 0
    %7395 = vmatpush2.bf16.msra.mxu0 %v6412
    %7396 = vmatprep.subr.bf16.mxu0 0
    %7397 = vmatpush2.bf16.msra.mxu0 %v6411
    %7398 = vmatprep.subr.bf16.mxu0 0
    %7399 = vmatpush2.bf16.msra.mxu0 %v6410
    %7400 = vmatprep.subr.bf16.mxu0 0
    %7401 = vmatpush2.bf16.msra.mxu0 %v6409
    %7402 = vmatprep.mubr.bf16.mxu0 %v5218
    %7403 = vmatmul.mubr.bf16.gmra.mxu0 %v5217
    %v7404 = vpop.f32.mrf.mxu0
    %v7405 = vadd.f32 %v7365, %v7404
    %v7406 = vpop.f32.mrf.mxu0
    %v7407 = vpop.f32.mrf.mxu0
    %v7408 = vpop.f32.mrf.mxu0
    %7409 = vdwg.mxu0
    %7410 = vmatprep.subr.bf16.mxu0 0
    %7411 = vmatpush1.bf16.msra.mxu0 %v6424
    %7412 = vmatprep.subr.bf16.mxu0 0
    %7413 = vmatpush1.bf16.msra.mxu0 %v6423
    %7414 = vmatprep.subr.bf16.mxu0 0
    %7415 = vmatpush1.bf16.msra.mxu0 %v6422
    %7416 = vmatprep.subr.bf16.mxu0 0
    %7417 = vmatpush1.bf16.msra.mxu0 %v6421
    %7418 = vmatprep.subr.bf16.mxu0 0
    %7419 = vmatpush1.bf16.msra.mxu0 %v6420
    %7420 = vmatprep.subr.bf16.mxu0 0
    %7421 = vmatpush1.bf16.msra.mxu0 %v6419
    %7422 = vmatprep.subr.bf16.mxu0 0
    %7423 = vmatpush1.bf16.msra.mxu0 %v6418
    %7424 = vmatprep.subr.bf16.mxu0 0
    %7425 = vmatpush1.bf16.msra.mxu0 %v6417
    %7426 = vmatprep.subr.bf16.mxu0 0
    %7427 = vmatpush2.bf16.msra.mxu0 %v6432
    %7428 = vmatprep.subr.bf16.mxu0 0
    %7429 = vmatpush2.bf16.msra.mxu0 %v6431
    %7430 = vmatprep.subr.bf16.mxu0 0
    %7431 = vmatpush2.bf16.msra.mxu0 %v6430
    %7432 = vmatprep.subr.bf16.mxu0 0
    %7433 = vmatpush2.bf16.msra.mxu0 %v6429
    %7434 = vmatprep.subr.bf16.mxu0 0
    %7435 = vmatpush2.bf16.msra.mxu0 %v6428
    %7436 = vmatprep.subr.bf16.mxu0 0
    %7437 = vmatpush2.bf16.msra.mxu0 %v6427
    %7438 = vmatprep.subr.bf16.mxu0 0
    %7439 = vmatpush2.bf16.msra.mxu0 %v6426
    %7440 = vmatprep.subr.bf16.mxu0 0
    %7441 = vmatpush2.bf16.msra.mxu0 %v6425
    %7442 = vmatprep.mubr.bf16.mxu0 %v5220
    %7443 = vmatmul.mubr.bf16.gmra.mxu0 %v5219
    %v7444 = vpop.f32.mrf.mxu0
    %v7445 = vadd.f32 %v7405, %v7444
    %v7446 = vpop.f32.mrf.mxu0
    %v7447 = vpop.f32.mrf.mxu0
    %v7448 = vpop.f32.mrf.mxu0
    %7449 = vdwg.mxu0
    %7450 = vmatprep.subr.bf16.mxu0 0
    %7451 = vmatpush1.bf16.msra.mxu0 %v6440
    %7452 = vmatprep.subr.bf16.mxu0 0
    %7453 = vmatpush1.bf16.msra.mxu0 %v6439
    %7454 = vmatprep.subr.bf16.mxu0 0
    %7455 = vmatpush1.bf16.msra.mxu0 %v6438
    %7456 = vmatprep.subr.bf16.mxu0 0
    %7457 = vmatpush1.bf16.msra.mxu0 %v6437
    %7458 = vmatprep.subr.bf16.mxu0 0
    %7459 = vmatpush1.bf16.msra.mxu0 %v6436
    %7460 = vmatprep.subr.bf16.mxu0 0
    %7461 = vmatpush1.bf16.msra.mxu0 %v6435
    %7462 = vmatprep.subr.bf16.mxu0 0
    %7463 = vmatpush1.bf16.msra.mxu0 %v6434
    %7464 = vmatprep.subr.bf16.mxu0 0
    %7465 = vmatpush1.bf16.msra.mxu0 %v6433
    %7466 = vmatprep.subr.bf16.mxu0 0
    %7467 = vmatpush2.bf16.msra.mxu0 0
    %7468 = vmatprep.subr.bf16.mxu0 0
    %7469 = vmatpush2.bf16.msra.mxu0 0
    %7470 = vmatprep.subr.bf16.mxu0 0
    %7471 = vmatpush2.bf16.msra.mxu0 0
    %7472 = vmatprep.subr.bf16.mxu0 0
    %7473 = vmatpush2.bf16.msra.mxu0 0
    %7474 = vmatprep.subr.bf16.mxu0 0
    %7475 = vmatpush2.bf16.msra.mxu0 0
    %7476 = vmatprep.subr.bf16.mxu0 0
    %7477 = vmatpush2.bf16.msra.mxu0 0
    %7478 = vmatprep.subr.bf16.mxu0 0
    %7479 = vmatpush2.bf16.msra.mxu0 0
    %7480 = vmatprep.subr.bf16.mxu0 0
    %7481 = vmatpush2.bf16.msra.mxu0 0
    %7482 = vmatprep.mubr.bf16.mxu0 0
    %7483 = vmatmul.mubr.bf16.gmra.mxu0 %v5221
    %v7484 = vpop.f32.mrf.mxu0
    %v7485 = vadd.f32 %v7445, %v7484
    %v7486 = vpop.f32.mrf.mxu0
    %v7487 = vpop.f32.mrf.mxu0
    %v7488 = vpop.f32.mrf.mxu0
    %7489 = vdwg.mxu0
    %v7492 = vunpack.c.l.s4 1966171168
    %v7493 = vunpack.c.0.s8 %v7492
    %v7494 = vlaneseq
    %v7495 = vshrl.u32 %v7494, 7
    %v7496 = vsub.s32 %v7493, %v7495
    %v7497 = vrot.slane %v7485, %v7496
    %v7499 = vunpack.c.l.s4 1966171168
    %v7500 = vunpack.c.0.s8 %v7499
    %v7501 = vlaneseq
    %v7502 = vshrl.u32 %v7501, 7
    %v7503 = vsub.s32 %v7500, %v7502
    %v7504 = vrot.slane %v7497, %v7503
    %7505 = vrot.lane.b32.xlu0 %v7504, 96
    %v7506 = vpop.permute.xlu0 %7505
    %v7508 = vadd.f32 %v7049, %v7506
    %7509 = vmatprep.subr.bf16.mxu0 0
    %7510 = vmatpush1.bf16.msra.mxu0 %v6280
    %7511 = vmatprep.subr.bf16.mxu0 0
    %7512 = vmatpush1.bf16.msra.mxu0 %v6279
    %7513 = vmatprep.subr.bf16.mxu0 0
    %7514 = vmatpush1.bf16.msra.mxu0 %v6278
    %7515 = vmatprep.subr.bf16.mxu0 0
    %7516 = vmatpush1.bf16.msra.mxu0 %v6277
    %7517 = vmatprep.subr.bf16.mxu0 0
    %7518 = vmatpush1.bf16.msra.mxu0 %v6276
    %7519 = vmatprep.subr.bf16.mxu0 0
    %7520 = vmatpush1.bf16.msra.mxu0 %v6275
    %7521 = vmatprep.subr.bf16.mxu0 0
    %7522 = vmatpush1.bf16.msra.mxu0 %v6274
    %7523 = vmatprep.subr.bf16.mxu0 0
    %7524 = vmatpush1.bf16.msra.mxu0 %v6273
    %7525 = vmatprep.subr.bf16.mxu0 0
    %7526 = vmatpush2.bf16.msra.mxu0 %v6288
    %7527 = vmatprep.subr.bf16.mxu0 0
    %7528 = vmatpush2.bf16.msra.mxu0 %v6287
    %7529 = vmatprep.subr.bf16.mxu0 0
    %7530 = vmatpush2.bf16.msra.mxu0 %v6286
    %7531 = vmatprep.subr.bf16.mxu0 0
    %7532 = vmatpush2.bf16.msra.mxu0 %v6285
    %7533 = vmatprep.subr.bf16.mxu0 0
    %7534 = vmatpush2.bf16.msra.mxu0 %v6284
    %7535 = vmatprep.subr.bf16.mxu0 0
    %7536 = vmatpush2.bf16.msra.mxu0 %v6283
    %7537 = vmatprep.subr.bf16.mxu0 0
    %7538 = vmatpush2.bf16.msra.mxu0 %v6282
    %7539 = vmatprep.subr.bf16.mxu0 0
    %7540 = vmatpush2.bf16.msra.mxu0 %v6281
    %7541 = vmatprep.mubr.bf16.mxu0 %v5223
    %7542 = vmatmul.mubr.bf16.gmra.mxu0 %v5222
    %v7543 = vpop.f32.mrf.mxu0
    %v7544 = vadd.f32 0.0, %v7543
    %v7545 = vpop.f32.mrf.mxu0
    %v7546 = vpop.f32.mrf.mxu0
    %v7547 = vpop.f32.mrf.mxu0
    %7548 = vdwg.mxu0
    %7549 = vmatprep.subr.bf16.mxu0 0
    %7550 = vmatpush1.bf16.msra.mxu0 %v6296
    %7551 = vmatprep.subr.bf16.mxu0 0
    %7552 = vmatpush1.bf16.msra.mxu0 %v6295
    %7553 = vmatprep.subr.bf16.mxu0 0
    %7554 = vmatpush1.bf16.msra.mxu0 %v6294
    %7555 = vmatprep.subr.bf16.mxu0 0
    %7556 = vmatpush1.bf16.msra.mxu0 %v6293
    %7557 = vmatprep.subr.bf16.mxu0 0
    %7558 = vmatpush1.bf16.msra.mxu0 %v6292
    %7559 = vmatprep.subr.bf16.mxu0 0
    %7560 = vmatpush1.bf16.msra.mxu0 %v6291
    %7561 = vmatprep.subr.bf16.mxu0 0
    %7562 = vmatpush1.bf16.msra.mxu0 %v6290
    %7563 = vmatprep.subr.bf16.mxu0 0
    %7564 = vmatpush1.bf16.msra.mxu0 %v6289
    %7565 = vmatprep.subr.bf16.mxu0 0
    %7566 = vmatpush2.bf16.msra.mxu0 %v6304
    %7567 = vmatprep.subr.bf16.mxu0 0
    %7568 = vmatpush2.bf16.msra.mxu0 %v6303
    %7569 = vmatprep.subr.bf16.mxu0 0
    %7570 = vmatpush2.bf16.msra.mxu0 %v6302
    %7571 = vmatprep.subr.bf16.mxu0 0
    %7572 = vmatpush2.bf16.msra.mxu0 %v6301
    %7573 = vmatprep.subr.bf16.mxu0 0
    %7574 = vmatpush2.bf16.msra.mxu0 %v6300
    %7575 = vmatprep.subr.bf16.mxu0 0
    %7576 = vmatpush2.bf16.msra.mxu0 %v6299
    %7577 = vmatprep.subr.bf16.mxu0 0
    %7578 = vmatpush2.bf16.msra.mxu0 %v6298
    %7579 = vmatprep.subr.bf16.mxu0 0
    %7580 = vmatpush2.bf16.msra.mxu0 %v6297
    %7581 = vmatprep.mubr.bf16.mxu0 %v5225
    %7582 = vmatmul.mubr.bf16.gmra.mxu0 %v5224
    %v7583 = vpop.f32.mrf.mxu0
    %v7584 = vadd.f32 %v7544, %v7583
    %v7585 = vpop.f32.mrf.mxu0
    %v7586 = vpop.f32.mrf.mxu0
    %v7587 = vpop.f32.mrf.mxu0
    %7588 = vdwg.mxu0
    %7589 = vmatprep.subr.bf16.mxu0 0
    %7590 = vmatpush1.bf16.msra.mxu0 %v6312
    %7591 = vmatprep.subr.bf16.mxu0 0
    %7592 = vmatpush1.bf16.msra.mxu0 %v6311
    %7593 = vmatprep.subr.bf16.mxu0 0
    %7594 = vmatpush1.bf16.msra.mxu0 %v6310
    %7595 = vmatprep.subr.bf16.mxu0 0
    %7596 = vmatpush1.bf16.msra.mxu0 %v6309
    %7597 = vmatprep.subr.bf16.mxu0 0
    %7598 = vmatpush1.bf16.msra.mxu0 %v6308
    %7599 = vmatprep.subr.bf16.mxu0 0
    %7600 = vmatpush1.bf16.msra.mxu0 %v6307
    %7601 = vmatprep.subr.bf16.mxu0 0
    %7602 = vmatpush1.bf16.msra.mxu0 %v6306
    %7603 = vmatprep.subr.bf16.mxu0 0
    %7604 = vmatpush1.bf16.msra.mxu0 %v6305
    %7605 = vmatprep.subr.bf16.mxu0 0
    %7606 = vmatpush2.bf16.msra.mxu0 %v6320
    %7607 = vmatprep.subr.bf16.mxu0 0
    %7608 = vmatpush2.bf16.msra.mxu0 %v6319
    %7609 = vmatprep.subr.bf16.mxu0 0
    %7610 = vmatpush2.bf16.msra.mxu0 %v6318
    %7611 = vmatprep.subr.bf16.mxu0 0
    %7612 = vmatpush2.bf16.msra.mxu0 %v6317
    %7613 = vmatprep.subr.bf16.mxu0 0
    %7614 = vmatpush2.bf16.msra.mxu0 %v6316
    %7615 = vmatprep.subr.bf16.mxu0 0
    %7616 = vmatpush2.bf16.msra.mxu0 %v6315
    %7617 = vmatprep.subr.bf16.mxu0 0
    %7618 = vmatpush2.bf16.msra.mxu0 %v6314
    %7619 = vmatprep.subr.bf16.mxu0 0
    %7620 = vmatpush2.bf16.msra.mxu0 %v6313
    %7621 = vmatprep.mubr.bf16.mxu0 %v5227
    %7622 = vmatmul.mubr.bf16.gmra.mxu0 %v5226
    %v7623 = vpop.f32.mrf.mxu0
    %v7624 = vadd.f32 %v7584, %v7623
    %v7625 = vpop.f32.mrf.mxu0
    %v7626 = vpop.f32.mrf.mxu0
    %v7627 = vpop.f32.mrf.mxu0
    %7628 = vdwg.mxu0
    %7629 = vmatprep.subr.bf16.mxu0 0
    %7630 = vmatpush1.bf16.msra.mxu0 %v6328
    %7631 = vmatprep.subr.bf16.mxu0 0
    %7632 = vmatpush1.bf16.msra.mxu0 %v6327
    %7633 = vmatprep.subr.bf16.mxu0 0
    %7634 = vmatpush1.bf16.msra.mxu0 %v6326
    %7635 = vmatprep.subr.bf16.mxu0 0
    %7636 = vmatpush1.bf16.msra.mxu0 %v6325
    %7637 = vmatprep.subr.bf16.mxu0 0
    %7638 = vmatpush1.bf16.msra.mxu0 %v6324
    %7639 = vmatprep.subr.bf16.mxu0 0
    %7640 = vmatpush1.bf16.msra.mxu0 %v6323
    %7641 = vmatprep.subr.bf16.mxu0 0
    %7642 = vmatpush1.bf16.msra.mxu0 %v6322
    %7643 = vmatprep.subr.bf16.mxu0 0
    %7644 = vmatpush1.bf16.msra.mxu0 %v6321
    %7645 = vmatprep.subr.bf16.mxu0 0
    %7646 = vmatpush2.bf16.msra.mxu0 %v6336
    %7647 = vmatprep.subr.bf16.mxu0 0
    %7648 = vmatpush2.bf16.msra.mxu0 %v6335
    %7649 = vmatprep.subr.bf16.mxu0 0
    %7650 = vmatpush2.bf16.msra.mxu0 %v6334
    %7651 = vmatprep.subr.bf16.mxu0 0
    %7652 = vmatpush2.bf16.msra.mxu0 %v6333
    %7653 = vmatprep.subr.bf16.mxu0 0
    %7654 = vmatpush2.bf16.msra.mxu0 %v6332
    %7655 = vmatprep.subr.bf16.mxu0 0
    %7656 = vmatpush2.bf16.msra.mxu0 %v6331
    %7657 = vmatprep.subr.bf16.mxu0 0
    %7658 = vmatpush2.bf16.msra.mxu0 %v6330
    %7659 = vmatprep.subr.bf16.mxu0 0
    %7660 = vmatpush2.bf16.msra.mxu0 %v6329
    %7661 = vmatprep.mubr.bf16.mxu0 %v5229
    %7662 = vmatmul.mubr.bf16.gmra.mxu0 %v5228
    %v7663 = vpop.f32.mrf.mxu0
    %v7664 = vadd.f32 %v7624, %v7663
    %v7665 = vpop.f32.mrf.mxu0
    %v7666 = vpop.f32.mrf.mxu0
    %v7667 = vpop.f32.mrf.mxu0
    %7668 = vdwg.mxu0
    %7669 = vmatprep.subr.bf16.mxu0 0
    %7670 = vmatpush1.bf16.msra.mxu0 %v6344
    %7671 = vmatprep.subr.bf16.mxu0 0
    %7672 = vmatpush1.bf16.msra.mxu0 %v6343
    %7673 = vmatprep.subr.bf16.mxu0 0
    %7674 = vmatpush1.bf16.msra.mxu0 %v6342
    %7675 = vmatprep.subr.bf16.mxu0 0
    %7676 = vmatpush1.bf16.msra.mxu0 %v6341
    %7677 = vmatprep.subr.bf16.mxu0 0
    %7678 = vmatpush1.bf16.msra.mxu0 %v6340
    %7679 = vmatprep.subr.bf16.mxu0 0
    %7680 = vmatpush1.bf16.msra.mxu0 %v6339
    %7681 = vmatprep.subr.bf16.mxu0 0
    %7682 = vmatpush1.bf16.msra.mxu0 %v6338
    %7683 = vmatprep.subr.bf16.mxu0 0
    %7684 = vmatpush1.bf16.msra.mxu0 %v6337
    %7685 = vmatprep.subr.bf16.mxu0 0
    %7686 = vmatpush2.bf16.msra.mxu0 %v6352
    %7687 = vmatprep.subr.bf16.mxu0 0
    %7688 = vmatpush2.bf16.msra.mxu0 %v6351
    %7689 = vmatprep.subr.bf16.mxu0 0
    %7690 = vmatpush2.bf16.msra.mxu0 %v6350
    %7691 = vmatprep.subr.bf16.mxu0 0
    %7692 = vmatpush2.bf16.msra.mxu0 %v6349
    %7693 = vmatprep.subr.bf16.mxu0 0
    %7694 = vmatpush2.bf16.msra.mxu0 %v6348
    %7695 = vmatprep.subr.bf16.mxu0 0
    %7696 = vmatpush2.bf16.msra.mxu0 %v6347
    %7697 = vmatprep.subr.bf16.mxu0 0
    %7698 = vmatpush2.bf16.msra.mxu0 %v6346
    %7699 = vmatprep.subr.bf16.mxu0 0
    %7700 = vmatpush2.bf16.msra.mxu0 %v6345
    %7701 = vmatprep.mubr.bf16.mxu0 %v5231
    %7702 = vmatmul.mubr.bf16.gmra.mxu0 %v5230
    %v7703 = vpop.f32.mrf.mxu0
    %v7704 = vadd.f32 %v7664, %v7703
    %v7705 = vpop.f32.mrf.mxu0
    %v7706 = vpop.f32.mrf.mxu0
    %v7707 = vpop.f32.mrf.mxu0
    %7708 = vdwg.mxu0
    %7709 = vmatprep.subr.bf16.mxu0 0
    %7710 = vmatpush1.bf16.msra.mxu0 %v6360
    %7711 = vmatprep.subr.bf16.mxu0 0
    %7712 = vmatpush1.bf16.msra.mxu0 %v6359
    %7713 = vmatprep.subr.bf16.mxu0 0
    %7714 = vmatpush1.bf16.msra.mxu0 %v6358
    %7715 = vmatprep.subr.bf16.mxu0 0
    %7716 = vmatpush1.bf16.msra.mxu0 %v6357
    %7717 = vmatprep.subr.bf16.mxu0 0
    %7718 = vmatpush1.bf16.msra.mxu0 %v6356
    %7719 = vmatprep.subr.bf16.mxu0 0
    %7720 = vmatpush1.bf16.msra.mxu0 %v6355
    %7721 = vmatprep.subr.bf16.mxu0 0
    %7722 = vmatpush1.bf16.msra.mxu0 %v6354
    %7723 = vmatprep.subr.bf16.mxu0 0
    %7724 = vmatpush1.bf16.msra.mxu0 %v6353
    %7725 = vmatprep.subr.bf16.mxu0 0
    %7726 = vmatpush2.bf16.msra.mxu0 %v6368
    %7727 = vmatprep.subr.bf16.mxu0 0
    %7728 = vmatpush2.bf16.msra.mxu0 %v6367
    %7729 = vmatprep.subr.bf16.mxu0 0
    %7730 = vmatpush2.bf16.msra.mxu0 %v6366
    %7731 = vmatprep.subr.bf16.mxu0 0
    %7732 = vmatpush2.bf16.msra.mxu0 %v6365
    %7733 = vmatprep.subr.bf16.mxu0 0
    %7734 = vmatpush2.bf16.msra.mxu0 %v6364
    %7735 = vmatprep.subr.bf16.mxu0 0
    %7736 = vmatpush2.bf16.msra.mxu0 %v6363
    %7737 = vmatprep.subr.bf16.mxu0 0
    %7738 = vmatpush2.bf16.msra.mxu0 %v6362
    %7739 = vmatprep.subr.bf16.mxu0 0
    %7740 = vmatpush2.bf16.msra.mxu0 %v6361
    %7741 = vmatprep.mubr.bf16.mxu0 %v5233
    %7742 = vmatmul.mubr.bf16.gmra.mxu0 %v5232
    %v7743 = vpop.f32.mrf.mxu0
    %v7744 = vadd.f32 %v7704, %v7743
    %v7745 = vpop.f32.mrf.mxu0
    %v7746 = vpop.f32.mrf.mxu0
    %v7747 = vpop.f32.mrf.mxu0
    %7748 = vdwg.mxu0
    %7749 = vmatprep.subr.bf16.mxu0 0
    %7750 = vmatpush1.bf16.msra.mxu0 %v6376
    %7751 = vmatprep.subr.bf16.mxu0 0
    %7752 = vmatpush1.bf16.msra.mxu0 %v6375
    %7753 = vmatprep.subr.bf16.mxu0 0
    %7754 = vmatpush1.bf16.msra.mxu0 %v6374
    %7755 = vmatprep.subr.bf16.mxu0 0
    %7756 = vmatpush1.bf16.msra.mxu0 %v6373
    %7757 = vmatprep.subr.bf16.mxu0 0
    %7758 = vmatpush1.bf16.msra.mxu0 %v6372
    %7759 = vmatprep.subr.bf16.mxu0 0
    %7760 = vmatpush1.bf16.msra.mxu0 %v6371
    %7761 = vmatprep.subr.bf16.mxu0 0
    %7762 = vmatpush1.bf16.msra.mxu0 %v6370
    %7763 = vmatprep.subr.bf16.mxu0 0
    %7764 = vmatpush1.bf16.msra.mxu0 %v6369
    %7765 = vmatprep.subr.bf16.mxu0 0
    %7766 = vmatpush2.bf16.msra.mxu0 %v6384
    %7767 = vmatprep.subr.bf16.mxu0 0
    %7768 = vmatpush2.bf16.msra.mxu0 %v6383
    %7769 = vmatprep.subr.bf16.mxu0 0
    %7770 = vmatpush2.bf16.msra.mxu0 %v6382
    %7771 = vmatprep.subr.bf16.mxu0 0
    %7772 = vmatpush2.bf16.msra.mxu0 %v6381
    %7773 = vmatprep.subr.bf16.mxu0 0
    %7774 = vmatpush2.bf16.msra.mxu0 %v6380
    %7775 = vmatprep.subr.bf16.mxu0 0
    %7776 = vmatpush2.bf16.msra.mxu0 %v6379
    %7777 = vmatprep.subr.bf16.mxu0 0
    %7778 = vmatpush2.bf16.msra.mxu0 %v6378
    %7779 = vmatprep.subr.bf16.mxu0 0
    %7780 = vmatpush2.bf16.msra.mxu0 %v6377
    %7781 = vmatprep.mubr.bf16.mxu0 %v5235
    %7782 = vmatmul.mubr.bf16.gmra.mxu0 %v5234
    %v7783 = vpop.f32.mrf.mxu0
    %v7784 = vadd.f32 %v7744, %v7783
    %v7785 = vpop.f32.mrf.mxu0
    %v7786 = vpop.f32.mrf.mxu0
    %v7787 = vpop.f32.mrf.mxu0
    %7788 = vdwg.mxu0
    %7789 = vmatprep.subr.bf16.mxu0 0
    %7790 = vmatpush1.bf16.msra.mxu0 %v6392
    %7791 = vmatprep.subr.bf16.mxu0 0
    %7792 = vmatpush1.bf16.msra.mxu0 %v6391
    %7793 = vmatprep.subr.bf16.mxu0 0
    %7794 = vmatpush1.bf16.msra.mxu0 %v6390
    %7795 = vmatprep.subr.bf16.mxu0 0
    %7796 = vmatpush1.bf16.msra.mxu0 %v6389
    %7797 = vmatprep.subr.bf16.mxu0 0
    %7798 = vmatpush1.bf16.msra.mxu0 %v6388
    %7799 = vmatprep.subr.bf16.mxu0 0
    %7800 = vmatpush1.bf16.msra.mxu0 %v6387
    %7801 = vmatprep.subr.bf16.mxu0 0
    %7802 = vmatpush1.bf16.msra.mxu0 %v6386
    %7803 = vmatprep.subr.bf16.mxu0 0
    %7804 = vmatpush1.bf16.msra.mxu0 %v6385
    %7805 = vmatprep.subr.bf16.mxu0 0
    %7806 = vmatpush2.bf16.msra.mxu0 %v6400
    %7807 = vmatprep.subr.bf16.mxu0 0
    %7808 = vmatpush2.bf16.msra.mxu0 %v6399
    %7809 = vmatprep.subr.bf16.mxu0 0
    %7810 = vmatpush2.bf16.msra.mxu0 %v6398
    %7811 = vmatprep.subr.bf16.mxu0 0
    %7812 = vmatpush2.bf16.msra.mxu0 %v6397
    %7813 = vmatprep.subr.bf16.mxu0 0
    %7814 = vmatpush2.bf16.msra.mxu0 %v6396
    %7815 = vmatprep.subr.bf16.mxu0 0
    %7816 = vmatpush2.bf16.msra.mxu0 %v6395
    %7817 = vmatprep.subr.bf16.mxu0 0
    %7818 = vmatpush2.bf16.msra.mxu0 %v6394
    %7819 = vmatprep.subr.bf16.mxu0 0
    %7820 = vmatpush2.bf16.msra.mxu0 %v6393
    %7821 = vmatprep.mubr.bf16.mxu0 %v5237
    %7822 = vmatmul.mubr.bf16.gmra.mxu0 %v5236
    %v7823 = vpop.f32.mrf.mxu0
    %v7824 = vadd.f32 %v7784, %v7823
    %v7825 = vpop.f32.mrf.mxu0
    %v7826 = vpop.f32.mrf.mxu0
    %v7827 = vpop.f32.mrf.mxu0
    %7828 = vdwg.mxu0
    %7829 = vmatprep.subr.bf16.mxu0 0
    %7830 = vmatpush1.bf16.msra.mxu0 %v6408
    %7831 = vmatprep.subr.bf16.mxu0 0
    %7832 = vmatpush1.bf16.msra.mxu0 %v6407
    %7833 = vmatprep.subr.bf16.mxu0 0
    %7834 = vmatpush1.bf16.msra.mxu0 %v6406
    %7835 = vmatprep.subr.bf16.mxu0 0
    %7836 = vmatpush1.bf16.msra.mxu0 %v6405
    %7837 = vmatprep.subr.bf16.mxu0 0
    %7838 = vmatpush1.bf16.msra.mxu0 %v6404
    %7839 = vmatprep.subr.bf16.mxu0 0
    %7840 = vmatpush1.bf16.msra.mxu0 %v6403
    %7841 = vmatprep.subr.bf16.mxu0 0
    %7842 = vmatpush1.bf16.msra.mxu0 %v6402
    %7843 = vmatprep.subr.bf16.mxu0 0
    %7844 = vmatpush1.bf16.msra.mxu0 %v6401
    %7845 = vmatprep.subr.bf16.mxu0 0
    %7846 = vmatpush2.bf16.msra.mxu0 %v6416
    %7847 = vmatprep.subr.bf16.mxu0 0
    %7848 = vmatpush2.bf16.msra.mxu0 %v6415
    %7849 = vmatprep.subr.bf16.mxu0 0
    %7850 = vmatpush2.bf16.msra.mxu0 %v6414
    %7851 = vmatprep.subr.bf16.mxu0 0
    %7852 = vmatpush2.bf16.msra.mxu0 %v6413
    %7853 = vmatprep.subr.bf16.mxu0 0
    %7854 = vmatpush2.bf16.msra.mxu0 %v6412
    %7855 = vmatprep.subr.bf16.mxu0 0
    %7856 = vmatpush2.bf16.msra.mxu0 %v6411
    %7857 = vmatprep.subr.bf16.mxu0 0
    %7858 = vmatpush2.bf16.msra.mxu0 %v6410
    %7859 = vmatprep.subr.bf16.mxu0 0
    %7860 = vmatpush2.bf16.msra.mxu0 %v6409
    %7861 = vmatprep.mubr.bf16.mxu0 %v5239
    %7862 = vmatmul.mubr.bf16.gmra.mxu0 %v5238
    %v7863 = vpop.f32.mrf.mxu0
    %v7864 = vadd.f32 %v7824, %v7863
    %v7865 = vpop.f32.mrf.mxu0
    %v7866 = vpop.f32.mrf.mxu0
    %v7867 = vpop.f32.mrf.mxu0
    %7868 = vdwg.mxu0
    %7869 = vmatprep.subr.bf16.mxu0 0
    %7870 = vmatpush1.bf16.msra.mxu0 %v6424
    %7871 = vmatprep.subr.bf16.mxu0 0
    %7872 = vmatpush1.bf16.msra.mxu0 %v6423
    %7873 = vmatprep.subr.bf16.mxu0 0
    %7874 = vmatpush1.bf16.msra.mxu0 %v6422
    %7875 = vmatprep.subr.bf16.mxu0 0
    %7876 = vmatpush1.bf16.msra.mxu0 %v6421
    %7877 = vmatprep.subr.bf16.mxu0 0
    %7878 = vmatpush1.bf16.msra.mxu0 %v6420
    %7879 = vmatprep.subr.bf16.mxu0 0
    %7880 = vmatpush1.bf16.msra.mxu0 %v6419
    %7881 = vmatprep.subr.bf16.mxu0 0
    %7882 = vmatpush1.bf16.msra.mxu0 %v6418
    %7883 = vmatprep.subr.bf16.mxu0 0
    %7884 = vmatpush1.bf16.msra.mxu0 %v6417
    %7885 = vmatprep.subr.bf16.mxu0 0
    %7886 = vmatpush2.bf16.msra.mxu0 %v6432
    %7887 = vmatprep.subr.bf16.mxu0 0
    %7888 = vmatpush2.bf16.msra.mxu0 %v6431
    %7889 = vmatprep.subr.bf16.mxu0 0
    %7890 = vmatpush2.bf16.msra.mxu0 %v6430
    %7891 = vmatprep.subr.bf16.mxu0 0
    %7892 = vmatpush2.bf16.msra.mxu0 %v6429
    %7893 = vmatprep.subr.bf16.mxu0 0
    %7894 = vmatpush2.bf16.msra.mxu0 %v6428
    %7895 = vmatprep.subr.bf16.mxu0 0
    %7896 = vmatpush2.bf16.msra.mxu0 %v6427
    %7897 = vmatprep.subr.bf16.mxu0 0
    %7898 = vmatpush2.bf16.msra.mxu0 %v6426
    %7899 = vmatprep.subr.bf16.mxu0 0
    %7900 = vmatpush2.bf16.msra.mxu0 %v6425
    %7901 = vmatprep.mubr.bf16.mxu0 %v5241
    %7902 = vmatmul.mubr.bf16.gmra.mxu0 %v5240
    %v7903 = vpop.f32.mrf.mxu0
    %v7904 = vadd.f32 %v7864, %v7903
    %v7905 = vpop.f32.mrf.mxu0
    %v7906 = vpop.f32.mrf.mxu0
    %v7907 = vpop.f32.mrf.mxu0
    %7908 = vdwg.mxu0
    %7909 = vmatprep.subr.bf16.mxu0 0
    %7910 = vmatpush1.bf16.msra.mxu0 %v6440
    %7911 = vmatprep.subr.bf16.mxu0 0
    %7912 = vmatpush1.bf16.msra.mxu0 %v6439
    %7913 = vmatprep.subr.bf16.mxu0 0
    %7914 = vmatpush1.bf16.msra.mxu0 %v6438
    %7915 = vmatprep.subr.bf16.mxu0 0
    %7916 = vmatpush1.bf16.msra.mxu0 %v6437
    %7917 = vmatprep.subr.bf16.mxu0 0
    %7918 = vmatpush1.bf16.msra.mxu0 %v6436
    %7919 = vmatprep.subr.bf16.mxu0 0
    %7920 = vmatpush1.bf16.msra.mxu0 %v6435
    %7921 = vmatprep.subr.bf16.mxu0 0
    %7922 = vmatpush1.bf16.msra.mxu0 %v6434
    %7923 = vmatprep.subr.bf16.mxu0 0
    %7924 = vmatpush1.bf16.msra.mxu0 %v6433
    %7925 = vmatprep.subr.bf16.mxu0 0
    %7926 = vmatpush2.bf16.msra.mxu0 0
    %7927 = vmatprep.subr.bf16.mxu0 0
    %7928 = vmatpush2.bf16.msra.mxu0 0
    %7929 = vmatprep.subr.bf16.mxu0 0
    %7930 = vmatpush2.bf16.msra.mxu0 0
    %7931 = vmatprep.subr.bf16.mxu0 0
    %7932 = vmatpush2.bf16.msra.mxu0 0
    %7933 = vmatprep.subr.bf16.mxu0 0
    %7934 = vmatpush2.bf16.msra.mxu0 0
    %7935 = vmatprep.subr.bf16.mxu0 0
    %7936 = vmatpush2.bf16.msra.mxu0 0
    %7937 = vmatprep.subr.bf16.mxu0 0
    %7938 = vmatpush2.bf16.msra.mxu0 0
    %7939 = vmatprep.subr.bf16.mxu0 0
    %7940 = vmatpush2.bf16.msra.mxu0 0
    %7941 = vmatprep.mubr.bf16.mxu0 0
    %7942 = vmatmul.mubr.bf16.gmra.mxu0 %v5242
    %v7943 = vpop.f32.mrf.mxu0
    %v7944 = vadd.f32 %v7904, %v7943
    %v7945 = vpop.f32.mrf.mxu0
    %v7946 = vpop.f32.mrf.mxu0
    %v7947 = vpop.f32.mrf.mxu0
    %7948 = vdwg.mxu0
    %v7951 = vunpack.c.l.s4 1966171168
    %v7952 = vunpack.c.0.s8 %v7951
    %v7953 = vlaneseq
    %v7954 = vshrl.u32 %v7953, 7
    %v7955 = vsub.s32 %v7952, %v7954
    %v7956 = vrot.slane %v7944, %v7955
    %v7958 = vunpack.c.l.s4 1966171168
    %v7959 = vunpack.c.0.s8 %v7958
    %v7960 = vlaneseq
    %v7961 = vshrl.u32 %v7960, 7
    %v7962 = vsub.s32 %v7959, %v7961
    %v7963 = vrot.slane %v7956, %v7962
    %7964 = vrot.lane.b32.xlu0 %v7963, 64
    %v7965 = vpop.permute.xlu0 %7964
    %v7967 = vadd.f32 %v7508, %v7965
    %7968 = vmatprep.subr.bf16.mxu0 0
    %7969 = vmatpush1.bf16.msra.mxu0 %v6280
    %7970 = vmatprep.subr.bf16.mxu0 0
    %7971 = vmatpush1.bf16.msra.mxu0 %v6279
    %7972 = vmatprep.subr.bf16.mxu0 0
    %7973 = vmatpush1.bf16.msra.mxu0 %v6278
    %7974 = vmatprep.subr.bf16.mxu0 0
    %7975 = vmatpush1.bf16.msra.mxu0 %v6277
    %7976 = vmatprep.subr.bf16.mxu0 0
    %7977 = vmatpush1.bf16.msra.mxu0 %v6276
    %7978 = vmatprep.subr.bf16.mxu0 0
    %7979 = vmatpush1.bf16.msra.mxu0 %v6275
    %7980 = vmatprep.subr.bf16.mxu0 0
    %7981 = vmatpush1.bf16.msra.mxu0 %v6274
    %7982 = vmatprep.subr.bf16.mxu0 0
    %7983 = vmatpush1.bf16.msra.mxu0 %v6273
    %7984 = vmatprep.subr.bf16.mxu0 0
    %7985 = vmatpush2.bf16.msra.mxu0 %v6288
    %7986 = vmatprep.subr.bf16.mxu0 0
    %7987 = vmatpush2.bf16.msra.mxu0 %v6287
    %7988 = vmatprep.subr.bf16.mxu0 0
    %7989 = vmatpush2.bf16.msra.mxu0 %v6286
    %7990 = vmatprep.subr.bf16.mxu0 0
    %7991 = vmatpush2.bf16.msra.mxu0 %v6285
    %7992 = vmatprep.subr.bf16.mxu0 0
    %7993 = vmatpush2.bf16.msra.mxu0 %v6284
    %7994 = vmatprep.subr.bf16.mxu0 0
    %7995 = vmatpush2.bf16.msra.mxu0 %v6283
    %7996 = vmatprep.subr.bf16.mxu0 0
    %7997 = vmatpush2.bf16.msra.mxu0 %v6282
    %7998 = vmatprep.subr.bf16.mxu0 0
    %7999 = vmatpush2.bf16.msra.mxu0 %v6281
    %8000 = vmatprep.mubr.bf16.mxu0 %v5244
    %8001 = vmatmul.mubr.bf16.gmra.mxu0 %v5243
    %v8002 = vpop.f32.mrf.mxu0
    %v8003 = vadd.f32 0.0, %v8002
    %v8004 = vpop.f32.mrf.mxu0
    %v8005 = vpop.f32.mrf.mxu0
    %v8006 = vpop.f32.mrf.mxu0
    %8007 = vdwg.mxu0
    %8008 = vmatprep.subr.bf16.mxu0 0
    %8009 = vmatpush1.bf16.msra.mxu0 %v6296
    %8010 = vmatprep.subr.bf16.mxu0 0
    %8011 = vmatpush1.bf16.msra.mxu0 %v6295
    %8012 = vmatprep.subr.bf16.mxu0 0
    %8013 = vmatpush1.bf16.msra.mxu0 %v6294
    %8014 = vmatprep.subr.bf16.mxu0 0
    %8015 = vmatpush1.bf16.msra.mxu0 %v6293
    %8016 = vmatprep.subr.bf16.mxu0 0
    %8017 = vmatpush1.bf16.msra.mxu0 %v6292
    %8018 = vmatprep.subr.bf16.mxu0 0
    %8019 = vmatpush1.bf16.msra.mxu0 %v6291
    %8020 = vmatprep.subr.bf16.mxu0 0
    %8021 = vmatpush1.bf16.msra.mxu0 %v6290
    %8022 = vmatprep.subr.bf16.mxu0 0
    %8023 = vmatpush1.bf16.msra.mxu0 %v6289
    %8024 = vmatprep.subr.bf16.mxu0 0
    %8025 = vmatpush2.bf16.msra.mxu0 %v6304
    %8026 = vmatprep.subr.bf16.mxu0 0
    %8027 = vmatpush2.bf16.msra.mxu0 %v6303
    %8028 = vmatprep.subr.bf16.mxu0 0
    %8029 = vmatpush2.bf16.msra.mxu0 %v6302
    %8030 = vmatprep.subr.bf16.mxu0 0
    %8031 = vmatpush2.bf16.msra.mxu0 %v6301
    %8032 = vmatprep.subr.bf16.mxu0 0
    %8033 = vmatpush2.bf16.msra.mxu0 %v6300
    %8034 = vmatprep.subr.bf16.mxu0 0
    %8035 = vmatpush2.bf16.msra.mxu0 %v6299
    %8036 = vmatprep.subr.bf16.mxu0 0
    %8037 = vmatpush2.bf16.msra.mxu0 %v6298
    %8038 = vmatprep.subr.bf16.mxu0 0
    %8039 = vmatpush2.bf16.msra.mxu0 %v6297
    %8040 = vmatprep.mubr.bf16.mxu0 %v5246
    %8041 = vmatmul.mubr.bf16.gmra.mxu0 %v5245
    %v8042 = vpop.f32.mrf.mxu0
    %v8043 = vadd.f32 %v8003, %v8042
    %v8044 = vpop.f32.mrf.mxu0
    %v8045 = vpop.f32.mrf.mxu0
    %v8046 = vpop.f32.mrf.mxu0
    %8047 = vdwg.mxu0
    %8048 = vmatprep.subr.bf16.mxu0 0
    %8049 = vmatpush1.bf16.msra.mxu0 %v6312
    %8050 = vmatprep.subr.bf16.mxu0 0
    %8051 = vmatpush1.bf16.msra.mxu0 %v6311
    %8052 = vmatprep.subr.bf16.mxu0 0
    %8053 = vmatpush1.bf16.msra.mxu0 %v6310
    %8054 = vmatprep.subr.bf16.mxu0 0
    %8055 = vmatpush1.bf16.msra.mxu0 %v6309
    %8056 = vmatprep.subr.bf16.mxu0 0
    %8057 = vmatpush1.bf16.msra.mxu0 %v6308
    %8058 = vmatprep.subr.bf16.mxu0 0
    %8059 = vmatpush1.bf16.msra.mxu0 %v6307
    %8060 = vmatprep.subr.bf16.mxu0 0
    %8061 = vmatpush1.bf16.msra.mxu0 %v6306
    %8062 = vmatprep.subr.bf16.mxu0 0
    %8063 = vmatpush1.bf16.msra.mxu0 %v6305
    %8064 = vmatprep.subr.bf16.mxu0 0
    %8065 = vmatpush2.bf16.msra.mxu0 %v6320
    %8066 = vmatprep.subr.bf16.mxu0 0
    %8067 = vmatpush2.bf16.msra.mxu0 %v6319
    %8068 = vmatprep.subr.bf16.mxu0 0
    %8069 = vmatpush2.bf16.msra.mxu0 %v6318
    %8070 = vmatprep.subr.bf16.mxu0 0
    %8071 = vmatpush2.bf16.msra.mxu0 %v6317
    %8072 = vmatprep.subr.bf16.mxu0 0
    %8073 = vmatpush2.bf16.msra.mxu0 %v6316
    %8074 = vmatprep.subr.bf16.mxu0 0
    %8075 = vmatpush2.bf16.msra.mxu0 %v6315
    %8076 = vmatprep.subr.bf16.mxu0 0
    %8077 = vmatpush2.bf16.msra.mxu0 %v6314
    %8078 = vmatprep.subr.bf16.mxu0 0
    %8079 = vmatpush2.bf16.msra.mxu0 %v6313
    %8080 = vmatprep.mubr.bf16.mxu0 %v5248
    %8081 = vmatmul.mubr.bf16.gmra.mxu0 %v5247
    %v8082 = vpop.f32.mrf.mxu0
    %v8083 = vadd.f32 %v8043, %v8082
    %v8084 = vpop.f32.mrf.mxu0
    %v8085 = vpop.f32.mrf.mxu0
    %v8086 = vpop.f32.mrf.mxu0
    %8087 = vdwg.mxu0
    %8088 = vmatprep.subr.bf16.mxu0 0
    %8089 = vmatpush1.bf16.msra.mxu0 %v6328
    %8090 = vmatprep.subr.bf16.mxu0 0
    %8091 = vmatpush1.bf16.msra.mxu0 %v6327
    %8092 = vmatprep.subr.bf16.mxu0 0
    %8093 = vmatpush1.bf16.msra.mxu0 %v6326
    %8094 = vmatprep.subr.bf16.mxu0 0
    %8095 = vmatpush1.bf16.msra.mxu0 %v6325
    %8096 = vmatprep.subr.bf16.mxu0 0
    %8097 = vmatpush1.bf16.msra.mxu0 %v6324
    %8098 = vmatprep.subr.bf16.mxu0 0
    %8099 = vmatpush1.bf16.msra.mxu0 %v6323
    %8100 = vmatprep.subr.bf16.mxu0 0
    %8101 = vmatpush1.bf16.msra.mxu0 %v6322
    %8102 = vmatprep.subr.bf16.mxu0 0
    %8103 = vmatpush1.bf16.msra.mxu0 %v6321
    %8104 = vmatprep.subr.bf16.mxu0 0
    %8105 = vmatpush2.bf16.msra.mxu0 %v6336
    %8106 = vmatprep.subr.bf16.mxu0 0
    %8107 = vmatpush2.bf16.msra.mxu0 %v6335
    %8108 = vmatprep.subr.bf16.mxu0 0
    %8109 = vmatpush2.bf16.msra.mxu0 %v6334
    %8110 = vmatprep.subr.bf16.mxu0 0
    %8111 = vmatpush2.bf16.msra.mxu0 %v6333
    %8112 = vmatprep.subr.bf16.mxu0 0
    %8113 = vmatpush2.bf16.msra.mxu0 %v6332
    %8114 = vmatprep.subr.bf16.mxu0 0
    %8115 = vmatpush2.bf16.msra.mxu0 %v6331
    %8116 = vmatprep.subr.bf16.mxu0 0
    %8117 = vmatpush2.bf16.msra.mxu0 %v6330
    %8118 = vmatprep.subr.bf16.mxu0 0
    %8119 = vmatpush2.bf16.msra.mxu0 %v6329
    %8120 = vmatprep.mubr.bf16.mxu0 %v5250
    %8121 = vmatmul.mubr.bf16.gmra.mxu0 %v5249
    %v8122 = vpop.f32.mrf.mxu0
    %v8123 = vadd.f32 %v8083, %v8122
    %v8124 = vpop.f32.mrf.mxu0
    %v8125 = vpop.f32.mrf.mxu0
    %v8126 = vpop.f32.mrf.mxu0
    %8127 = vdwg.mxu0
    %8128 = vmatprep.subr.bf16.mxu0 0
    %8129 = vmatpush1.bf16.msra.mxu0 %v6344
    %8130 = vmatprep.subr.bf16.mxu0 0
    %8131 = vmatpush1.bf16.msra.mxu0 %v6343
    %8132 = vmatprep.subr.bf16.mxu0 0
    %8133 = vmatpush1.bf16.msra.mxu0 %v6342
    %8134 = vmatprep.subr.bf16.mxu0 0
    %8135 = vmatpush1.bf16.msra.mxu0 %v6341
    %8136 = vmatprep.subr.bf16.mxu0 0
    %8137 = vmatpush1.bf16.msra.mxu0 %v6340
    %8138 = vmatprep.subr.bf16.mxu0 0
    %8139 = vmatpush1.bf16.msra.mxu0 %v6339
    %8140 = vmatprep.subr.bf16.mxu0 0
    %8141 = vmatpush1.bf16.msra.mxu0 %v6338
    %8142 = vmatprep.subr.bf16.mxu0 0
    %8143 = vmatpush1.bf16.msra.mxu0 %v6337
    %8144 = vmatprep.subr.bf16.mxu0 0
    %8145 = vmatpush2.bf16.msra.mxu0 %v6352
    %8146 = vmatprep.subr.bf16.mxu0 0
    %8147 = vmatpush2.bf16.msra.mxu0 %v6351
    %8148 = vmatprep.subr.bf16.mxu0 0
    %8149 = vmatpush2.bf16.msra.mxu0 %v6350
    %8150 = vmatprep.subr.bf16.mxu0 0
    %8151 = vmatpush2.bf16.msra.mxu0 %v6349
    %8152 = vmatprep.subr.bf16.mxu0 0
    %8153 = vmatpush2.bf16.msra.mxu0 %v6348
    %8154 = vmatprep.subr.bf16.mxu0 0
    %8155 = vmatpush2.bf16.msra.mxu0 %v6347
    %8156 = vmatprep.subr.bf16.mxu0 0
    %8157 = vmatpush2.bf16.msra.mxu0 %v6346
    %8158 = vmatprep.subr.bf16.mxu0 0
    %8159 = vmatpush2.bf16.msra.mxu0 %v6345
    %8160 = vmatprep.mubr.bf16.mxu0 %v5252
    %8161 = vmatmul.mubr.bf16.gmra.mxu0 %v5251
    %v8162 = vpop.f32.mrf.mxu0
    %v8163 = vadd.f32 %v8123, %v8162
    %v8164 = vpop.f32.mrf.mxu0
    %v8165 = vpop.f32.mrf.mxu0
    %v8166 = vpop.f32.mrf.mxu0
    %8167 = vdwg.mxu0
    %8168 = vmatprep.subr.bf16.mxu0 0
    %8169 = vmatpush1.bf16.msra.mxu0 %v6360
    %8170 = vmatprep.subr.bf16.mxu0 0
    %8171 = vmatpush1.bf16.msra.mxu0 %v6359
    %8172 = vmatprep.subr.bf16.mxu0 0
    %8173 = vmatpush1.bf16.msra.mxu0 %v6358
    %8174 = vmatprep.subr.bf16.mxu0 0
    %8175 = vmatpush1.bf16.msra.mxu0 %v6357
    %8176 = vmatprep.subr.bf16.mxu0 0
    %8177 = vmatpush1.bf16.msra.mxu0 %v6356
    %8178 = vmatprep.subr.bf16.mxu0 0
    %8179 = vmatpush1.bf16.msra.mxu0 %v6355
    %8180 = vmatprep.subr.bf16.mxu0 0
    %8181 = vmatpush1.bf16.msra.mxu0 %v6354
    %8182 = vmatprep.subr.bf16.mxu0 0
    %8183 = vmatpush1.bf16.msra.mxu0 %v6353
    %8184 = vmatprep.subr.bf16.mxu0 0
    %8185 = vmatpush2.bf16.msra.mxu0 %v6368
    %8186 = vmatprep.subr.bf16.mxu0 0
    %8187 = vmatpush2.bf16.msra.mxu0 %v6367
    %8188 = vmatprep.subr.bf16.mxu0 0
    %8189 = vmatpush2.bf16.msra.mxu0 %v6366
    %8190 = vmatprep.subr.bf16.mxu0 0
    %8191 = vmatpush2.bf16.msra.mxu0 %v6365
    %8192 = vmatprep.subr.bf16.mxu0 0
    %8193 = vmatpush2.bf16.msra.mxu0 %v6364
    %8194 = vmatprep.subr.bf16.mxu0 0
    %8195 = vmatpush2.bf16.msra.mxu0 %v6363
    %8196 = vmatprep.subr.bf16.mxu0 0
    %8197 = vmatpush2.bf16.msra.mxu0 %v6362
    %8198 = vmatprep.subr.bf16.mxu0 0
    %8199 = vmatpush2.bf16.msra.mxu0 %v6361
    %8200 = vmatprep.mubr.bf16.mxu0 %v5254
    %8201 = vmatmul.mubr.bf16.gmra.mxu0 %v5253
    %v8202 = vpop.f32.mrf.mxu0
    %v8203 = vadd.f32 %v8163, %v8202
    %v8204 = vpop.f32.mrf.mxu0
    %v8205 = vpop.f32.mrf.mxu0
    %v8206 = vpop.f32.mrf.mxu0
    %8207 = vdwg.mxu0
    %8208 = vmatprep.subr.bf16.mxu0 0
    %8209 = vmatpush1.bf16.msra.mxu0 %v6376
    %8210 = vmatprep.subr.bf16.mxu0 0
    %8211 = vmatpush1.bf16.msra.mxu0 %v6375
    %8212 = vmatprep.subr.bf16.mxu0 0
    %8213 = vmatpush1.bf16.msra.mxu0 %v6374
    %8214 = vmatprep.subr.bf16.mxu0 0
    %8215 = vmatpush1.bf16.msra.mxu0 %v6373
    %8216 = vmatprep.subr.bf16.mxu0 0
    %8217 = vmatpush1.bf16.msra.mxu0 %v6372
    %8218 = vmatprep.subr.bf16.mxu0 0
    %8219 = vmatpush1.bf16.msra.mxu0 %v6371
    %8220 = vmatprep.subr.bf16.mxu0 0
    %8221 = vmatpush1.bf16.msra.mxu0 %v6370
    %8222 = vmatprep.subr.bf16.mxu0 0
    %8223 = vmatpush1.bf16.msra.mxu0 %v6369
    %8224 = vmatprep.subr.bf16.mxu0 0
    %8225 = vmatpush2.bf16.msra.mxu0 %v6384
    %8226 = vmatprep.subr.bf16.mxu0 0
    %8227 = vmatpush2.bf16.msra.mxu0 %v6383
    %8228 = vmatprep.subr.bf16.mxu0 0
    %8229 = vmatpush2.bf16.msra.mxu0 %v6382
    %8230 = vmatprep.subr.bf16.mxu0 0
    %8231 = vmatpush2.bf16.msra.mxu0 %v6381
    %8232 = vmatprep.subr.bf16.mxu0 0
    %8233 = vmatpush2.bf16.msra.mxu0 %v6380
    %8234 = vmatprep.subr.bf16.mxu0 0
    %8235 = vmatpush2.bf16.msra.mxu0 %v6379
    %8236 = vmatprep.subr.bf16.mxu0 0
    %8237 = vmatpush2.bf16.msra.mxu0 %v6378
    %8238 = vmatprep.subr.bf16.mxu0 0
    %8239 = vmatpush2.bf16.msra.mxu0 %v6377
    %8240 = vmatprep.mubr.bf16.mxu0 %v5256
    %8241 = vmatmul.mubr.bf16.gmra.mxu0 %v5255
    %v8242 = vpop.f32.mrf.mxu0
    %v8243 = vadd.f32 %v8203, %v8242
    %v8244 = vpop.f32.mrf.mxu0
    %v8245 = vpop.f32.mrf.mxu0
    %v8246 = vpop.f32.mrf.mxu0
    %8247 = vdwg.mxu0
    %8248 = vmatprep.subr.bf16.mxu0 0
    %8249 = vmatpush1.bf16.msra.mxu0 %v6392
    %8250 = vmatprep.subr.bf16.mxu0 0
    %8251 = vmatpush1.bf16.msra.mxu0 %v6391
    %8252 = vmatprep.subr.bf16.mxu0 0
    %8253 = vmatpush1.bf16.msra.mxu0 %v6390
    %8254 = vmatprep.subr.bf16.mxu0 0
    %8255 = vmatpush1.bf16.msra.mxu0 %v6389
    %8256 = vmatprep.subr.bf16.mxu0 0
    %8257 = vmatpush1.bf16.msra.mxu0 %v6388
    %8258 = vmatprep.subr.bf16.mxu0 0
    %8259 = vmatpush1.bf16.msra.mxu0 %v6387
    %8260 = vmatprep.subr.bf16.mxu0 0
    %8261 = vmatpush1.bf16.msra.mxu0 %v6386
    %8262 = vmatprep.subr.bf16.mxu0 0
    %8263 = vmatpush1.bf16.msra.mxu0 %v6385
    %8264 = vmatprep.subr.bf16.mxu0 0
    %8265 = vmatpush2.bf16.msra.mxu0 %v6400
    %8266 = vmatprep.subr.bf16.mxu0 0
    %8267 = vmatpush2.bf16.msra.mxu0 %v6399
    %8268 = vmatprep.subr.bf16.mxu0 0
    %8269 = vmatpush2.bf16.msra.mxu0 %v6398
    %8270 = vmatprep.subr.bf16.mxu0 0
    %8271 = vmatpush2.bf16.msra.mxu0 %v6397
    %8272 = vmatprep.subr.bf16.mxu0 0
    %8273 = vmatpush2.bf16.msra.mxu0 %v6396
    %8274 = vmatprep.subr.bf16.mxu0 0
    %8275 = vmatpush2.bf16.msra.mxu0 %v6395
    %8276 = vmatprep.subr.bf16.mxu0 0
    %8277 = vmatpush2.bf16.msra.mxu0 %v6394
    %8278 = vmatprep.subr.bf16.mxu0 0
    %8279 = vmatpush2.bf16.msra.mxu0 %v6393
    %8280 = vmatprep.mubr.bf16.mxu0 %v5258
    %8281 = vmatmul.mubr.bf16.gmra.mxu0 %v5257
    %v8282 = vpop.f32.mrf.mxu0
    %v8283 = vadd.f32 %v8243, %v8282
    %v8284 = vpop.f32.mrf.mxu0
    %v8285 = vpop.f32.mrf.mxu0
    %v8286 = vpop.f32.mrf.mxu0
    %8287 = vdwg.mxu0
    %8288 = vmatprep.subr.bf16.mxu0 0
    %8289 = vmatpush1.bf16.msra.mxu0 %v6408
    %8290 = vmatprep.subr.bf16.mxu0 0
    %8291 = vmatpush1.bf16.msra.mxu0 %v6407
    %8292 = vmatprep.subr.bf16.mxu0 0
    %8293 = vmatpush1.bf16.msra.mxu0 %v6406
    %8294 = vmatprep.subr.bf16.mxu0 0
    %8295 = vmatpush1.bf16.msra.mxu0 %v6405
    %8296 = vmatprep.subr.bf16.mxu0 0
    %8297 = vmatpush1.bf16.msra.mxu0 %v6404
    %8298 = vmatprep.subr.bf16.mxu0 0
    %8299 = vmatpush1.bf16.msra.mxu0 %v6403
    %8300 = vmatprep.subr.bf16.mxu0 0
    %8301 = vmatpush1.bf16.msra.mxu0 %v6402
    %8302 = vmatprep.subr.bf16.mxu0 0
    %8303 = vmatpush1.bf16.msra.mxu0 %v6401
    %8304 = vmatprep.subr.bf16.mxu0 0
    %8305 = vmatpush2.bf16.msra.mxu0 %v6416
    %8306 = vmatprep.subr.bf16.mxu0 0
    %8307 = vmatpush2.bf16.msra.mxu0 %v6415
    %8308 = vmatprep.subr.bf16.mxu0 0
    %8309 = vmatpush2.bf16.msra.mxu0 %v6414
    %8310 = vmatprep.subr.bf16.mxu0 0
    %8311 = vmatpush2.bf16.msra.mxu0 %v6413
    %8312 = vmatprep.subr.bf16.mxu0 0
    %8313 = vmatpush2.bf16.msra.mxu0 %v6412
    %8314 = vmatprep.subr.bf16.mxu0 0
    %8315 = vmatpush2.bf16.msra.mxu0 %v6411
    %8316 = vmatprep.subr.bf16.mxu0 0
    %8317 = vmatpush2.bf16.msra.mxu0 %v6410
    %8318 = vmatprep.subr.bf16.mxu0 0
    %8319 = vmatpush2.bf16.msra.mxu0 %v6409
    %8320 = vmatprep.mubr.bf16.mxu0 %v5260
    %8321 = vmatmul.mubr.bf16.gmra.mxu0 %v5259
    %v8322 = vpop.f32.mrf.mxu0
    %v8323 = vadd.f32 %v8283, %v8322
    %v8324 = vpop.f32.mrf.mxu0
    %v8325 = vpop.f32.mrf.mxu0
    %v8326 = vpop.f32.mrf.mxu0
    %8327 = vdwg.mxu0
    %8328 = vmatprep.subr.bf16.mxu0 0
    %8329 = vmatpush1.bf16.msra.mxu0 %v6424
    %8330 = vmatprep.subr.bf16.mxu0 0
    %8331 = vmatpush1.bf16.msra.mxu0 %v6423
    %8332 = vmatprep.subr.bf16.mxu0 0
    %8333 = vmatpush1.bf16.msra.mxu0 %v6422
    %8334 = vmatprep.subr.bf16.mxu0 0
    %8335 = vmatpush1.bf16.msra.mxu0 %v6421
    %8336 = vmatprep.subr.bf16.mxu0 0
    %8337 = vmatpush1.bf16.msra.mxu0 %v6420
    %8338 = vmatprep.subr.bf16.mxu0 0
    %8339 = vmatpush1.bf16.msra.mxu0 %v6419
    %8340 = vmatprep.subr.bf16.mxu0 0
    %8341 = vmatpush1.bf16.msra.mxu0 %v6418
    %8342 = vmatprep.subr.bf16.mxu0 0
    %8343 = vmatpush1.bf16.msra.mxu0 %v6417
    %8344 = vmatprep.subr.bf16.mxu0 0
    %8345 = vmatpush2.bf16.msra.mxu0 %v6432
    %8346 = vmatprep.subr.bf16.mxu0 0
    %8347 = vmatpush2.bf16.msra.mxu0 %v6431
    %8348 = vmatprep.subr.bf16.mxu0 0
    %8349 = vmatpush2.bf16.msra.mxu0 %v6430
    %8350 = vmatprep.subr.bf16.mxu0 0
    %8351 = vmatpush2.bf16.msra.mxu0 %v6429
    %8352 = vmatprep.subr.bf16.mxu0 0
    %8353 = vmatpush2.bf16.msra.mxu0 %v6428
    %8354 = vmatprep.subr.bf16.mxu0 0
    %8355 = vmatpush2.bf16.msra.mxu0 %v6427
    %8356 = vmatprep.subr.bf16.mxu0 0
    %8357 = vmatpush2.bf16.msra.mxu0 %v6426
    %8358 = vmatprep.subr.bf16.mxu0 0
    %8359 = vmatpush2.bf16.msra.mxu0 %v6425
    %8360 = vmatprep.mubr.bf16.mxu0 %v5262
    %8361 = vmatmul.mubr.bf16.gmra.mxu0 %v5261
    %v8362 = vpop.f32.mrf.mxu0
    %v8363 = vadd.f32 %v8323, %v8362
    %v8364 = vpop.f32.mrf.mxu0
    %v8365 = vpop.f32.mrf.mxu0
    %v8366 = vpop.f32.mrf.mxu0
    %8367 = vdwg.mxu0
    %8368 = vmatprep.subr.bf16.mxu0 0
    %8369 = vmatpush1.bf16.msra.mxu0 %v6440
    %8370 = vmatprep.subr.bf16.mxu0 0
    %8371 = vmatpush1.bf16.msra.mxu0 %v6439
    %8372 = vmatprep.subr.bf16.mxu0 0
    %8373 = vmatpush1.bf16.msra.mxu0 %v6438
    %8374 = vmatprep.subr.bf16.mxu0 0
    %8375 = vmatpush1.bf16.msra.mxu0 %v6437
    %8376 = vmatprep.subr.bf16.mxu0 0
    %8377 = vmatpush1.bf16.msra.mxu0 %v6436
    %8378 = vmatprep.subr.bf16.mxu0 0
    %8379 = vmatpush1.bf16.msra.mxu0 %v6435
    %8380 = vmatprep.subr.bf16.mxu0 0
    %8381 = vmatpush1.bf16.msra.mxu0 %v6434
    %8382 = vmatprep.subr.bf16.mxu0 0
    %8383 = vmatpush1.bf16.msra.mxu0 %v6433
    %8384 = vmatprep.subr.bf16.mxu0 0
    %8385 = vmatpush2.bf16.msra.mxu0 0
    %8386 = vmatprep.subr.bf16.mxu0 0
    %8387 = vmatpush2.bf16.msra.mxu0 0
    %8388 = vmatprep.subr.bf16.mxu0 0
    %8389 = vmatpush2.bf16.msra.mxu0 0
    %8390 = vmatprep.subr.bf16.mxu0 0
    %8391 = vmatpush2.bf16.msra.mxu0 0
    %8392 = vmatprep.subr.bf16.mxu0 0
    %8393 = vmatpush2.bf16.msra.mxu0 0
    %8394 = vmatprep.subr.bf16.mxu0 0
    %8395 = vmatpush2.bf16.msra.mxu0 0
    %8396 = vmatprep.subr.bf16.mxu0 0
    %8397 = vmatpush2.bf16.msra.mxu0 0
    %8398 = vmatprep.subr.bf16.mxu0 0
    %8399 = vmatpush2.bf16.msra.mxu0 0
    %8400 = vmatprep.mubr.bf16.mxu0 0
    %8401 = vmatmul.mubr.bf16.gmra.mxu0 %v5263
    %v8402 = vpop.f32.mrf.mxu0
    %v8403 = vadd.f32 %v8363, %v8402
    %v8404 = vpop.f32.mrf.mxu0
    %v8405 = vpop.f32.mrf.mxu0
    %v8406 = vpop.f32.mrf.mxu0
    %8407 = vdwg.mxu0
    %v8410 = vunpack.c.l.s4 1966171168
    %v8411 = vunpack.c.0.s8 %v8410
    %v8412 = vlaneseq
    %v8413 = vshrl.u32 %v8412, 7
    %v8414 = vsub.s32 %v8411, %v8413
    %v8415 = vrot.slane %v8403, %v8414
    %v8417 = vunpack.c.l.s4 1966171168
    %v8418 = vunpack.c.0.s8 %v8417
    %v8419 = vlaneseq
    %v8420 = vshrl.u32 %v8419, 7
    %v8421 = vsub.s32 %v8418, %v8420
    %v8422 = vrot.slane %v8415, %v8421
    %8423 = vrot.lane.b32.xlu0 %v8422, 32
    %v8424 = vpop.permute.xlu0 %8423
    %v8426 = vadd.f32 %v7967, %v8424
    %vm8427 = vcmask 253952
    %8428 = vst.msk [vmem:[#allocation7] sm:$0x1] %vm8427, %v8426
    // Predicated region
    $region90: #{map_encoder_forward.1} parent=1 // pred_check
      _
    $region91: #{map_encoder_forward.1} parent=1 // pred_check_branch
      %8430 = sbr.rel (0) target = $region93
    $region92: #{map_encoder_forward.1} parent=1 // pred_region
      %s8432 = ssub.s32 16, 16
      %8433 = vsyncadd [#allocation8], %s8432
      %s8435 = sshll.u32 [#allocation7], 4
      %s8436 = int_to_ptr.vmem [resolvable:$true] %s8435
      %8438 = dma.vmem_to_hbm [thread:$0]  %s8436, 16, %s7, [#allocation8]
    $region93: #{map_encoder_forward.1} parent=1 // pred_fallthru
      _
    // Predicated region
    $region94: #{map_encoder_forward.1} parent=1 // pred_check
      _
    $region95: #{map_encoder_forward.1} parent=1 // pred_check_branch
      %8440 = sbr.rel (0) target = $region97
    $region96: #{map_encoder_forward.1} parent=1 // pred_region
      %8441 = dma.done [#allocation8], 16
    $region97: #{map_encoder_forward.1} parent=1 // pred_fallthru
      _
    %8442 = vsyncpa [#allocation8], 1
  %8443 = vsyncmov [#allocation6]
  %s8444 = vpop.sfrf %8443
  %p8445 = scmp.eq.s32.totalorder %s8444, 0
  %p8446 = pneg %p8445
  %8448 = shalt.err (%p8446)
  %s8449 = scalar_lea.sflag [#allocation6], 1
  %8450 = vsyncmov %s8449
  %s8451 = vpop.sfrf %8450
  %p8452 = scmp.eq.s32.totalorder %s8451, 0
  %p8453 = pneg %p8452
  %8455 = shalt.err (%p8453)

</llo_original>
